<compile_context>
chip_gen: v7x
topology: tpu7x:2x2x1
jax: 0.10.0
libtpu: 0.0.40
codegen_flags: <defaults>
</compile_context>

<pallas_src>
import functools

import jax
import jax.numpy as jnp
from jax.experimental import pallas as pl
from jax.experimental.pallas import tpu as pltpu

DROPOUT_P = 0.2
_LN_EPS = 1e-5


# ----------------------------------------------------------------------------
# Stateless in-kernel PRNG (integer VPU ops only; works on TPU and in interpret mode).
# ----------------------------------------------------------------------------
def _wrap_i32(v):
    v &= 0xFFFFFFFF
    return v - 0x100000000 if v >= 0x80000000 else v


_K_ROW = _wrap_i32(0x9E3779B1)
_K_COL = _wrap_i32(0x85EBCA77)
_K_SEED = _wrap_i32(0xC2B2AE3D)
_M1 = _wrap_i32(0x7FEB352D)
_SALT_ATTN = 0x1234
_SALT_PROJ = 0x2345
_SALT_FFN = 0x3456


def _random_keep(shape, seed, salt, row_offset, p):
    """Per-element hash -> boolean keep mask with P(keep) = 1 - p (one mix round)."""
    r = jax.lax.broadcasted_iota(jnp.int32, shape, 0) + row_offset
    c = jax.lax.broadcasted_iota(jnp.int32, shape, 1)
    h = (r * jnp.int32(_K_ROW) + c * jnp.int32(_K_COL)
         + seed * jnp.int32(_K_SEED) + jnp.int32(salt))
    h = h ^ ((h >> 15) & jnp.int32(0x1FFFF))
    h = h * jnp.int32(_M1)
    h = h ^ ((h >> 16) & jnp.int32(0xFFFF))
    h = h & jnp.int32(0x7FFFFFFF)                       # uniform over [0, 2^31)
    thresh = jnp.int32(min(int(p * float(1 << 31)), (1 << 31) - 1))  # trace-time const
    return h >= thresh


def _dropout(y, seed, salt, row_offset, p):
    # Inverted dropout (PyTorch training semantics): keep w.p. 1-p, scale kept by 1/(1-p).
    # TODO(synk): deterministic hash of (seed, position); does not reproduce torch's RNG stream.
    keep = _random_keep(y.shape, seed, salt, row_offset, p)
    return jnp.where(keep, y * jnp.float32(1.0 / (1.0 - p)), jnp.float32(0.0))


def _layernorm(x, gamma, beta):
    mu = jnp.mean(x, axis=-1, keepdims=True)
    xc = x - mu
    var = jnp.mean(xc * xc, axis=-1, keepdims=True)
    return xc * jax.lax.rsqrt(var + jnp.float32(_LN_EPS)) * gamma + beta


# ----------------------------------------------------------------------------
# Fused kernel: bb batch rows per grid step.
#   x  ->  x1 = x  + Dropout(Proj(MHA(LN1(x))))
#   x1 ->  out = x1 + Dropout(W2 @ ReLU(W1 @ LN2(x1) + b1) + b2)
# ----------------------------------------------------------------------------
def _block_kernel(seed_ref, x_ref, g1_ref, b1ln_ref, wqkv_ref, wo_ref, bo_ref,
                  g2_ref, b2ln_ref, w1_ref, b1_ref, w2_ref, b2_ref,
                  o_ref, attn_ref, *, n_head, head_size, scale, train, dropout_p):
    bb, T, C = x_ref.shape
    M = bb * T
    hs = head_size
    bf16 = jnp.bfloat16
    g = pl.program_id(0)
    seed = seed_ref[0]

    x = x_ref[...].reshape(M, C)                                    # (M, C) f32 residual
    xb = _layernorm(x, g1_ref[...], b1ln_ref[...]).astype(bf16)     # LN1, bf16 MXU input

    # Fused QKV projection: one (M, C) @ (C, 3C) matmul (lane-dense, f32 accumulation).
    qkv = jnp.dot(xb, wqkv_ref[...], preferred_element_type=jnp.float32)   # (M, 3C)

    row = jax.lax.broadcasted_iota(jnp.int32, (T, T), 0)
    col = jax.lax.broadcasted_iota(jnp.int32, (T, T), 1)
    causal = row >= col

    for b in range(bb):                                             # static unroll
        r0 = b * T
        for h in range(n_head):                                     # static unroll
            c0 = h * hs
            # module quirk: scaling uses C ** -0.5 (n_embd), folded into q (T, hs).
            q = qkv[r0:r0 + T, c0:c0 + hs] * jnp.float32(scale)
            k = qkv[r0:r0 + T, C + c0:C + c0 + hs]
            v = qkv[r0:r0 + T, 2 * C + c0:2 * C + c0 + hs]
            s = jax.lax.dot_general(q.astype(bf16), k.astype(bf16),
                                    (((1,), (1,)), ((), ())),
                                    preferred_element_type=jnp.float32)    # (T, T)
            s = jnp.where(causal, s, jnp.float32(-1e30))
            p = jnp.exp(s - jnp.max(s, axis=-1, keepdims=True))            # unnormalized
            denom = jnp.sum(p, axis=-1, keepdims=True)                     # (T, 1)
            if train and dropout_p > 0.0:
                # mask is value-independent, so dropout-before-normalize == after.
                p = _dropout(p, seed, _SALT_ATTN,
                             ((g * bb + b) * n_head + h) * T, dropout_p)
            o_h = jnp.dot(p.astype(bf16), v.astype(bf16),
                          preferred_element_type=jnp.float32)               # (T, hs)
            o_h = o_h * pl.reciprocal(denom, approx=True)                   # deferred softmax
            attn_ref[b, :, c0:c0 + hs] = o_h.astype(bf16)                   # lane slot of head h

    # Single output projection: (M, C) @ (C, C) (accumulation inside the MXU).
    y = jnp.dot(attn_ref[...].reshape(M, C), wo_ref[...],
                preferred_element_type=jnp.float32) + bo_ref[...]
    if train and dropout_p > 0.0:
        y = _dropout(y, seed, _SALT_PROJ, g * M, dropout_p)
    x1 = x + y                                                       # residual after attention

    # Feed-forward on the same VMEM-resident tile (no HBM round trip for x1).
    zb = _layernorm(x1, g2_ref[...], b2ln_ref[...]).astype(bf16)
    hdn = jnp.dot(zb, w1_ref[...], preferred_element_type=jnp.float32) + b1_ref[...]
    hdn = jnp.maximum(hdn, 0.0)
    y2 = jnp.dot(hdn.astype(bf16), w2_ref[...],
                 preferred_element_type=jnp.float32) + b2_ref[...]
    if train and dropout_p > 0.0:
        y2 = _dropout(y2, seed, _SALT_FFN, g * M, dropout_p)

    o_ref[...] = (x1 + y2).reshape(o_ref.shape).astype(o_ref.dtype)


# ----------------------------------------------------------------------------
# Wrappers
# ----------------------------------------------------------------------------
def prepare_block_params(params):
    """One-time repack: fuse QKV weights, flatten WO, cast weights to bf16."""
    nh, C, hs = params["wq"].shape
    f32, bf16 = jnp.float32, jnp.bfloat16

    def to2d(w):  # (nh, C, hs) -> (C, nh*hs), head-major columns
        return jnp.transpose(w, (1, 0, 2)).reshape(C, nh * hs)

    wqkv = jnp.concatenate([to2d(params["wq"]), to2d(params["wk"]),
                            to2d(params["wv"])], axis=1)             # (C, 3C)
    wo = params["wo"].reshape(nh * hs, C)                            # (C, C), head-major rows
    return dict(
        n_head=nh, head_size=hs,
        ln1_g=params["ln1_g"].astype(f32), ln1_b=params["ln1_b"].astype(f32),
        wqkv=wqkv.astype(bf16), wo=wo.astype(bf16), bo=params["bo"].astype(f32),
        ln2_g=params["ln2_g"].astype(f32), ln2_b=params["ln2_b"].astype(f32),
        w1=params["w1"].astype(bf16), b1=params["b1"].astype(f32),
        w2=params["w2"].astype(bf16), b2=params["b2"].astype(f32),
    )


def _vmem_estimate(bb, T, C, H):
    M = bb * T
    w = 2 * 2 * (3 * C * C + C * C + C * H + H * C)      # bf16 weights, double-buffered
    io = 2 * 2 * M * C * 4                               # x / out tiles, double-buffered f32
    scratch = M * C * 2                                  # bf16 attention scratch
    interm = M * 3 * C * 4 + M * H * 4 + 2 * M * C * 4   # qkv + hidden + x1/ln temporaries
    return w + io + scratch + interm + 4 * (4 * C + 2 * H)


def _pick_bb(B, T, C, H, requested=None, budget=30 * 1024 * 1024):
    if requested is not None:
        assert B % requested == 0, "block_b must divide B"
        return requested
    for bb in (4, 2, 1):
        if B % bb == 0 and _vmem_estimate(bb, T, C, H) <= budget:
            return bb
    return 1


def transformer_block(x, prep, *, seed=0, train=True, block_b=None):
    """Forward of Block: x = x + sa(ln1(x)); x = x + ffwd(ln2(x))."""
    B, T, C = x.shape
    nh, hs = prep["n_head"], prep["head_size"]
    H = prep["w1"].shape[1]
    assert nh * hs == C and H == 4 * C
    assert T % 8 == 0 and C % 128 == 0 and H % 128 == 0

    bb = _pick_bb(B, T, C, H, block_b)
    est = _vmem_estimate(bb, T, C, H)
    assert est <= 40 * 1024 * 1024, "tile exceeds VMEM budget; reduce block_b"
    vmem_limit = min(max(int(est * 1.5), 16 * 1024 * 1024), 48 * 1024 * 1024)

    seed_arr = jnp.asarray([seed], dtype=jnp.int32)
    kernel = functools.partial(
        _block_kernel, n_head=nh, head_size=hs, scale=1.0 / float(C) ** 0.5,
        train=train, dropout_p=DROPOUT_P)

    cost = pl.CostEstimate(
        flops=int(B * T * C * (24 * C + 4 * T)),
        transcendentals=int(B * nh * T * T + 3 * B * T),
        bytes_accessed=int(8 * B * T * C + 2 * (3 * C * C + C * C + 2 * C * H) + 16 * C + 8 * H))

    out = pl.pallas_call(
        kernel,
        out_shape=jax.ShapeDtypeStruct((B, T, C), x.dtype),
        grid_spec=pltpu.PrefetchScalarGridSpec(
            num_scalar_prefetch=1,                    # dropout seed lands in SMEM
            grid=(B // bb,),
            in_specs=[
                pl.BlockSpec((bb, T, C), lambda i, s: (i, 0, 0)),   # x (bb batch rows)
                pl.BlockSpec((1, C), lambda i, s: (0, 0)),          # ln1 gamma
                pl.BlockSpec((1, C), lambda i, s: (0, 0)),          # ln1 beta
                pl.BlockSpec((C, 3 * C), lambda i, s: (0, 0)),      # fused wqkv (bf16)
                pl.BlockSpec((C, C), lambda i, s: (0, 0)),          # wo (bf16)
                pl.BlockSpec((1, C), lambda i, s: (0, 0)),          # bo
                pl.BlockSpec((1, C), lambda i, s: (0, 0)),          # ln2 gamma
                pl.BlockSpec((1, C), lambda i, s: (0, 0)),          # ln2 beta
                pl.BlockSpec((C, H), lambda i, s: (0, 0)),          # w1 (bf16)
                pl.BlockSpec((1, H), lambda i, s: (0, 0)),          # b1
                pl.BlockSpec((H, C), lambda i, s: (0, 0)),          # w2 (bf16)
                pl.BlockSpec((1, C), lambda i, s: (0, 0)),          # b2
            ],
            out_specs=pl.BlockSpec((bb, T, C), lambda i, s: (i, 0, 0)),
            scratch_shapes=[pltpu.VMEM((bb, T, C), jnp.bfloat16)],  # per-head output slots
        ),
        compiler_params=pltpu.CompilerParams(
            dimension_semantics=("parallel",),
            vmem_limit_bytes=vmem_limit),
        cost_estimate=cost,
    )(seed_arr, x, prep["ln1_g"], prep["ln1_b"], prep["wqkv"], prep["wo"], prep["bo"],
      prep["ln2_g"], prep["ln2_b"], prep["w1"], prep["b1"], prep["w2"], prep["b2"])
    return out


# ----------------------------------------------------------------------------
# Pure-JAX reference (eval mode, mirrors the kernel's bf16-input / f32-acc matmuls)
# ----------------------------------------------------------------------------
def _reference_block(x, params):
    f32 = jnp.float32

    def q_(a):  # bf16 quantization of MXU inputs, exactly as in the kernel
        return a.astype(jnp.bfloat16).astype(f32)

    def ln(z, g, b):
        mu = jnp.mean(z, axis=-1, keepdims=True)
        zc = z - mu
        var = jnp.mean(zc * zc, axis=-1, keepdims=True)
        return zc * jax.lax.rsqrt(var + _LN_EPS) * g + b

    B, T, C = x.shape
    scale = 1.0 / float(C) ** 0.5
    xb = q_(ln(x, params["ln1_g"], params["ln1_b"]))
    q = jnp.einsum("btc,hcd->bhtd", xb, q_(params["wq"])) * scale
    k = jnp.einsum("btc,hcd->bhtd", xb, q_(params["wk"]))
    v = jnp.einsum("btc,hcd->bhtd", xb, q_(params["wv"]))
    s = jnp.einsum("bhtd,bhsd->bhts", q_(q), q_(k))
    causal = jnp.tril(jnp.ones((T, T), bool))
    s = jnp.where(causal[None, None], s, -1e30)
    p_un = jnp.exp(s - jnp.max(s, axis=-1, keepdims=True))
    denom = jnp.sum(p_un, axis=-1, keepdims=True)
    o = jnp.einsum("bhts,bhsd->bhtd", q_(p_un), q_(v)) / denom
    y = jnp.einsum("bhtd,hdc->btc", q_(o), q_(params["wo"])) + params["bo"]
    x1 = x + y
    zb = q_(ln(x1, params["ln2_g"], params["ln2_b"]))
    h = jnp.maximum(jnp.einsum("btc,cf->btf", zb, q_(params["w1"])) + params["b1"], 0.0)
    y2 = jnp.einsum("btf,fc->btc", q_(h), q_(params["w2"])) + params["b2"]
    return x1 + y2


if __name__ == "__main__":
    # Small shapes consistent with the module: n_embd=384, n_head=6, short sequence.
    B, T = 2, 8
    C = 384                     # n_embd
    NH = 6                      # n_head
    HS = C // NH                # head_size = 64
    H = 4 * C

    key = jax.random.PRNGKey(0)
    ks = jax.random.split(key, 10)
    bc = 1.0 / (C ** 0.5)       # nn.Linear init bound, fan_in = n_embd
    bh = 1.0 / (H ** 0.5)       # fan_in = 4 * n_embd

    params = dict(
        ln1_g=jnp.ones((1, C), jnp.float32), ln1_b=jnp.zeros((1, C), jnp.float32),
        wq=jax.random.uniform(ks[0], (NH, C, HS), jnp.float32, -bc, bc),
        wk=jax.random.uniform(ks[1], (NH, C, HS), jnp.float32, -bc, bc),
        wv=jax.random.uniform(ks[2], (NH, C, HS), jnp.float32, -bc, bc),
        wo=jax.random.uniform(ks[3], (NH, HS, C), jnp.float32, -bc, bc),
        bo=jax.random.uniform(ks[4], (1, C), jnp.float32, -bc, bc),
        ln2_g=jnp.ones((1, C), jnp.float32), ln2_b=jnp.zeros((1, C), jnp.float32),
        w1=jax.random.uniform(ks[5], (C, H), jnp.float32, -bc, bc),
        b1=jax.random.uniform(ks[6], (1, H), jnp.float32, -bc, bc),
        w2=jax.random.uniform(ks[7], (H, C), jnp.float32, -bh, bh),
        b2=jax.random.uniform(ks[8], (1, C), jnp.float32, -bh, bh),
    )
    x = jax.random.normal(ks[9], (B, T, C), jnp.float32)

    prep = prepare_block_params(params)   # one-time bf16 cast + QKV/WO repack

    # Eval mode (dropout = identity): check against the pure-JAX reference.
    y_eval = transformer_block(x, prep, train=False)
    ref = _reference_block(x, params)
    err = float(jnp.max(jnp.abs(y_eval - ref)))
    assert err < 2e-2, f"mismatch vs reference: max abs err = {err}"

    # Training mode: fused in-kernel inverted dropout (p=0.2), deterministic seed.
    y_train = transformer_block(x, prep, seed=123, train=True)

    jax.block_until_ready((y_eval, y_train))
    print("KERNEL_OK")
</pallas_src>

<mosaic_0001>
module attributes {stable_mosaic.version = 11 : i64} {
  func.func @_block_kernel(%arg0: i32, %arg1: memref<1xi32, #tpu.memory_space<smem>>, %arg2: memref<2x8x384xf32, #tpu.memory_space<vmem>>, %arg3: memref<1x384xf32, #tpu.memory_space<vmem>>, %arg4: memref<1x384xf32, #tpu.memory_space<vmem>>, %arg5: memref<384x1152xbf16, #tpu.memory_space<vmem>>, %arg6: memref<384x384xbf16, #tpu.memory_space<vmem>>, %arg7: memref<1x384xf32, #tpu.memory_space<vmem>>, %arg8: memref<1x384xf32, #tpu.memory_space<vmem>>, %arg9: memref<1x384xf32, #tpu.memory_space<vmem>>, %arg10: memref<384x1536xbf16, #tpu.memory_space<vmem>>, %arg11: memref<1x1536xf32, #tpu.memory_space<vmem>>, %arg12: memref<1536x384xbf16, #tpu.memory_space<vmem>>, %arg13: memref<1x384xf32, #tpu.memory_space<vmem>>, %arg14: memref<2x8x384xf32, #tpu.memory_space<vmem>>, %arg15: memref<2x8x384xbf16, #tpu.memory_space<vmem>>) attributes {dimension_semantics = [#tpu.dimension_semantics<parallel>], iteration_bounds = array<i64: 1>, scalar_prefetch = 1 : i64, scratch_operands = 1 : i64, tpu.core_type = #tpu.core_type<tc>, window_params = [{transform_indices = @transform_0, window_bounds = array<i64: 2, 8, 384>}, {pipeline_mode = #tpu.pipeline_mode<synchronous>, transform_indices = @transform_1, window_bounds = array<i64: 1, 384>}, {pipeline_mode = #tpu.pipeline_mode<synchronous>, transform_indices = @transform_2, window_bounds = array<i64: 1, 384>}, {pipeline_mode = #tpu.pipeline_mode<synchronous>, transform_indices = @transform_3, window_bounds = array<i64: 384, 1152>}, {pipeline_mode = #tpu.pipeline_mode<synchronous>, transform_indices = @transform_4, window_bounds = array<i64: 384, 384>}, {pipeline_mode = #tpu.pipeline_mode<synchronous>, transform_indices = @transform_5, window_bounds = array<i64: 1, 384>}, {pipeline_mode = #tpu.pipeline_mode<synchronous>, transform_indices = @transform_6, window_bounds = array<i64: 1, 384>}, {pipeline_mode = #tpu.pipeline_mode<synchronous>, transform_indices = @transform_7, window_bounds = array<i64: 1, 384>}, {pipeline_mode = #tpu.pipeline_mode<synchronous>, transform_indices = @transform_8, window_bounds = array<i64: 384, 1536>}, {pipeline_mode = #tpu.pipeline_mode<synchronous>, transform_indices = @transform_9, window_bounds = array<i64: 1, 1536>}, {pipeline_mode = #tpu.pipeline_mode<synchronous>, transform_indices = @transform_10, window_bounds = array<i64: 1536, 384>}, {pipeline_mode = #tpu.pipeline_mode<synchronous>, transform_indices = @transform_11, window_bounds = array<i64: 1, 384>}, {transform_indices = @transform_12, window_bounds = array<i64: 2, 8, 384>}]} {
    %c0 = arith.constant 0 : index
    %c0_0 = arith.constant 0 : index
    %c0_1 = arith.constant 0 : index
    %0 = vector.load %arg2[%c0, %c0_0, %c0_1] : memref<2x8x384xf32, #tpu.memory_space<vmem>>, vector<2x8x384xf32>
    %1 = vector.shape_cast %0 : vector<2x8x384xf32> to vector<16x384xf32>
    %c0_2 = arith.constant 0 : index
    %c0_3 = arith.constant 0 : index
    %2 = vector.load %arg3[%c0_2, %c0_3] : memref<1x384xf32, #tpu.memory_space<vmem>>, vector<1x384xf32>
    %c0_4 = arith.constant 0 : index
    %c0_5 = arith.constant 0 : index
    %3 = vector.load %arg4[%c0_4, %c0_5] : memref<1x384xf32, #tpu.memory_space<vmem>>, vector<1x384xf32>
    %cst = arith.constant dense<0.000000e+00> : vector<16xf32>
    %4 = vector.multi_reduction <add>, %1, %cst [1] : vector<16x384xf32> to vector<16xf32>
    %5 = vector.shape_cast %4 : vector<16xf32> to vector<16x1xf32>
    %cst_6 = arith.constant 3.840000e+02 : f32
    %6 = vector.broadcast %cst_6 : f32 to vector<16x1xf32>
    %7 = arith.divf %5, %6 : vector<16x1xf32>
    %8 = vector.broadcast %7 : vector<16x1xf32> to vector<16x384xf32>
    %9 = arith.subf %1, %8 : vector<16x384xf32>
    %10 = arith.mulf %9, %9 : vector<16x384xf32>
    %cst_7 = arith.constant dense<0.000000e+00> : vector<16xf32>
    %11 = vector.multi_reduction <add>, %10, %cst_7 [1] : vector<16x384xf32> to vector<16xf32>
    %12 = vector.shape_cast %11 : vector<16xf32> to vector<16x1xf32>
    %cst_8 = arith.constant 3.840000e+02 : f32
    %13 = vector.broadcast %cst_8 : f32 to vector<16x1xf32>
    %14 = arith.divf %12, %13 : vector<16x1xf32>
    %cst_9 = arith.constant 9.99999974E-6 : f32
    %15 = vector.broadcast %cst_9 : f32 to vector<16x1xf32>
    %16 = arith.addf %14, %15 : vector<16x1xf32>
    %17 = math.rsqrt %16 : vector<16x1xf32>
    %18 = vector.broadcast %17 : vector<16x1xf32> to vector<16x384xf32>
    %19 = arith.mulf %9, %18 : vector<16x384xf32>
    %20 = vector.broadcast %2 : vector<1x384xf32> to vector<16x384xf32>
    %21 = arith.mulf %19, %20 : vector<16x384xf32>
    %22 = vector.broadcast %3 : vector<1x384xf32> to vector<16x384xf32>
    %23 = arith.addf %21, %22 : vector<16x384xf32>
    %24 = arith.truncf %23 : vector<16x384xf32> to vector<16x384xbf16>
    %c0_10 = arith.constant 0 : index
    %c0_11 = arith.constant 0 : index
    %25 = vector.load %arg5[%c0_10, %c0_11] : memref<384x1152xbf16, #tpu.memory_space<vmem>>, vector<384x1152xbf16>
    %cst_12 = arith.constant dense<0.000000e+00> : vector<16x1152xf32>
    %26 = tpu.matmul %24, %25, %cst_12 {dimension_numbers = #tpu.dot_dimension_numbers<[1], [0], [0], [1], [0, 0, 1, 1], [], []>} : vector<16x384xbf16>, vector<384x1152xbf16>, vector<16x1152xf32> -> vector<16x1152xf32>
    %27 = tpu.iota {dimensions = array<i32: 0>} : vector<8x8xi32>
    %28 = tpu.iota {dimensions = array<i32: 1>} : vector<8x8xi32>
    %29 = arith.cmpi sge, %27, %28 : vector<8x8xi32>
    %30 = vector.extract_strided_slice %26 {offsets = [0, 0], sizes = [8, 64], strides = [1, 1]} : vector<16x1152xf32> to vector<8x64xf32>
    %cst_13 = arith.constant 0.0510310382 : f32
    %31 = vector.broadcast %cst_13 : f32 to vector<8x64xf32>
    %32 = arith.mulf %30, %31 : vector<8x64xf32>
    %33 = vector.extract_strided_slice %26 {offsets = [0, 384], sizes = [8, 64], strides = [1, 1]} : vector<16x1152xf32> to vector<8x64xf32>
    %34 = vector.extract_strided_slice %26 {offsets = [0, 768], sizes = [8, 64], strides = [1, 1]} : vector<16x1152xf32> to vector<8x64xf32>
    %35 = arith.truncf %32 : vector<8x64xf32> to vector<8x64xbf16>
    %36 = arith.truncf %33 : vector<8x64xf32> to vector<8x64xbf16>
    %cst_14 = arith.constant dense<0.000000e+00> : vector<8x8xf32>
    %37 = tpu.matmul %35, %36, %cst_14 {dimension_numbers = #tpu.dot_dimension_numbers<[1], [1], [0], [0], [0, 0, 1, 0], [], []>} : vector<8x64xbf16>, vector<8x64xbf16>, vector<8x8xf32> -> vector<8x8xf32>
    %cst_15 = arith.constant -1.000000e+30 : f32
    %38 = vector.broadcast %cst_15 : f32 to vector<8x8xf32>
    %39 = arith.select %29, %37, %38 : vector<8x8xi1>, vector<8x8xf32>
    %cst_16 = arith.constant dense<0xFF800000> : vector<8xf32>
    %40 = vector.multi_reduction <maximumf>, %39, %cst_16 [1] : vector<8x8xf32> to vector<8xf32>
    %41 = vector.shape_cast %40 : vector<8xf32> to vector<8x1xf32>
    %42 = vector.broadcast %41 : vector<8x1xf32> to vector<8x8xf32>
    %43 = arith.subf %39, %42 : vector<8x8xf32>
    %44 = math.exp %43 : vector<8x8xf32>
    %cst_17 = arith.constant dense<0.000000e+00> : vector<8xf32>
    %45 = vector.multi_reduction <add>, %44, %cst_17 [1] : vector<8x8xf32> to vector<8xf32>
    %46 = vector.shape_cast %45 : vector<8xf32> to vector<8x1xf32>
    %47 = arith.truncf %44 : vector<8x8xf32> to vector<8x8xbf16>
    %48 = arith.truncf %34 : vector<8x64xf32> to vector<8x64xbf16>
    %cst_18 = arith.constant dense<0.000000e+00> : vector<8x64xf32>
    %49 = tpu.matmul %47, %48, %cst_18 {dimension_numbers = #tpu.dot_dimension_numbers<[1], [0], [0], [1], [0, 0, 1, 1], [], []>} : vector<8x8xbf16>, vector<8x64xbf16>, vector<8x64xf32> -> vector<8x64xf32>
    %50 = tpu.reciprocal %46 {approx = true} : vector<8x1xf32> -> vector<8x1xf32>
    %51 = vector.broadcast %50 : vector<8x1xf32> to vector<8x64xf32>
    %52 = arith.mulf %49, %51 : vector<8x64xf32>
    %53 = arith.truncf %52 : vector<8x64xf32> to vector<8x64xbf16>
    %c0_19 = arith.constant 0 : index
    %c0_20 = arith.constant 0 : index
    %c0_21 = arith.constant 0 : index
    %54 = vector.load %arg15[%c0_19, %c0_20, %c0_21] : memref<2x8x384xbf16, #tpu.memory_space<vmem>>, vector<1x8x64xbf16>
    %55 = vector.shape_cast %54 : vector<1x8x64xbf16> to vector<8x64xbf16>
    %56 = vector.shape_cast %53 : vector<8x64xbf16> to vector<1x8x64xbf16>
    tpu.vector_store %arg15[%c0_19, %c0_20, %c0_21], %56 {strides = array<i32>} : memref<2x8x384xbf16, #tpu.memory_space<vmem>>, vector<1x8x64xbf16>,
    %57 = vector.extract_strided_slice %26 {offsets = [0, 64], sizes = [8, 64], strides = [1, 1]} : vector<16x1152xf32> to vector<8x64xf32>
    %cst_22 = arith.constant 0.0510310382 : f32
    %58 = vector.broadcast %cst_22 : f32 to vector<8x64xf32>
    %59 = arith.mulf %57, %58 : vector<8x64xf32>
    %60 = vector.extract_strided_slice %26 {offsets = [0, 448], sizes = [8, 64], strides = [1, 1]} : vector<16x1152xf32> to vector<8x64xf32>
    %61 = vector.extract_strided_slice %26 {offsets = [0, 832], sizes = [8, 64], strides = [1, 1]} : vector<16x1152xf32> to vector<8x64xf32>
    %62 = arith.truncf %59 : vector<8x64xf32> to vector<8x64xbf16>
    %63 = arith.truncf %60 : vector<8x64xf32> to vector<8x64xbf16>
    %cst_23 = arith.constant dense<0.000000e+00> : vector<8x8xf32>
    %64 = tpu.matmul %62, %63, %cst_23 {dimension_numbers = #tpu.dot_dimension_numbers<[1], [1], [0], [0], [0, 0, 1, 0], [], []>} : vector<8x64xbf16>, vector<8x64xbf16>, vector<8x8xf32> -> vector<8x8xf32>
    %cst_24 = arith.constant -1.000000e+30 : f32
    %65 = vector.broadcast %cst_24 : f32 to vector<8x8xf32>
    %66 = arith.select %29, %64, %65 : vector<8x8xi1>, vector<8x8xf32>
    %cst_25 = arith.constant dense<0xFF800000> : vector<8xf32>
    %67 = vector.multi_reduction <maximumf>, %66, %cst_25 [1] : vector<8x8xf32> to vector<8xf32>
    %68 = vector.shape_cast %67 : vector<8xf32> to vector<8x1xf32>
    %69 = vector.broadcast %68 : vector<8x1xf32> to vector<8x8xf32>
    %70 = arith.subf %66, %69 : vector<8x8xf32>
    %71 = math.exp %70 : vector<8x8xf32>
    %cst_26 = arith.constant dense<0.000000e+00> : vector<8xf32>
    %72 = vector.multi_reduction <add>, %71, %cst_26 [1] : vector<8x8xf32> to vector<8xf32>
    %73 = vector.shape_cast %72 : vector<8xf32> to vector<8x1xf32>
    %74 = arith.truncf %71 : vector<8x8xf32> to vector<8x8xbf16>
    %75 = arith.truncf %61 : vector<8x64xf32> to vector<8x64xbf16>
    %cst_27 = arith.constant dense<0.000000e+00> : vector<8x64xf32>
    %76 = tpu.matmul %74, %75, %cst_27 {dimension_numbers = #tpu.dot_dimension_numbers<[1], [0], [0], [1], [0, 0, 1, 1], [], []>} : vector<8x8xbf16>, vector<8x64xbf16>, vector<8x64xf32> -> vector<8x64xf32>
    %77 = tpu.reciprocal %73 {approx = true} : vector<8x1xf32> -> vector<8x1xf32>
    %78 = vector.broadcast %77 : vector<8x1xf32> to vector<8x64xf32>
    %79 = arith.mulf %76, %78 : vector<8x64xf32>
    %80 = arith.truncf %79 : vector<8x64xf32> to vector<8x64xbf16>
    %c0_28 = arith.constant 0 : index
    %c0_29 = arith.constant 0 : index
    %c64 = arith.constant 64 : index
    %81 = vector.load %arg15[%c0_28, %c0_29, %c64] : memref<2x8x384xbf16, #tpu.memory_space<vmem>>, vector<1x8x64xbf16>
    %82 = vector.shape_cast %81 : vector<1x8x64xbf16> to vector<8x64xbf16>
    %83 = vector.shape_cast %80 : vector<8x64xbf16> to vector<1x8x64xbf16>
    tpu.vector_store %arg15[%c0_28, %c0_29, %c64], %83 {strides = array<i32>} : memref<2x8x384xbf16, #tpu.memory_space<vmem>>, vector<1x8x64xbf16>,
    %84 = vector.extract_strided_slice %26 {offsets = [0, 128], sizes = [8, 64], strides = [1, 1]} : vector<16x1152xf32> to vector<8x64xf32>
    %cst_30 = arith.constant 0.0510310382 : f32
    %85 = vector.broadcast %cst_30 : f32 to vector<8x64xf32>
    %86 = arith.mulf %84, %85 : vector<8x64xf32>
    %87 = vector.extract_strided_slice %26 {offsets = [0, 512], sizes = [8, 64], strides = [1, 1]} : vector<16x1152xf32> to vector<8x64xf32>
    %88 = vector.extract_strided_slice %26 {offsets = [0, 896], sizes = [8, 64], strides = [1, 1]} : vector<16x1152xf32> to vector<8x64xf32>
    %89 = arith.truncf %86 : vector<8x64xf32> to vector<8x64xbf16>
    %90 = arith.truncf %87 : vector<8x64xf32> to vector<8x64xbf16>
    %cst_31 = arith.constant dense<0.000000e+00> : vector<8x8xf32>
    %91 = tpu.matmul %89, %90, %cst_31 {dimension_numbers = #tpu.dot_dimension_numbers<[1], [1], [0], [0], [0, 0, 1, 0], [], []>} : vector<8x64xbf16>, vector<8x64xbf16>, vector<8x8xf32> -> vector<8x8xf32>
    %cst_32 = arith.constant -1.000000e+30 : f32
    %92 = vector.broadcast %cst_32 : f32 to vector<8x8xf32>
    %93 = arith.select %29, %91, %92 : vector<8x8xi1>, vector<8x8xf32>
    %cst_33 = arith.constant dense<0xFF800000> : vector<8xf32>
    %94 = vector.multi_reduction <maximumf>, %93, %cst_33 [1] : vector<8x8xf32> to vector<8xf32>
    %95 = vector.shape_cast %94 : vector<8xf32> to vector<8x1xf32>
    %96 = vector.broadcast %95 : vector<8x1xf32> to vector<8x8xf32>
    %97 = arith.subf %93, %96 : vector<8x8xf32>
    %98 = math.exp %97 : vector<8x8xf32>
    %cst_34 = arith.constant dense<0.000000e+00> : vector<8xf32>
    %99 = vector.multi_reduction <add>, %98, %cst_34 [1] : vector<8x8xf32> to vector<8xf32>
    %100 = vector.shape_cast %99 : vector<8xf32> to vector<8x1xf32>
    %101 = arith.truncf %98 : vector<8x8xf32> to vector<8x8xbf16>
    %102 = arith.truncf %88 : vector<8x64xf32> to vector<8x64xbf16>
    %cst_35 = arith.constant dense<0.000000e+00> : vector<8x64xf32>
    %103 = tpu.matmul %101, %102, %cst_35 {dimension_numbers = #tpu.dot_dimension_numbers<[1], [0], [0], [1], [0, 0, 1, 1], [], []>} : vector<8x8xbf16>, vector<8x64xbf16>, vector<8x64xf32> -> vector<8x64xf32>
    %104 = tpu.reciprocal %100 {approx = true} : vector<8x1xf32> -> vector<8x1xf32>
    %105 = vector.broadcast %104 : vector<8x1xf32> to vector<8x64xf32>
    %106 = arith.mulf %103, %105 : vector<8x64xf32>
    %107 = arith.truncf %106 : vector<8x64xf32> to vector<8x64xbf16>
    %c0_36 = arith.constant 0 : index
    %c0_37 = arith.constant 0 : index
    %c128 = arith.constant 128 : index
    %108 = vector.load %arg15[%c0_36, %c0_37, %c128] : memref<2x8x384xbf16, #tpu.memory_space<vmem>>, vector<1x8x64xbf16>
    %109 = vector.shape_cast %108 : vector<1x8x64xbf16> to vector<8x64xbf16>
    %110 = vector.shape_cast %107 : vector<8x64xbf16> to vector<1x8x64xbf16>
    tpu.vector_store %arg15[%c0_36, %c0_37, %c128], %110 {strides = array<i32>} : memref<2x8x384xbf16, #tpu.memory_space<vmem>>, vector<1x8x64xbf16>,
    %111 = vector.extract_strided_slice %26 {offsets = [0, 192], sizes = [8, 64], strides = [1, 1]} : vector<16x1152xf32> to vector<8x64xf32>
    %cst_38 = arith.constant 0.0510310382 : f32
    %112 = vector.broadcast %cst_38 : f32 to vector<8x64xf32>
    %113 = arith.mulf %111, %112 : vector<8x64xf32>
    %114 = vector.extract_strided_slice %26 {offsets = [0, 576], sizes = [8, 64], strides = [1, 1]} : vector<16x1152xf32> to vector<8x64xf32>
    %115 = vector.extract_strided_slice %26 {offsets = [0, 960], sizes = [8, 64], strides = [1, 1]} : vector<16x1152xf32> to vector<8x64xf32>
    %116 = arith.truncf %113 : vector<8x64xf32> to vector<8x64xbf16>
    %117 = arith.truncf %114 : vector<8x64xf32> to vector<8x64xbf16>
    %cst_39 = arith.constant dense<0.000000e+00> : vector<8x8xf32>
    %118 = tpu.matmul %116, %117, %cst_39 {dimension_numbers = #tpu.dot_dimension_numbers<[1], [1], [0], [0], [0, 0, 1, 0], [], []>} : vector<8x64xbf16>, vector<8x64xbf16>, vector<8x8xf32> -> vector<8x8xf32>
    %cst_40 = arith.constant -1.000000e+30 : f32
    %119 = vector.broadcast %cst_40 : f32 to vector<8x8xf32>
    %120 = arith.select %29, %118, %119 : vector<8x8xi1>, vector<8x8xf32>
    %cst_41 = arith.constant dense<0xFF800000> : vector<8xf32>
    %121 = vector.multi_reduction <maximumf>, %120, %cst_41 [1] : vector<8x8xf32> to vector<8xf32>
    %122 = vector.shape_cast %121 : vector<8xf32> to vector<8x1xf32>
    %123 = vector.broadcast %122 : vector<8x1xf32> to vector<8x8xf32>
    %124 = arith.subf %120, %123 : vector<8x8xf32>
    %125 = math.exp %124 : vector<8x8xf32>
    %cst_42 = arith.constant dense<0.000000e+00> : vector<8xf32>
    %126 = vector.multi_reduction <add>, %125, %cst_42 [1] : vector<8x8xf32> to vector<8xf32>
    %127 = vector.shape_cast %126 : vector<8xf32> to vector<8x1xf32>
    %128 = arith.truncf %125 : vector<8x8xf32> to vector<8x8xbf16>
    %129 = arith.truncf %115 : vector<8x64xf32> to vector<8x64xbf16>
    %cst_43 = arith.constant dense<0.000000e+00> : vector<8x64xf32>
    %130 = tpu.matmul %128, %129, %cst_43 {dimension_numbers = #tpu.dot_dimension_numbers<[1], [0], [0], [1], [0, 0, 1, 1], [], []>} : vector<8x8xbf16>, vector<8x64xbf16>, vector<8x64xf32> -> vector<8x64xf32>
    %131 = tpu.reciprocal %127 {approx = true} : vector<8x1xf32> -> vector<8x1xf32>
    %132 = vector.broadcast %131 : vector<8x1xf32> to vector<8x64xf32>
    %133 = arith.mulf %130, %132 : vector<8x64xf32>
    %134 = arith.truncf %133 : vector<8x64xf32> to vector<8x64xbf16>
    %c0_44 = arith.constant 0 : index
    %c0_45 = arith.constant 0 : index
    %c192 = arith.constant 192 : index
    %135 = vector.load %arg15[%c0_44, %c0_45, %c192] : memref<2x8x384xbf16, #tpu.memory_space<vmem>>, vector<1x8x64xbf16>
    %136 = vector.shape_cast %135 : vector<1x8x64xbf16> to vector<8x64xbf16>
    %137 = vector.shape_cast %134 : vector<8x64xbf16> to vector<1x8x64xbf16>
    tpu.vector_store %arg15[%c0_44, %c0_45, %c192], %137 {strides = array<i32>} : memref<2x8x384xbf16, #tpu.memory_space<vmem>>, vector<1x8x64xbf16>,
    %138 = vector.extract_strided_slice %26 {offsets = [0, 256], sizes = [8, 64], strides = [1, 1]} : vector<16x1152xf32> to vector<8x64xf32>
    %cst_46 = arith.constant 0.0510310382 : f32
    %139 = vector.broadcast %cst_46 : f32 to vector<8x64xf32>
    %140 = arith.mulf %138, %139 : vector<8x64xf32>
    %141 = vector.extract_strided_slice %26 {offsets = [0, 640], sizes = [8, 64], strides = [1, 1]} : vector<16x1152xf32> to vector<8x64xf32>
    %142 = vector.extract_strided_slice %26 {offsets = [0, 1024], sizes = [8, 64], strides = [1, 1]} : vector<16x1152xf32> to vector<8x64xf32>
    %143 = arith.truncf %140 : vector<8x64xf32> to vector<8x64xbf16>
    %144 = arith.truncf %141 : vector<8x64xf32> to vector<8x64xbf16>
    %cst_47 = arith.constant dense<0.000000e+00> : vector<8x8xf32>
    %145 = tpu.matmul %143, %144, %cst_47 {dimension_numbers = #tpu.dot_dimension_numbers<[1], [1], [0], [0], [0, 0, 1, 0], [], []>} : vector<8x64xbf16>, vector<8x64xbf16>, vector<8x8xf32> -> vector<8x8xf32>
    %cst_48 = arith.constant -1.000000e+30 : f32
    %146 = vector.broadcast %cst_48 : f32 to vector<8x8xf32>
    %147 = arith.select %29, %145, %146 : vector<8x8xi1>, vector<8x8xf32>
    %cst_49 = arith.constant dense<0xFF800000> : vector<8xf32>
    %148 = vector.multi_reduction <maximumf>, %147, %cst_49 [1] : vector<8x8xf32> to vector<8xf32>
    %149 = vector.shape_cast %148 : vector<8xf32> to vector<8x1xf32>
    %150 = vector.broadcast %149 : vector<8x1xf32> to vector<8x8xf32>
    %151 = arith.subf %147, %150 : vector<8x8xf32>
    %152 = math.exp %151 : vector<8x8xf32>
    %cst_50 = arith.constant dense<0.000000e+00> : vector<8xf32>
    %153 = vector.multi_reduction <add>, %152, %cst_50 [1] : vector<8x8xf32> to vector<8xf32>
    %154 = vector.shape_cast %153 : vector<8xf32> to vector<8x1xf32>
    %155 = arith.truncf %152 : vector<8x8xf32> to vector<8x8xbf16>
    %156 = arith.truncf %142 : vector<8x64xf32> to vector<8x64xbf16>
    %cst_51 = arith.constant dense<0.000000e+00> : vector<8x64xf32>
    %157 = tpu.matmul %155, %156, %cst_51 {dimension_numbers = #tpu.dot_dimension_numbers<[1], [0], [0], [1], [0, 0, 1, 1], [], []>} : vector<8x8xbf16>, vector<8x64xbf16>, vector<8x64xf32> -> vector<8x64xf32>
    %158 = tpu.reciprocal %154 {approx = true} : vector<8x1xf32> -> vector<8x1xf32>
    %159 = vector.broadcast %158 : vector<8x1xf32> to vector<8x64xf32>
    %160 = arith.mulf %157, %159 : vector<8x64xf32>
    %161 = arith.truncf %160 : vector<8x64xf32> to vector<8x64xbf16>
    %c0_52 = arith.constant 0 : index
    %c0_53 = arith.constant 0 : index
    %c256 = arith.constant 256 : index
    %162 = vector.load %arg15[%c0_52, %c0_53, %c256] : memref<2x8x384xbf16, #tpu.memory_space<vmem>>, vector<1x8x64xbf16>
    %163 = vector.shape_cast %162 : vector<1x8x64xbf16> to vector<8x64xbf16>
    %164 = vector.shape_cast %161 : vector<8x64xbf16> to vector<1x8x64xbf16>
    tpu.vector_store %arg15[%c0_52, %c0_53, %c256], %164 {strides = array<i32>} : memref<2x8x384xbf16, #tpu.memory_space<vmem>>, vector<1x8x64xbf16>,
    %165 = vector.extract_strided_slice %26 {offsets = [0, 320], sizes = [8, 64], strides = [1, 1]} : vector<16x1152xf32> to vector<8x64xf32>
    %cst_54 = arith.constant 0.0510310382 : f32
    %166 = vector.broadcast %cst_54 : f32 to vector<8x64xf32>
    %167 = arith.mulf %165, %166 : vector<8x64xf32>
    %168 = vector.extract_strided_slice %26 {offsets = [0, 704], sizes = [8, 64], strides = [1, 1]} : vector<16x1152xf32> to vector<8x64xf32>
    %169 = vector.extract_strided_slice %26 {offsets = [0, 1088], sizes = [8, 64], strides = [1, 1]} : vector<16x1152xf32> to vector<8x64xf32>
    %170 = arith.truncf %167 : vector<8x64xf32> to vector<8x64xbf16>
    %171 = arith.truncf %168 : vector<8x64xf32> to vector<8x64xbf16>
    %cst_55 = arith.constant dense<0.000000e+00> : vector<8x8xf32>
    %172 = tpu.matmul %170, %171, %cst_55 {dimension_numbers = #tpu.dot_dimension_numbers<[1], [1], [0], [0], [0, 0, 1, 0], [], []>} : vector<8x64xbf16>, vector<8x64xbf16>, vector<8x8xf32> -> vector<8x8xf32>
    %cst_56 = arith.constant -1.000000e+30 : f32
    %173 = vector.broadcast %cst_56 : f32 to vector<8x8xf32>
    %174 = arith.select %29, %172, %173 : vector<8x8xi1>, vector<8x8xf32>
    %cst_57 = arith.constant dense<0xFF800000> : vector<8xf32>
    %175 = vector.multi_reduction <maximumf>, %174, %cst_57 [1] : vector<8x8xf32> to vector<8xf32>
    %176 = vector.shape_cast %175 : vector<8xf32> to vector<8x1xf32>
    %177 = vector.broadcast %176 : vector<8x1xf32> to vector<8x8xf32>
    %178 = arith.subf %174, %177 : vector<8x8xf32>
    %179 = math.exp %178 : vector<8x8xf32>
    %cst_58 = arith.constant dense<0.000000e+00> : vector<8xf32>
    %180 = vector.multi_reduction <add>, %179, %cst_58 [1] : vector<8x8xf32> to vector<8xf32>
    %181 = vector.shape_cast %180 : vector<8xf32> to vector<8x1xf32>
    %182 = arith.truncf %179 : vector<8x8xf32> to vector<8x8xbf16>
    %183 = arith.truncf %169 : vector<8x64xf32> to vector<8x64xbf16>
    %cst_59 = arith.constant dense<0.000000e+00> : vector<8x64xf32>
    %184 = tpu.matmul %182, %183, %cst_59 {dimension_numbers = #tpu.dot_dimension_numbers<[1], [0], [0], [1], [0, 0, 1, 1], [], []>} : vector<8x8xbf16>, vector<8x64xbf16>, vector<8x64xf32> -> vector<8x64xf32>
    %185 = tpu.reciprocal %181 {approx = true} : vector<8x1xf32> -> vector<8x1xf32>
    %186 = vector.broadcast %185 : vector<8x1xf32> to vector<8x64xf32>
    %187 = arith.mulf %184, %186 : vector<8x64xf32>
    %188 = arith.truncf %187 : vector<8x64xf32> to vector<8x64xbf16>
    %c0_60 = arith.constant 0 : index
    %c0_61 = arith.constant 0 : index
    %c320 = arith.constant 320 : index
    %189 = vector.load %arg15[%c0_60, %c0_61, %c320] : memref<2x8x384xbf16, #tpu.memory_space<vmem>>, vector<1x8x64xbf16>
    %190 = vector.shape_cast %189 : vector<1x8x64xbf16> to vector<8x64xbf16>
    %191 = vector.shape_cast %188 : vector<8x64xbf16> to vector<1x8x64xbf16>
    tpu.vector_store %arg15[%c0_60, %c0_61, %c320], %191 {strides = array<i32>} : memref<2x8x384xbf16, #tpu.memory_space<vmem>>, vector<1x8x64xbf16>,
    %192 = vector.extract_strided_slice %26 {offsets = [8, 0], sizes = [8, 64], strides = [1, 1]} : vector<16x1152xf32> to vector<8x64xf32>
    %cst_62 = arith.constant 0.0510310382 : f32
    %193 = vector.broadcast %cst_62 : f32 to vector<8x64xf32>
    %194 = arith.mulf %192, %193 : vector<8x64xf32>
    %195 = vector.extract_strided_slice %26 {offsets = [8, 384], sizes = [8, 64], strides = [1, 1]} : vector<16x1152xf32> to vector<8x64xf32>
    %196 = vector.extract_strided_slice %26 {offsets = [8, 768], sizes = [8, 64], strides = [1, 1]} : vector<16x1152xf32> to vector<8x64xf32>
    %197 = arith.truncf %194 : vector<8x64xf32> to vector<8x64xbf16>
    %198 = arith.truncf %195 : vector<8x64xf32> to vector<8x64xbf16>
    %cst_63 = arith.constant dense<0.000000e+00> : vector<8x8xf32>
    %199 = tpu.matmul %197, %198, %cst_63 {dimension_numbers = #tpu.dot_dimension_numbers<[1], [1], [0], [0], [0, 0, 1, 0], [], []>} : vector<8x64xbf16>, vector<8x64xbf16>, vector<8x8xf32> -> vector<8x8xf32>
    %cst_64 = arith.constant -1.000000e+30 : f32
    %200 = vector.broadcast %cst_64 : f32 to vector<8x8xf32>
    %201 = arith.select %29, %199, %200 : vector<8x8xi1>, vector<8x8xf32>
    %cst_65 = arith.constant dense<0xFF800000> : vector<8xf32>
    %202 = vector.multi_reduction <maximumf>, %201, %cst_65 [1] : vector<8x8xf32> to vector<8xf32>
    %203 = vector.shape_cast %202 : vector<8xf32> to vector<8x1xf32>
    %204 = vector.broadcast %203 : vector<8x1xf32> to vector<8x8xf32>
    %205 = arith.subf %201, %204 : vector<8x8xf32>
    %206 = math.exp %205 : vector<8x8xf32>
    %cst_66 = arith.constant dense<0.000000e+00> : vector<8xf32>
    %207 = vector.multi_reduction <add>, %206, %cst_66 [1] : vector<8x8xf32> to vector<8xf32>
    %208 = vector.shape_cast %207 : vector<8xf32> to vector<8x1xf32>
    %209 = arith.truncf %206 : vector<8x8xf32> to vector<8x8xbf16>
    %210 = arith.truncf %196 : vector<8x64xf32> to vector<8x64xbf16>
    %cst_67 = arith.constant dense<0.000000e+00> : vector<8x64xf32>
    %211 = tpu.matmul %209, %210, %cst_67 {dimension_numbers = #tpu.dot_dimension_numbers<[1], [0], [0], [1], [0, 0, 1, 1], [], []>} : vector<8x8xbf16>, vector<8x64xbf16>, vector<8x64xf32> -> vector<8x64xf32>
    %212 = tpu.reciprocal %208 {approx = true} : vector<8x1xf32> -> vector<8x1xf32>
    %213 = vector.broadcast %212 : vector<8x1xf32> to vector<8x64xf32>
    %214 = arith.mulf %211, %213 : vector<8x64xf32>
    %215 = arith.truncf %214 : vector<8x64xf32> to vector<8x64xbf16>
    %c1 = arith.constant 1 : index
    %c0_68 = arith.constant 0 : index
    %c0_69 = arith.constant 0 : index
    %216 = vector.load %arg15[%c1, %c0_68, %c0_69] : memref<2x8x384xbf16, #tpu.memory_space<vmem>>, vector<1x8x64xbf16>
    %217 = vector.shape_cast %216 : vector<1x8x64xbf16> to vector<8x64xbf16>
    %218 = vector.shape_cast %215 : vector<8x64xbf16> to vector<1x8x64xbf16>
    tpu.vector_store %arg15[%c1, %c0_68, %c0_69], %218 {strides = array<i32>} : memref<2x8x384xbf16, #tpu.memory_space<vmem>>, vector<1x8x64xbf16>,
    %219 = vector.extract_strided_slice %26 {offsets = [8, 64], sizes = [8, 64], strides = [1, 1]} : vector<16x1152xf32> to vector<8x64xf32>
    %cst_70 = arith.constant 0.0510310382 : f32
    %220 = vector.broadcast %cst_70 : f32 to vector<8x64xf32>
    %221 = arith.mulf %219, %220 : vector<8x64xf32>
    %222 = vector.extract_strided_slice %26 {offsets = [8, 448], sizes = [8, 64], strides = [1, 1]} : vector<16x1152xf32> to vector<8x64xf32>
    %223 = vector.extract_strided_slice %26 {offsets = [8, 832], sizes = [8, 64], strides = [1, 1]} : vector<16x1152xf32> to vector<8x64xf32>
    %224 = arith.truncf %221 : vector<8x64xf32> to vector<8x64xbf16>
    %225 = arith.truncf %222 : vector<8x64xf32> to vector<8x64xbf16>
    %cst_71 = arith.constant dense<0.000000e+00> : vector<8x8xf32>
    %226 = tpu.matmul %224, %225, %cst_71 {dimension_numbers = #tpu.dot_dimension_numbers<[1], [1], [0], [0], [0, 0, 1, 0], [], []>} : vector<8x64xbf16>, vector<8x64xbf16>, vector<8x8xf32> -> vector<8x8xf32>
    %cst_72 = arith.constant -1.000000e+30 : f32
    %227 = vector.broadcast %cst_72 : f32 to vector<8x8xf32>
    %228 = arith.select %29, %226, %227 : vector<8x8xi1>, vector<8x8xf32>
    %cst_73 = arith.constant dense<0xFF800000> : vector<8xf32>
    %229 = vector.multi_reduction <maximumf>, %228, %cst_73 [1] : vector<8x8xf32> to vector<8xf32>
    %230 = vector.shape_cast %229 : vector<8xf32> to vector<8x1xf32>
    %231 = vector.broadcast %230 : vector<8x1xf32> to vector<8x8xf32>
    %232 = arith.subf %228, %231 : vector<8x8xf32>
    %233 = math.exp %232 : vector<8x8xf32>
    %cst_74 = arith.constant dense<0.000000e+00> : vector<8xf32>
    %234 = vector.multi_reduction <add>, %233, %cst_74 [1] : vector<8x8xf32> to vector<8xf32>
    %235 = vector.shape_cast %234 : vector<8xf32> to vector<8x1xf32>
    %236 = arith.truncf %233 : vector<8x8xf32> to vector<8x8xbf16>
    %237 = arith.truncf %223 : vector<8x64xf32> to vector<8x64xbf16>
    %cst_75 = arith.constant dense<0.000000e+00> : vector<8x64xf32>
    %238 = tpu.matmul %236, %237, %cst_75 {dimension_numbers = #tpu.dot_dimension_numbers<[1], [0], [0], [1], [0, 0, 1, 1], [], []>} : vector<8x8xbf16>, vector<8x64xbf16>, vector<8x64xf32> -> vector<8x64xf32>
    %239 = tpu.reciprocal %235 {approx = true} : vector<8x1xf32> -> vector<8x1xf32>
    %240 = vector.broadcast %239 : vector<8x1xf32> to vector<8x64xf32>
    %241 = arith.mulf %238, %240 : vector<8x64xf32>
    %242 = arith.truncf %241 : vector<8x64xf32> to vector<8x64xbf16>
    %c1_76 = arith.constant 1 : index
    %c0_77 = arith.constant 0 : index
    %c64_78 = arith.constant 64 : index
    %243 = vector.load %arg15[%c1_76, %c0_77, %c64_78] : memref<2x8x384xbf16, #tpu.memory_space<vmem>>, vector<1x8x64xbf16>
    %244 = vector.shape_cast %243 : vector<1x8x64xbf16> to vector<8x64xbf16>
    %245 = vector.shape_cast %242 : vector<8x64xbf16> to vector<1x8x64xbf16>
    tpu.vector_store %arg15[%c1_76, %c0_77, %c64_78], %245 {strides = array<i32>} : memref<2x8x384xbf16, #tpu.memory_space<vmem>>, vector<1x8x64xbf16>,
    %246 = vector.extract_strided_slice %26 {offsets = [8, 128], sizes = [8, 64], strides = [1, 1]} : vector<16x1152xf32> to vector<8x64xf32>
    %cst_79 = arith.constant 0.0510310382 : f32
    %247 = vector.broadcast %cst_79 : f32 to vector<8x64xf32>
    %248 = arith.mulf %246, %247 : vector<8x64xf32>
    %249 = vector.extract_strided_slice %26 {offsets = [8, 512], sizes = [8, 64], strides = [1, 1]} : vector<16x1152xf32> to vector<8x64xf32>
    %250 = vector.extract_strided_slice %26 {offsets = [8, 896], sizes = [8, 64], strides = [1, 1]} : vector<16x1152xf32> to vector<8x64xf32>
    %251 = arith.truncf %248 : vector<8x64xf32> to vector<8x64xbf16>
    %252 = arith.truncf %249 : vector<8x64xf32> to vector<8x64xbf16>
    %cst_80 = arith.constant dense<0.000000e+00> : vector<8x8xf32>
    %253 = tpu.matmul %251, %252, %cst_80 {dimension_numbers = #tpu.dot_dimension_numbers<[1], [1], [0], [0], [0, 0, 1, 0], [], []>} : vector<8x64xbf16>, vector<8x64xbf16>, vector<8x8xf32> -> vector<8x8xf32>
    %cst_81 = arith.constant -1.000000e+30 : f32
    %254 = vector.broadcast %cst_81 : f32 to vector<8x8xf32>
    %255 = arith.select %29, %253, %254 : vector<8x8xi1>, vector<8x8xf32>
    %cst_82 = arith.constant dense<0xFF800000> : vector<8xf32>
    %256 = vector.multi_reduction <maximumf>, %255, %cst_82 [1] : vector<8x8xf32> to vector<8xf32>
    %257 = vector.shape_cast %256 : vector<8xf32> to vector<8x1xf32>
    %258 = vector.broadcast %257 : vector<8x1xf32> to vector<8x8xf32>
    %259 = arith.subf %255, %258 : vector<8x8xf32>
    %260 = math.exp %259 : vector<8x8xf32>
    %cst_83 = arith.constant dense<0.000000e+00> : vector<8xf32>
    %261 = vector.multi_reduction <add>, %260, %cst_83 [1] : vector<8x8xf32> to vector<8xf32>
    %262 = vector.shape_cast %261 : vector<8xf32> to vector<8x1xf32>
    %263 = arith.truncf %260 : vector<8x8xf32> to vector<8x8xbf16>
    %264 = arith.truncf %250 : vector<8x64xf32> to vector<8x64xbf16>
    %cst_84 = arith.constant dense<0.000000e+00> : vector<8x64xf32>
    %265 = tpu.matmul %263, %264, %cst_84 {dimension_numbers = #tpu.dot_dimension_numbers<[1], [0], [0], [1], [0, 0, 1, 1], [], []>} : vector<8x8xbf16>, vector<8x64xbf16>, vector<8x64xf32> -> vector<8x64xf32>
    %266 = tpu.reciprocal %262 {approx = true} : vector<8x1xf32> -> vector<8x1xf32>
    %267 = vector.broadcast %266 : vector<8x1xf32> to vector<8x64xf32>
    %268 = arith.mulf %265, %267 : vector<8x64xf32>
    %269 = arith.truncf %268 : vector<8x64xf32> to vector<8x64xbf16>
    %c1_85 = arith.constant 1 : index
    %c0_86 = arith.constant 0 : index
    %c128_87 = arith.constant 128 : index
    %270 = vector.load %arg15[%c1_85, %c0_86, %c128_87] : memref<2x8x384xbf16, #tpu.memory_space<vmem>>, vector<1x8x64xbf16>
    %271 = vector.shape_cast %270 : vector<1x8x64xbf16> to vector<8x64xbf16>
    %272 = vector.shape_cast %269 : vector<8x64xbf16> to vector<1x8x64xbf16>
    tpu.vector_store %arg15[%c1_85, %c0_86, %c128_87], %272 {strides = array<i32>} : memref<2x8x384xbf16, #tpu.memory_space<vmem>>, vector<1x8x64xbf16>,
    %273 = vector.extract_strided_slice %26 {offsets = [8, 192], sizes = [8, 64], strides = [1, 1]} : vector<16x1152xf32> to vector<8x64xf32>
    %cst_88 = arith.constant 0.0510310382 : f32
    %274 = vector.broadcast %cst_88 : f32 to vector<8x64xf32>
    %275 = arith.mulf %273, %274 : vector<8x64xf32>
    %276 = vector.extract_strided_slice %26 {offsets = [8, 576], sizes = [8, 64], strides = [1, 1]} : vector<16x1152xf32> to vector<8x64xf32>
    %277 = vector.extract_strided_slice %26 {offsets = [8, 960], sizes = [8, 64], strides = [1, 1]} : vector<16x1152xf32> to vector<8x64xf32>
    %278 = arith.truncf %275 : vector<8x64xf32> to vector<8x64xbf16>
    %279 = arith.truncf %276 : vector<8x64xf32> to vector<8x64xbf16>
    %cst_89 = arith.constant dense<0.000000e+00> : vector<8x8xf32>
    %280 = tpu.matmul %278, %279, %cst_89 {dimension_numbers = #tpu.dot_dimension_numbers<[1], [1], [0], [0], [0, 0, 1, 0], [], []>} : vector<8x64xbf16>, vector<8x64xbf16>, vector<8x8xf32> -> vector<8x8xf32>
    %cst_90 = arith.constant -1.000000e+30 : f32
    %281 = vector.broadcast %cst_90 : f32 to vector<8x8xf32>
    %282 = arith.select %29, %280, %281 : vector<8x8xi1>, vector<8x8xf32>
    %cst_91 = arith.constant dense<0xFF800000> : vector<8xf32>
    %283 = vector.multi_reduction <maximumf>, %282, %cst_91 [1] : vector<8x8xf32> to vector<8xf32>
    %284 = vector.shape_cast %283 : vector<8xf32> to vector<8x1xf32>
    %285 = vector.broadcast %284 : vector<8x1xf32> to vector<8x8xf32>
    %286 = arith.subf %282, %285 : vector<8x8xf32>
    %287 = math.exp %286 : vector<8x8xf32>
    %cst_92 = arith.constant dense<0.000000e+00> : vector<8xf32>
    %288 = vector.multi_reduction <add>, %287, %cst_92 [1] : vector<8x8xf32> to vector<8xf32>
    %289 = vector.shape_cast %288 : vector<8xf32> to vector<8x1xf32>
    %290 = arith.truncf %287 : vector<8x8xf32> to vector<8x8xbf16>
    %291 = arith.truncf %277 : vector<8x64xf32> to vector<8x64xbf16>
    %cst_93 = arith.constant dense<0.000000e+00> : vector<8x64xf32>
    %292 = tpu.matmul %290, %291, %cst_93 {dimension_numbers = #tpu.dot_dimension_numbers<[1], [0], [0], [1], [0, 0, 1, 1], [], []>} : vector<8x8xbf16>, vector<8x64xbf16>, vector<8x64xf32> -> vector<8x64xf32>
    %293 = tpu.reciprocal %289 {approx = true} : vector<8x1xf32> -> vector<8x1xf32>
    %294 = vector.broadcast %293 : vector<8x1xf32> to vector<8x64xf32>
    %295 = arith.mulf %292, %294 : vector<8x64xf32>
    %296 = arith.truncf %295 : vector<8x64xf32> to vector<8x64xbf16>
    %c1_94 = arith.constant 1 : index
    %c0_95 = arith.constant 0 : index
    %c192_96 = arith.constant 192 : index
    %297 = vector.load %arg15[%c1_94, %c0_95, %c192_96] : memref<2x8x384xbf16, #tpu.memory_space<vmem>>, vector<1x8x64xbf16>
    %298 = vector.shape_cast %297 : vector<1x8x64xbf16> to vector<8x64xbf16>
    %299 = vector.shape_cast %296 : vector<8x64xbf16> to vector<1x8x64xbf16>
    tpu.vector_store %arg15[%c1_94, %c0_95, %c192_96], %299 {strides = array<i32>} : memref<2x8x384xbf16, #tpu.memory_space<vmem>>, vector<1x8x64xbf16>,
    %300 = vector.extract_strided_slice %26 {offsets = [8, 256], sizes = [8, 64], strides = [1, 1]} : vector<16x1152xf32> to vector<8x64xf32>
    %cst_97 = arith.constant 0.0510310382 : f32
    %301 = vector.broadcast %cst_97 : f32 to vector<8x64xf32>
    %302 = arith.mulf %300, %301 : vector<8x64xf32>
    %303 = vector.extract_strided_slice %26 {offsets = [8, 640], sizes = [8, 64], strides = [1, 1]} : vector<16x1152xf32> to vector<8x64xf32>
    %304 = vector.extract_strided_slice %26 {offsets = [8, 1024], sizes = [8, 64], strides = [1, 1]} : vector<16x1152xf32> to vector<8x64xf32>
    %305 = arith.truncf %302 : vector<8x64xf32> to vector<8x64xbf16>
    %306 = arith.truncf %303 : vector<8x64xf32> to vector<8x64xbf16>
    %cst_98 = arith.constant dense<0.000000e+00> : vector<8x8xf32>
    %307 = tpu.matmul %305, %306, %cst_98 {dimension_numbers = #tpu.dot_dimension_numbers<[1], [1], [0], [0], [0, 0, 1, 0], [], []>} : vector<8x64xbf16>, vector<8x64xbf16>, vector<8x8xf32> -> vector<8x8xf32>
    %cst_99 = arith.constant -1.000000e+30 : f32
    %308 = vector.broadcast %cst_99 : f32 to vector<8x8xf32>
    %309 = arith.select %29, %307, %308 : vector<8x8xi1>, vector<8x8xf32>
    %cst_100 = arith.constant dense<0xFF800000> : vector<8xf32>
    %310 = vector.multi_reduction <maximumf>, %309, %cst_100 [1] : vector<8x8xf32> to vector<8xf32>
    %311 = vector.shape_cast %310 : vector<8xf32> to vector<8x1xf32>
    %312 = vector.broadcast %311 : vector<8x1xf32> to vector<8x8xf32>
    %313 = arith.subf %309, %312 : vector<8x8xf32>
    %314 = math.exp %313 : vector<8x8xf32>
    %cst_101 = arith.constant dense<0.000000e+00> : vector<8xf32>
    %315 = vector.multi_reduction <add>, %314, %cst_101 [1] : vector<8x8xf32> to vector<8xf32>
    %316 = vector.shape_cast %315 : vector<8xf32> to vector<8x1xf32>
    %317 = arith.truncf %314 : vector<8x8xf32> to vector<8x8xbf16>
    %318 = arith.truncf %304 : vector<8x64xf32> to vector<8x64xbf16>
    %cst_102 = arith.constant dense<0.000000e+00> : vector<8x64xf32>
    %319 = tpu.matmul %317, %318, %cst_102 {dimension_numbers = #tpu.dot_dimension_numbers<[1], [0], [0], [1], [0, 0, 1, 1], [], []>} : vector<8x8xbf16>, vector<8x64xbf16>, vector<8x64xf32> -> vector<8x64xf32>
    %320 = tpu.reciprocal %316 {approx = true} : vector<8x1xf32> -> vector<8x1xf32>
    %321 = vector.broadcast %320 : vector<8x1xf32> to vector<8x64xf32>
    %322 = arith.mulf %319, %321 : vector<8x64xf32>
    %323 = arith.truncf %322 : vector<8x64xf32> to vector<8x64xbf16>
    %c1_103 = arith.constant 1 : index
    %c0_104 = arith.constant 0 : index
    %c256_105 = arith.constant 256 : index
    %324 = vector.load %arg15[%c1_103, %c0_104, %c256_105] : memref<2x8x384xbf16, #tpu.memory_space<vmem>>, vector<1x8x64xbf16>
    %325 = vector.shape_cast %324 : vector<1x8x64xbf16> to vector<8x64xbf16>
    %326 = vector.shape_cast %323 : vector<8x64xbf16> to vector<1x8x64xbf16>
    tpu.vector_store %arg15[%c1_103, %c0_104, %c256_105], %326 {strides = array<i32>} : memref<2x8x384xbf16, #tpu.memory_space<vmem>>, vector<1x8x64xbf16>,
    %327 = vector.extract_strided_slice %26 {offsets = [8, 320], sizes = [8, 64], strides = [1, 1]} : vector<16x1152xf32> to vector<8x64xf32>
    %cst_106 = arith.constant 0.0510310382 : f32
    %328 = vector.broadcast %cst_106 : f32 to vector<8x64xf32>
    %329 = arith.mulf %327, %328 : vector<8x64xf32>
    %330 = vector.extract_strided_slice %26 {offsets = [8, 704], sizes = [8, 64], strides = [1, 1]} : vector<16x1152xf32> to vector<8x64xf32>
    %331 = vector.extract_strided_slice %26 {offsets = [8, 1088], sizes = [8, 64], strides = [1, 1]} : vector<16x1152xf32> to vector<8x64xf32>
    %332 = arith.truncf %329 : vector<8x64xf32> to vector<8x64xbf16>
    %333 = arith.truncf %330 : vector<8x64xf32> to vector<8x64xbf16>
    %cst_107 = arith.constant dense<0.000000e+00> : vector<8x8xf32>
    %334 = tpu.matmul %332, %333, %cst_107 {dimension_numbers = #tpu.dot_dimension_numbers<[1], [1], [0], [0], [0, 0, 1, 0], [], []>} : vector<8x64xbf16>, vector<8x64xbf16>, vector<8x8xf32> -> vector<8x8xf32>
    %cst_108 = arith.constant -1.000000e+30 : f32
    %335 = vector.broadcast %cst_108 : f32 to vector<8x8xf32>
    %336 = arith.select %29, %334, %335 : vector<8x8xi1>, vector<8x8xf32>
    %cst_109 = arith.constant dense<0xFF800000> : vector<8xf32>
    %337 = vector.multi_reduction <maximumf>, %336, %cst_109 [1] : vector<8x8xf32> to vector<8xf32>
    %338 = vector.shape_cast %337 : vector<8xf32> to vector<8x1xf32>
    %339 = vector.broadcast %338 : vector<8x1xf32> to vector<8x8xf32>
    %340 = arith.subf %336, %339 : vector<8x8xf32>
    %341 = math.exp %340 : vector<8x8xf32>
    %cst_110 = arith.constant dense<0.000000e+00> : vector<8xf32>
    %342 = vector.multi_reduction <add>, %341, %cst_110 [1] : vector<8x8xf32> to vector<8xf32>
    %343 = vector.shape_cast %342 : vector<8xf32> to vector<8x1xf32>
    %344 = arith.truncf %341 : vector<8x8xf32> to vector<8x8xbf16>
    %345 = arith.truncf %331 : vector<8x64xf32> to vector<8x64xbf16>
    %cst_111 = arith.constant dense<0.000000e+00> : vector<8x64xf32>
    %346 = tpu.matmul %344, %345, %cst_111 {dimension_numbers = #tpu.dot_dimension_numbers<[1], [0], [0], [1], [0, 0, 1, 1], [], []>} : vector<8x8xbf16>, vector<8x64xbf16>, vector<8x64xf32> -> vector<8x64xf32>
    %347 = tpu.reciprocal %343 {approx = true} : vector<8x1xf32> -> vector<8x1xf32>
    %348 = vector.broadcast %347 : vector<8x1xf32> to vector<8x64xf32>
    %349 = arith.mulf %346, %348 : vector<8x64xf32>
    %350 = arith.truncf %349 : vector<8x64xf32> to vector<8x64xbf16>
    %c1_112 = arith.constant 1 : index
    %c0_113 = arith.constant 0 : index
    %c320_114 = arith.constant 320 : index
    %351 = vector.load %arg15[%c1_112, %c0_113, %c320_114] : memref<2x8x384xbf16, #tpu.memory_space<vmem>>, vector<1x8x64xbf16>
    %352 = vector.shape_cast %351 : vector<1x8x64xbf16> to vector<8x64xbf16>
    %353 = vector.shape_cast %350 : vector<8x64xbf16> to vector<1x8x64xbf16>
    tpu.vector_store %arg15[%c1_112, %c0_113, %c320_114], %353 {strides = array<i32>} : memref<2x8x384xbf16, #tpu.memory_space<vmem>>, vector<1x8x64xbf16>,
    %c0_115 = arith.constant 0 : index
    %c0_116 = arith.constant 0 : index
    %c0_117 = arith.constant 0 : index
    %354 = vector.load %arg15[%c0_115, %c0_116, %c0_117] : memref<2x8x384xbf16, #tpu.memory_space<vmem>>, vector<2x8x384xbf16>
    %355 = vector.shape_cast %354 : vector<2x8x384xbf16> to vector<16x384xbf16>
    %c0_118 = arith.constant 0 : index
    %c0_119 = arith.constant 0 : index
    %356 = vector.load %arg6[%c0_118, %c0_119] : memref<384x384xbf16, #tpu.memory_space<vmem>>, vector<384x384xbf16>
    %cst_120 = arith.constant dense<0.000000e+00> : vector<16x384xf32>
    %357 = tpu.matmul %355, %356, %cst_120 {dimension_numbers = #tpu.dot_dimension_numbers<[1], [0], [0], [1], [0, 0, 1, 1], [], []>} : vector<16x384xbf16>, vector<384x384xbf16>, vector<16x384xf32> -> vector<16x384xf32>
    %c0_121 = arith.constant 0 : index
    %c0_122 = arith.constant 0 : index
    %358 = vector.load %arg7[%c0_121, %c0_122] : memref<1x384xf32, #tpu.memory_space<vmem>>, vector<1x384xf32>
    %359 = vector.broadcast %358 : vector<1x384xf32> to vector<16x384xf32>
    %360 = arith.addf %357, %359 : vector<16x384xf32>
    %361 = arith.addf %1, %360 : vector<16x384xf32>
    %c0_123 = arith.constant 0 : index
    %c0_124 = arith.constant 0 : index
    %362 = vector.load %arg8[%c0_123, %c0_124] : memref<1x384xf32, #tpu.memory_space<vmem>>, vector<1x384xf32>
    %c0_125 = arith.constant 0 : index
    %c0_126 = arith.constant 0 : index
    %363 = vector.load %arg9[%c0_125, %c0_126] : memref<1x384xf32, #tpu.memory_space<vmem>>, vector<1x384xf32>
    %cst_127 = arith.constant dense<0.000000e+00> : vector<16xf32>
    %364 = vector.multi_reduction <add>, %361, %cst_127 [1] : vector<16x384xf32> to vector<16xf32>
    %365 = vector.shape_cast %364 : vector<16xf32> to vector<16x1xf32>
    %cst_128 = arith.constant 3.840000e+02 : f32
    %366 = vector.broadcast %cst_128 : f32 to vector<16x1xf32>
    %367 = arith.divf %365, %366 : vector<16x1xf32>
    %368 = vector.broadcast %367 : vector<16x1xf32> to vector<16x384xf32>
    %369 = arith.subf %361, %368 : vector<16x384xf32>
    %370 = arith.mulf %369, %369 : vector<16x384xf32>
    %cst_129 = arith.constant dense<0.000000e+00> : vector<16xf32>
    %371 = vector.multi_reduction <add>, %370, %cst_129 [1] : vector<16x384xf32> to vector<16xf32>
    %372 = vector.shape_cast %371 : vector<16xf32> to vector<16x1xf32>
    %cst_130 = arith.constant 3.840000e+02 : f32
    %373 = vector.broadcast %cst_130 : f32 to vector<16x1xf32>
    %374 = arith.divf %372, %373 : vector<16x1xf32>
    %cst_131 = arith.constant 9.99999974E-6 : f32
    %375 = vector.broadcast %cst_131 : f32 to vector<16x1xf32>
    %376 = arith.addf %374, %375 : vector<16x1xf32>
    %377 = math.rsqrt %376 : vector<16x1xf32>
    %378 = vector.broadcast %377 : vector<16x1xf32> to vector<16x384xf32>
    %379 = arith.mulf %369, %378 : vector<16x384xf32>
    %380 = vector.broadcast %362 : vector<1x384xf32> to vector<16x384xf32>
    %381 = arith.mulf %379, %380 : vector<16x384xf32>
    %382 = vector.broadcast %363 : vector<1x384xf32> to vector<16x384xf32>
    %383 = arith.addf %381, %382 : vector<16x384xf32>
    %384 = arith.truncf %383 : vector<16x384xf32> to vector<16x384xbf16>
    %c0_132 = arith.constant 0 : index
    %c0_133 = arith.constant 0 : index
    %385 = vector.load %arg10[%c0_132, %c0_133] : memref<384x1536xbf16, #tpu.memory_space<vmem>>, vector<384x1536xbf16>
    %cst_134 = arith.constant dense<0.000000e+00> : vector<16x1536xf32>
    %386 = tpu.matmul %384, %385, %cst_134 {dimension_numbers = #tpu.dot_dimension_numbers<[1], [0], [0], [1], [0, 0, 1, 1], [], []>} : vector<16x384xbf16>, vector<384x1536xbf16>, vector<16x1536xf32> -> vector<16x1536xf32>
    %c0_135 = arith.constant 0 : index
    %c0_136 = arith.constant 0 : index
    %387 = vector.load %arg11[%c0_135, %c0_136] : memref<1x1536xf32, #tpu.memory_space<vmem>>, vector<1x1536xf32>
    %388 = vector.broadcast %387 : vector<1x1536xf32> to vector<16x1536xf32>
    %389 = arith.addf %386, %388 : vector<16x1536xf32>
    %cst_137 = arith.constant 0.000000e+00 : f32
    %390 = vector.broadcast %cst_137 : f32 to vector<16x1536xf32>
    %391 = arith.maximumf %389, %390 : vector<16x1536xf32>
    %392 = arith.truncf %391 : vector<16x1536xf32> to vector<16x1536xbf16>
    %c0_138 = arith.constant 0 : index
    %c0_139 = arith.constant 0 : index
    %393 = vector.load %arg12[%c0_138, %c0_139] : memref<1536x384xbf16, #tpu.memory_space<vmem>>, vector<1536x384xbf16>
    %cst_140 = arith.constant dense<0.000000e+00> : vector<16x384xf32>
    %394 = tpu.matmul %392, %393, %cst_140 {dimension_numbers = #tpu.dot_dimension_numbers<[1], [0], [0], [1], [0, 0, 1, 1], [], []>} : vector<16x1536xbf16>, vector<1536x384xbf16>, vector<16x384xf32> -> vector<16x384xf32>
    %c0_141 = arith.constant 0 : index
    %c0_142 = arith.constant 0 : index
    %395 = vector.load %arg13[%c0_141, %c0_142] : memref<1x384xf32, #tpu.memory_space<vmem>>, vector<1x384xf32>
    %396 = vector.broadcast %395 : vector<1x384xf32> to vector<16x384xf32>
    %397 = arith.addf %394, %396 : vector<16x384xf32>
    %398 = arith.addf %361, %397 : vector<16x384xf32>
    %399 = vector.shape_cast %398 : vector<16x384xf32> to vector<2x8x384xf32>
    %c0_143 = arith.constant 0 : index
    %c0_144 = arith.constant 0 : index
    %c0_145 = arith.constant 0 : index
    %400 = vector.load %arg14[%c0_143, %c0_144, %c0_145] : memref<2x8x384xf32, #tpu.memory_space<vmem>>, vector<2x8x384xf32>
    tpu.vector_store %arg14[%c0_143, %c0_144, %c0_145], %399 {strides = array<i32>} : memref<2x8x384xf32, #tpu.memory_space<vmem>>, vector<2x8x384xf32>,
    return
  }
  func.func @transform_0(%arg0: i32, %arg1: memref<1xi32, #tpu.memory_space<smem>>) -> (i32, i32, i32) {
    %c0_i32 = arith.constant 0 : i32
    %c0_i32_0 = arith.constant 0 : i32
    %c0_i32_1 = arith.constant 0 : i32
    return %arg0, %c0_i32, %c0_i32_0 : i32, i32, i32
  }
  func.func @transform_1(%arg0: i32, %arg1: memref<1xi32, #tpu.memory_space<smem>>) -> (i32, i32) {
    %c0_i32 = arith.constant 0 : i32
    %c0_i32_0 = arith.constant 0 : i32
    %c0_i32_1 = arith.constant 0 : i32
    return %c0_i32, %c0_i32_0 : i32, i32
  }
  func.func @transform_2(%arg0: i32, %arg1: memref<1xi32, #tpu.memory_space<smem>>) -> (i32, i32) {
    %c0_i32 = arith.constant 0 : i32
    %c0_i32_0 = arith.constant 0 : i32
    %c0_i32_1 = arith.constant 0 : i32
    return %c0_i32, %c0_i32_0 : i32, i32
  }
  func.func @transform_3(%arg0: i32, %arg1: memref<1xi32, #tpu.memory_space<smem>>) -> (i32, i32) {
    %c0_i32 = arith.constant 0 : i32
    %c0_i32_0 = arith.constant 0 : i32
    %c0_i32_1 = arith.constant 0 : i32
    return %c0_i32, %c0_i32_0 : i32, i32
  }
  func.func @transform_4(%arg0: i32, %arg1: memref<1xi32, #tpu.memory_space<smem>>) -> (i32, i32) {
    %c0_i32 = arith.constant 0 : i32
    %c0_i32_0 = arith.constant 0 : i32
    %c0_i32_1 = arith.constant 0 : i32
    return %c0_i32, %c0_i32_0 : i32, i32
  }
  func.func @transform_5(%arg0: i32, %arg1: memref<1xi32, #tpu.memory_space<smem>>) -> (i32, i32) {
    %c0_i32 = arith.constant 0 : i32
    %c0_i32_0 = arith.constant 0 : i32
    %c0_i32_1 = arith.constant 0 : i32
    return %c0_i32, %c0_i32_0 : i32, i32
  }
  func.func @transform_6(%arg0: i32, %arg1: memref<1xi32, #tpu.memory_space<smem>>) -> (i32, i32) {
    %c0_i32 = arith.constant 0 : i32
    %c0_i32_0 = arith.constant 0 : i32
    %c0_i32_1 = arith.constant 0 : i32
    return %c0_i32, %c0_i32_0 : i32, i32
  }
  func.func @transform_7(%arg0: i32, %arg1: memref<1xi32, #tpu.memory_space<smem>>) -> (i32, i32) {
    %c0_i32 = arith.constant 0 : i32
    %c0_i32_0 = arith.constant 0 : i32
    %c0_i32_1 = arith.constant 0 : i32
    return %c0_i32, %c0_i32_0 : i32, i32
  }
  func.func @transform_8(%arg0: i32, %arg1: memref<1xi32, #tpu.memory_space<smem>>) -> (i32, i32) {
    %c0_i32 = arith.constant 0 : i32
    %c0_i32_0 = arith.constant 0 : i32
    %c0_i32_1 = arith.constant 0 : i32
    return %c0_i32, %c0_i32_0 : i32, i32
  }
  func.func @transform_9(%arg0: i32, %arg1: memref<1xi32, #tpu.memory_space<smem>>) -> (i32, i32) {
    %c0_i32 = arith.constant 0 : i32
    %c0_i32_0 = arith.constant 0 : i32
    %c0_i32_1 = arith.constant 0 : i32
    return %c0_i32, %c0_i32_0 : i32, i32
  }
  func.func @transform_10(%arg0: i32, %arg1: memref<1xi32, #tpu.memory_space<smem>>) -> (i32, i32) {
    %c0_i32 = arith.constant 0 : i32
    %c0_i32_0 = arith.constant 0 : i32
    %c0_i32_1 = arith.constant 0 : i32
    return %c0_i32, %c0_i32_0 : i32, i32
  }
  func.func @transform_11(%arg0: i32, %arg1: memref<1xi32, #tpu.memory_space<smem>>) -> (i32, i32) {
    %c0_i32 = arith.constant 0 : i32
    %c0_i32_0 = arith.constant 0 : i32
    %c0_i32_1 = arith.constant 0 : i32
    return %c0_i32, %c0_i32_0 : i32, i32
  }
  func.func @transform_12(%arg0: i32, %arg1: memref<1xi32, #tpu.memory_space<smem>>) -> (i32, i32, i32) {
    %c0_i32 = arith.constant 0 : i32
    %c0_i32_0 = arith.constant 0 : i32
    %c0_i32_1 = arith.constant 0 : i32
    return %arg0, %c0_i32, %c0_i32_0 : i32, i32, i32
  }
}

</mosaic_0001>

<llo_original>
// kernel: tpu_custom_call.1
$region0: #{tpu_custom_call.1}
  #allocation0 [shape = 'u32[]', space=smem, size = 0x4, offset = 0x4, fixed_abs, tag = 'smem constant byte address 0x4 - core index']
  #allocation1 [shape = 'u32[144,128]{1,0:T(1,128)}', space=vmem, size = 0x12000, scoped, tag = 'internal scratch']
  #allocation2 [shape = 'bf16[2,8,384]{2,1,0:T(8,128)(2,1)}', space=vmem, size = 0x3000, scoped, tag = 'scratch operand']
  #allocation3 [shape = 's32[1]{0}', space=sflag, size = 0x4, scoped, tag = 'scoped memory for tpu_custom_call.1']
  #allocation4 [shape = 's32[1]{0:T(128)S(6)}', space=smem, size = 0x200, scoped, tag = 'prefetched SMEM operand 0']
  %s0 = inlined_call_operand.<no memory space> [shape: s32[1], index: 0, kind: input, shape index: {}]
  %s1 = inlined_call_operand.hbm [shape: f32[2,8,384], index: 1, kind: input, shape index: {}]
  %s2 = inlined_call_operand.hbm [shape: f32[1,384], index: 2, kind: input, shape index: {}]
  %s3 = inlined_call_operand.hbm [shape: f32[1,384], index: 3, kind: input, shape index: {}]
  %s4 = inlined_call_operand.hbm [shape: bf16[384,1152], index: 4, kind: input, shape index: {}]
  %s5 = inlined_call_operand.hbm [shape: bf16[384,384], index: 5, kind: input, shape index: {}]
  %s6 = inlined_call_operand.hbm [shape: f32[1,384], index: 6, kind: input, shape index: {}]
  %s7 = inlined_call_operand.hbm [shape: f32[1,384], index: 7, kind: input, shape index: {}]
  %s8 = inlined_call_operand.hbm [shape: f32[1,384], index: 8, kind: input, shape index: {}]
  %s9 = inlined_call_operand.hbm [shape: bf16[384,1536], index: 9, kind: input, shape index: {}]
  %s10 = inlined_call_operand.hbm [shape: f32[1,1536], index: 10, kind: input, shape index: {}]
  %s11 = inlined_call_operand.hbm [shape: bf16[1536,384], index: 11, kind: input, shape index: {}]
  %s12 = inlined_call_operand.hbm [shape: f32[1,384], index: 12, kind: input, shape index: {}]
  %s13 = inlined_call_operand.hbm [shape: f32[2,8,384], index: 13, kind: output, shape index: {}]
  %s14 = sld [smem:[#allocation0]]
  $region106: #{tpu_custom_call.1} parent=0
    _
  %s16 = ssub.s32 1, %s14
  %s17 = scalar_select 0, %s16, %s14
  %18 = sst [smem:[#allocation4]] %s0
  $region1: #{tpu_custom_call.1} parent=0
    #allocation5 [shape = 'u8[24576]{0}', space=vmem, size = 0x6000, scoped, tag = 'input window, operand 1, single buffered']
    #allocation6 [shape = 's32[1]{0}', space=sflag, size = 0x4, scoped, tag = 'scoped memory for tpu_custom_call.1']
    #allocation7 [shape = 's32[1]{0}', space=sflag, size = 0x4, scoped, tag = 'scoped memory for tpu_custom_call.1']
    #allocation8 [shape = 'u8[1536]{0}', space=vmem, size = 0x800, scoped, tag = 'input window, operand 2, single buffered']
    #allocation9 [shape = 's32[1]{0}', space=sflag, size = 0x4, scoped, tag = 'scoped memory for tpu_custom_call.1']
    #allocation10 [shape = 'u8[1536]{0}', space=vmem, size = 0x800, scoped, tag = 'input window, operand 3, single buffered']
    #allocation11 [shape = 'u8[884736]{0}', space=vmem, size = 0xd8000, scoped, tag = 'input window, operand 4, single buffered']
    #allocation12 [shape = 's32[1]{0}', space=sflag, size = 0x4, scoped, tag = 'scoped memory for tpu_custom_call.1']
    #allocation13 [shape = 'u8[294912]{0}', space=vmem, size = 0x48000, scoped, tag = 'input window, operand 5, single buffered']
    #allocation14 [shape = 'u8[1536]{0}', space=vmem, size = 0x800, scoped, tag = 'input window, operand 6, single buffered']
    #allocation15 [shape = 's32[1]{0}', space=sflag, size = 0x4, scoped, tag = 'scoped memory for tpu_custom_call.1']
    #allocation16 [shape = 'u8[1536]{0}', space=vmem, size = 0x800, scoped, tag = 'input window, operand 7, single buffered']
    #allocation17 [shape = 'u8[1536]{0}', space=vmem, size = 0x800, scoped, tag = 'input window, operand 8, single buffered']
    #allocation18 [shape = 's32[1]{0}', space=sflag, size = 0x4, scoped, tag = 'scoped memory for tpu_custom_call.1']
    #allocation19 [shape = 'u8[1179648]{0}', space=vmem, size = 0x120000, scoped, tag = 'input window, operand 9, single buffered']
    #allocation20 [shape = 'u8[6144]{0}', space=vmem, size = 0x1800, scoped, tag = 'input window, operand 10, single buffered']
    #allocation21 [shape = 's32[1]{0}', space=sflag, size = 0x4, scoped, tag = 'scoped memory for tpu_custom_call.1']
    #allocation22 [shape = 'u8[1179648]{0}', space=vmem, size = 0x120000, scoped, tag = 'input window, operand 11, single buffered']
    #allocation23 [shape = 'u8[1536]{0}', space=vmem, size = 0x800, scoped, tag = 'input window, operand 12, single buffered']
    #allocation24 [shape = 's32[1]{0}', space=sflag, size = 0x4, scoped, tag = 'scoped memory for tpu_custom_call.1']
    #allocation25 [shape = 'u8[24576]{0}', space=vmem, size = 0x6000, scoped, tag = 'output window, operand 0, single buffered']
    %19 = vsyncpa [#allocation6], 0
    %20 = vsyncpa [#allocation9], 0
    %21 = vsyncpa [#allocation12], 0
    %22 = vsyncpa [#allocation15], 0
    %23 = vsyncpa [#allocation18], 0
    %24 = vsyncpa [#allocation21], 0
    %25 = vsyncpa [#allocation24], 0
    %26 = vsyncpa [#allocation7], 0
    // Predicated region
    $region2: #{tpu_custom_call.1} parent=1 // pred_check
      _
    $region3: #{tpu_custom_call.1} parent=1 // pred_check_branch
      %28 = sbr.rel (0) target = $region5
    $region4: #{tpu_custom_call.1} parent=1 // pred_region
      %s30 = ssub.s32 768, 768
      %31 = vsyncadd [#allocation6], %s30
      %s32 = sshll.u32 [#allocation5], 4
      %s33 = int_to_ptr.vmem [resolvable:$true] %s32
      %38 = dma.hbm_to_vmem [thread:$0]  %s1, 768, %s33, [#allocation6], 384, 384, 24
    $region5: #{tpu_custom_call.1} parent=1 // pred_fallthru
      _
    // Predicated region
    $region6: #{tpu_custom_call.1} parent=1 // pred_check
      _
    $region7: #{tpu_custom_call.1} parent=1 // pred_check_branch
      %40 = sbr.rel (0) target = $region9
    $region8: #{tpu_custom_call.1} parent=1 // pred_region
      %s42 = ssub.s32 48, 48
      %43 = vsyncadd [#allocation9], %s42
      %s45 = sshll.u32 [#allocation8], 4
      %s46 = int_to_ptr.vmem [resolvable:$true] %s45
      %48 = dma.hbm_to_vmem [thread:$0]  %s2, 48, %s46, [#allocation9]
    $region9: #{tpu_custom_call.1} parent=1 // pred_fallthru
      _
    // Predicated region
    $region10: #{tpu_custom_call.1} parent=1 // pred_check
      _
    $region11: #{tpu_custom_call.1} parent=1 // pred_check_branch
      %50 = sbr.rel (0) target = $region13
    $region12: #{tpu_custom_call.1} parent=1 // pred_region
      %s52 = ssub.s32 48, 48
      %53 = vsyncadd [#allocation9], %s52
      %s55 = sshll.u32 [#allocation10], 4
      %s56 = int_to_ptr.vmem [resolvable:$true] %s55
      %58 = dma.hbm_to_vmem [thread:$0]  %s3, 48, %s56, [#allocation9]
    $region13: #{tpu_custom_call.1} parent=1 // pred_fallthru
      _
    // Predicated region
    $region14: #{tpu_custom_call.1} parent=1 // pred_check
      _
    $region15: #{tpu_custom_call.1} parent=1 // pred_check_branch
      %60 = sbr.rel (0) target = $region17
    $region16: #{tpu_custom_call.1} parent=1 // pred_region
      %s62 = ssub.s32 27648, 27648
      %63 = vsyncadd [#allocation12], %s62
      %s64 = sshll.u32 [#allocation11], 4
      %s65 = int_to_ptr.vmem [resolvable:$true] %s64
      %70 = dma.hbm_to_vmem [thread:$0]  %s4, 27648, %s65, [#allocation12], 576, 576, 36
    $region17: #{tpu_custom_call.1} parent=1 // pred_fallthru
      _
    // Predicated region
    $region18: #{tpu_custom_call.1} parent=1 // pred_check
      _
    $region19: #{tpu_custom_call.1} parent=1 // pred_check_branch
      %72 = sbr.rel (0) target = $region21
    $region20: #{tpu_custom_call.1} parent=1 // pred_region
      %s74 = ssub.s32 9216, 9216
      %75 = vsyncadd [#allocation12], %s74
      %s76 = sshll.u32 [#allocation13], 4
      %s77 = int_to_ptr.vmem [resolvable:$true] %s76
      %82 = dma.hbm_to_vmem [thread:$0]  %s5, 9216, %s77, [#allocation12], 192, 192, 12
    $region21: #{tpu_custom_call.1} parent=1 // pred_fallthru
      _
    // Predicated region
    $region22: #{tpu_custom_call.1} parent=1 // pred_check
      _
    $region23: #{tpu_custom_call.1} parent=1 // pred_check_branch
      %84 = sbr.rel (0) target = $region25
    $region24: #{tpu_custom_call.1} parent=1 // pred_region
      %s86 = ssub.s32 48, 48
      %87 = vsyncadd [#allocation15], %s86
      %s89 = sshll.u32 [#allocation14], 4
      %s90 = int_to_ptr.vmem [resolvable:$true] %s89
      %92 = dma.hbm_to_vmem [thread:$0]  %s6, 48, %s90, [#allocation15]
    $region25: #{tpu_custom_call.1} parent=1 // pred_fallthru
      _
    // Predicated region
    $region26: #{tpu_custom_call.1} parent=1 // pred_check
      _
    $region27: #{tpu_custom_call.1} parent=1 // pred_check_branch
      %94 = sbr.rel (0) target = $region29
    $region28: #{tpu_custom_call.1} parent=1 // pred_region
      %s96 = ssub.s32 48, 48
      %97 = vsyncadd [#allocation15], %s96
      %s99 = sshll.u32 [#allocation16], 4
      %s100 = int_to_ptr.vmem [resolvable:$true] %s99
      %102 = dma.hbm_to_vmem [thread:$0]  %s7, 48, %s100, [#allocation15]
    $region29: #{tpu_custom_call.1} parent=1 // pred_fallthru
      _
    // Predicated region
    $region30: #{tpu_custom_call.1} parent=1 // pred_check
      _
    $region31: #{tpu_custom_call.1} parent=1 // pred_check_branch
      %104 = sbr.rel (0) target = $region33
    $region32: #{tpu_custom_call.1} parent=1 // pred_region
      %s106 = ssub.s32 48, 48
      %107 = vsyncadd [#allocation18], %s106
      %s109 = sshll.u32 [#allocation17], 4
      %s110 = int_to_ptr.vmem [resolvable:$true] %s109
      %112 = dma.hbm_to_vmem [thread:$0]  %s8, 48, %s110, [#allocation18]
    $region33: #{tpu_custom_call.1} parent=1 // pred_fallthru
      _
    // Predicated region
    $region34: #{tpu_custom_call.1} parent=1 // pred_check
      _
    $region35: #{tpu_custom_call.1} parent=1 // pred_check_branch
      %114 = sbr.rel (0) target = $region37
    $region36: #{tpu_custom_call.1} parent=1 // pred_region
      %s116 = ssub.s32 36864, 36864
      %117 = vsyncadd [#allocation18], %s116
      %s118 = sshll.u32 [#allocation19], 4
      %s119 = int_to_ptr.vmem [resolvable:$true] %s118
      %124 = dma.hbm_to_vmem [thread:$0]  %s9, 36864, %s119, [#allocation18], 768, 768, 48
    $region37: #{tpu_custom_call.1} parent=1 // pred_fallthru
      _
    // Predicated region
    $region38: #{tpu_custom_call.1} parent=1 // pred_check
      _
    $region39: #{tpu_custom_call.1} parent=1 // pred_check_branch
      %126 = sbr.rel (0) target = $region41
    $region40: #{tpu_custom_call.1} parent=1 // pred_region
      %s128 = ssub.s32 192, 192
      %129 = vsyncadd [#allocation21], %s128
      %s131 = sshll.u32 [#allocation20], 4
      %s132 = int_to_ptr.vmem [resolvable:$true] %s131
      %134 = dma.hbm_to_vmem [thread:$0]  %s10, 192, %s132, [#allocation21]
    $region41: #{tpu_custom_call.1} parent=1 // pred_fallthru
      _
    // Predicated region
    $region42: #{tpu_custom_call.1} parent=1 // pred_check
      _
    $region43: #{tpu_custom_call.1} parent=1 // pred_check_branch
      %136 = sbr.rel (0) target = $region45
    $region44: #{tpu_custom_call.1} parent=1 // pred_region
      %s138 = ssub.s32 36864, 36864
      %139 = vsyncadd [#allocation21], %s138
      %s140 = sshll.u32 [#allocation22], 4
      %s141 = int_to_ptr.vmem [resolvable:$true] %s140
      %146 = dma.hbm_to_vmem [thread:$0]  %s11, 36864, %s141, [#allocation21], 192, 192, 12
    $region45: #{tpu_custom_call.1} parent=1 // pred_fallthru
      _
    // Predicated region
    $region46: #{tpu_custom_call.1} parent=1 // pred_check
      _
    $region47: #{tpu_custom_call.1} parent=1 // pred_check_branch
      %148 = sbr.rel (0) target = $region49
    $region48: #{tpu_custom_call.1} parent=1 // pred_region
      %s150 = ssub.s32 48, 48
      %151 = vsyncadd [#allocation24], %s150
      %s153 = sshll.u32 [#allocation23], 4
      %s154 = int_to_ptr.vmem [resolvable:$true] %s153
      %156 = dma.hbm_to_vmem [thread:$0]  %s12, 48, %s154, [#allocation24]
    $region49: #{tpu_custom_call.1} parent=1 // pred_fallthru
      _
    // Predicated region
    $region50: #{tpu_custom_call.1} parent=1 // pred_check
      _
    $region51: #{tpu_custom_call.1} parent=1 // pred_check_branch
      %158 = sbr.rel (0) target = $region53
    $region52: #{tpu_custom_call.1} parent=1 // pred_region
      %159 = dma.done [#allocation6], 768
    $region53: #{tpu_custom_call.1} parent=1 // pred_fallthru
      _
    // Predicated region
    $region54: #{tpu_custom_call.1} parent=1 // pred_check
      _
    $region55: #{tpu_custom_call.1} parent=1 // pred_check_branch
      %161 = sbr.rel (0) target = $region57
    $region56: #{tpu_custom_call.1} parent=1 // pred_region
      %162 = dma.done [#allocation9], 48
    $region57: #{tpu_custom_call.1} parent=1 // pred_fallthru
      _
    // Predicated region
    $region58: #{tpu_custom_call.1} parent=1 // pred_check
      _
    $region59: #{tpu_custom_call.1} parent=1 // pred_check_branch
      %164 = sbr.rel (0) target = $region61
    $region60: #{tpu_custom_call.1} parent=1 // pred_region
      %165 = dma.done [#allocation9], 48
    $region61: #{tpu_custom_call.1} parent=1 // pred_fallthru
      _
    // Predicated region
    $region62: #{tpu_custom_call.1} parent=1 // pred_check
      _
    $region63: #{tpu_custom_call.1} parent=1 // pred_check_branch
      %167 = sbr.rel (0) target = $region65
    $region64: #{tpu_custom_call.1} parent=1 // pred_region
      %168 = dma.done [#allocation12], 27648
    $region65: #{tpu_custom_call.1} parent=1 // pred_fallthru
      _
    // Predicated region
    $region66: #{tpu_custom_call.1} parent=1 // pred_check
      _
    $region67: #{tpu_custom_call.1} parent=1 // pred_check_branch
      %170 = sbr.rel (0) target = $region69
    $region68: #{tpu_custom_call.1} parent=1 // pred_region
      %171 = dma.done [#allocation12], 9216
    $region69: #{tpu_custom_call.1} parent=1 // pred_fallthru
      _
    // Predicated region
    $region70: #{tpu_custom_call.1} parent=1 // pred_check
      _
    $region71: #{tpu_custom_call.1} parent=1 // pred_check_branch
      %173 = sbr.rel (0) target = $region73
    $region72: #{tpu_custom_call.1} parent=1 // pred_region
      %174 = dma.done [#allocation15], 48
    $region73: #{tpu_custom_call.1} parent=1 // pred_fallthru
      _
    // Predicated region
    $region74: #{tpu_custom_call.1} parent=1 // pred_check
      _
    $region75: #{tpu_custom_call.1} parent=1 // pred_check_branch
      %176 = sbr.rel (0) target = $region77
    $region76: #{tpu_custom_call.1} parent=1 // pred_region
      %177 = dma.done [#allocation15], 48
    $region77: #{tpu_custom_call.1} parent=1 // pred_fallthru
      _
    // Predicated region
    $region78: #{tpu_custom_call.1} parent=1 // pred_check
      _
    $region79: #{tpu_custom_call.1} parent=1 // pred_check_branch
      %179 = sbr.rel (0) target = $region81
    $region80: #{tpu_custom_call.1} parent=1 // pred_region
      %180 = dma.done [#allocation18], 48
    $region81: #{tpu_custom_call.1} parent=1 // pred_fallthru
      _
    // Predicated region
    $region82: #{tpu_custom_call.1} parent=1 // pred_check
      _
    $region83: #{tpu_custom_call.1} parent=1 // pred_check_branch
      %182 = sbr.rel (0) target = $region85
    $region84: #{tpu_custom_call.1} parent=1 // pred_region
      %183 = dma.done [#allocation18], 36864
    $region85: #{tpu_custom_call.1} parent=1 // pred_fallthru
      _
    // Predicated region
    $region86: #{tpu_custom_call.1} parent=1 // pred_check
      _
    $region87: #{tpu_custom_call.1} parent=1 // pred_check_branch
      %185 = sbr.rel (0) target = $region89
    $region88: #{tpu_custom_call.1} parent=1 // pred_region
      %186 = dma.done [#allocation21], 192
    $region89: #{tpu_custom_call.1} parent=1 // pred_fallthru
      _
    // Predicated region
    $region90: #{tpu_custom_call.1} parent=1 // pred_check
      _
    $region91: #{tpu_custom_call.1} parent=1 // pred_check_branch
      %188 = sbr.rel (0) target = $region93
    $region92: #{tpu_custom_call.1} parent=1 // pred_region
      %189 = dma.done [#allocation21], 36864
    $region93: #{tpu_custom_call.1} parent=1 // pred_fallthru
      _
    // Predicated region
    $region94: #{tpu_custom_call.1} parent=1 // pred_check
      _
    $region95: #{tpu_custom_call.1} parent=1 // pred_check_branch
      %191 = sbr.rel (0) target = $region97
    $region96: #{tpu_custom_call.1} parent=1 // pred_region
      %192 = dma.done [#allocation24], 48
    $region97: #{tpu_custom_call.1} parent=1 // pred_fallthru
      _
    %v194 = vld [vmem:[#allocation5] sm:$0xff]
    %v195 = vld [vmem:[#allocation5 + $0x8] sm:$0xff]
    %v196 = vld [vmem:[#allocation5 + $0x10] sm:$0xff]
    %v197 = vld [vmem:[#allocation5 + $0x18] sm:$0xff]
    %v198 = vld [vmem:[#allocation5 + $0x20] sm:$0xff]
    %v199 = vld [vmem:[#allocation5 + $0x28] sm:$0xff]
    %v200 = vld [vmem:[#allocation8] sm:$0x7]
    %v201 = vld [vmem:[#allocation10] sm:$0x7]
    %v202 = vadd.f32 %v194, %v195
    %v203 = vadd.f32 %v202, %v196
    %204 = vadd.xlane.f32.xlu0 %v203
    %v205 = vpop.xlane.xlu0 %204
    %v206 = vadd.f32 %v197, %v198
    %v207 = vadd.f32 %v206, %v199
    %208 = vadd.xlane.f32.xlu0 %v207
    %v209 = vpop.xlane.xlu0 %208
    %v210 = vrcp.pop 384.0
    %v211 = vmul.f32 %v205, %v210
    %v212 = vmul.f32 %v209, %v210
    %v213 = vsub.f32 %v194, %v211
    %v214 = vsub.f32 %v195, %v211
    %v215 = vsub.f32 %v196, %v211
    %v216 = vsub.f32 %v197, %v212
    %v217 = vsub.f32 %v198, %v212
    %v218 = vsub.f32 %v199, %v212
    %v219 = vmul.f32 %v213, %v213
    %v220 = vmul.f32 %v214, %v214
    %v221 = vmul.f32 %v215, %v215
    %v222 = vmul.f32 %v216, %v216
    %v223 = vmul.f32 %v217, %v217
    %v224 = vmul.f32 %v218, %v218
    %v225 = vadd.f32 %v219, %v220
    %v226 = vadd.f32 %v225, %v221
    %227 = vadd.xlane.f32.xlu0 %v226
    %v228 = vpop.xlane.xlu0 %227
    %v229 = vadd.f32 %v222, %v223
    %v230 = vadd.f32 %v229, %v224
    %231 = vadd.xlane.f32.xlu0 %v230
    %v232 = vpop.xlane.xlu0 %231
    %v233 = vmul.f32 %v228, %v210
    %v234 = vmul.f32 %v232, %v210
    %v235 = vadd.f32 %v233, 1e-05
    %v236 = vadd.f32 %v234, 1e-05
    %v237 = vrsqrt.pop %v235
    %v238 = vrsqrt.pop %v236
    %v239 = vmul.f32 %v213, %v237
    %v240 = vmul.f32 %v214, %v237
    %v241 = vmul.f32 %v215, %v237
    %v242 = vmul.f32 %v216, %v238
    %v243 = vmul.f32 %v217, %v238
    %v244 = vmul.f32 %v218, %v238
    %v246 = vlaneseq
    %v247 = vshrl.u32 %v246, 7
    %v248 = vsub.s32 0, %v247
    %v249 = vrot.slane %v200, %v248
    %v250 = vlaneseq
    %v251 = vshrl.u32 %v250, 7
    %v252 = vsub.s32 1, %v251
    %v253 = vrot.slane %v200, %v252
    %v254 = vlaneseq
    %v255 = vshrl.u32 %v254, 7
    %v256 = vsub.s32 2, %v255
    %v257 = vrot.slane %v200, %v256
    %v261 = vmul.f32 %v239, %v249
    %v262 = vmul.f32 %v240, %v253
    %v263 = vmul.f32 %v241, %v257
    %v264 = vmul.f32 %v242, %v249
    %v265 = vmul.f32 %v243, %v253
    %v266 = vmul.f32 %v244, %v257
    %v268 = vlaneseq
    %v269 = vshrl.u32 %v268, 7
    %v270 = vsub.s32 0, %v269
    %v271 = vrot.slane %v201, %v270
    %v272 = vlaneseq
    %v273 = vshrl.u32 %v272, 7
    %v274 = vsub.s32 1, %v273
    %v275 = vrot.slane %v201, %v274
    %v276 = vlaneseq
    %v277 = vshrl.u32 %v276, 7
    %v278 = vsub.s32 2, %v277
    %v279 = vrot.slane %v201, %v278
    %v283 = vadd.f32 %v261, %v271
    %v284 = vadd.f32 %v262, %v275
    %v285 = vadd.f32 %v263, %v279
    %v286 = vadd.f32 %v264, %v271
    %v287 = vadd.f32 %v265, %v275
    %v288 = vadd.f32 %v266, %v279
    %v289 = vpack.c.bf16 %v286, %v283
    %v290 = vpack.c.bf16 %v287, %v284
    %v291 = vpack.c.bf16 %v288, %v285
    %v292 = vld [vmem:[#allocation11] sm:$0xff]
    %v293 = vld [vmem:[#allocation11 + $0x8] sm:$0xff]
    %v294 = vld [vmem:[#allocation11 + $0x10] sm:$0xff]
    %v295 = vld [vmem:[#allocation11 + $0x18] sm:$0xff]
    %v296 = vld [vmem:[#allocation11 + $0x20] sm:$0xf]
    %v297 = vld [vmem:[#allocation11 + $0x24] sm:$0xff]
    %v298 = vld [vmem:[#allocation11 + $0x2c] sm:$0xff]
    %v299 = vld [vmem:[#allocation11 + $0x34] sm:$0xff]
    %v300 = vld [vmem:[#allocation11 + $0x3c] sm:$0xff]
    %v301 = vld [vmem:[#allocation11 + $0x44] sm:$0xf]
    %v302 = vld [vmem:[#allocation11 + $0x48] sm:$0xff]
    %v303 = vld [vmem:[#allocation11 + $0x50] sm:$0xff]
    %v304 = vld [vmem:[#allocation11 + $0x58] sm:$0xff]
    %v305 = vld [vmem:[#allocation11 + $0x60] sm:$0xff]
    %v306 = vld [vmem:[#allocation11 + $0x68] sm:$0xf]
    %v307 = vld [vmem:[#allocation11 + $0x6c] sm:$0xff]
    %v308 = vld [vmem:[#allocation11 + $0x74] sm:$0xff]
    %v309 = vld [vmem:[#allocation11 + $0x7c] sm:$0xff]
    %v310 = vld [vmem:[#allocation11 + $0x84] sm:$0xff]
    %v311 = vld [vmem:[#allocation11 + $0x8c] sm:$0xf]
    %v312 = vld [vmem:[#allocation11 + $0x90] sm:$0xff]
    %v313 = vld [vmem:[#allocation11 + $0x98] sm:$0xff]
    %v314 = vld [vmem:[#allocation11 + $0xa0] sm:$0xff]
    %v315 = vld [vmem:[#allocation11 + $0xa8] sm:$0xff]
    %v316 = vld [vmem:[#allocation11 + $0xb0] sm:$0xf]
    %v317 = vld [vmem:[#allocation11 + $0xb4] sm:$0xff]
    %v318 = vld [vmem:[#allocation11 + $0xbc] sm:$0xff]
    %v319 = vld [vmem:[#allocation11 + $0xc4] sm:$0xff]
    %v320 = vld [vmem:[#allocation11 + $0xcc] sm:$0xff]
    %v321 = vld [vmem:[#allocation11 + $0xd4] sm:$0xf]
    %v322 = vld [vmem:[#allocation11 + $0xd8] sm:$0xff]
    %v323 = vld [vmem:[#allocation11 + $0xe0] sm:$0xff]
    %v324 = vld [vmem:[#allocation11 + $0xe8] sm:$0xff]
    %v325 = vld [vmem:[#allocation11 + $0xf0] sm:$0xff]
    %v326 = vld [vmem:[#allocation11 + $0xf8] sm:$0xf]
    %v327 = vld [vmem:[#allocation11 + $0xfc] sm:$0xff]
    %v328 = vld [vmem:[#allocation11 + $0x104] sm:$0xff]
    %v329 = vld [vmem:[#allocation11 + $0x10c] sm:$0xff]
    %v330 = vld [vmem:[#allocation11 + $0x114] sm:$0xff]
    %v331 = vld [vmem:[#allocation11 + $0x11c] sm:$0xf]
    %v332 = vld [vmem:[#allocation11 + $0x120] sm:$0xff]
    %v333 = vld [vmem:[#allocation11 + $0x128] sm:$0xff]
    %v334 = vld [vmem:[#allocation11 + $0x130] sm:$0xff]
    %v335 = vld [vmem:[#allocation11 + $0x138] sm:$0xff]
    %v336 = vld [vmem:[#allocation11 + $0x140] sm:$0xf]
    %v337 = vld [vmem:[#allocation11 + $0x144] sm:$0xff]
    %v338 = vld [vmem:[#allocation11 + $0x14c] sm:$0xff]
    %v339 = vld [vmem:[#allocation11 + $0x154] sm:$0xff]
    %v340 = vld [vmem:[#allocation11 + $0x15c] sm:$0xff]
    %v341 = vld [vmem:[#allocation11 + $0x164] sm:$0xf]
    %v342 = vld [vmem:[#allocation11 + $0x168] sm:$0xff]
    %v343 = vld [vmem:[#allocation11 + $0x170] sm:$0xff]
    %v344 = vld [vmem:[#allocation11 + $0x178] sm:$0xff]
    %v345 = vld [vmem:[#allocation11 + $0x180] sm:$0xff]
    %v346 = vld [vmem:[#allocation11 + $0x188] sm:$0xf]
    %v347 = vld [vmem:[#allocation11 + $0x18c] sm:$0xff]
    %v348 = vld [vmem:[#allocation11 + $0x194] sm:$0xff]
    %v349 = vld [vmem:[#allocation11 + $0x19c] sm:$0xff]
    %v350 = vld [vmem:[#allocation11 + $0x1a4] sm:$0xff]
    %v351 = vld [vmem:[#allocation11 + $0x1ac] sm:$0xf]
    %v352 = vld [vmem:[#allocation11 + $0x1b0] sm:$0xff]
    %v353 = vld [vmem:[#allocation11 + $0x1b8] sm:$0xff]
    %v354 = vld [vmem:[#allocation11 + $0x1c0] sm:$0xff]
    %v355 = vld [vmem:[#allocation11 + $0x1c8] sm:$0xff]
    %v356 = vld [vmem:[#allocation11 + $0x1d0] sm:$0xf]
    %v357 = vld [vmem:[#allocation11 + $0x1d4] sm:$0xff]
    %v358 = vld [vmem:[#allocation11 + $0x1dc] sm:$0xff]
    %v359 = vld [vmem:[#allocation11 + $0x1e4] sm:$0xff]
    %v360 = vld [vmem:[#allocation11 + $0x1ec] sm:$0xff]
    %v361 = vld [vmem:[#allocation11 + $0x1f4] sm:$0xf]
    %v362 = vld [vmem:[#allocation11 + $0x1f8] sm:$0xff]
    %v363 = vld [vmem:[#allocation11 + $0x200] sm:$0xff]
    %v364 = vld [vmem:[#allocation11 + $0x208] sm:$0xff]
    %v365 = vld [vmem:[#allocation11 + $0x210] sm:$0xff]
    %v366 = vld [vmem:[#allocation11 + $0x218] sm:$0xf]
    %v367 = vld [vmem:[#allocation11 + $0x21c] sm:$0xff]
    %v368 = vld [vmem:[#allocation11 + $0x224] sm:$0xff]
    %v369 = vld [vmem:[#allocation11 + $0x22c] sm:$0xff]
    %v370 = vld [vmem:[#allocation11 + $0x234] sm:$0xff]
    %v371 = vld [vmem:[#allocation11 + $0x23c] sm:$0xf]
    %v372 = vld [vmem:[#allocation11 + $0x240] sm:$0xff]
    %v373 = vld [vmem:[#allocation11 + $0x248] sm:$0xff]
    %v374 = vld [vmem:[#allocation11 + $0x250] sm:$0xff]
    %v375 = vld [vmem:[#allocation11 + $0x258] sm:$0xff]
    %v376 = vld [vmem:[#allocation11 + $0x260] sm:$0xf]
    %v377 = vld [vmem:[#allocation11 + $0x264] sm:$0xff]
    %v378 = vld [vmem:[#allocation11 + $0x26c] sm:$0xff]
    %v379 = vld [vmem:[#allocation11 + $0x274] sm:$0xff]
    %v380 = vld [vmem:[#allocation11 + $0x27c] sm:$0xff]
    %v381 = vld [vmem:[#allocation11 + $0x284] sm:$0xf]
    %v382 = vld [vmem:[#allocation11 + $0x288] sm:$0xff]
    %v383 = vld [vmem:[#allocation11 + $0x290] sm:$0xff]
    %v384 = vld [vmem:[#allocation11 + $0x298] sm:$0xff]
    %v385 = vld [vmem:[#allocation11 + $0x2a0] sm:$0xff]
    %v386 = vld [vmem:[#allocation11 + $0x2a8] sm:$0xf]
    %v387 = vld [vmem:[#allocation11 + $0x2ac] sm:$0xff]
    %v388 = vld [vmem:[#allocation11 + $0x2b4] sm:$0xff]
    %v389 = vld [vmem:[#allocation11 + $0x2bc] sm:$0xff]
    %v390 = vld [vmem:[#allocation11 + $0x2c4] sm:$0xff]
    %v391 = vld [vmem:[#allocation11 + $0x2cc] sm:$0xf]
    %v392 = vld [vmem:[#allocation11 + $0x2d0] sm:$0xff]
    %v393 = vld [vmem:[#allocation11 + $0x2d8] sm:$0xff]
    %v394 = vld [vmem:[#allocation11 + $0x2e0] sm:$0xff]
    %v395 = vld [vmem:[#allocation11 + $0x2e8] sm:$0xff]
    %v396 = vld [vmem:[#allocation11 + $0x2f0] sm:$0xf]
    %v397 = vld [vmem:[#allocation11 + $0x2f4] sm:$0xff]
    %v398 = vld [vmem:[#allocation11 + $0x2fc] sm:$0xff]
    %v399 = vld [vmem:[#allocation11 + $0x304] sm:$0xff]
    %v400 = vld [vmem:[#allocation11 + $0x30c] sm:$0xff]
    %v401 = vld [vmem:[#allocation11 + $0x314] sm:$0xf]
    %v402 = vld [vmem:[#allocation11 + $0x318] sm:$0xff]
    %v403 = vld [vmem:[#allocation11 + $0x320] sm:$0xff]
    %v404 = vld [vmem:[#allocation11 + $0x328] sm:$0xff]
    %v405 = vld [vmem:[#allocation11 + $0x330] sm:$0xff]
    %v406 = vld [vmem:[#allocation11 + $0x338] sm:$0xf]
    %v407 = vld [vmem:[#allocation11 + $0x33c] sm:$0xff]
    %v408 = vld [vmem:[#allocation11 + $0x344] sm:$0xff]
    %v409 = vld [vmem:[#allocation11 + $0x34c] sm:$0xff]
    %v410 = vld [vmem:[#allocation11 + $0x354] sm:$0xff]
    %v411 = vld [vmem:[#allocation11 + $0x35c] sm:$0xf]
    %v412 = vld [vmem:[#allocation11 + $0x360] sm:$0xff]
    %v413 = vld [vmem:[#allocation11 + $0x368] sm:$0xff]
    %v414 = vld [vmem:[#allocation11 + $0x370] sm:$0xff]
    %v415 = vld [vmem:[#allocation11 + $0x378] sm:$0xff]
    %v416 = vld [vmem:[#allocation11 + $0x380] sm:$0xf]
    %v417 = vld [vmem:[#allocation11 + $0x384] sm:$0xff]
    %v418 = vld [vmem:[#allocation11 + $0x38c] sm:$0xff]
    %v419 = vld [vmem:[#allocation11 + $0x394] sm:$0xff]
    %v420 = vld [vmem:[#allocation11 + $0x39c] sm:$0xff]
    %v421 = vld [vmem:[#allocation11 + $0x3a4] sm:$0xf]
    %v422 = vld [vmem:[#allocation11 + $0x3a8] sm:$0xff]
    %v423 = vld [vmem:[#allocation11 + $0x3b0] sm:$0xff]
    %v424 = vld [vmem:[#allocation11 + $0x3b8] sm:$0xff]
    %v425 = vld [vmem:[#allocation11 + $0x3c0] sm:$0xff]
    %v426 = vld [vmem:[#allocation11 + $0x3c8] sm:$0xf]
    %v427 = vld [vmem:[#allocation11 + $0x3cc] sm:$0xff]
    %v428 = vld [vmem:[#allocation11 + $0x3d4] sm:$0xff]
    %v429 = vld [vmem:[#allocation11 + $0x3dc] sm:$0xff]
    %v430 = vld [vmem:[#allocation11 + $0x3e4] sm:$0xff]
    %v431 = vld [vmem:[#allocation11 + $0x3ec] sm:$0xf]
    %v432 = vld [vmem:[#allocation11 + $0x3f0] sm:$0xff]
    %v433 = vld [vmem:[#allocation11 + $0x3f8] sm:$0xff]
    %v434 = vld [vmem:[#allocation11 + $0x400] sm:$0xff]
    %v435 = vld [vmem:[#allocation11 + $0x408] sm:$0xff]
    %v436 = vld [vmem:[#allocation11 + $0x410] sm:$0xf]
    %v437 = vld [vmem:[#allocation11 + $0x414] sm:$0xff]
    %v438 = vld [vmem:[#allocation11 + $0x41c] sm:$0xff]
    %v439 = vld [vmem:[#allocation11 + $0x424] sm:$0xff]
    %v440 = vld [vmem:[#allocation11 + $0x42c] sm:$0xff]
    %v441 = vld [vmem:[#allocation11 + $0x434] sm:$0xf]
    %v442 = vld [vmem:[#allocation11 + $0x438] sm:$0xff]
    %v443 = vld [vmem:[#allocation11 + $0x440] sm:$0xff]
    %v444 = vld [vmem:[#allocation11 + $0x448] sm:$0xff]
    %v445 = vld [vmem:[#allocation11 + $0x450] sm:$0xff]
    %v446 = vld [vmem:[#allocation11 + $0x458] sm:$0xf]
    %v447 = vld [vmem:[#allocation11 + $0x45c] sm:$0xff]
    %v448 = vld [vmem:[#allocation11 + $0x464] sm:$0xff]
    %v449 = vld [vmem:[#allocation11 + $0x46c] sm:$0xff]
    %v450 = vld [vmem:[#allocation11 + $0x474] sm:$0xff]
    %v451 = vld [vmem:[#allocation11 + $0x47c] sm:$0xf]
    %v452 = vld [vmem:[#allocation11 + $0x480] sm:$0xff]
    %v453 = vld [vmem:[#allocation11 + $0x488] sm:$0xff]
    %v454 = vld [vmem:[#allocation11 + $0x490] sm:$0xff]
    %v455 = vld [vmem:[#allocation11 + $0x498] sm:$0xff]
    %v456 = vld [vmem:[#allocation11 + $0x4a0] sm:$0xf]
    %v457 = vld [vmem:[#allocation11 + $0x4a4] sm:$0xff]
    %v458 = vld [vmem:[#allocation11 + $0x4ac] sm:$0xff]
    %v459 = vld [vmem:[#allocation11 + $0x4b4] sm:$0xff]
    %v460 = vld [vmem:[#allocation11 + $0x4bc] sm:$0xff]
    %v461 = vld [vmem:[#allocation11 + $0x4c4] sm:$0xf]
    %v462 = vld [vmem:[#allocation11 + $0x4c8] sm:$0xff]
    %v463 = vld [vmem:[#allocation11 + $0x4d0] sm:$0xff]
    %v464 = vld [vmem:[#allocation11 + $0x4d8] sm:$0xff]
    %v465 = vld [vmem:[#allocation11 + $0x4e0] sm:$0xff]
    %v466 = vld [vmem:[#allocation11 + $0x4e8] sm:$0xf]
    %v467 = vld [vmem:[#allocation11 + $0x4ec] sm:$0xff]
    %v468 = vld [vmem:[#allocation11 + $0x4f4] sm:$0xff]
    %v469 = vld [vmem:[#allocation11 + $0x4fc] sm:$0xff]
    %v470 = vld [vmem:[#allocation11 + $0x504] sm:$0xff]
    %v471 = vld [vmem:[#allocation11 + $0x50c] sm:$0xf]
    %v472 = vld [vmem:[#allocation11 + $0x510] sm:$0xff]
    %v473 = vld [vmem:[#allocation11 + $0x518] sm:$0xff]
    %v474 = vld [vmem:[#allocation11 + $0x520] sm:$0xff]
    %v475 = vld [vmem:[#allocation11 + $0x528] sm:$0xff]
    %v476 = vld [vmem:[#allocation11 + $0x530] sm:$0xf]
    %v477 = vld [vmem:[#allocation11 + $0x534] sm:$0xff]
    %v478 = vld [vmem:[#allocation11 + $0x53c] sm:$0xff]
    %v479 = vld [vmem:[#allocation11 + $0x544] sm:$0xff]
    %v480 = vld [vmem:[#allocation11 + $0x54c] sm:$0xff]
    %v481 = vld [vmem:[#allocation11 + $0x554] sm:$0xf]
    %v482 = vld [vmem:[#allocation11 + $0x558] sm:$0xff]
    %v483 = vld [vmem:[#allocation11 + $0x560] sm:$0xff]
    %v484 = vld [vmem:[#allocation11 + $0x568] sm:$0xff]
    %v485 = vld [vmem:[#allocation11 + $0x570] sm:$0xff]
    %v486 = vld [vmem:[#allocation11 + $0x578] sm:$0xf]
    %v487 = vld [vmem:[#allocation11 + $0x57c] sm:$0xff]
    %v488 = vld [vmem:[#allocation11 + $0x584] sm:$0xff]
    %v489 = vld [vmem:[#allocation11 + $0x58c] sm:$0xff]
    %v490 = vld [vmem:[#allocation11 + $0x594] sm:$0xff]
    %v491 = vld [vmem:[#allocation11 + $0x59c] sm:$0xf]
    %v492 = vld [vmem:[#allocation11 + $0x5a0] sm:$0xff]
    %v493 = vld [vmem:[#allocation11 + $0x5a8] sm:$0xff]
    %v494 = vld [vmem:[#allocation11 + $0x5b0] sm:$0xff]
    %v495 = vld [vmem:[#allocation11 + $0x5b8] sm:$0xff]
    %v496 = vld [vmem:[#allocation11 + $0x5c0] sm:$0xf]
    %v497 = vld [vmem:[#allocation11 + $0x5c4] sm:$0xff]
    %v498 = vld [vmem:[#allocation11 + $0x5cc] sm:$0xff]
    %v499 = vld [vmem:[#allocation11 + $0x5d4] sm:$0xff]
    %v500 = vld [vmem:[#allocation11 + $0x5dc] sm:$0xff]
    %v501 = vld [vmem:[#allocation11 + $0x5e4] sm:$0xf]
    %v502 = vld [vmem:[#allocation11 + $0x5e8] sm:$0xff]
    %v503 = vld [vmem:[#allocation11 + $0x5f0] sm:$0xff]
    %v504 = vld [vmem:[#allocation11 + $0x5f8] sm:$0xff]
    %v505 = vld [vmem:[#allocation11 + $0x600] sm:$0xff]
    %v506 = vld [vmem:[#allocation11 + $0x608] sm:$0xf]
    %v507 = vld [vmem:[#allocation11 + $0x60c] sm:$0xff]
    %v508 = vld [vmem:[#allocation11 + $0x614] sm:$0xff]
    %v509 = vld [vmem:[#allocation11 + $0x61c] sm:$0xff]
    %v510 = vld [vmem:[#allocation11 + $0x624] sm:$0xff]
    %v511 = vld [vmem:[#allocation11 + $0x62c] sm:$0xf]
    %v512 = vld [vmem:[#allocation11 + $0x630] sm:$0xff]
    %v513 = vld [vmem:[#allocation11 + $0x638] sm:$0xff]
    %v514 = vld [vmem:[#allocation11 + $0x640] sm:$0xff]
    %v515 = vld [vmem:[#allocation11 + $0x648] sm:$0xff]
    %v516 = vld [vmem:[#allocation11 + $0x650] sm:$0xf]
    %v517 = vld [vmem:[#allocation11 + $0x654] sm:$0xff]
    %v518 = vld [vmem:[#allocation11 + $0x65c] sm:$0xff]
    %v519 = vld [vmem:[#allocation11 + $0x664] sm:$0xff]
    %v520 = vld [vmem:[#allocation11 + $0x66c] sm:$0xff]
    %v521 = vld [vmem:[#allocation11 + $0x674] sm:$0xf]
    %v522 = vld [vmem:[#allocation11 + $0x678] sm:$0xff]
    %v523 = vld [vmem:[#allocation11 + $0x680] sm:$0xff]
    %v524 = vld [vmem:[#allocation11 + $0x688] sm:$0xff]
    %v525 = vld [vmem:[#allocation11 + $0x690] sm:$0xff]
    %v526 = vld [vmem:[#allocation11 + $0x698] sm:$0xf]
    %v527 = vld [vmem:[#allocation11 + $0x69c] sm:$0xff]
    %v528 = vld [vmem:[#allocation11 + $0x6a4] sm:$0xff]
    %v529 = vld [vmem:[#allocation11 + $0x6ac] sm:$0xff]
    %v530 = vld [vmem:[#allocation11 + $0x6b4] sm:$0xff]
    %v531 = vld [vmem:[#allocation11 + $0x6bc] sm:$0xf]
    %v772 = vunpack.c.l.b16 %v292
    %v773 = vunpack.c.h.b16 %v292
    %v774 = vunpack.c.l.b16 %v293
    %v775 = vunpack.c.h.b16 %v293
    %v776 = vunpack.c.l.b16 %v294
    %v777 = vunpack.c.h.b16 %v294
    %v778 = vunpack.c.l.b16 %v295
    %v779 = vunpack.c.h.b16 %v295
    %v780 = vunpack.c.l.b16 %v296
    %v781 = vunpack.c.l.b16 %v297
    %v782 = vunpack.c.h.b16 %v297
    %v783 = vunpack.c.l.b16 %v298
    %v784 = vunpack.c.h.b16 %v298
    %v785 = vunpack.c.l.b16 %v299
    %v786 = vunpack.c.h.b16 %v299
    %v787 = vunpack.c.l.b16 %v300
    %v788 = vunpack.c.h.b16 %v300
    %v789 = vunpack.c.l.b16 %v301
    %v790 = vunpack.c.l.b16 %v302
    %v791 = vunpack.c.h.b16 %v302
    %v792 = vunpack.c.l.b16 %v303
    %v793 = vunpack.c.h.b16 %v303
    %v794 = vunpack.c.l.b16 %v304
    %v795 = vunpack.c.h.b16 %v304
    %v796 = vunpack.c.l.b16 %v305
    %v797 = vunpack.c.h.b16 %v305
    %v798 = vunpack.c.l.b16 %v306
    %v799 = vunpack.c.l.b16 %v307
    %v800 = vunpack.c.h.b16 %v307
    %v801 = vunpack.c.l.b16 %v308
    %v802 = vunpack.c.h.b16 %v308
    %v803 = vunpack.c.l.b16 %v309
    %v804 = vunpack.c.h.b16 %v309
    %v805 = vunpack.c.l.b16 %v310
    %v806 = vunpack.c.h.b16 %v310
    %v807 = vunpack.c.l.b16 %v311
    %v808 = vunpack.c.l.b16 %v312
    %v809 = vunpack.c.h.b16 %v312
    %v810 = vunpack.c.l.b16 %v313
    %v811 = vunpack.c.h.b16 %v313
    %v812 = vunpack.c.l.b16 %v314
    %v813 = vunpack.c.h.b16 %v314
    %v814 = vunpack.c.l.b16 %v315
    %v815 = vunpack.c.h.b16 %v315
    %v816 = vunpack.c.l.b16 %v316
    %v817 = vunpack.c.l.b16 %v317
    %v818 = vunpack.c.h.b16 %v317
    %v819 = vunpack.c.l.b16 %v318
    %v820 = vunpack.c.h.b16 %v318
    %v821 = vunpack.c.l.b16 %v319
    %v822 = vunpack.c.h.b16 %v319
    %v823 = vunpack.c.l.b16 %v320
    %v824 = vunpack.c.h.b16 %v320
    %v825 = vunpack.c.l.b16 %v321
    %v826 = vunpack.c.l.b16 %v322
    %v827 = vunpack.c.h.b16 %v322
    %v828 = vunpack.c.l.b16 %v323
    %v829 = vunpack.c.h.b16 %v323
    %v830 = vunpack.c.l.b16 %v324
    %v831 = vunpack.c.h.b16 %v324
    %v832 = vunpack.c.l.b16 %v325
    %v833 = vunpack.c.h.b16 %v325
    %v834 = vunpack.c.l.b16 %v326
    %v835 = vunpack.c.l.b16 %v327
    %v836 = vunpack.c.h.b16 %v327
    %v837 = vunpack.c.l.b16 %v328
    %v838 = vunpack.c.h.b16 %v328
    %v839 = vunpack.c.l.b16 %v329
    %v840 = vunpack.c.h.b16 %v329
    %v841 = vunpack.c.l.b16 %v330
    %v842 = vunpack.c.h.b16 %v330
    %v843 = vunpack.c.l.b16 %v331
    %v844 = vunpack.c.l.b16 %v332
    %v845 = vunpack.c.h.b16 %v332
    %v846 = vunpack.c.l.b16 %v333
    %v847 = vunpack.c.h.b16 %v333
    %v848 = vunpack.c.l.b16 %v334
    %v849 = vunpack.c.h.b16 %v334
    %v850 = vunpack.c.l.b16 %v335
    %v851 = vunpack.c.h.b16 %v335
    %v852 = vunpack.c.l.b16 %v336
    %v853 = vunpack.c.l.b16 %v337
    %v854 = vunpack.c.h.b16 %v337
    %v855 = vunpack.c.l.b16 %v338
    %v856 = vunpack.c.h.b16 %v338
    %v857 = vunpack.c.l.b16 %v339
    %v858 = vunpack.c.h.b16 %v339
    %v859 = vunpack.c.l.b16 %v340
    %v860 = vunpack.c.h.b16 %v340
    %v861 = vunpack.c.l.b16 %v341
    %v862 = vunpack.c.l.b16 %v342
    %v863 = vunpack.c.h.b16 %v342
    %v864 = vunpack.c.l.b16 %v343
    %v865 = vunpack.c.h.b16 %v343
    %v866 = vunpack.c.l.b16 %v344
    %v867 = vunpack.c.h.b16 %v344
    %v868 = vunpack.c.l.b16 %v345
    %v869 = vunpack.c.h.b16 %v345
    %v870 = vunpack.c.l.b16 %v346
    %v871 = vunpack.c.l.b16 %v347
    %v872 = vunpack.c.h.b16 %v347
    %v873 = vunpack.c.l.b16 %v348
    %v874 = vunpack.c.h.b16 %v348
    %v875 = vunpack.c.l.b16 %v349
    %v876 = vunpack.c.h.b16 %v349
    %v877 = vunpack.c.l.b16 %v350
    %v878 = vunpack.c.h.b16 %v350
    %v879 = vunpack.c.l.b16 %v351
    %v880 = vunpack.c.l.b16 %v352
    %v881 = vunpack.c.h.b16 %v352
    %v882 = vunpack.c.l.b16 %v353
    %v883 = vunpack.c.h.b16 %v353
    %v884 = vunpack.c.l.b16 %v354
    %v885 = vunpack.c.h.b16 %v354
    %v886 = vunpack.c.l.b16 %v355
    %v887 = vunpack.c.h.b16 %v355
    %v888 = vunpack.c.l.b16 %v356
    %v889 = vunpack.c.l.b16 %v357
    %v890 = vunpack.c.h.b16 %v357
    %v891 = vunpack.c.l.b16 %v358
    %v892 = vunpack.c.h.b16 %v358
    %v893 = vunpack.c.l.b16 %v359
    %v894 = vunpack.c.h.b16 %v359
    %v895 = vunpack.c.l.b16 %v360
    %v896 = vunpack.c.h.b16 %v360
    %v897 = vunpack.c.l.b16 %v361
    %v898 = vunpack.c.l.b16 %v362
    %v899 = vunpack.c.h.b16 %v362
    %v900 = vunpack.c.l.b16 %v363
    %v901 = vunpack.c.h.b16 %v363
    %v902 = vunpack.c.l.b16 %v364
    %v903 = vunpack.c.h.b16 %v364
    %v904 = vunpack.c.l.b16 %v365
    %v905 = vunpack.c.h.b16 %v365
    %v906 = vunpack.c.l.b16 %v366
    %v907 = vunpack.c.l.b16 %v367
    %v908 = vunpack.c.h.b16 %v367
    %v909 = vunpack.c.l.b16 %v368
    %v910 = vunpack.c.h.b16 %v368
    %v911 = vunpack.c.l.b16 %v369
    %v912 = vunpack.c.h.b16 %v369
    %v913 = vunpack.c.l.b16 %v370
    %v914 = vunpack.c.h.b16 %v370
    %v915 = vunpack.c.l.b16 %v371
    %v916 = vunpack.c.l.b16 %v372
    %v917 = vunpack.c.h.b16 %v372
    %v918 = vunpack.c.l.b16 %v373
    %v919 = vunpack.c.h.b16 %v373
    %v920 = vunpack.c.l.b16 %v374
    %v921 = vunpack.c.h.b16 %v374
    %v922 = vunpack.c.l.b16 %v375
    %v923 = vunpack.c.h.b16 %v375
    %v924 = vunpack.c.l.b16 %v376
    %v925 = vunpack.c.l.b16 %v377
    %v926 = vunpack.c.h.b16 %v377
    %v927 = vunpack.c.l.b16 %v378
    %v928 = vunpack.c.h.b16 %v378
    %v929 = vunpack.c.l.b16 %v379
    %v930 = vunpack.c.h.b16 %v379
    %v931 = vunpack.c.l.b16 %v380
    %v932 = vunpack.c.h.b16 %v380
    %v933 = vunpack.c.l.b16 %v381
    %v934 = vunpack.c.l.b16 %v382
    %v935 = vunpack.c.h.b16 %v382
    %v936 = vunpack.c.l.b16 %v383
    %v937 = vunpack.c.h.b16 %v383
    %v938 = vunpack.c.l.b16 %v384
    %v939 = vunpack.c.h.b16 %v384
    %v940 = vunpack.c.l.b16 %v385
    %v941 = vunpack.c.h.b16 %v385
    %v942 = vunpack.c.l.b16 %v386
    %v943 = vunpack.c.l.b16 %v387
    %v944 = vunpack.c.h.b16 %v387
    %v945 = vunpack.c.l.b16 %v388
    %v946 = vunpack.c.h.b16 %v388
    %v947 = vunpack.c.l.b16 %v389
    %v948 = vunpack.c.h.b16 %v389
    %v949 = vunpack.c.l.b16 %v390
    %v950 = vunpack.c.h.b16 %v390
    %v951 = vunpack.c.l.b16 %v391
    %v952 = vunpack.c.l.b16 %v392
    %v953 = vunpack.c.h.b16 %v392
    %v954 = vunpack.c.l.b16 %v393
    %v955 = vunpack.c.h.b16 %v393
    %v956 = vunpack.c.l.b16 %v394
    %v957 = vunpack.c.h.b16 %v394
    %v958 = vunpack.c.l.b16 %v395
    %v959 = vunpack.c.h.b16 %v395
    %v960 = vunpack.c.l.b16 %v396
    %v961 = vunpack.c.l.b16 %v397
    %v962 = vunpack.c.h.b16 %v397
    %v963 = vunpack.c.l.b16 %v398
    %v964 = vunpack.c.h.b16 %v398
    %v965 = vunpack.c.l.b16 %v399
    %v966 = vunpack.c.h.b16 %v399
    %v967 = vunpack.c.l.b16 %v400
    %v968 = vunpack.c.h.b16 %v400
    %v969 = vunpack.c.l.b16 %v401
    %v970 = vunpack.c.l.b16 %v402
    %v971 = vunpack.c.h.b16 %v402
    %v972 = vunpack.c.l.b16 %v403
    %v973 = vunpack.c.h.b16 %v403
    %v974 = vunpack.c.l.b16 %v404
    %v975 = vunpack.c.h.b16 %v404
    %v976 = vunpack.c.l.b16 %v405
    %v977 = vunpack.c.h.b16 %v405
    %v978 = vunpack.c.l.b16 %v406
    %v979 = vunpack.c.l.b16 %v407
    %v980 = vunpack.c.h.b16 %v407
    %v981 = vunpack.c.l.b16 %v408
    %v982 = vunpack.c.h.b16 %v408
    %v983 = vunpack.c.l.b16 %v409
    %v984 = vunpack.c.h.b16 %v409
    %v985 = vunpack.c.l.b16 %v410
    %v986 = vunpack.c.h.b16 %v410
    %v987 = vunpack.c.l.b16 %v411
    %v988 = vunpack.c.l.b16 %v412
    %v989 = vunpack.c.h.b16 %v412
    %v990 = vunpack.c.l.b16 %v413
    %v991 = vunpack.c.h.b16 %v413
    %v992 = vunpack.c.l.b16 %v414
    %v993 = vunpack.c.h.b16 %v414
    %v994 = vunpack.c.l.b16 %v415
    %v995 = vunpack.c.h.b16 %v415
    %v996 = vunpack.c.l.b16 %v416
    %v997 = vunpack.c.l.b16 %v417
    %v998 = vunpack.c.h.b16 %v417
    %v999 = vunpack.c.l.b16 %v418
    %v1000 = vunpack.c.h.b16 %v418
    %v1001 = vunpack.c.l.b16 %v419
    %v1002 = vunpack.c.h.b16 %v419
    %v1003 = vunpack.c.l.b16 %v420
    %v1004 = vunpack.c.h.b16 %v420
    %v1005 = vunpack.c.l.b16 %v421
    %v1006 = vunpack.c.l.b16 %v422
    %v1007 = vunpack.c.h.b16 %v422
    %v1008 = vunpack.c.l.b16 %v423
    %v1009 = vunpack.c.h.b16 %v423
    %v1010 = vunpack.c.l.b16 %v424
    %v1011 = vunpack.c.h.b16 %v424
    %v1012 = vunpack.c.l.b16 %v425
    %v1013 = vunpack.c.h.b16 %v425
    %v1014 = vunpack.c.l.b16 %v426
    %v1015 = vunpack.c.l.b16 %v427
    %v1016 = vunpack.c.h.b16 %v427
    %v1017 = vunpack.c.l.b16 %v428
    %v1018 = vunpack.c.h.b16 %v428
    %v1019 = vunpack.c.l.b16 %v429
    %v1020 = vunpack.c.h.b16 %v429
    %v1021 = vunpack.c.l.b16 %v430
    %v1022 = vunpack.c.h.b16 %v430
    %v1023 = vunpack.c.l.b16 %v431
    %v1024 = vunpack.c.l.b16 %v432
    %v1025 = vunpack.c.h.b16 %v432
    %v1026 = vunpack.c.l.b16 %v433
    %v1027 = vunpack.c.h.b16 %v433
    %v1028 = vunpack.c.l.b16 %v434
    %v1029 = vunpack.c.h.b16 %v434
    %v1030 = vunpack.c.l.b16 %v435
    %v1031 = vunpack.c.h.b16 %v435
    %v1032 = vunpack.c.l.b16 %v436
    %v1033 = vunpack.c.l.b16 %v437
    %v1034 = vunpack.c.h.b16 %v437
    %v1035 = vunpack.c.l.b16 %v438
    %v1036 = vunpack.c.h.b16 %v438
    %v1037 = vunpack.c.l.b16 %v439
    %v1038 = vunpack.c.h.b16 %v439
    %v1039 = vunpack.c.l.b16 %v440
    %v1040 = vunpack.c.h.b16 %v440
    %v1041 = vunpack.c.l.b16 %v441
    %v1042 = vunpack.c.l.b16 %v442
    %v1043 = vunpack.c.h.b16 %v442
    %v1044 = vunpack.c.l.b16 %v443
    %v1045 = vunpack.c.h.b16 %v443
    %v1046 = vunpack.c.l.b16 %v444
    %v1047 = vunpack.c.h.b16 %v444
    %v1048 = vunpack.c.l.b16 %v445
    %v1049 = vunpack.c.h.b16 %v445
    %v1050 = vunpack.c.l.b16 %v446
    %v1051 = vunpack.c.l.b16 %v447
    %v1052 = vunpack.c.h.b16 %v447
    %v1053 = vunpack.c.l.b16 %v448
    %v1054 = vunpack.c.h.b16 %v448
    %v1055 = vunpack.c.l.b16 %v449
    %v1056 = vunpack.c.h.b16 %v449
    %v1057 = vunpack.c.l.b16 %v450
    %v1058 = vunpack.c.h.b16 %v450
    %v1059 = vunpack.c.l.b16 %v451
    %v1060 = vunpack.c.l.b16 %v452
    %v1061 = vunpack.c.h.b16 %v452
    %v1062 = vunpack.c.l.b16 %v453
    %v1063 = vunpack.c.h.b16 %v453
    %v1064 = vunpack.c.l.b16 %v454
    %v1065 = vunpack.c.h.b16 %v454
    %v1066 = vunpack.c.l.b16 %v455
    %v1067 = vunpack.c.h.b16 %v455
    %v1068 = vunpack.c.l.b16 %v456
    %v1069 = vunpack.c.l.b16 %v457
    %v1070 = vunpack.c.h.b16 %v457
    %v1071 = vunpack.c.l.b16 %v458
    %v1072 = vunpack.c.h.b16 %v458
    %v1073 = vunpack.c.l.b16 %v459
    %v1074 = vunpack.c.h.b16 %v459
    %v1075 = vunpack.c.l.b16 %v460
    %v1076 = vunpack.c.h.b16 %v460
    %v1077 = vunpack.c.l.b16 %v461
    %v1078 = vunpack.c.l.b16 %v462
    %v1079 = vunpack.c.h.b16 %v462
    %v1080 = vunpack.c.l.b16 %v463
    %v1081 = vunpack.c.h.b16 %v463
    %v1082 = vunpack.c.l.b16 %v464
    %v1083 = vunpack.c.h.b16 %v464
    %v1084 = vunpack.c.l.b16 %v465
    %v1085 = vunpack.c.h.b16 %v465
    %v1086 = vunpack.c.l.b16 %v466
    %v1087 = vunpack.c.l.b16 %v467
    %v1088 = vunpack.c.h.b16 %v467
    %v1089 = vunpack.c.l.b16 %v468
    %v1090 = vunpack.c.h.b16 %v468
    %v1091 = vunpack.c.l.b16 %v469
    %v1092 = vunpack.c.h.b16 %v469
    %v1093 = vunpack.c.l.b16 %v470
    %v1094 = vunpack.c.h.b16 %v470
    %v1095 = vunpack.c.l.b16 %v471
    %v1096 = vunpack.c.l.b16 %v472
    %v1097 = vunpack.c.h.b16 %v472
    %v1098 = vunpack.c.l.b16 %v473
    %v1099 = vunpack.c.h.b16 %v473
    %v1100 = vunpack.c.l.b16 %v474
    %v1101 = vunpack.c.h.b16 %v474
    %v1102 = vunpack.c.l.b16 %v475
    %v1103 = vunpack.c.h.b16 %v475
    %v1104 = vunpack.c.l.b16 %v476
    %v1105 = vunpack.c.l.b16 %v477
    %v1106 = vunpack.c.h.b16 %v477
    %v1107 = vunpack.c.l.b16 %v478
    %v1108 = vunpack.c.h.b16 %v478
    %v1109 = vunpack.c.l.b16 %v479
    %v1110 = vunpack.c.h.b16 %v479
    %v1111 = vunpack.c.l.b16 %v480
    %v1112 = vunpack.c.h.b16 %v480
    %v1113 = vunpack.c.l.b16 %v481
    %v1114 = vunpack.c.l.b16 %v482
    %v1115 = vunpack.c.h.b16 %v482
    %v1116 = vunpack.c.l.b16 %v483
    %v1117 = vunpack.c.h.b16 %v483
    %v1118 = vunpack.c.l.b16 %v484
    %v1119 = vunpack.c.h.b16 %v484
    %v1120 = vunpack.c.l.b16 %v485
    %v1121 = vunpack.c.h.b16 %v485
    %v1122 = vunpack.c.l.b16 %v486
    %v1123 = vunpack.c.l.b16 %v487
    %v1124 = vunpack.c.h.b16 %v487
    %v1125 = vunpack.c.l.b16 %v488
    %v1126 = vunpack.c.h.b16 %v488
    %v1127 = vunpack.c.l.b16 %v489
    %v1128 = vunpack.c.h.b16 %v489
    %v1129 = vunpack.c.l.b16 %v490
    %v1130 = vunpack.c.h.b16 %v490
    %v1131 = vunpack.c.l.b16 %v491
    %v1132 = vunpack.c.l.b16 %v492
    %v1133 = vunpack.c.h.b16 %v492
    %v1134 = vunpack.c.l.b16 %v493
    %v1135 = vunpack.c.h.b16 %v493
    %v1136 = vunpack.c.l.b16 %v494
    %v1137 = vunpack.c.h.b16 %v494
    %v1138 = vunpack.c.l.b16 %v495
    %v1139 = vunpack.c.h.b16 %v495
    %v1140 = vunpack.c.l.b16 %v496
    %v1141 = vunpack.c.l.b16 %v497
    %v1142 = vunpack.c.h.b16 %v497
    %v1143 = vunpack.c.l.b16 %v498
    %v1144 = vunpack.c.h.b16 %v498
    %v1145 = vunpack.c.l.b16 %v499
    %v1146 = vunpack.c.h.b16 %v499
    %v1147 = vunpack.c.l.b16 %v500
    %v1148 = vunpack.c.h.b16 %v500
    %v1149 = vunpack.c.l.b16 %v501
    %v1150 = vunpack.c.l.b16 %v502
    %v1151 = vunpack.c.h.b16 %v502
    %v1152 = vunpack.c.l.b16 %v503
    %v1153 = vunpack.c.h.b16 %v503
    %v1154 = vunpack.c.l.b16 %v504
    %v1155 = vunpack.c.h.b16 %v504
    %v1156 = vunpack.c.l.b16 %v505
    %v1157 = vunpack.c.h.b16 %v505
    %v1158 = vunpack.c.l.b16 %v506
    %v1159 = vunpack.c.l.b16 %v507
    %v1160 = vunpack.c.h.b16 %v507
    %v1161 = vunpack.c.l.b16 %v508
    %v1162 = vunpack.c.h.b16 %v508
    %v1163 = vunpack.c.l.b16 %v509
    %v1164 = vunpack.c.h.b16 %v509
    %v1165 = vunpack.c.l.b16 %v510
    %v1166 = vunpack.c.h.b16 %v510
    %v1167 = vunpack.c.l.b16 %v511
    %v1168 = vunpack.c.l.b16 %v512
    %v1169 = vunpack.c.h.b16 %v512
    %v1170 = vunpack.c.l.b16 %v513
    %v1171 = vunpack.c.h.b16 %v513
    %v1172 = vunpack.c.l.b16 %v514
    %v1173 = vunpack.c.h.b16 %v514
    %v1174 = vunpack.c.l.b16 %v515
    %v1175 = vunpack.c.h.b16 %v515
    %v1176 = vunpack.c.l.b16 %v516
    %v1177 = vunpack.c.l.b16 %v517
    %v1178 = vunpack.c.h.b16 %v517
    %v1179 = vunpack.c.l.b16 %v518
    %v1180 = vunpack.c.h.b16 %v518
    %v1181 = vunpack.c.l.b16 %v519
    %v1182 = vunpack.c.h.b16 %v519
    %v1183 = vunpack.c.l.b16 %v520
    %v1184 = vunpack.c.h.b16 %v520
    %v1185 = vunpack.c.l.b16 %v521
    %v1186 = vunpack.c.l.b16 %v522
    %v1187 = vunpack.c.h.b16 %v522
    %v1188 = vunpack.c.l.b16 %v523
    %v1189 = vunpack.c.h.b16 %v523
    %v1190 = vunpack.c.l.b16 %v524
    %v1191 = vunpack.c.h.b16 %v524
    %v1192 = vunpack.c.l.b16 %v525
    %v1193 = vunpack.c.h.b16 %v525
    %v1194 = vunpack.c.l.b16 %v526
    %v1195 = vunpack.c.l.b16 %v527
    %v1196 = vunpack.c.h.b16 %v527
    %v1197 = vunpack.c.l.b16 %v528
    %v1198 = vunpack.c.h.b16 %v528
    %v1199 = vunpack.c.l.b16 %v529
    %v1200 = vunpack.c.h.b16 %v529
    %v1201 = vunpack.c.l.b16 %v530
    %v1202 = vunpack.c.h.b16 %v530
    %v1203 = vunpack.c.l.b16 %v531
    %v1204 = vpack.c.b16 %v781, %v772
    %v1205 = vpack.c.b16 %v782, %v773
    %v1206 = vpack.c.b16 %v783, %v774
    %v1207 = vpack.c.b16 %v784, %v775
    %v1208 = vpack.c.b16 %v785, %v776
    %v1209 = vpack.c.b16 %v786, %v777
    %v1210 = vpack.c.b16 %v787, %v778
    %v1211 = vpack.c.b16 %v788, %v779
    %v1212 = vpack.c.b16 %v789, %v780
    %v1213 = vpack.c.b16 %v799, %v790
    %v1214 = vpack.c.b16 %v800, %v791
    %v1215 = vpack.c.b16 %v801, %v792
    %v1216 = vpack.c.b16 %v802, %v793
    %v1217 = vpack.c.b16 %v803, %v794
    %v1218 = vpack.c.b16 %v804, %v795
    %v1219 = vpack.c.b16 %v805, %v796
    %v1220 = vpack.c.b16 %v806, %v797
    %v1221 = vpack.c.b16 %v807, %v798
    %v1222 = vpack.c.b16 %v817, %v808
    %v1223 = vpack.c.b16 %v818, %v809
    %v1224 = vpack.c.b16 %v819, %v810
    %v1225 = vpack.c.b16 %v820, %v811
    %v1226 = vpack.c.b16 %v821, %v812
    %v1227 = vpack.c.b16 %v822, %v813
    %v1228 = vpack.c.b16 %v823, %v814
    %v1229 = vpack.c.b16 %v824, %v815
    %v1230 = vpack.c.b16 %v825, %v816
    %v1231 = vpack.c.b16 %v835, %v826
    %v1232 = vpack.c.b16 %v836, %v827
    %v1233 = vpack.c.b16 %v837, %v828
    %v1234 = vpack.c.b16 %v838, %v829
    %v1235 = vpack.c.b16 %v839, %v830
    %v1236 = vpack.c.b16 %v840, %v831
    %v1237 = vpack.c.b16 %v841, %v832
    %v1238 = vpack.c.b16 %v842, %v833
    %v1239 = vpack.c.b16 %v843, %v834
    %v1240 = vpack.c.b16 %v853, %v844
    %v1241 = vpack.c.b16 %v854, %v845
    %v1242 = vpack.c.b16 %v855, %v846
    %v1243 = vpack.c.b16 %v856, %v847
    %v1244 = vpack.c.b16 %v857, %v848
    %v1245 = vpack.c.b16 %v858, %v849
    %v1246 = vpack.c.b16 %v859, %v850
    %v1247 = vpack.c.b16 %v860, %v851
    %v1248 = vpack.c.b16 %v861, %v852
    %v1249 = vpack.c.b16 %v871, %v862
    %v1250 = vpack.c.b16 %v872, %v863
    %v1251 = vpack.c.b16 %v873, %v864
    %v1252 = vpack.c.b16 %v874, %v865
    %v1253 = vpack.c.b16 %v875, %v866
    %v1254 = vpack.c.b16 %v876, %v867
    %v1255 = vpack.c.b16 %v877, %v868
    %v1256 = vpack.c.b16 %v878, %v869
    %v1257 = vpack.c.b16 %v879, %v870
    %v1258 = vpack.c.b16 %v889, %v880
    %v1259 = vpack.c.b16 %v890, %v881
    %v1260 = vpack.c.b16 %v891, %v882
    %v1261 = vpack.c.b16 %v892, %v883
    %v1262 = vpack.c.b16 %v893, %v884
    %v1263 = vpack.c.b16 %v894, %v885
    %v1264 = vpack.c.b16 %v895, %v886
    %v1265 = vpack.c.b16 %v896, %v887
    %v1266 = vpack.c.b16 %v897, %v888
    %v1267 = vpack.c.b16 %v907, %v898
    %v1268 = vpack.c.b16 %v908, %v899
    %v1269 = vpack.c.b16 %v909, %v900
    %v1270 = vpack.c.b16 %v910, %v901
    %v1271 = vpack.c.b16 %v911, %v902
    %v1272 = vpack.c.b16 %v912, %v903
    %v1273 = vpack.c.b16 %v913, %v904
    %v1274 = vpack.c.b16 %v914, %v905
    %v1275 = vpack.c.b16 %v915, %v906
    %v1276 = vpack.c.b16 %v925, %v916
    %v1277 = vpack.c.b16 %v926, %v917
    %v1278 = vpack.c.b16 %v927, %v918
    %v1279 = vpack.c.b16 %v928, %v919
    %v1280 = vpack.c.b16 %v929, %v920
    %v1281 = vpack.c.b16 %v930, %v921
    %v1282 = vpack.c.b16 %v931, %v922
    %v1283 = vpack.c.b16 %v932, %v923
    %v1284 = vpack.c.b16 %v933, %v924
    %v1285 = vpack.c.b16 %v943, %v934
    %v1286 = vpack.c.b16 %v944, %v935
    %v1287 = vpack.c.b16 %v945, %v936
    %v1288 = vpack.c.b16 %v946, %v937
    %v1289 = vpack.c.b16 %v947, %v938
    %v1290 = vpack.c.b16 %v948, %v939
    %v1291 = vpack.c.b16 %v949, %v940
    %v1292 = vpack.c.b16 %v950, %v941
    %v1293 = vpack.c.b16 %v951, %v942
    %v1294 = vpack.c.b16 %v961, %v952
    %v1295 = vpack.c.b16 %v962, %v953
    %v1296 = vpack.c.b16 %v963, %v954
    %v1297 = vpack.c.b16 %v964, %v955
    %v1298 = vpack.c.b16 %v965, %v956
    %v1299 = vpack.c.b16 %v966, %v957
    %v1300 = vpack.c.b16 %v967, %v958
    %v1301 = vpack.c.b16 %v968, %v959
    %v1302 = vpack.c.b16 %v969, %v960
    %v1303 = vpack.c.b16 %v979, %v970
    %v1304 = vpack.c.b16 %v980, %v971
    %v1305 = vpack.c.b16 %v981, %v972
    %v1306 = vpack.c.b16 %v982, %v973
    %v1307 = vpack.c.b16 %v983, %v974
    %v1308 = vpack.c.b16 %v984, %v975
    %v1309 = vpack.c.b16 %v985, %v976
    %v1310 = vpack.c.b16 %v986, %v977
    %v1311 = vpack.c.b16 %v987, %v978
    %v1312 = vpack.c.b16 %v997, %v988
    %v1313 = vpack.c.b16 %v998, %v989
    %v1314 = vpack.c.b16 %v999, %v990
    %v1315 = vpack.c.b16 %v1000, %v991
    %v1316 = vpack.c.b16 %v1001, %v992
    %v1317 = vpack.c.b16 %v1002, %v993
    %v1318 = vpack.c.b16 %v1003, %v994
    %v1319 = vpack.c.b16 %v1004, %v995
    %v1320 = vpack.c.b16 %v1005, %v996
    %v1321 = vpack.c.b16 %v1015, %v1006
    %v1322 = vpack.c.b16 %v1016, %v1007
    %v1323 = vpack.c.b16 %v1017, %v1008
    %v1324 = vpack.c.b16 %v1018, %v1009
    %v1325 = vpack.c.b16 %v1019, %v1010
    %v1326 = vpack.c.b16 %v1020, %v1011
    %v1327 = vpack.c.b16 %v1021, %v1012
    %v1328 = vpack.c.b16 %v1022, %v1013
    %v1329 = vpack.c.b16 %v1023, %v1014
    %v1330 = vpack.c.b16 %v1033, %v1024
    %v1331 = vpack.c.b16 %v1034, %v1025
    %v1332 = vpack.c.b16 %v1035, %v1026
    %v1333 = vpack.c.b16 %v1036, %v1027
    %v1334 = vpack.c.b16 %v1037, %v1028
    %v1335 = vpack.c.b16 %v1038, %v1029
    %v1336 = vpack.c.b16 %v1039, %v1030
    %v1337 = vpack.c.b16 %v1040, %v1031
    %v1338 = vpack.c.b16 %v1041, %v1032
    %v1339 = vpack.c.b16 %v1051, %v1042
    %v1340 = vpack.c.b16 %v1052, %v1043
    %v1341 = vpack.c.b16 %v1053, %v1044
    %v1342 = vpack.c.b16 %v1054, %v1045
    %v1343 = vpack.c.b16 %v1055, %v1046
    %v1344 = vpack.c.b16 %v1056, %v1047
    %v1345 = vpack.c.b16 %v1057, %v1048
    %v1346 = vpack.c.b16 %v1058, %v1049
    %v1347 = vpack.c.b16 %v1059, %v1050
    %v1348 = vpack.c.b16 %v1069, %v1060
    %v1349 = vpack.c.b16 %v1070, %v1061
    %v1350 = vpack.c.b16 %v1071, %v1062
    %v1351 = vpack.c.b16 %v1072, %v1063
    %v1352 = vpack.c.b16 %v1073, %v1064
    %v1353 = vpack.c.b16 %v1074, %v1065
    %v1354 = vpack.c.b16 %v1075, %v1066
    %v1355 = vpack.c.b16 %v1076, %v1067
    %v1356 = vpack.c.b16 %v1077, %v1068
    %v1357 = vpack.c.b16 %v1087, %v1078
    %v1358 = vpack.c.b16 %v1088, %v1079
    %v1359 = vpack.c.b16 %v1089, %v1080
    %v1360 = vpack.c.b16 %v1090, %v1081
    %v1361 = vpack.c.b16 %v1091, %v1082
    %v1362 = vpack.c.b16 %v1092, %v1083
    %v1363 = vpack.c.b16 %v1093, %v1084
    %v1364 = vpack.c.b16 %v1094, %v1085
    %v1365 = vpack.c.b16 %v1095, %v1086
    %v1366 = vpack.c.b16 %v1105, %v1096
    %v1367 = vpack.c.b16 %v1106, %v1097
    %v1368 = vpack.c.b16 %v1107, %v1098
    %v1369 = vpack.c.b16 %v1108, %v1099
    %v1370 = vpack.c.b16 %v1109, %v1100
    %v1371 = vpack.c.b16 %v1110, %v1101
    %v1372 = vpack.c.b16 %v1111, %v1102
    %v1373 = vpack.c.b16 %v1112, %v1103
    %v1374 = vpack.c.b16 %v1113, %v1104
    %v1375 = vpack.c.b16 %v1123, %v1114
    %v1376 = vpack.c.b16 %v1124, %v1115
    %v1377 = vpack.c.b16 %v1125, %v1116
    %v1378 = vpack.c.b16 %v1126, %v1117
    %v1379 = vpack.c.b16 %v1127, %v1118
    %v1380 = vpack.c.b16 %v1128, %v1119
    %v1381 = vpack.c.b16 %v1129, %v1120
    %v1382 = vpack.c.b16 %v1130, %v1121
    %v1383 = vpack.c.b16 %v1131, %v1122
    %v1384 = vpack.c.b16 %v1141, %v1132
    %v1385 = vpack.c.b16 %v1142, %v1133
    %v1386 = vpack.c.b16 %v1143, %v1134
    %v1387 = vpack.c.b16 %v1144, %v1135
    %v1388 = vpack.c.b16 %v1145, %v1136
    %v1389 = vpack.c.b16 %v1146, %v1137
    %v1390 = vpack.c.b16 %v1147, %v1138
    %v1391 = vpack.c.b16 %v1148, %v1139
    %v1392 = vpack.c.b16 %v1149, %v1140
    %v1393 = vpack.c.b16 %v1159, %v1150
    %v1394 = vpack.c.b16 %v1160, %v1151
    %v1395 = vpack.c.b16 %v1161, %v1152
    %v1396 = vpack.c.b16 %v1162, %v1153
    %v1397 = vpack.c.b16 %v1163, %v1154
    %v1398 = vpack.c.b16 %v1164, %v1155
    %v1399 = vpack.c.b16 %v1165, %v1156
    %v1400 = vpack.c.b16 %v1166, %v1157
    %v1401 = vpack.c.b16 %v1167, %v1158
    %v1402 = vpack.c.b16 %v1177, %v1168
    %v1403 = vpack.c.b16 %v1178, %v1169
    %v1404 = vpack.c.b16 %v1179, %v1170
    %v1405 = vpack.c.b16 %v1180, %v1171
    %v1406 = vpack.c.b16 %v1181, %v1172
    %v1407 = vpack.c.b16 %v1182, %v1173
    %v1408 = vpack.c.b16 %v1183, %v1174
    %v1409 = vpack.c.b16 %v1184, %v1175
    %v1410 = vpack.c.b16 %v1185, %v1176
    %v1411 = vpack.c.b16 %v1195, %v1186
    %v1412 = vpack.c.b16 %v1196, %v1187
    %v1413 = vpack.c.b16 %v1197, %v1188
    %v1414 = vpack.c.b16 %v1198, %v1189
    %v1415 = vpack.c.b16 %v1199, %v1190
    %v1416 = vpack.c.b16 %v1200, %v1191
    %v1417 = vpack.c.b16 %v1201, %v1192
    %v1418 = vpack.c.b16 %v1202, %v1193
    %v1419 = vpack.c.b16 %v1203, %v1194
    %1636 = vmatprep.subr.bf16.mxu0 %v1205
    %1637 = vmatpush1.bf16.msra.mxu0 %v1204
    %1638 = vmatprep.subr.bf16.mxu0 %v1214
    %1639 = vmatpush1.bf16.msra.mxu0 %v1213
    %1640 = vmatprep.subr.bf16.mxu0 %v1223
    %1641 = vmatpush1.bf16.msra.mxu0 %v1222
    %1642 = vmatprep.subr.bf16.mxu0 %v1232
    %1643 = vmatpush1.bf16.msra.mxu0 %v1231
    %1644 = vmatprep.subr.bf16.mxu0 %v1241
    %1645 = vmatpush1.bf16.msra.mxu0 %v1240
    %1646 = vmatprep.subr.bf16.mxu0 %v1250
    %1647 = vmatpush1.bf16.msra.mxu0 %v1249
    %1648 = vmatprep.subr.bf16.mxu0 %v1259
    %1649 = vmatpush1.bf16.msra.mxu0 %v1258
    %1650 = vmatprep.subr.bf16.mxu0 %v1268
    %1651 = vmatpush1.bf16.msra.mxu0 %v1267
    %1652 = vmatprep.subr.bf16.mxu0 %v1277
    %1653 = vmatpush1.bf16.msra.mxu0 %v1276
    %1654 = vmatprep.subr.bf16.mxu0 %v1286
    %1655 = vmatpush1.bf16.msra.mxu0 %v1285
    %1656 = vmatprep.subr.bf16.mxu0 %v1295
    %1657 = vmatpush1.bf16.msra.mxu0 %v1294
    %1658 = vmatprep.subr.bf16.mxu0 %v1304
    %1659 = vmatpush1.bf16.msra.mxu0 %v1303
    %1660 = vmatprep.subr.bf16.mxu0 %v1313
    %1661 = vmatpush1.bf16.msra.mxu0 %v1312
    %1662 = vmatprep.subr.bf16.mxu0 %v1322
    %1663 = vmatpush1.bf16.msra.mxu0 %v1321
    %1664 = vmatprep.subr.bf16.mxu0 %v1331
    %1665 = vmatpush1.bf16.msra.mxu0 %v1330
    %1666 = vmatprep.subr.bf16.mxu0 %v1340
    %1667 = vmatpush1.bf16.msra.mxu0 %v1339
    %1668 = vmatprep.mubr.bf16.mxu0 %v290
    %1669 = vmatmul.mubr.bf16.gmra.mrb[0].mxu0 %v289
    %v1670 = vpop.f32.mrb[0].mxu0
    %v1671 = vadd.f32 0.0, %v1670
    %v1672 = vpop.f32.mrb[0].mxu0
    %v1673 = vadd.f32 0.0, %v1672
    %v1674 = vpop.f32.mrb[0].mxu0
    %v1675 = vadd.f32 0.0, %v1674
    %v1676 = vpop.f32.mrb[0].mxu0
    %v1677 = vadd.f32 0.0, %v1676
    %1678 = vdwg.mxu0
    %1679 = vmatprep.subr.bf16.mxu0 %v1349
    %1680 = vmatpush1.bf16.msra.mxu0 %v1348
    %1681 = vmatprep.subr.bf16.mxu0 %v1358
    %1682 = vmatpush1.bf16.msra.mxu0 %v1357
    %1683 = vmatprep.subr.bf16.mxu0 %v1367
    %1684 = vmatpush1.bf16.msra.mxu0 %v1366
    %1685 = vmatprep.subr.bf16.mxu0 %v1376
    %1686 = vmatpush1.bf16.msra.mxu0 %v1375
    %1687 = vmatprep.subr.bf16.mxu0 %v1385
    %1688 = vmatpush1.bf16.msra.mxu0 %v1384
    %1689 = vmatprep.subr.bf16.mxu0 %v1394
    %1690 = vmatpush1.bf16.msra.mxu0 %v1393
    %1691 = vmatprep.subr.bf16.mxu0 %v1403
    %1692 = vmatpush1.bf16.msra.mxu0 %v1402
    %1693 = vmatprep.subr.bf16.mxu0 %v1412
    %1694 = vmatpush1.bf16.msra.mxu0 %v1411
    %1695 = vmatprep.subr.bf16.mxu0 0
    %1696 = vmatpush1.bf16.msra.mxu0 0
    %1697 = vmatprep.subr.bf16.mxu0 0
    %1698 = vmatpush1.bf16.msra.mxu0 0
    %1699 = vmatprep.subr.bf16.mxu0 0
    %1700 = vmatpush1.bf16.msra.mxu0 0
    %1701 = vmatprep.subr.bf16.mxu0 0
    %1702 = vmatpush1.bf16.msra.mxu0 0
    %1703 = vmatprep.subr.bf16.mxu0 0
    %1704 = vmatpush1.bf16.msra.mxu0 0
    %1705 = vmatprep.subr.bf16.mxu0 0
    %1706 = vmatpush1.bf16.msra.mxu0 0
    %1707 = vmatprep.subr.bf16.mxu0 0
    %1708 = vmatpush1.bf16.msra.mxu0 0
    %1709 = vmatprep.subr.bf16.mxu0 0
    %1710 = vmatpush1.bf16.msra.mxu0 0
    %1711 = vmatprep.mubr.bf16.mxu0 0
    %1712 = vmatmul.mubr.bf16.gmra.mrb[0].mxu0 %v291
    %v1713 = vpop.f32.mrb[0].mxu0
    %v1714 = vadd.f32 %v1671, %v1713
    %v1715 = vpop.f32.mrb[0].mxu0
    %v1716 = vadd.f32 %v1673, %v1715
    %v1717 = vpop.f32.mrb[0].mxu0
    %v1718 = vadd.f32 %v1675, %v1717
    %v1719 = vpop.f32.mrb[0].mxu0
    %v1720 = vadd.f32 %v1677, %v1719
    %1721 = vdwg.mxu0
    %1722 = vmatprep.subr.bf16.mxu0 %v1207
    %1723 = vmatpush1.bf16.msra.mxu0 %v1206
    %1724 = vmatprep.subr.bf16.mxu0 %v1216
    %1725 = vmatpush1.bf16.msra.mxu0 %v1215
    %1726 = vmatprep.subr.bf16.mxu0 %v1225
    %1727 = vmatpush1.bf16.msra.mxu0 %v1224
    %1728 = vmatprep.subr.bf16.mxu0 %v1234
    %1729 = vmatpush1.bf16.msra.mxu0 %v1233
    %1730 = vmatprep.subr.bf16.mxu0 %v1243
    %1731 = vmatpush1.bf16.msra.mxu0 %v1242
    %1732 = vmatprep.subr.bf16.mxu0 %v1252
    %1733 = vmatpush1.bf16.msra.mxu0 %v1251
    %1734 = vmatprep.subr.bf16.mxu0 %v1261
    %1735 = vmatpush1.bf16.msra.mxu0 %v1260
    %1736 = vmatprep.subr.bf16.mxu0 %v1270
    %1737 = vmatpush1.bf16.msra.mxu0 %v1269
    %1738 = vmatprep.subr.bf16.mxu0 %v1279
    %1739 = vmatpush1.bf16.msra.mxu0 %v1278
    %1740 = vmatprep.subr.bf16.mxu0 %v1288
    %1741 = vmatpush1.bf16.msra.mxu0 %v1287
    %1742 = vmatprep.subr.bf16.mxu0 %v1297
    %1743 = vmatpush1.bf16.msra.mxu0 %v1296
    %1744 = vmatprep.subr.bf16.mxu0 %v1306
    %1745 = vmatpush1.bf16.msra.mxu0 %v1305
    %1746 = vmatprep.subr.bf16.mxu0 %v1315
    %1747 = vmatpush1.bf16.msra.mxu0 %v1314
    %1748 = vmatprep.subr.bf16.mxu0 %v1324
    %1749 = vmatpush1.bf16.msra.mxu0 %v1323
    %1750 = vmatprep.subr.bf16.mxu0 %v1333
    %1751 = vmatpush1.bf16.msra.mxu0 %v1332
    %1752 = vmatprep.subr.bf16.mxu0 %v1342
    %1753 = vmatpush1.bf16.msra.mxu0 %v1341
    %1754 = vmatprep.mubr.bf16.mxu0 %v290
    %1755 = vmatmul.mubr.bf16.gmra.mrb[0].mxu0 %v289
    %v1756 = vpop.f32.mrb[0].mxu0
    %v1757 = vadd.f32 0.0, %v1756
    %v1758 = vpop.f32.mrb[0].mxu0
    %v1759 = vadd.f32 0.0, %v1758
    %v1760 = vpop.f32.mrb[0].mxu0
    %v1761 = vadd.f32 0.0, %v1760
    %v1762 = vpop.f32.mrb[0].mxu0
    %v1763 = vadd.f32 0.0, %v1762
    %1764 = vdwg.mxu0
    %1765 = vmatprep.subr.bf16.mxu0 %v1351
    %1766 = vmatpush1.bf16.msra.mxu0 %v1350
    %1767 = vmatprep.subr.bf16.mxu0 %v1360
    %1768 = vmatpush1.bf16.msra.mxu0 %v1359
    %1769 = vmatprep.subr.bf16.mxu0 %v1369
    %1770 = vmatpush1.bf16.msra.mxu0 %v1368
    %1771 = vmatprep.subr.bf16.mxu0 %v1378
    %1772 = vmatpush1.bf16.msra.mxu0 %v1377
    %1773 = vmatprep.subr.bf16.mxu0 %v1387
    %1774 = vmatpush1.bf16.msra.mxu0 %v1386
    %1775 = vmatprep.subr.bf16.mxu0 %v1396
    %1776 = vmatpush1.bf16.msra.mxu0 %v1395
    %1777 = vmatprep.subr.bf16.mxu0 %v1405
    %1778 = vmatpush1.bf16.msra.mxu0 %v1404
    %1779 = vmatprep.subr.bf16.mxu0 %v1414
    %1780 = vmatpush1.bf16.msra.mxu0 %v1413
    %1781 = vmatprep.subr.bf16.mxu0 0
    %1782 = vmatpush1.bf16.msra.mxu0 0
    %1783 = vmatprep.subr.bf16.mxu0 0
    %1784 = vmatpush1.bf16.msra.mxu0 0
    %1785 = vmatprep.subr.bf16.mxu0 0
    %1786 = vmatpush1.bf16.msra.mxu0 0
    %1787 = vmatprep.subr.bf16.mxu0 0
    %1788 = vmatpush1.bf16.msra.mxu0 0
    %1789 = vmatprep.subr.bf16.mxu0 0
    %1790 = vmatpush1.bf16.msra.mxu0 0
    %1791 = vmatprep.subr.bf16.mxu0 0
    %1792 = vmatpush1.bf16.msra.mxu0 0
    %1793 = vmatprep.subr.bf16.mxu0 0
    %1794 = vmatpush1.bf16.msra.mxu0 0
    %1795 = vmatprep.subr.bf16.mxu0 0
    %1796 = vmatpush1.bf16.msra.mxu0 0
    %1797 = vmatprep.mubr.bf16.mxu0 0
    %1798 = vmatmul.mubr.bf16.gmra.mrb[0].mxu0 %v291
    %v1799 = vpop.f32.mrb[0].mxu0
    %v1800 = vadd.f32 %v1757, %v1799
    %v1801 = vpop.f32.mrb[0].mxu0
    %v1802 = vadd.f32 %v1759, %v1801
    %v1803 = vpop.f32.mrb[0].mxu0
    %v1804 = vadd.f32 %v1761, %v1803
    %v1805 = vpop.f32.mrb[0].mxu0
    %v1806 = vadd.f32 %v1763, %v1805
    %1807 = vdwg.mxu0
    %1808 = vmatprep.subr.bf16.mxu0 %v1209
    %1809 = vmatpush1.bf16.msra.mxu0 %v1208
    %1810 = vmatprep.subr.bf16.mxu0 %v1218
    %1811 = vmatpush1.bf16.msra.mxu0 %v1217
    %1812 = vmatprep.subr.bf16.mxu0 %v1227
    %1813 = vmatpush1.bf16.msra.mxu0 %v1226
    %1814 = vmatprep.subr.bf16.mxu0 %v1236
    %1815 = vmatpush1.bf16.msra.mxu0 %v1235
    %1816 = vmatprep.subr.bf16.mxu0 %v1245
    %1817 = vmatpush1.bf16.msra.mxu0 %v1244
    %1818 = vmatprep.subr.bf16.mxu0 %v1254
    %1819 = vmatpush1.bf16.msra.mxu0 %v1253
    %1820 = vmatprep.subr.bf16.mxu0 %v1263
    %1821 = vmatpush1.bf16.msra.mxu0 %v1262
    %1822 = vmatprep.subr.bf16.mxu0 %v1272
    %1823 = vmatpush1.bf16.msra.mxu0 %v1271
    %1824 = vmatprep.subr.bf16.mxu0 %v1281
    %1825 = vmatpush1.bf16.msra.mxu0 %v1280
    %1826 = vmatprep.subr.bf16.mxu0 %v1290
    %1827 = vmatpush1.bf16.msra.mxu0 %v1289
    %1828 = vmatprep.subr.bf16.mxu0 %v1299
    %1829 = vmatpush1.bf16.msra.mxu0 %v1298
    %1830 = vmatprep.subr.bf16.mxu0 %v1308
    %1831 = vmatpush1.bf16.msra.mxu0 %v1307
    %1832 = vmatprep.subr.bf16.mxu0 %v1317
    %1833 = vmatpush1.bf16.msra.mxu0 %v1316
    %1834 = vmatprep.subr.bf16.mxu0 %v1326
    %1835 = vmatpush1.bf16.msra.mxu0 %v1325
    %1836 = vmatprep.subr.bf16.mxu0 %v1335
    %1837 = vmatpush1.bf16.msra.mxu0 %v1334
    %1838 = vmatprep.subr.bf16.mxu0 %v1344
    %1839 = vmatpush1.bf16.msra.mxu0 %v1343
    %1840 = vmatprep.mubr.bf16.mxu0 %v290
    %1841 = vmatmul.mubr.bf16.gmra.mrb[0].mxu0 %v289
    %v1842 = vpop.f32.mrb[0].mxu0
    %v1843 = vadd.f32 0.0, %v1842
    %v1844 = vpop.f32.mrb[0].mxu0
    %v1845 = vadd.f32 0.0, %v1844
    %v1846 = vpop.f32.mrb[0].mxu0
    %v1847 = vadd.f32 0.0, %v1846
    %v1848 = vpop.f32.mrb[0].mxu0
    %v1849 = vadd.f32 0.0, %v1848
    %1850 = vdwg.mxu0
    %1851 = vmatprep.subr.bf16.mxu0 %v1353
    %1852 = vmatpush1.bf16.msra.mxu0 %v1352
    %1853 = vmatprep.subr.bf16.mxu0 %v1362
    %1854 = vmatpush1.bf16.msra.mxu0 %v1361
    %1855 = vmatprep.subr.bf16.mxu0 %v1371
    %1856 = vmatpush1.bf16.msra.mxu0 %v1370
    %1857 = vmatprep.subr.bf16.mxu0 %v1380
    %1858 = vmatpush1.bf16.msra.mxu0 %v1379
    %1859 = vmatprep.subr.bf16.mxu0 %v1389
    %1860 = vmatpush1.bf16.msra.mxu0 %v1388
    %1861 = vmatprep.subr.bf16.mxu0 %v1398
    %1862 = vmatpush1.bf16.msra.mxu0 %v1397
    %1863 = vmatprep.subr.bf16.mxu0 %v1407
    %1864 = vmatpush1.bf16.msra.mxu0 %v1406
    %1865 = vmatprep.subr.bf16.mxu0 %v1416
    %1866 = vmatpush1.bf16.msra.mxu0 %v1415
    %1867 = vmatprep.subr.bf16.mxu0 0
    %1868 = vmatpush1.bf16.msra.mxu0 0
    %1869 = vmatprep.subr.bf16.mxu0 0
    %1870 = vmatpush1.bf16.msra.mxu0 0
    %1871 = vmatprep.subr.bf16.mxu0 0
    %1872 = vmatpush1.bf16.msra.mxu0 0
    %1873 = vmatprep.subr.bf16.mxu0 0
    %1874 = vmatpush1.bf16.msra.mxu0 0
    %1875 = vmatprep.subr.bf16.mxu0 0
    %1876 = vmatpush1.bf16.msra.mxu0 0
    %1877 = vmatprep.subr.bf16.mxu0 0
    %1878 = vmatpush1.bf16.msra.mxu0 0
    %1879 = vmatprep.subr.bf16.mxu0 0
    %1880 = vmatpush1.bf16.msra.mxu0 0
    %1881 = vmatprep.subr.bf16.mxu0 0
    %1882 = vmatpush1.bf16.msra.mxu0 0
    %1883 = vmatprep.mubr.bf16.mxu0 0
    %1884 = vmatmul.mubr.bf16.gmra.mrb[0].mxu0 %v291
    %v1885 = vpop.f32.mrb[0].mxu0
    %v1886 = vadd.f32 %v1843, %v1885
    %v1887 = vpop.f32.mrb[0].mxu0
    %v1888 = vadd.f32 %v1845, %v1887
    %v1889 = vpop.f32.mrb[0].mxu0
    %v1890 = vadd.f32 %v1847, %v1889
    %v1891 = vpop.f32.mrb[0].mxu0
    %v1892 = vadd.f32 %v1849, %v1891
    %1893 = vdwg.mxu0
    %1894 = vmatprep.subr.bf16.mxu0 %v1211
    %1895 = vmatpush1.bf16.msra.mxu0 %v1210
    %1896 = vmatprep.subr.bf16.mxu0 %v1220
    %1897 = vmatpush1.bf16.msra.mxu0 %v1219
    %1898 = vmatprep.subr.bf16.mxu0 %v1229
    %1899 = vmatpush1.bf16.msra.mxu0 %v1228
    %1900 = vmatprep.subr.bf16.mxu0 %v1238
    %1901 = vmatpush1.bf16.msra.mxu0 %v1237
    %1902 = vmatprep.subr.bf16.mxu0 %v1247
    %1903 = vmatpush1.bf16.msra.mxu0 %v1246
    %1904 = vmatprep.subr.bf16.mxu0 %v1256
    %1905 = vmatpush1.bf16.msra.mxu0 %v1255
    %1906 = vmatprep.subr.bf16.mxu0 %v1265
    %1907 = vmatpush1.bf16.msra.mxu0 %v1264
    %1908 = vmatprep.subr.bf16.mxu0 %v1274
    %1909 = vmatpush1.bf16.msra.mxu0 %v1273
    %1910 = vmatprep.subr.bf16.mxu0 %v1283
    %1911 = vmatpush1.bf16.msra.mxu0 %v1282
    %1912 = vmatprep.subr.bf16.mxu0 %v1292
    %1913 = vmatpush1.bf16.msra.mxu0 %v1291
    %1914 = vmatprep.subr.bf16.mxu0 %v1301
    %1915 = vmatpush1.bf16.msra.mxu0 %v1300
    %1916 = vmatprep.subr.bf16.mxu0 %v1310
    %1917 = vmatpush1.bf16.msra.mxu0 %v1309
    %1918 = vmatprep.subr.bf16.mxu0 %v1319
    %1919 = vmatpush1.bf16.msra.mxu0 %v1318
    %1920 = vmatprep.subr.bf16.mxu0 %v1328
    %1921 = vmatpush1.bf16.msra.mxu0 %v1327
    %1922 = vmatprep.subr.bf16.mxu0 %v1337
    %1923 = vmatpush1.bf16.msra.mxu0 %v1336
    %1924 = vmatprep.subr.bf16.mxu0 %v1346
    %1925 = vmatpush1.bf16.msra.mxu0 %v1345
    %1926 = vmatprep.mubr.bf16.mxu0 %v290
    %1927 = vmatmul.mubr.bf16.gmra.mrb[0].mxu0 %v289
    %v1928 = vpop.f32.mrb[0].mxu0
    %v1929 = vadd.f32 0.0, %v1928
    %v1930 = vpop.f32.mrb[0].mxu0
    %v1931 = vadd.f32 0.0, %v1930
    %v1932 = vpop.f32.mrb[0].mxu0
    %v1933 = vadd.f32 0.0, %v1932
    %v1934 = vpop.f32.mrb[0].mxu0
    %v1935 = vadd.f32 0.0, %v1934
    %1936 = vdwg.mxu0
    %1937 = vmatprep.subr.bf16.mxu0 %v1355
    %1938 = vmatpush1.bf16.msra.mxu0 %v1354
    %1939 = vmatprep.subr.bf16.mxu0 %v1364
    %1940 = vmatpush1.bf16.msra.mxu0 %v1363
    %1941 = vmatprep.subr.bf16.mxu0 %v1373
    %1942 = vmatpush1.bf16.msra.mxu0 %v1372
    %1943 = vmatprep.subr.bf16.mxu0 %v1382
    %1944 = vmatpush1.bf16.msra.mxu0 %v1381
    %1945 = vmatprep.subr.bf16.mxu0 %v1391
    %1946 = vmatpush1.bf16.msra.mxu0 %v1390
    %1947 = vmatprep.subr.bf16.mxu0 %v1400
    %1948 = vmatpush1.bf16.msra.mxu0 %v1399
    %1949 = vmatprep.subr.bf16.mxu0 %v1409
    %1950 = vmatpush1.bf16.msra.mxu0 %v1408
    %1951 = vmatprep.subr.bf16.mxu0 %v1418
    %1952 = vmatpush1.bf16.msra.mxu0 %v1417
    %1953 = vmatprep.subr.bf16.mxu0 0
    %1954 = vmatpush1.bf16.msra.mxu0 0
    %1955 = vmatprep.subr.bf16.mxu0 0
    %1956 = vmatpush1.bf16.msra.mxu0 0
    %1957 = vmatprep.subr.bf16.mxu0 0
    %1958 = vmatpush1.bf16.msra.mxu0 0
    %1959 = vmatprep.subr.bf16.mxu0 0
    %1960 = vmatpush1.bf16.msra.mxu0 0
    %1961 = vmatprep.subr.bf16.mxu0 0
    %1962 = vmatpush1.bf16.msra.mxu0 0
    %1963 = vmatprep.subr.bf16.mxu0 0
    %1964 = vmatpush1.bf16.msra.mxu0 0
    %1965 = vmatprep.subr.bf16.mxu0 0
    %1966 = vmatpush1.bf16.msra.mxu0 0
    %1967 = vmatprep.subr.bf16.mxu0 0
    %1968 = vmatpush1.bf16.msra.mxu0 0
    %1969 = vmatprep.mubr.bf16.mxu0 0
    %1970 = vmatmul.mubr.bf16.gmra.mrb[0].mxu0 %v291
    %v1971 = vpop.f32.mrb[0].mxu0
    %v1972 = vadd.f32 %v1929, %v1971
    %v1973 = vpop.f32.mrb[0].mxu0
    %v1974 = vadd.f32 %v1931, %v1973
    %v1975 = vpop.f32.mrb[0].mxu0
    %v1976 = vadd.f32 %v1933, %v1975
    %v1977 = vpop.f32.mrb[0].mxu0
    %v1978 = vadd.f32 %v1935, %v1977
    %1979 = vdwg.mxu0
    %1980 = vmatprep.subr.bf16.mxu0 0
    %1981 = vmatpush1.bf16.msra.mxu0 %v1212
    %1982 = vmatprep.subr.bf16.mxu0 0
    %1983 = vmatpush1.bf16.msra.mxu0 %v1221
    %1984 = vmatprep.subr.bf16.mxu0 0
    %1985 = vmatpush1.bf16.msra.mxu0 %v1230
    %1986 = vmatprep.subr.bf16.mxu0 0
    %1987 = vmatpush1.bf16.msra.mxu0 %v1239
    %1988 = vmatprep.subr.bf16.mxu0 0
    %1989 = vmatpush1.bf16.msra.mxu0 %v1248
    %1990 = vmatprep.subr.bf16.mxu0 0
    %1991 = vmatpush1.bf16.msra.mxu0 %v1257
    %1992 = vmatprep.subr.bf16.mxu0 0
    %1993 = vmatpush1.bf16.msra.mxu0 %v1266
    %1994 = vmatprep.subr.bf16.mxu0 0
    %1995 = vmatpush1.bf16.msra.mxu0 %v1275
    %1996 = vmatprep.subr.bf16.mxu0 0
    %1997 = vmatpush1.bf16.msra.mxu0 %v1284
    %1998 = vmatprep.subr.bf16.mxu0 0
    %1999 = vmatpush1.bf16.msra.mxu0 %v1293
    %2000 = vmatprep.subr.bf16.mxu0 0
    %2001 = vmatpush1.bf16.msra.mxu0 %v1302
    %2002 = vmatprep.subr.bf16.mxu0 0
    %2003 = vmatpush1.bf16.msra.mxu0 %v1311
    %2004 = vmatprep.subr.bf16.mxu0 0
    %2005 = vmatpush1.bf16.msra.mxu0 %v1320
    %2006 = vmatprep.subr.bf16.mxu0 0
    %2007 = vmatpush1.bf16.msra.mxu0 %v1329
    %2008 = vmatprep.subr.bf16.mxu0 0
    %2009 = vmatpush1.bf16.msra.mxu0 %v1338
    %2010 = vmatprep.subr.bf16.mxu0 0
    %2011 = vmatpush1.bf16.msra.mxu0 %v1347
    %2012 = vmatprep.mubr.bf16.mxu0 %v290
    %2013 = vmatmul.mubr.bf16.gmra.mrb[0].mxu0 %v289
    %v2014 = vpop.f32.mrb[0].mxu0
    %v2015 = vadd.f32 0.0, %v2014
    %v2016 = vpop.f32.mrb[0].mxu0
    %v2017 = vpop.f32.mrb[0].mxu0
    %v2018 = vadd.f32 0.0, %v2017
    %v2019 = vpop.f32.mrb[0].mxu0
    %2020 = vdwg.mxu0
    %2021 = vmatprep.subr.bf16.mxu0 0
    %2022 = vmatpush1.bf16.msra.mxu0 %v1356
    %2023 = vmatprep.subr.bf16.mxu0 0
    %2024 = vmatpush1.bf16.msra.mxu0 %v1365
    %2025 = vmatprep.subr.bf16.mxu0 0
    %2026 = vmatpush1.bf16.msra.mxu0 %v1374
    %2027 = vmatprep.subr.bf16.mxu0 0
    %2028 = vmatpush1.bf16.msra.mxu0 %v1383
    %2029 = vmatprep.subr.bf16.mxu0 0
    %2030 = vmatpush1.bf16.msra.mxu0 %v1392
    %2031 = vmatprep.subr.bf16.mxu0 0
    %2032 = vmatpush1.bf16.msra.mxu0 %v1401
    %2033 = vmatprep.subr.bf16.mxu0 0
    %2034 = vmatpush1.bf16.msra.mxu0 %v1410
    %2035 = vmatprep.subr.bf16.mxu0 0
    %2036 = vmatpush1.bf16.msra.mxu0 %v1419
    %2037 = vmatprep.subr.bf16.mxu0 0
    %2038 = vmatpush1.bf16.msra.mxu0 0
    %2039 = vmatprep.subr.bf16.mxu0 0
    %2040 = vmatpush1.bf16.msra.mxu0 0
    %2041 = vmatprep.subr.bf16.mxu0 0
    %2042 = vmatpush1.bf16.msra.mxu0 0
    %2043 = vmatprep.subr.bf16.mxu0 0
    %2044 = vmatpush1.bf16.msra.mxu0 0
    %2045 = vmatprep.subr.bf16.mxu0 0
    %2046 = vmatpush1.bf16.msra.mxu0 0
    %2047 = vmatprep.subr.bf16.mxu0 0
    %2048 = vmatpush1.bf16.msra.mxu0 0
    %2049 = vmatprep.subr.bf16.mxu0 0
    %2050 = vmatpush1.bf16.msra.mxu0 0
    %2051 = vmatprep.subr.bf16.mxu0 0
    %2052 = vmatpush1.bf16.msra.mxu0 0
    %2053 = vmatprep.mubr.bf16.mxu0 0
    %2054 = vmatmul.mubr.bf16.gmra.mrb[0].mxu0 %v291
    %v2055 = vpop.f32.mrb[0].mxu0
    %v2056 = vadd.f32 %v2015, %v2055
    %v2057 = vpop.f32.mrb[0].mxu0
    %v2058 = vpop.f32.mrb[0].mxu0
    %v2059 = vadd.f32 %v2018, %v2058
    %v2060 = vpop.f32.mrb[0].mxu0
    %2061 = vdwg.mxu0
    %v2062 = vlaneseq
    %v2063 = vshrl.u32 %v2062, 7
    %v2064 = vlaneseq
    %v2065 = vand.u32 %v2064, 127
    %vm2066 = vcmp.ge.s32.totalorder %v2063, %v2065
    %v2067 = vmul.f32 %v1714, 0.05103104
    %v2068 = vpack.c.bf16 %v2067, %v2067
    %v2069 = vpack.c.bf16 %v1802, %v1802
    %vm2070 = vcmask 523264
    %v2072 = vsel %vm2070, %v2068, 0
    %v2075 = vsel %vm2070, %v2069, 0
    %2077 = vmatprep.subr.bf16.mxu0 0
    %2078 = vmatpush1.bf16.xpose.msra.mxu0 %v2075
    %2079 = vmatprep.subr.bf16.mxu0 0
    %2080 = vmatpush1.bf16.xpose.msra.mxu0 0
    %2081 = vmatprep.subr.bf16.mxu0 0
    %2082 = vmatpush1.bf16.xpose.msra.mxu0 0
    %2083 = vmatprep.subr.bf16.mxu0 0
    %2084 = vmatpush1.bf16.xpose.msra.mxu0 0
    %2085 = vmatprep.subr.bf16.mxu0 0
    %2086 = vmatpush1.bf16.xpose.msra.mxu0 0
    %2087 = vmatprep.subr.bf16.mxu0 0
    %2088 = vmatpush1.bf16.xpose.msra.mxu0 0
    %2089 = vmatprep.subr.bf16.mxu0 0
    %2090 = vmatpush1.bf16.xpose.msra.mxu0 0
    %2091 = vmatprep.subr.bf16.mxu0 0
    %2092 = vmatpush1.bf16.xpose.msra.mxu0 0
    %2093 = vmatprep.subr.bf16.mxu0 0
    %2094 = vmatpush1.bf16.xpose.msra.mxu0 0
    %2095 = vmatprep.subr.bf16.mxu0 0
    %2096 = vmatpush1.bf16.xpose.msra.mxu0 0
    %2097 = vmatprep.subr.bf16.mxu0 0
    %2098 = vmatpush1.bf16.xpose.msra.mxu0 0
    %2099 = vmatprep.subr.bf16.mxu0 0
    %2100 = vmatpush1.bf16.xpose.msra.mxu0 0
    %2101 = vmatprep.subr.bf16.mxu0 0
    %2102 = vmatpush1.bf16.xpose.msra.mxu0 0
    %2103 = vmatprep.subr.bf16.mxu0 0
    %2104 = vmatpush1.bf16.xpose.msra.mxu0 0
    %2105 = vmatprep.subr.bf16.mxu0 0
    %2106 = vmatpush1.bf16.xpose.msra.mxu0 0
    %2107 = vmatprep.subr.bf16.mxu0 0
    %2108 = vmatpush1.bf16.xpose.msra.mxu0 0
    %2109 = vmatprep.mubr.bf16.mxu0 0
    %2110 = vmatmul.mubr.bf16.gmra.mrb[0].mxu0 %v2072
    %v2111 = vpop.f32.mrb[0].mxu0
    %v2112 = vadd.f32 0.0, %v2111
    %v2113 = vpop.f32.mrb[0].mxu0
    %v2114 = vpop.f32.mrb[0].mxu0
    %v2115 = vpop.f32.mrb[0].mxu0
    %2116 = vdwg.mxu0
    %v2117 = vsel %vm2066, %v2112, -1e+30
    %vm2118 = vcmask 64512
    %v2119 = vsel %vm2118, %v2117, -inf
    %2120 = vmax.xlane.f32.xlu0 %v2119
    %v2121 = vpop.xlane.xlu0 %2120
    %v2122 = vsub.f32 %v2117, %v2121
    %v2123 = vmul.f32 %v2122, 1.442695
    %v2124 = vpow.pop %v2123
    %v2125 = vsel %vm2118, %v2124, 0.0
    %2126 = vadd.xlane.f32.xlu0 %v2125
    %v2127 = vpop.xlane.xlu0 %2126
    %v2128 = vpack.c.bf16 %v2124, %v2124
    %v2129 = vpack.c.bf16 %v1972, %v1972
    %v2131 = vsel %vm2118, %v2128, 0
    %vm2133 = vcmask 1043456
    %v2135 = vsel %vm2133, %v2129, 0
    %2137 = vmatprep.subr.bf16.mxu0 0
    %2138 = vmatpush1.bf16.msra.mxu0 %v2135
    %2139 = vmatprep.subr.bf16.mxu0 0
    %2140 = vmatpush1.bf16.msra.mxu0 0
    %2141 = vmatprep.subr.bf16.mxu0 0
    %2142 = vmatpush1.bf16.msra.mxu0 0
    %2143 = vmatprep.subr.bf16.mxu0 0
    %2144 = vmatpush1.bf16.msra.mxu0 0
    %2145 = vmatprep.subr.bf16.mxu0 0
    %2146 = vmatpush1.bf16.msra.mxu0 0
    %2147 = vmatprep.subr.bf16.mxu0 0
    %2148 = vmatpush1.bf16.msra.mxu0 0
    %2149 = vmatprep.subr.bf16.mxu0 0
    %2150 = vmatpush1.bf16.msra.mxu0 0
    %2151 = vmatprep.subr.bf16.mxu0 0
    %2152 = vmatpush1.bf16.msra.mxu0 0
    %2153 = vmatprep.subr.bf16.mxu0 0
    %2154 = vmatpush1.bf16.msra.mxu0 0
    %2155 = vmatprep.subr.bf16.mxu0 0
    %2156 = vmatpush1.bf16.msra.mxu0 0
    %2157 = vmatprep.subr.bf16.mxu0 0
    %2158 = vmatpush1.bf16.msra.mxu0 0
    %2159 = vmatprep.subr.bf16.mxu0 0
    %2160 = vmatpush1.bf16.msra.mxu0 0
    %2161 = vmatprep.subr.bf16.mxu0 0
    %2162 = vmatpush1.bf16.msra.mxu0 0
    %2163 = vmatprep.subr.bf16.mxu0 0
    %2164 = vmatpush1.bf16.msra.mxu0 0
    %2165 = vmatprep.subr.bf16.mxu0 0
    %2166 = vmatpush1.bf16.msra.mxu0 0
    %2167 = vmatprep.subr.bf16.mxu0 0
    %2168 = vmatpush1.bf16.msra.mxu0 0
    %2169 = vmatprep.mubr.bf16.mxu0 0
    %2170 = vmatmul.mubr.bf16.gmra.mrb[0].mxu0 %v2131
    %v2171 = vpop.f32.mrb[0].mxu0
    %v2172 = vadd.f32 0.0, %v2171
    %v2173 = vpop.f32.mrb[0].mxu0
    %v2174 = vpop.f32.mrb[0].mxu0
    %v2175 = vpop.f32.mrb[0].mxu0
    %2176 = vdwg.mxu0
    %v2177 = vrcp.pop %v2127
    %v2178 = vmul.f32 %v2172, %v2177
    %v2179 = vpack.c.bf16 %v2178, %v2178
    %vm2180 = vcmask 519168
    %2181 = vst.msk [vmem:[#allocation2] sm:$0xf] %vm2180, %v2179
    %2183 = vrot.lane.b32.xlu0 %v2068, 64
    %v2184 = vpop.permute.xlu0 %2183
    %2186 = vrot.lane.b32.xlu0 %v2069, 64
    %v2187 = vpop.permute.xlu0 %2186
    %v2189 = vsel %vm2070, %v2184, 0
    %v2192 = vsel %vm2070, %v2187, 0
    %2194 = vmatprep.subr.bf16.mxu0 0
    %2195 = vmatpush1.bf16.xpose.msra.mxu0 %v2192
    %2196 = vmatprep.subr.bf16.mxu0 0
    %2197 = vmatpush1.bf16.xpose.msra.mxu0 0
    %2198 = vmatprep.subr.bf16.mxu0 0
    %2199 = vmatpush1.bf16.xpose.msra.mxu0 0
    %2200 = vmatprep.subr.bf16.mxu0 0
    %2201 = vmatpush1.bf16.xpose.msra.mxu0 0
    %2202 = vmatprep.subr.bf16.mxu0 0
    %2203 = vmatpush1.bf16.xpose.msra.mxu0 0
    %2204 = vmatprep.subr.bf16.mxu0 0
    %2205 = vmatpush1.bf16.xpose.msra.mxu0 0
    %2206 = vmatprep.subr.bf16.mxu0 0
    %2207 = vmatpush1.bf16.xpose.msra.mxu0 0
    %2208 = vmatprep.subr.bf16.mxu0 0
    %2209 = vmatpush1.bf16.xpose.msra.mxu0 0
    %2210 = vmatprep.subr.bf16.mxu0 0
    %2211 = vmatpush1.bf16.xpose.msra.mxu0 0
    %2212 = vmatprep.subr.bf16.mxu0 0
    %2213 = vmatpush1.bf16.xpose.msra.mxu0 0
    %2214 = vmatprep.subr.bf16.mxu0 0
    %2215 = vmatpush1.bf16.xpose.msra.mxu0 0
    %2216 = vmatprep.subr.bf16.mxu0 0
    %2217 = vmatpush1.bf16.xpose.msra.mxu0 0
    %2218 = vmatprep.subr.bf16.mxu0 0
    %2219 = vmatpush1.bf16.xpose.msra.mxu0 0
    %2220 = vmatprep.subr.bf16.mxu0 0
    %2221 = vmatpush1.bf16.xpose.msra.mxu0 0
    %2222 = vmatprep.subr.bf16.mxu0 0
    %2223 = vmatpush1.bf16.xpose.msra.mxu0 0
    %2224 = vmatprep.subr.bf16.mxu0 0
    %2225 = vmatpush1.bf16.xpose.msra.mxu0 0
    %2226 = vmatprep.mubr.bf16.mxu0 0
    %2227 = vmatmul.mubr.bf16.gmra.mrb[0].mxu0 %v2189
    %v2228 = vpop.f32.mrb[0].mxu0
    %v2229 = vadd.f32 0.0, %v2228
    %v2230 = vpop.f32.mrb[0].mxu0
    %v2231 = vpop.f32.mrb[0].mxu0
    %v2232 = vpop.f32.mrb[0].mxu0
    %2233 = vdwg.mxu0
    %v2234 = vsel %vm2066, %v2229, -1e+30
    %v2235 = vsel %vm2118, %v2234, -inf
    %2236 = vmax.xlane.f32.xlu0 %v2235
    %v2237 = vpop.xlane.xlu0 %2236
    %v2238 = vsub.f32 %v2234, %v2237
    %v2239 = vmul.f32 %v2238, 1.442695
    %v2240 = vpow.pop %v2239
    %v2241 = vsel %vm2118, %v2240, 0.0
    %2242 = vadd.xlane.f32.xlu0 %v2241
    %v2243 = vpop.xlane.xlu0 %2242
    %v2244 = vpack.c.bf16 %v2240, %v2240
    %2246 = vrot.lane.b32.xlu0 %v2129, 64
    %v2247 = vpop.permute.xlu0 %2246
    %v2249 = vsel %vm2118, %v2244, 0
    %v2252 = vsel %vm2133, %v2247, 0
    %2254 = vmatprep.subr.bf16.mxu0 0
    %2255 = vmatpush1.bf16.msra.mxu0 %v2252
    %2256 = vmatprep.subr.bf16.mxu0 0
    %2257 = vmatpush1.bf16.msra.mxu0 0
    %2258 = vmatprep.subr.bf16.mxu0 0
    %2259 = vmatpush1.bf16.msra.mxu0 0
    %2260 = vmatprep.subr.bf16.mxu0 0
    %2261 = vmatpush1.bf16.msra.mxu0 0
    %2262 = vmatprep.subr.bf16.mxu0 0
    %2263 = vmatpush1.bf16.msra.mxu0 0
    %2264 = vmatprep.subr.bf16.mxu0 0
    %2265 = vmatpush1.bf16.msra.mxu0 0
    %2266 = vmatprep.subr.bf16.mxu0 0
    %2267 = vmatpush1.bf16.msra.mxu0 0
    %2268 = vmatprep.subr.bf16.mxu0 0
    %2269 = vmatpush1.bf16.msra.mxu0 0
    %2270 = vmatprep.subr.bf16.mxu0 0
    %2271 = vmatpush1.bf16.msra.mxu0 0
    %2272 = vmatprep.subr.bf16.mxu0 0
    %2273 = vmatpush1.bf16.msra.mxu0 0
    %2274 = vmatprep.subr.bf16.mxu0 0
    %2275 = vmatpush1.bf16.msra.mxu0 0
    %2276 = vmatprep.subr.bf16.mxu0 0
    %2277 = vmatpush1.bf16.msra.mxu0 0
    %2278 = vmatprep.subr.bf16.mxu0 0
    %2279 = vmatpush1.bf16.msra.mxu0 0
    %2280 = vmatprep.subr.bf16.mxu0 0
    %2281 = vmatpush1.bf16.msra.mxu0 0
    %2282 = vmatprep.subr.bf16.mxu0 0
    %2283 = vmatpush1.bf16.msra.mxu0 0
    %2284 = vmatprep.subr.bf16.mxu0 0
    %2285 = vmatpush1.bf16.msra.mxu0 0
    %2286 = vmatprep.mubr.bf16.mxu0 0
    %2287 = vmatmul.mubr.bf16.gmra.mrb[0].mxu0 %v2249
    %v2288 = vpop.f32.mrb[0].mxu0
    %v2289 = vadd.f32 0.0, %v2288
    %v2290 = vpop.f32.mrb[0].mxu0
    %v2291 = vpop.f32.mrb[0].mxu0
    %v2292 = vpop.f32.mrb[0].mxu0
    %2293 = vdwg.mxu0
    %v2294 = vrcp.pop %v2243
    %v2295 = vmul.f32 %v2289, %v2294
    %v2296 = vpack.c.bf16 %v2295, %v2295
    %v2298 = vunpack.c.l.b16 %v2296
    %v2299 = vpack.c.b16 %v2298, %v2298
    %2300 = vrot.lane.b32.xlu0 %v2299, 64
    %v2301 = vpop.permute.xlu0 %2300
    %vm2303 = vcmask 1043968
    %2304 = vst.msk [vmem:[#allocation2] sm:$0xf] %vm2303, %v2301
    %v2305 = vmul.f32 %v1716, 0.05103104
    %v2306 = vpack.c.bf16 %v2305, %v2305
    %v2307 = vpack.c.bf16 %v1886, %v1886
    %v2309 = vsel %vm2070, %v2306, 0
    %v2312 = vsel %vm2070, %v2307, 0
    %2314 = vmatprep.subr.bf16.mxu0 0
    %2315 = vmatpush1.bf16.xpose.msra.mxu0 %v2312
    %2316 = vmatprep.subr.bf16.mxu0 0
    %2317 = vmatpush1.bf16.xpose.msra.mxu0 0
    %2318 = vmatprep.subr.bf16.mxu0 0
    %2319 = vmatpush1.bf16.xpose.msra.mxu0 0
    %2320 = vmatprep.subr.bf16.mxu0 0
    %2321 = vmatpush1.bf16.xpose.msra.mxu0 0
    %2322 = vmatprep.subr.bf16.mxu0 0
    %2323 = vmatpush1.bf16.xpose.msra.mxu0 0
    %2324 = vmatprep.subr.bf16.mxu0 0
    %2325 = vmatpush1.bf16.xpose.msra.mxu0 0
    %2326 = vmatprep.subr.bf16.mxu0 0
    %2327 = vmatpush1.bf16.xpose.msra.mxu0 0
    %2328 = vmatprep.subr.bf16.mxu0 0
    %2329 = vmatpush1.bf16.xpose.msra.mxu0 0
    %2330 = vmatprep.subr.bf16.mxu0 0
    %2331 = vmatpush1.bf16.xpose.msra.mxu0 0
    %2332 = vmatprep.subr.bf16.mxu0 0
    %2333 = vmatpush1.bf16.xpose.msra.mxu0 0
    %2334 = vmatprep.subr.bf16.mxu0 0
    %2335 = vmatpush1.bf16.xpose.msra.mxu0 0
    %2336 = vmatprep.subr.bf16.mxu0 0
    %2337 = vmatpush1.bf16.xpose.msra.mxu0 0
    %2338 = vmatprep.subr.bf16.mxu0 0
    %2339 = vmatpush1.bf16.xpose.msra.mxu0 0
    %2340 = vmatprep.subr.bf16.mxu0 0
    %2341 = vmatpush1.bf16.xpose.msra.mxu0 0
    %2342 = vmatprep.subr.bf16.mxu0 0
    %2343 = vmatpush1.bf16.xpose.msra.mxu0 0
    %2344 = vmatprep.subr.bf16.mxu0 0
    %2345 = vmatpush1.bf16.xpose.msra.mxu0 0
    %2346 = vmatprep.mubr.bf16.mxu0 0
    %2347 = vmatmul.mubr.bf16.gmra.mrb[0].mxu0 %v2309
    %v2348 = vpop.f32.mrb[0].mxu0
    %v2349 = vadd.f32 0.0, %v2348
    %v2350 = vpop.f32.mrb[0].mxu0
    %v2351 = vpop.f32.mrb[0].mxu0
    %v2352 = vpop.f32.mrb[0].mxu0
    %2353 = vdwg.mxu0
    %v2354 = vsel %vm2066, %v2349, -1e+30
    %v2355 = vsel %vm2118, %v2354, -inf
    %2356 = vmax.xlane.f32.xlu0 %v2355
    %v2357 = vpop.xlane.xlu0 %2356
    %v2358 = vsub.f32 %v2354, %v2357
    %v2359 = vmul.f32 %v2358, 1.442695
    %v2360 = vpow.pop %v2359
    %v2361 = vsel %vm2118, %v2360, 0.0
    %2362 = vadd.xlane.f32.xlu0 %v2361
    %v2363 = vpop.xlane.xlu0 %2362
    %v2364 = vpack.c.bf16 %v2360, %v2360
    %v2365 = vpack.c.bf16 %v1974, %v1974
    %v2367 = vsel %vm2118, %v2364, 0
    %v2370 = vsel %vm2133, %v2365, 0
    %2372 = vmatprep.subr.bf16.mxu0 0
    %2373 = vmatpush1.bf16.msra.mxu0 %v2370
    %2374 = vmatprep.subr.bf16.mxu0 0
    %2375 = vmatpush1.bf16.msra.mxu0 0
    %2376 = vmatprep.subr.bf16.mxu0 0
    %2377 = vmatpush1.bf16.msra.mxu0 0
    %2378 = vmatprep.subr.bf16.mxu0 0
    %2379 = vmatpush1.bf16.msra.mxu0 0
    %2380 = vmatprep.subr.bf16.mxu0 0
    %2381 = vmatpush1.bf16.msra.mxu0 0
    %2382 = vmatprep.subr.bf16.mxu0 0
    %2383 = vmatpush1.bf16.msra.mxu0 0
    %2384 = vmatprep.subr.bf16.mxu0 0
    %2385 = vmatpush1.bf16.msra.mxu0 0
    %2386 = vmatprep.subr.bf16.mxu0 0
    %2387 = vmatpush1.bf16.msra.mxu0 0
    %2388 = vmatprep.subr.bf16.mxu0 0
    %2389 = vmatpush1.bf16.msra.mxu0 0
    %2390 = vmatprep.subr.bf16.mxu0 0
    %2391 = vmatpush1.bf16.msra.mxu0 0
    %2392 = vmatprep.subr.bf16.mxu0 0
    %2393 = vmatpush1.bf16.msra.mxu0 0
    %2394 = vmatprep.subr.bf16.mxu0 0
    %2395 = vmatpush1.bf16.msra.mxu0 0
    %2396 = vmatprep.subr.bf16.mxu0 0
    %2397 = vmatpush1.bf16.msra.mxu0 0
    %2398 = vmatprep.subr.bf16.mxu0 0
    %2399 = vmatpush1.bf16.msra.mxu0 0
    %2400 = vmatprep.subr.bf16.mxu0 0
    %2401 = vmatpush1.bf16.msra.mxu0 0
    %2402 = vmatprep.subr.bf16.mxu0 0
    %2403 = vmatpush1.bf16.msra.mxu0 0
    %2404 = vmatprep.mubr.bf16.mxu0 0
    %2405 = vmatmul.mubr.bf16.gmra.mrb[0].mxu0 %v2367
    %v2406 = vpop.f32.mrb[0].mxu0
    %v2407 = vadd.f32 0.0, %v2406
    %v2408 = vpop.f32.mrb[0].mxu0
    %v2409 = vpop.f32.mrb[0].mxu0
    %v2410 = vpop.f32.mrb[0].mxu0
    %2411 = vdwg.mxu0
    %v2412 = vrcp.pop %v2363
    %v2413 = vmul.f32 %v2407, %v2412
    %v2414 = vpack.c.bf16 %v2413, %v2413
    %2415 = vst.msk [vmem:[#allocation2 + $0x4] sm:$0xf] %vm2180, %v2414
    %2417 = vrot.lane.b32.xlu0 %v2306, 64
    %v2418 = vpop.permute.xlu0 %2417
    %2420 = vrot.lane.b32.xlu0 %v2307, 64
    %v2421 = vpop.permute.xlu0 %2420
    %v2423 = vsel %vm2070, %v2418, 0
    %v2426 = vsel %vm2070, %v2421, 0
    %2428 = vmatprep.subr.bf16.mxu0 0
    %2429 = vmatpush1.bf16.xpose.msra.mxu0 %v2426
    %2430 = vmatprep.subr.bf16.mxu0 0
    %2431 = vmatpush1.bf16.xpose.msra.mxu0 0
    %2432 = vmatprep.subr.bf16.mxu0 0
    %2433 = vmatpush1.bf16.xpose.msra.mxu0 0
    %2434 = vmatprep.subr.bf16.mxu0 0
    %2435 = vmatpush1.bf16.xpose.msra.mxu0 0
    %2436 = vmatprep.subr.bf16.mxu0 0
    %2437 = vmatpush1.bf16.xpose.msra.mxu0 0
    %2438 = vmatprep.subr.bf16.mxu0 0
    %2439 = vmatpush1.bf16.xpose.msra.mxu0 0
    %2440 = vmatprep.subr.bf16.mxu0 0
    %2441 = vmatpush1.bf16.xpose.msra.mxu0 0
    %2442 = vmatprep.subr.bf16.mxu0 0
    %2443 = vmatpush1.bf16.xpose.msra.mxu0 0
    %2444 = vmatprep.subr.bf16.mxu0 0
    %2445 = vmatpush1.bf16.xpose.msra.mxu0 0
    %2446 = vmatprep.subr.bf16.mxu0 0
    %2447 = vmatpush1.bf16.xpose.msra.mxu0 0
    %2448 = vmatprep.subr.bf16.mxu0 0
    %2449 = vmatpush1.bf16.xpose.msra.mxu0 0
    %2450 = vmatprep.subr.bf16.mxu0 0
    %2451 = vmatpush1.bf16.xpose.msra.mxu0 0
    %2452 = vmatprep.subr.bf16.mxu0 0
    %2453 = vmatpush1.bf16.xpose.msra.mxu0 0
    %2454 = vmatprep.subr.bf16.mxu0 0
    %2455 = vmatpush1.bf16.xpose.msra.mxu0 0
    %2456 = vmatprep.subr.bf16.mxu0 0
    %2457 = vmatpush1.bf16.xpose.msra.mxu0 0
    %2458 = vmatprep.subr.bf16.mxu0 0
    %2459 = vmatpush1.bf16.xpose.msra.mxu0 0
    %2460 = vmatprep.mubr.bf16.mxu0 0
    %2461 = vmatmul.mubr.bf16.gmra.mrb[0].mxu0 %v2423
    %v2462 = vpop.f32.mrb[0].mxu0
    %v2463 = vadd.f32 0.0, %v2462
    %v2464 = vpop.f32.mrb[0].mxu0
    %v2465 = vpop.f32.mrb[0].mxu0
    %v2466 = vpop.f32.mrb[0].mxu0
    %2467 = vdwg.mxu0
    %v2468 = vsel %vm2066, %v2463, -1e+30
    %v2469 = vsel %vm2118, %v2468, -inf
    %2470 = vmax.xlane.f32.xlu0 %v2469
    %v2471 = vpop.xlane.xlu0 %2470
    %v2472 = vsub.f32 %v2468, %v2471
    %v2473 = vmul.f32 %v2472, 1.442695
    %v2474 = vpow.pop %v2473
    %v2475 = vsel %vm2118, %v2474, 0.0
    %2476 = vadd.xlane.f32.xlu0 %v2475
    %v2477 = vpop.xlane.xlu0 %2476
    %v2478 = vpack.c.bf16 %v2474, %v2474
    %2480 = vrot.lane.b32.xlu0 %v2365, 64
    %v2481 = vpop.permute.xlu0 %2480
    %v2483 = vsel %vm2118, %v2478, 0
    %v2486 = vsel %vm2133, %v2481, 0
    %2488 = vmatprep.subr.bf16.mxu0 0
    %2489 = vmatpush1.bf16.msra.mxu0 %v2486
    %2490 = vmatprep.subr.bf16.mxu0 0
    %2491 = vmatpush1.bf16.msra.mxu0 0
    %2492 = vmatprep.subr.bf16.mxu0 0
    %2493 = vmatpush1.bf16.msra.mxu0 0
    %2494 = vmatprep.subr.bf16.mxu0 0
    %2495 = vmatpush1.bf16.msra.mxu0 0
    %2496 = vmatprep.subr.bf16.mxu0 0
    %2497 = vmatpush1.bf16.msra.mxu0 0
    %2498 = vmatprep.subr.bf16.mxu0 0
    %2499 = vmatpush1.bf16.msra.mxu0 0
    %2500 = vmatprep.subr.bf16.mxu0 0
    %2501 = vmatpush1.bf16.msra.mxu0 0
    %2502 = vmatprep.subr.bf16.mxu0 0
    %2503 = vmatpush1.bf16.msra.mxu0 0
    %2504 = vmatprep.subr.bf16.mxu0 0
    %2505 = vmatpush1.bf16.msra.mxu0 0
    %2506 = vmatprep.subr.bf16.mxu0 0
    %2507 = vmatpush1.bf16.msra.mxu0 0
    %2508 = vmatprep.subr.bf16.mxu0 0
    %2509 = vmatpush1.bf16.msra.mxu0 0
    %2510 = vmatprep.subr.bf16.mxu0 0
    %2511 = vmatpush1.bf16.msra.mxu0 0
    %2512 = vmatprep.subr.bf16.mxu0 0
    %2513 = vmatpush1.bf16.msra.mxu0 0
    %2514 = vmatprep.subr.bf16.mxu0 0
    %2515 = vmatpush1.bf16.msra.mxu0 0
    %2516 = vmatprep.subr.bf16.mxu0 0
    %2517 = vmatpush1.bf16.msra.mxu0 0
    %2518 = vmatprep.subr.bf16.mxu0 0
    %2519 = vmatpush1.bf16.msra.mxu0 0
    %2520 = vmatprep.mubr.bf16.mxu0 0
    %2521 = vmatmul.mubr.bf16.gmra.mrb[0].mxu0 %v2483
    %v2522 = vpop.f32.mrb[0].mxu0
    %v2523 = vadd.f32 0.0, %v2522
    %v2524 = vpop.f32.mrb[0].mxu0
    %v2525 = vpop.f32.mrb[0].mxu0
    %v2526 = vpop.f32.mrb[0].mxu0
    %2527 = vdwg.mxu0
    %v2528 = vrcp.pop %v2477
    %v2529 = vmul.f32 %v2523, %v2528
    %v2530 = vpack.c.bf16 %v2529, %v2529
    %v2532 = vunpack.c.l.b16 %v2530
    %v2533 = vpack.c.b16 %v2532, %v2532
    %2534 = vrot.lane.b32.xlu0 %v2533, 64
    %v2535 = vpop.permute.xlu0 %2534
    %2537 = vst.msk [vmem:[#allocation2 + $0x4] sm:$0xf] %vm2303, %v2535
    %v2538 = vmul.f32 %v1800, 0.05103104
    %v2539 = vpack.c.bf16 %v2538, %v2538
    %v2540 = vpack.c.bf16 %v1888, %v1888
    %v2542 = vsel %vm2070, %v2539, 0
    %v2545 = vsel %vm2070, %v2540, 0
    %2547 = vmatprep.subr.bf16.mxu0 0
    %2548 = vmatpush1.bf16.xpose.msra.mxu0 %v2545
    %2549 = vmatprep.subr.bf16.mxu0 0
    %2550 = vmatpush1.bf16.xpose.msra.mxu0 0
    %2551 = vmatprep.subr.bf16.mxu0 0
    %2552 = vmatpush1.bf16.xpose.msra.mxu0 0
    %2553 = vmatprep.subr.bf16.mxu0 0
    %2554 = vmatpush1.bf16.xpose.msra.mxu0 0
    %2555 = vmatprep.subr.bf16.mxu0 0
    %2556 = vmatpush1.bf16.xpose.msra.mxu0 0
    %2557 = vmatprep.subr.bf16.mxu0 0
    %2558 = vmatpush1.bf16.xpose.msra.mxu0 0
    %2559 = vmatprep.subr.bf16.mxu0 0
    %2560 = vmatpush1.bf16.xpose.msra.mxu0 0
    %2561 = vmatprep.subr.bf16.mxu0 0
    %2562 = vmatpush1.bf16.xpose.msra.mxu0 0
    %2563 = vmatprep.subr.bf16.mxu0 0
    %2564 = vmatpush1.bf16.xpose.msra.mxu0 0
    %2565 = vmatprep.subr.bf16.mxu0 0
    %2566 = vmatpush1.bf16.xpose.msra.mxu0 0
    %2567 = vmatprep.subr.bf16.mxu0 0
    %2568 = vmatpush1.bf16.xpose.msra.mxu0 0
    %2569 = vmatprep.subr.bf16.mxu0 0
    %2570 = vmatpush1.bf16.xpose.msra.mxu0 0
    %2571 = vmatprep.subr.bf16.mxu0 0
    %2572 = vmatpush1.bf16.xpose.msra.mxu0 0
    %2573 = vmatprep.subr.bf16.mxu0 0
    %2574 = vmatpush1.bf16.xpose.msra.mxu0 0
    %2575 = vmatprep.subr.bf16.mxu0 0
    %2576 = vmatpush1.bf16.xpose.msra.mxu0 0
    %2577 = vmatprep.subr.bf16.mxu0 0
    %2578 = vmatpush1.bf16.xpose.msra.mxu0 0
    %2579 = vmatprep.mubr.bf16.mxu0 0
    %2580 = vmatmul.mubr.bf16.gmra.mrb[0].mxu0 %v2542
    %v2581 = vpop.f32.mrb[0].mxu0
    %v2582 = vadd.f32 0.0, %v2581
    %v2583 = vpop.f32.mrb[0].mxu0
    %v2584 = vpop.f32.mrb[0].mxu0
    %v2585 = vpop.f32.mrb[0].mxu0
    %2586 = vdwg.mxu0
    %v2587 = vsel %vm2066, %v2582, -1e+30
    %v2588 = vsel %vm2118, %v2587, -inf
    %2589 = vmax.xlane.f32.xlu0 %v2588
    %v2590 = vpop.xlane.xlu0 %2589
    %v2591 = vsub.f32 %v2587, %v2590
    %v2592 = vmul.f32 %v2591, 1.442695
    %v2593 = vpow.pop %v2592
    %v2594 = vsel %vm2118, %v2593, 0.0
    %2595 = vadd.xlane.f32.xlu0 %v2594
    %v2596 = vpop.xlane.xlu0 %2595
    %v2597 = vpack.c.bf16 %v2593, %v2593
    %v2598 = vpack.c.bf16 %v2056, %v2056
    %v2600 = vsel %vm2118, %v2597, 0
    %v2603 = vsel %vm2133, %v2598, 0
    %2605 = vmatprep.subr.bf16.mxu0 0
    %2606 = vmatpush1.bf16.msra.mxu0 %v2603
    %2607 = vmatprep.subr.bf16.mxu0 0
    %2608 = vmatpush1.bf16.msra.mxu0 0
    %2609 = vmatprep.subr.bf16.mxu0 0
    %2610 = vmatpush1.bf16.msra.mxu0 0
    %2611 = vmatprep.subr.bf16.mxu0 0
    %2612 = vmatpush1.bf16.msra.mxu0 0
    %2613 = vmatprep.subr.bf16.mxu0 0
    %2614 = vmatpush1.bf16.msra.mxu0 0
    %2615 = vmatprep.subr.bf16.mxu0 0
    %2616 = vmatpush1.bf16.msra.mxu0 0
    %2617 = vmatprep.subr.bf16.mxu0 0
    %2618 = vmatpush1.bf16.msra.mxu0 0
    %2619 = vmatprep.subr.bf16.mxu0 0
    %2620 = vmatpush1.bf16.msra.mxu0 0
    %2621 = vmatprep.subr.bf16.mxu0 0
    %2622 = vmatpush1.bf16.msra.mxu0 0
    %2623 = vmatprep.subr.bf16.mxu0 0
    %2624 = vmatpush1.bf16.msra.mxu0 0
    %2625 = vmatprep.subr.bf16.mxu0 0
    %2626 = vmatpush1.bf16.msra.mxu0 0
    %2627 = vmatprep.subr.bf16.mxu0 0
    %2628 = vmatpush1.bf16.msra.mxu0 0
    %2629 = vmatprep.subr.bf16.mxu0 0
    %2630 = vmatpush1.bf16.msra.mxu0 0
    %2631 = vmatprep.subr.bf16.mxu0 0
    %2632 = vmatpush1.bf16.msra.mxu0 0
    %2633 = vmatprep.subr.bf16.mxu0 0
    %2634 = vmatpush1.bf16.msra.mxu0 0
    %2635 = vmatprep.subr.bf16.mxu0 0
    %2636 = vmatpush1.bf16.msra.mxu0 0
    %2637 = vmatprep.mubr.bf16.mxu0 0
    %2638 = vmatmul.mubr.bf16.gmra.mrb[0].mxu0 %v2600
    %v2639 = vpop.f32.mrb[0].mxu0
    %v2640 = vadd.f32 0.0, %v2639
    %v2641 = vpop.f32.mrb[0].mxu0
    %v2642 = vpop.f32.mrb[0].mxu0
    %v2643 = vpop.f32.mrb[0].mxu0
    %2644 = vdwg.mxu0
    %v2645 = vrcp.pop %v2596
    %v2646 = vmul.f32 %v2640, %v2645
    %v2647 = vpack.c.bf16 %v2646, %v2646
    %2648 = vst.msk [vmem:[#allocation2 + $0x8] sm:$0xf] %vm2180, %v2647
    %2650 = vrot.lane.b32.xlu0 %v2539, 64
    %v2651 = vpop.permute.xlu0 %2650
    %2653 = vrot.lane.b32.xlu0 %v2540, 64
    %v2654 = vpop.permute.xlu0 %2653
    %v2656 = vsel %vm2070, %v2651, 0
    %v2659 = vsel %vm2070, %v2654, 0
    %2661 = vmatprep.subr.bf16.mxu0 0
    %2662 = vmatpush1.bf16.xpose.msra.mxu0 %v2659
    %2663 = vmatprep.subr.bf16.mxu0 0
    %2664 = vmatpush1.bf16.xpose.msra.mxu0 0
    %2665 = vmatprep.subr.bf16.mxu0 0
    %2666 = vmatpush1.bf16.xpose.msra.mxu0 0
    %2667 = vmatprep.subr.bf16.mxu0 0
    %2668 = vmatpush1.bf16.xpose.msra.mxu0 0
    %2669 = vmatprep.subr.bf16.mxu0 0
    %2670 = vmatpush1.bf16.xpose.msra.mxu0 0
    %2671 = vmatprep.subr.bf16.mxu0 0
    %2672 = vmatpush1.bf16.xpose.msra.mxu0 0
    %2673 = vmatprep.subr.bf16.mxu0 0
    %2674 = vmatpush1.bf16.xpose.msra.mxu0 0
    %2675 = vmatprep.subr.bf16.mxu0 0
    %2676 = vmatpush1.bf16.xpose.msra.mxu0 0
    %2677 = vmatprep.subr.bf16.mxu0 0
    %2678 = vmatpush1.bf16.xpose.msra.mxu0 0
    %2679 = vmatprep.subr.bf16.mxu0 0
    %2680 = vmatpush1.bf16.xpose.msra.mxu0 0
    %2681 = vmatprep.subr.bf16.mxu0 0
    %2682 = vmatpush1.bf16.xpose.msra.mxu0 0
    %2683 = vmatprep.subr.bf16.mxu0 0
    %2684 = vmatpush1.bf16.xpose.msra.mxu0 0
    %2685 = vmatprep.subr.bf16.mxu0 0
    %2686 = vmatpush1.bf16.xpose.msra.mxu0 0
    %2687 = vmatprep.subr.bf16.mxu0 0
    %2688 = vmatpush1.bf16.xpose.msra.mxu0 0
    %2689 = vmatprep.subr.bf16.mxu0 0
    %2690 = vmatpush1.bf16.xpose.msra.mxu0 0
    %2691 = vmatprep.subr.bf16.mxu0 0
    %2692 = vmatpush1.bf16.xpose.msra.mxu0 0
    %2693 = vmatprep.mubr.bf16.mxu0 0
    %2694 = vmatmul.mubr.bf16.gmra.mrb[0].mxu0 %v2656
    %v2695 = vpop.f32.mrb[0].mxu0
    %v2696 = vadd.f32 0.0, %v2695
    %v2697 = vpop.f32.mrb[0].mxu0
    %v2698 = vpop.f32.mrb[0].mxu0
    %v2699 = vpop.f32.mrb[0].mxu0
    %2700 = vdwg.mxu0
    %v2701 = vsel %vm2066, %v2696, -1e+30
    %v2702 = vsel %vm2118, %v2701, -inf
    %2703 = vmax.xlane.f32.xlu0 %v2702
    %v2704 = vpop.xlane.xlu0 %2703
    %v2705 = vsub.f32 %v2701, %v2704
    %v2706 = vmul.f32 %v2705, 1.442695
    %v2707 = vpow.pop %v2706
    %v2708 = vsel %vm2118, %v2707, 0.0
    %2709 = vadd.xlane.f32.xlu0 %v2708
    %v2710 = vpop.xlane.xlu0 %2709
    %v2711 = vpack.c.bf16 %v2707, %v2707
    %2713 = vrot.lane.b32.xlu0 %v2598, 64
    %v2714 = vpop.permute.xlu0 %2713
    %v2716 = vsel %vm2118, %v2711, 0
    %v2719 = vsel %vm2133, %v2714, 0
    %2721 = vmatprep.subr.bf16.mxu0 0
    %2722 = vmatpush1.bf16.msra.mxu0 %v2719
    %2723 = vmatprep.subr.bf16.mxu0 0
    %2724 = vmatpush1.bf16.msra.mxu0 0
    %2725 = vmatprep.subr.bf16.mxu0 0
    %2726 = vmatpush1.bf16.msra.mxu0 0
    %2727 = vmatprep.subr.bf16.mxu0 0
    %2728 = vmatpush1.bf16.msra.mxu0 0
    %2729 = vmatprep.subr.bf16.mxu0 0
    %2730 = vmatpush1.bf16.msra.mxu0 0
    %2731 = vmatprep.subr.bf16.mxu0 0
    %2732 = vmatpush1.bf16.msra.mxu0 0
    %2733 = vmatprep.subr.bf16.mxu0 0
    %2734 = vmatpush1.bf16.msra.mxu0 0
    %2735 = vmatprep.subr.bf16.mxu0 0
    %2736 = vmatpush1.bf16.msra.mxu0 0
    %2737 = vmatprep.subr.bf16.mxu0 0
    %2738 = vmatpush1.bf16.msra.mxu0 0
    %2739 = vmatprep.subr.bf16.mxu0 0
    %2740 = vmatpush1.bf16.msra.mxu0 0
    %2741 = vmatprep.subr.bf16.mxu0 0
    %2742 = vmatpush1.bf16.msra.mxu0 0
    %2743 = vmatprep.subr.bf16.mxu0 0
    %2744 = vmatpush1.bf16.msra.mxu0 0
    %2745 = vmatprep.subr.bf16.mxu0 0
    %2746 = vmatpush1.bf16.msra.mxu0 0
    %2747 = vmatprep.subr.bf16.mxu0 0
    %2748 = vmatpush1.bf16.msra.mxu0 0
    %2749 = vmatprep.subr.bf16.mxu0 0
    %2750 = vmatpush1.bf16.msra.mxu0 0
    %2751 = vmatprep.subr.bf16.mxu0 0
    %2752 = vmatpush1.bf16.msra.mxu0 0
    %2753 = vmatprep.mubr.bf16.mxu0 0
    %2754 = vmatmul.mubr.bf16.gmra.mrb[0].mxu0 %v2716
    %v2755 = vpop.f32.mrb[0].mxu0
    %v2756 = vadd.f32 0.0, %v2755
    %v2757 = vpop.f32.mrb[0].mxu0
    %v2758 = vpop.f32.mrb[0].mxu0
    %v2759 = vpop.f32.mrb[0].mxu0
    %2760 = vdwg.mxu0
    %v2761 = vrcp.pop %v2710
    %v2762 = vmul.f32 %v2756, %v2761
    %v2763 = vpack.c.bf16 %v2762, %v2762
    %v2765 = vunpack.c.l.b16 %v2763
    %v2766 = vpack.c.b16 %v2765, %v2765
    %2767 = vrot.lane.b32.xlu0 %v2766, 64
    %v2768 = vpop.permute.xlu0 %2767
    %2770 = vst.msk [vmem:[#allocation2 + $0x8] sm:$0xf] %vm2303, %v2768
    %v2771 = vmul.f32 %v1718, 0.05103104
    %v2772 = vpack.c.bf16 %v2771, %v2771
    %v2773 = vpack.c.bf16 %v1806, %v1806
    %v2775 = vsel %vm2070, %v2772, 0
    %v2778 = vsel %vm2070, %v2773, 0
    %2780 = vmatprep.subr.bf16.mxu0 0
    %2781 = vmatpush1.bf16.xpose.msra.mxu0 %v2778
    %2782 = vmatprep.subr.bf16.mxu0 0
    %2783 = vmatpush1.bf16.xpose.msra.mxu0 0
    %2784 = vmatprep.subr.bf16.mxu0 0
    %2785 = vmatpush1.bf16.xpose.msra.mxu0 0
    %2786 = vmatprep.subr.bf16.mxu0 0
    %2787 = vmatpush1.bf16.xpose.msra.mxu0 0
    %2788 = vmatprep.subr.bf16.mxu0 0
    %2789 = vmatpush1.bf16.xpose.msra.mxu0 0
    %2790 = vmatprep.subr.bf16.mxu0 0
    %2791 = vmatpush1.bf16.xpose.msra.mxu0 0
    %2792 = vmatprep.subr.bf16.mxu0 0
    %2793 = vmatpush1.bf16.xpose.msra.mxu0 0
    %2794 = vmatprep.subr.bf16.mxu0 0
    %2795 = vmatpush1.bf16.xpose.msra.mxu0 0
    %2796 = vmatprep.subr.bf16.mxu0 0
    %2797 = vmatpush1.bf16.xpose.msra.mxu0 0
    %2798 = vmatprep.subr.bf16.mxu0 0
    %2799 = vmatpush1.bf16.xpose.msra.mxu0 0
    %2800 = vmatprep.subr.bf16.mxu0 0
    %2801 = vmatpush1.bf16.xpose.msra.mxu0 0
    %2802 = vmatprep.subr.bf16.mxu0 0
    %2803 = vmatpush1.bf16.xpose.msra.mxu0 0
    %2804 = vmatprep.subr.bf16.mxu0 0
    %2805 = vmatpush1.bf16.xpose.msra.mxu0 0
    %2806 = vmatprep.subr.bf16.mxu0 0
    %2807 = vmatpush1.bf16.xpose.msra.mxu0 0
    %2808 = vmatprep.subr.bf16.mxu0 0
    %2809 = vmatpush1.bf16.xpose.msra.mxu0 0
    %2810 = vmatprep.subr.bf16.mxu0 0
    %2811 = vmatpush1.bf16.xpose.msra.mxu0 0
    %2812 = vmatprep.mubr.bf16.mxu0 0
    %2813 = vmatmul.mubr.bf16.gmra.mrb[0].mxu0 %v2775
    %v2814 = vpop.f32.mrb[0].mxu0
    %v2815 = vadd.f32 0.0, %v2814
    %v2816 = vpop.f32.mrb[0].mxu0
    %v2817 = vpop.f32.mrb[0].mxu0
    %v2818 = vpop.f32.mrb[0].mxu0
    %2819 = vdwg.mxu0
    %v2820 = vsel %vm2066, %v2815, -1e+30
    %v2821 = vsel %vm2118, %v2820, -inf
    %2822 = vmax.xlane.f32.xlu0 %v2821
    %v2823 = vpop.xlane.xlu0 %2822
    %v2824 = vsub.f32 %v2820, %v2823
    %v2825 = vmul.f32 %v2824, 1.442695
    %v2826 = vpow.pop %v2825
    %v2827 = vsel %vm2118, %v2826, 0.0
    %2828 = vadd.xlane.f32.xlu0 %v2827
    %v2829 = vpop.xlane.xlu0 %2828
    %v2830 = vpack.c.bf16 %v2826, %v2826
    %v2831 = vpack.c.bf16 %v1976, %v1976
    %v2833 = vsel %vm2118, %v2830, 0
    %v2836 = vsel %vm2133, %v2831, 0
    %2838 = vmatprep.subr.bf16.mxu0 0
    %2839 = vmatpush1.bf16.msra.mxu0 %v2836
    %2840 = vmatprep.subr.bf16.mxu0 0
    %2841 = vmatpush1.bf16.msra.mxu0 0
    %2842 = vmatprep.subr.bf16.mxu0 0
    %2843 = vmatpush1.bf16.msra.mxu0 0
    %2844 = vmatprep.subr.bf16.mxu0 0
    %2845 = vmatpush1.bf16.msra.mxu0 0
    %2846 = vmatprep.subr.bf16.mxu0 0
    %2847 = vmatpush1.bf16.msra.mxu0 0
    %2848 = vmatprep.subr.bf16.mxu0 0
    %2849 = vmatpush1.bf16.msra.mxu0 0
    %2850 = vmatprep.subr.bf16.mxu0 0
    %2851 = vmatpush1.bf16.msra.mxu0 0
    %2852 = vmatprep.subr.bf16.mxu0 0
    %2853 = vmatpush1.bf16.msra.mxu0 0
    %2854 = vmatprep.subr.bf16.mxu0 0
    %2855 = vmatpush1.bf16.msra.mxu0 0
    %2856 = vmatprep.subr.bf16.mxu0 0
    %2857 = vmatpush1.bf16.msra.mxu0 0
    %2858 = vmatprep.subr.bf16.mxu0 0
    %2859 = vmatpush1.bf16.msra.mxu0 0
    %2860 = vmatprep.subr.bf16.mxu0 0
    %2861 = vmatpush1.bf16.msra.mxu0 0
    %2862 = vmatprep.subr.bf16.mxu0 0
    %2863 = vmatpush1.bf16.msra.mxu0 0
    %2864 = vmatprep.subr.bf16.mxu0 0
    %2865 = vmatpush1.bf16.msra.mxu0 0
    %2866 = vmatprep.subr.bf16.mxu0 0
    %2867 = vmatpush1.bf16.msra.mxu0 0
    %2868 = vmatprep.subr.bf16.mxu0 0
    %2869 = vmatpush1.bf16.msra.mxu0 0
    %2870 = vmatprep.mubr.bf16.mxu0 0
    %2871 = vmatmul.mubr.bf16.gmra.mrb[0].mxu0 %v2833
    %v2872 = vpop.f32.mrb[0].mxu0
    %v2873 = vadd.f32 0.0, %v2872
    %v2874 = vpop.f32.mrb[0].mxu0
    %v2875 = vpop.f32.mrb[0].mxu0
    %v2876 = vpop.f32.mrb[0].mxu0
    %2877 = vdwg.mxu0
    %v2878 = vrcp.pop %v2829
    %v2879 = vmul.f32 %v2873, %v2878
    %v2880 = vpack.c.bf16 %v2879, %v2879
    %s2881 = scalar_lea.vmem [#allocation2], 12
    %2882 = vst.msk [vmem:[%s2881] sm:$0xf] %vm2180, %v2880
    %2884 = vrot.lane.b32.xlu0 %v2772, 64
    %v2885 = vpop.permute.xlu0 %2884
    %2887 = vrot.lane.b32.xlu0 %v2773, 64
    %v2888 = vpop.permute.xlu0 %2887
    %v2890 = vsel %vm2070, %v2885, 0
    %v2893 = vsel %vm2070, %v2888, 0
    %2895 = vmatprep.subr.bf16.mxu0 0
    %2896 = vmatpush1.bf16.xpose.msra.mxu0 %v2893
    %2897 = vmatprep.subr.bf16.mxu0 0
    %2898 = vmatpush1.bf16.xpose.msra.mxu0 0
    %2899 = vmatprep.subr.bf16.mxu0 0
    %2900 = vmatpush1.bf16.xpose.msra.mxu0 0
    %2901 = vmatprep.subr.bf16.mxu0 0
    %2902 = vmatpush1.bf16.xpose.msra.mxu0 0
    %2903 = vmatprep.subr.bf16.mxu0 0
    %2904 = vmatpush1.bf16.xpose.msra.mxu0 0
    %2905 = vmatprep.subr.bf16.mxu0 0
    %2906 = vmatpush1.bf16.xpose.msra.mxu0 0
    %2907 = vmatprep.subr.bf16.mxu0 0
    %2908 = vmatpush1.bf16.xpose.msra.mxu0 0
    %2909 = vmatprep.subr.bf16.mxu0 0
    %2910 = vmatpush1.bf16.xpose.msra.mxu0 0
    %2911 = vmatprep.subr.bf16.mxu0 0
    %2912 = vmatpush1.bf16.xpose.msra.mxu0 0
    %2913 = vmatprep.subr.bf16.mxu0 0
    %2914 = vmatpush1.bf16.xpose.msra.mxu0 0
    %2915 = vmatprep.subr.bf16.mxu0 0
    %2916 = vmatpush1.bf16.xpose.msra.mxu0 0
    %2917 = vmatprep.subr.bf16.mxu0 0
    %2918 = vmatpush1.bf16.xpose.msra.mxu0 0
    %2919 = vmatprep.subr.bf16.mxu0 0
    %2920 = vmatpush1.bf16.xpose.msra.mxu0 0
    %2921 = vmatprep.subr.bf16.mxu0 0
    %2922 = vmatpush1.bf16.xpose.msra.mxu0 0
    %2923 = vmatprep.subr.bf16.mxu0 0
    %2924 = vmatpush1.bf16.xpose.msra.mxu0 0
    %2925 = vmatprep.subr.bf16.mxu0 0
    %2926 = vmatpush1.bf16.xpose.msra.mxu0 0
    %2927 = vmatprep.mubr.bf16.mxu0 0
    %2928 = vmatmul.mubr.bf16.gmra.mrb[0].mxu0 %v2890
    %v2929 = vpop.f32.mrb[0].mxu0
    %v2930 = vadd.f32 0.0, %v2929
    %v2931 = vpop.f32.mrb[0].mxu0
    %v2932 = vpop.f32.mrb[0].mxu0
    %v2933 = vpop.f32.mrb[0].mxu0
    %2934 = vdwg.mxu0
    %v2935 = vsel %vm2066, %v2930, -1e+30
    %v2936 = vsel %vm2118, %v2935, -inf
    %2937 = vmax.xlane.f32.xlu0 %v2936
    %v2938 = vpop.xlane.xlu0 %2937
    %v2939 = vsub.f32 %v2935, %v2938
    %v2940 = vmul.f32 %v2939, 1.442695
    %v2941 = vpow.pop %v2940
    %v2942 = vsel %vm2118, %v2941, 0.0
    %2943 = vadd.xlane.f32.xlu0 %v2942
    %v2944 = vpop.xlane.xlu0 %2943
    %v2945 = vpack.c.bf16 %v2941, %v2941
    %2947 = vrot.lane.b32.xlu0 %v2831, 64
    %v2948 = vpop.permute.xlu0 %2947
    %v2950 = vsel %vm2118, %v2945, 0
    %v2953 = vsel %vm2133, %v2948, 0
    %2955 = vmatprep.subr.bf16.mxu0 0
    %2956 = vmatpush1.bf16.msra.mxu0 %v2953
    %2957 = vmatprep.subr.bf16.mxu0 0
    %2958 = vmatpush1.bf16.msra.mxu0 0
    %2959 = vmatprep.subr.bf16.mxu0 0
    %2960 = vmatpush1.bf16.msra.mxu0 0
    %2961 = vmatprep.subr.bf16.mxu0 0
    %2962 = vmatpush1.bf16.msra.mxu0 0
    %2963 = vmatprep.subr.bf16.mxu0 0
    %2964 = vmatpush1.bf16.msra.mxu0 0
    %2965 = vmatprep.subr.bf16.mxu0 0
    %2966 = vmatpush1.bf16.msra.mxu0 0
    %2967 = vmatprep.subr.bf16.mxu0 0
    %2968 = vmatpush1.bf16.msra.mxu0 0
    %2969 = vmatprep.subr.bf16.mxu0 0
    %2970 = vmatpush1.bf16.msra.mxu0 0
    %2971 = vmatprep.subr.bf16.mxu0 0
    %2972 = vmatpush1.bf16.msra.mxu0 0
    %2973 = vmatprep.subr.bf16.mxu0 0
    %2974 = vmatpush1.bf16.msra.mxu0 0
    %2975 = vmatprep.subr.bf16.mxu0 0
    %2976 = vmatpush1.bf16.msra.mxu0 0
    %2977 = vmatprep.subr.bf16.mxu0 0
    %2978 = vmatpush1.bf16.msra.mxu0 0
    %2979 = vmatprep.subr.bf16.mxu0 0
    %2980 = vmatpush1.bf16.msra.mxu0 0
    %2981 = vmatprep.subr.bf16.mxu0 0
    %2982 = vmatpush1.bf16.msra.mxu0 0
    %2983 = vmatprep.subr.bf16.mxu0 0
    %2984 = vmatpush1.bf16.msra.mxu0 0
    %2985 = vmatprep.subr.bf16.mxu0 0
    %2986 = vmatpush1.bf16.msra.mxu0 0
    %2987 = vmatprep.mubr.bf16.mxu0 0
    %2988 = vmatmul.mubr.bf16.gmra.mrb[0].mxu0 %v2950
    %v2989 = vpop.f32.mrb[0].mxu0
    %v2990 = vadd.f32 0.0, %v2989
    %v2991 = vpop.f32.mrb[0].mxu0
    %v2992 = vpop.f32.mrb[0].mxu0
    %v2993 = vpop.f32.mrb[0].mxu0
    %2994 = vdwg.mxu0
    %v2995 = vrcp.pop %v2944
    %v2996 = vmul.f32 %v2990, %v2995
    %v2997 = vpack.c.bf16 %v2996, %v2996
    %v2999 = vunpack.c.l.b16 %v2997
    %v3000 = vpack.c.b16 %v2999, %v2999
    %3001 = vrot.lane.b32.xlu0 %v3000, 64
    %v3002 = vpop.permute.xlu0 %3001
    %3004 = vst.msk [vmem:[%s2881] sm:$0xf] %vm2303, %v3002
    %v3005 = vmul.f32 %v1720, 0.05103104
    %v3006 = vpack.c.bf16 %v3005, %v3005
    %v3007 = vpack.c.bf16 %v1890, %v1890
    %v3009 = vsel %vm2070, %v3006, 0
    %v3012 = vsel %vm2070, %v3007, 0
    %3014 = vmatprep.subr.bf16.mxu0 0
    %3015 = vmatpush1.bf16.xpose.msra.mxu0 %v3012
    %3016 = vmatprep.subr.bf16.mxu0 0
    %3017 = vmatpush1.bf16.xpose.msra.mxu0 0
    %3018 = vmatprep.subr.bf16.mxu0 0
    %3019 = vmatpush1.bf16.xpose.msra.mxu0 0
    %3020 = vmatprep.subr.bf16.mxu0 0
    %3021 = vmatpush1.bf16.xpose.msra.mxu0 0
    %3022 = vmatprep.subr.bf16.mxu0 0
    %3023 = vmatpush1.bf16.xpose.msra.mxu0 0
    %3024 = vmatprep.subr.bf16.mxu0 0
    %3025 = vmatpush1.bf16.xpose.msra.mxu0 0
    %3026 = vmatprep.subr.bf16.mxu0 0
    %3027 = vmatpush1.bf16.xpose.msra.mxu0 0
    %3028 = vmatprep.subr.bf16.mxu0 0
    %3029 = vmatpush1.bf16.xpose.msra.mxu0 0
    %3030 = vmatprep.subr.bf16.mxu0 0
    %3031 = vmatpush1.bf16.xpose.msra.mxu0 0
    %3032 = vmatprep.subr.bf16.mxu0 0
    %3033 = vmatpush1.bf16.xpose.msra.mxu0 0
    %3034 = vmatprep.subr.bf16.mxu0 0
    %3035 = vmatpush1.bf16.xpose.msra.mxu0 0
    %3036 = vmatprep.subr.bf16.mxu0 0
    %3037 = vmatpush1.bf16.xpose.msra.mxu0 0
    %3038 = vmatprep.subr.bf16.mxu0 0
    %3039 = vmatpush1.bf16.xpose.msra.mxu0 0
    %3040 = vmatprep.subr.bf16.mxu0 0
    %3041 = vmatpush1.bf16.xpose.msra.mxu0 0
    %3042 = vmatprep.subr.bf16.mxu0 0
    %3043 = vmatpush1.bf16.xpose.msra.mxu0 0
    %3044 = vmatprep.subr.bf16.mxu0 0
    %3045 = vmatpush1.bf16.xpose.msra.mxu0 0
    %3046 = vmatprep.mubr.bf16.mxu0 0
    %3047 = vmatmul.mubr.bf16.gmra.mrb[0].mxu0 %v3009
    %v3048 = vpop.f32.mrb[0].mxu0
    %v3049 = vadd.f32 0.0, %v3048
    %v3050 = vpop.f32.mrb[0].mxu0
    %v3051 = vpop.f32.mrb[0].mxu0
    %v3052 = vpop.f32.mrb[0].mxu0
    %3053 = vdwg.mxu0
    %v3054 = vsel %vm2066, %v3049, -1e+30
    %v3055 = vsel %vm2118, %v3054, -inf
    %3056 = vmax.xlane.f32.xlu0 %v3055
    %v3057 = vpop.xlane.xlu0 %3056
    %v3058 = vsub.f32 %v3054, %v3057
    %v3059 = vmul.f32 %v3058, 1.442695
    %v3060 = vpow.pop %v3059
    %v3061 = vsel %vm2118, %v3060, 0.0
    %3062 = vadd.xlane.f32.xlu0 %v3061
    %v3063 = vpop.xlane.xlu0 %3062
    %v3064 = vpack.c.bf16 %v3060, %v3060
    %v3065 = vpack.c.bf16 %v1978, %v1978
    %v3067 = vsel %vm2118, %v3064, 0
    %v3070 = vsel %vm2133, %v3065, 0
    %3072 = vmatprep.subr.bf16.mxu0 0
    %3073 = vmatpush1.bf16.msra.mxu0 %v3070
    %3074 = vmatprep.subr.bf16.mxu0 0
    %3075 = vmatpush1.bf16.msra.mxu0 0
    %3076 = vmatprep.subr.bf16.mxu0 0
    %3077 = vmatpush1.bf16.msra.mxu0 0
    %3078 = vmatprep.subr.bf16.mxu0 0
    %3079 = vmatpush1.bf16.msra.mxu0 0
    %3080 = vmatprep.subr.bf16.mxu0 0
    %3081 = vmatpush1.bf16.msra.mxu0 0
    %3082 = vmatprep.subr.bf16.mxu0 0
    %3083 = vmatpush1.bf16.msra.mxu0 0
    %3084 = vmatprep.subr.bf16.mxu0 0
    %3085 = vmatpush1.bf16.msra.mxu0 0
    %3086 = vmatprep.subr.bf16.mxu0 0
    %3087 = vmatpush1.bf16.msra.mxu0 0
    %3088 = vmatprep.subr.bf16.mxu0 0
    %3089 = vmatpush1.bf16.msra.mxu0 0
    %3090 = vmatprep.subr.bf16.mxu0 0
    %3091 = vmatpush1.bf16.msra.mxu0 0
    %3092 = vmatprep.subr.bf16.mxu0 0
    %3093 = vmatpush1.bf16.msra.mxu0 0
    %3094 = vmatprep.subr.bf16.mxu0 0
    %3095 = vmatpush1.bf16.msra.mxu0 0
    %3096 = vmatprep.subr.bf16.mxu0 0
    %3097 = vmatpush1.bf16.msra.mxu0 0
    %3098 = vmatprep.subr.bf16.mxu0 0
    %3099 = vmatpush1.bf16.msra.mxu0 0
    %3100 = vmatprep.subr.bf16.mxu0 0
    %3101 = vmatpush1.bf16.msra.mxu0 0
    %3102 = vmatprep.subr.bf16.mxu0 0
    %3103 = vmatpush1.bf16.msra.mxu0 0
    %3104 = vmatprep.mubr.bf16.mxu0 0
    %3105 = vmatmul.mubr.bf16.gmra.mrb[0].mxu0 %v3067
    %v3106 = vpop.f32.mrb[0].mxu0
    %v3107 = vadd.f32 0.0, %v3106
    %v3108 = vpop.f32.mrb[0].mxu0
    %v3109 = vpop.f32.mrb[0].mxu0
    %v3110 = vpop.f32.mrb[0].mxu0
    %3111 = vdwg.mxu0
    %v3112 = vrcp.pop %v3063
    %v3113 = vmul.f32 %v3107, %v3112
    %v3114 = vpack.c.bf16 %v3113, %v3113
    %3115 = vst.msk [vmem:[%s2881 + $0x4] sm:$0xf] %vm2180, %v3114
    %3117 = vrot.lane.b32.xlu0 %v3006, 64
    %v3118 = vpop.permute.xlu0 %3117
    %3120 = vrot.lane.b32.xlu0 %v3007, 64
    %v3121 = vpop.permute.xlu0 %3120
    %v3123 = vsel %vm2070, %v3118, 0
    %v3126 = vsel %vm2070, %v3121, 0
    %3128 = vmatprep.subr.bf16.mxu0 0
    %3129 = vmatpush1.bf16.xpose.msra.mxu0 %v3126
    %3130 = vmatprep.subr.bf16.mxu0 0
    %3131 = vmatpush1.bf16.xpose.msra.mxu0 0
    %3132 = vmatprep.subr.bf16.mxu0 0
    %3133 = vmatpush1.bf16.xpose.msra.mxu0 0
    %3134 = vmatprep.subr.bf16.mxu0 0
    %3135 = vmatpush1.bf16.xpose.msra.mxu0 0
    %3136 = vmatprep.subr.bf16.mxu0 0
    %3137 = vmatpush1.bf16.xpose.msra.mxu0 0
    %3138 = vmatprep.subr.bf16.mxu0 0
    %3139 = vmatpush1.bf16.xpose.msra.mxu0 0
    %3140 = vmatprep.subr.bf16.mxu0 0
    %3141 = vmatpush1.bf16.xpose.msra.mxu0 0
    %3142 = vmatprep.subr.bf16.mxu0 0
    %3143 = vmatpush1.bf16.xpose.msra.mxu0 0
    %3144 = vmatprep.subr.bf16.mxu0 0
    %3145 = vmatpush1.bf16.xpose.msra.mxu0 0
    %3146 = vmatprep.subr.bf16.mxu0 0
    %3147 = vmatpush1.bf16.xpose.msra.mxu0 0
    %3148 = vmatprep.subr.bf16.mxu0 0
    %3149 = vmatpush1.bf16.xpose.msra.mxu0 0
    %3150 = vmatprep.subr.bf16.mxu0 0
    %3151 = vmatpush1.bf16.xpose.msra.mxu0 0
    %3152 = vmatprep.subr.bf16.mxu0 0
    %3153 = vmatpush1.bf16.xpose.msra.mxu0 0
    %3154 = vmatprep.subr.bf16.mxu0 0
    %3155 = vmatpush1.bf16.xpose.msra.mxu0 0
    %3156 = vmatprep.subr.bf16.mxu0 0
    %3157 = vmatpush1.bf16.xpose.msra.mxu0 0
    %3158 = vmatprep.subr.bf16.mxu0 0
    %3159 = vmatpush1.bf16.xpose.msra.mxu0 0
    %3160 = vmatprep.mubr.bf16.mxu0 0
    %3161 = vmatmul.mubr.bf16.gmra.mrb[0].mxu0 %v3123
    %v3162 = vpop.f32.mrb[0].mxu0
    %v3163 = vadd.f32 0.0, %v3162
    %v3164 = vpop.f32.mrb[0].mxu0
    %v3165 = vpop.f32.mrb[0].mxu0
    %v3166 = vpop.f32.mrb[0].mxu0
    %3167 = vdwg.mxu0
    %v3168 = vsel %vm2066, %v3163, -1e+30
    %v3169 = vsel %vm2118, %v3168, -inf
    %3170 = vmax.xlane.f32.xlu0 %v3169
    %v3171 = vpop.xlane.xlu0 %3170
    %v3172 = vsub.f32 %v3168, %v3171
    %v3173 = vmul.f32 %v3172, 1.442695
    %v3174 = vpow.pop %v3173
    %v3175 = vsel %vm2118, %v3174, 0.0
    %3176 = vadd.xlane.f32.xlu0 %v3175
    %v3177 = vpop.xlane.xlu0 %3176
    %v3178 = vpack.c.bf16 %v3174, %v3174
    %3180 = vrot.lane.b32.xlu0 %v3065, 64
    %v3181 = vpop.permute.xlu0 %3180
    %v3183 = vsel %vm2118, %v3178, 0
    %v3186 = vsel %vm2133, %v3181, 0
    %3188 = vmatprep.subr.bf16.mxu0 0
    %3189 = vmatpush1.bf16.msra.mxu0 %v3186
    %3190 = vmatprep.subr.bf16.mxu0 0
    %3191 = vmatpush1.bf16.msra.mxu0 0
    %3192 = vmatprep.subr.bf16.mxu0 0
    %3193 = vmatpush1.bf16.msra.mxu0 0
    %3194 = vmatprep.subr.bf16.mxu0 0
    %3195 = vmatpush1.bf16.msra.mxu0 0
    %3196 = vmatprep.subr.bf16.mxu0 0
    %3197 = vmatpush1.bf16.msra.mxu0 0
    %3198 = vmatprep.subr.bf16.mxu0 0
    %3199 = vmatpush1.bf16.msra.mxu0 0
    %3200 = vmatprep.subr.bf16.mxu0 0
    %3201 = vmatpush1.bf16.msra.mxu0 0
    %3202 = vmatprep.subr.bf16.mxu0 0
    %3203 = vmatpush1.bf16.msra.mxu0 0
    %3204 = vmatprep.subr.bf16.mxu0 0
    %3205 = vmatpush1.bf16.msra.mxu0 0
    %3206 = vmatprep.subr.bf16.mxu0 0
    %3207 = vmatpush1.bf16.msra.mxu0 0
    %3208 = vmatprep.subr.bf16.mxu0 0
    %3209 = vmatpush1.bf16.msra.mxu0 0
    %3210 = vmatprep.subr.bf16.mxu0 0
    %3211 = vmatpush1.bf16.msra.mxu0 0
    %3212 = vmatprep.subr.bf16.mxu0 0
    %3213 = vmatpush1.bf16.msra.mxu0 0
    %3214 = vmatprep.subr.bf16.mxu0 0
    %3215 = vmatpush1.bf16.msra.mxu0 0
    %3216 = vmatprep.subr.bf16.mxu0 0
    %3217 = vmatpush1.bf16.msra.mxu0 0
    %3218 = vmatprep.subr.bf16.mxu0 0
    %3219 = vmatpush1.bf16.msra.mxu0 0
    %3220 = vmatprep.mubr.bf16.mxu0 0
    %3221 = vmatmul.mubr.bf16.gmra.mrb[0].mxu0 %v3183
    %v3222 = vpop.f32.mrb[0].mxu0
    %v3223 = vadd.f32 0.0, %v3222
    %v3224 = vpop.f32.mrb[0].mxu0
    %v3225 = vpop.f32.mrb[0].mxu0
    %v3226 = vpop.f32.mrb[0].mxu0
    %3227 = vdwg.mxu0
    %v3228 = vrcp.pop %v3177
    %v3229 = vmul.f32 %v3223, %v3228
    %v3230 = vpack.c.bf16 %v3229, %v3229
    %v3232 = vunpack.c.l.b16 %v3230
    %v3233 = vpack.c.b16 %v3232, %v3232
    %3234 = vrot.lane.b32.xlu0 %v3233, 64
    %v3235 = vpop.permute.xlu0 %3234
    %3237 = vst.msk [vmem:[%s2881 + $0x4] sm:$0xf] %vm2303, %v3235
    %v3238 = vmul.f32 %v1804, 0.05103104
    %v3239 = vpack.c.bf16 %v3238, %v3238
    %v3240 = vpack.c.bf16 %v1892, %v1892
    %v3242 = vsel %vm2070, %v3239, 0
    %v3245 = vsel %vm2070, %v3240, 0
    %3247 = vmatprep.subr.bf16.mxu0 0
    %3248 = vmatpush1.bf16.xpose.msra.mxu0 %v3245
    %3249 = vmatprep.subr.bf16.mxu0 0
    %3250 = vmatpush1.bf16.xpose.msra.mxu0 0
    %3251 = vmatprep.subr.bf16.mxu0 0
    %3252 = vmatpush1.bf16.xpose.msra.mxu0 0
    %3253 = vmatprep.subr.bf16.mxu0 0
    %3254 = vmatpush1.bf16.xpose.msra.mxu0 0
    %3255 = vmatprep.subr.bf16.mxu0 0
    %3256 = vmatpush1.bf16.xpose.msra.mxu0 0
    %3257 = vmatprep.subr.bf16.mxu0 0
    %3258 = vmatpush1.bf16.xpose.msra.mxu0 0
    %3259 = vmatprep.subr.bf16.mxu0 0
    %3260 = vmatpush1.bf16.xpose.msra.mxu0 0
    %3261 = vmatprep.subr.bf16.mxu0 0
    %3262 = vmatpush1.bf16.xpose.msra.mxu0 0
    %3263 = vmatprep.subr.bf16.mxu0 0
    %3264 = vmatpush1.bf16.xpose.msra.mxu0 0
    %3265 = vmatprep.subr.bf16.mxu0 0
    %3266 = vmatpush1.bf16.xpose.msra.mxu0 0
    %3267 = vmatprep.subr.bf16.mxu0 0
    %3268 = vmatpush1.bf16.xpose.msra.mxu0 0
    %3269 = vmatprep.subr.bf16.mxu0 0
    %3270 = vmatpush1.bf16.xpose.msra.mxu0 0
    %3271 = vmatprep.subr.bf16.mxu0 0
    %3272 = vmatpush1.bf16.xpose.msra.mxu0 0
    %3273 = vmatprep.subr.bf16.mxu0 0
    %3274 = vmatpush1.bf16.xpose.msra.mxu0 0
    %3275 = vmatprep.subr.bf16.mxu0 0
    %3276 = vmatpush1.bf16.xpose.msra.mxu0 0
    %3277 = vmatprep.subr.bf16.mxu0 0
    %3278 = vmatpush1.bf16.xpose.msra.mxu0 0
    %3279 = vmatprep.mubr.bf16.mxu0 0
    %3280 = vmatmul.mubr.bf16.gmra.mrb[0].mxu0 %v3242
    %v3281 = vpop.f32.mrb[0].mxu0
    %v3282 = vadd.f32 0.0, %v3281
    %v3283 = vpop.f32.mrb[0].mxu0
    %v3284 = vpop.f32.mrb[0].mxu0
    %v3285 = vpop.f32.mrb[0].mxu0
    %3286 = vdwg.mxu0
    %v3287 = vsel %vm2066, %v3282, -1e+30
    %v3288 = vsel %vm2118, %v3287, -inf
    %3289 = vmax.xlane.f32.xlu0 %v3288
    %v3290 = vpop.xlane.xlu0 %3289
    %v3291 = vsub.f32 %v3287, %v3290
    %v3292 = vmul.f32 %v3291, 1.442695
    %v3293 = vpow.pop %v3292
    %v3294 = vsel %vm2118, %v3293, 0.0
    %3295 = vadd.xlane.f32.xlu0 %v3294
    %v3296 = vpop.xlane.xlu0 %3295
    %v3297 = vpack.c.bf16 %v3293, %v3293
    %v3298 = vpack.c.bf16 %v2059, %v2059
    %v3300 = vsel %vm2118, %v3297, 0
    %v3303 = vsel %vm2133, %v3298, 0
    %3305 = vmatprep.subr.bf16.mxu0 0
    %3306 = vmatpush1.bf16.msra.mxu0 %v3303
    %3307 = vmatprep.subr.bf16.mxu0 0
    %3308 = vmatpush1.bf16.msra.mxu0 0
    %3309 = vmatprep.subr.bf16.mxu0 0
    %3310 = vmatpush1.bf16.msra.mxu0 0
    %3311 = vmatprep.subr.bf16.mxu0 0
    %3312 = vmatpush1.bf16.msra.mxu0 0
    %3313 = vmatprep.subr.bf16.mxu0 0
    %3314 = vmatpush1.bf16.msra.mxu0 0
    %3315 = vmatprep.subr.bf16.mxu0 0
    %3316 = vmatpush1.bf16.msra.mxu0 0
    %3317 = vmatprep.subr.bf16.mxu0 0
    %3318 = vmatpush1.bf16.msra.mxu0 0
    %3319 = vmatprep.subr.bf16.mxu0 0
    %3320 = vmatpush1.bf16.msra.mxu0 0
    %3321 = vmatprep.subr.bf16.mxu0 0
    %3322 = vmatpush1.bf16.msra.mxu0 0
    %3323 = vmatprep.subr.bf16.mxu0 0
    %3324 = vmatpush1.bf16.msra.mxu0 0
    %3325 = vmatprep.subr.bf16.mxu0 0
    %3326 = vmatpush1.bf16.msra.mxu0 0
    %3327 = vmatprep.subr.bf16.mxu0 0
    %3328 = vmatpush1.bf16.msra.mxu0 0
    %3329 = vmatprep.subr.bf16.mxu0 0
    %3330 = vmatpush1.bf16.msra.mxu0 0
    %3331 = vmatprep.subr.bf16.mxu0 0
    %3332 = vmatpush1.bf16.msra.mxu0 0
    %3333 = vmatprep.subr.bf16.mxu0 0
    %3334 = vmatpush1.bf16.msra.mxu0 0
    %3335 = vmatprep.subr.bf16.mxu0 0
    %3336 = vmatpush1.bf16.msra.mxu0 0
    %3337 = vmatprep.mubr.bf16.mxu0 0
    %3338 = vmatmul.mubr.bf16.gmra.mrb[0].mxu0 %v3300
    %v3339 = vpop.f32.mrb[0].mxu0
    %v3340 = vadd.f32 0.0, %v3339
    %v3341 = vpop.f32.mrb[0].mxu0
    %v3342 = vpop.f32.mrb[0].mxu0
    %v3343 = vpop.f32.mrb[0].mxu0
    %3344 = vdwg.mxu0
    %v3345 = vrcp.pop %v3296
    %v3346 = vmul.f32 %v3340, %v3345
    %v3347 = vpack.c.bf16 %v3346, %v3346
    %3348 = vst.msk [vmem:[%s2881 + $0x8] sm:$0xf] %vm2180, %v3347
    %3350 = vrot.lane.b32.xlu0 %v3239, 64
    %v3351 = vpop.permute.xlu0 %3350
    %3353 = vrot.lane.b32.xlu0 %v3240, 64
    %v3354 = vpop.permute.xlu0 %3353
    %v3356 = vsel %vm2070, %v3351, 0
    %v3359 = vsel %vm2070, %v3354, 0
    %3361 = vmatprep.subr.bf16.mxu0 0
    %3362 = vmatpush1.bf16.xpose.msra.mxu0 %v3359
    %3363 = vmatprep.subr.bf16.mxu0 0
    %3364 = vmatpush1.bf16.xpose.msra.mxu0 0
    %3365 = vmatprep.subr.bf16.mxu0 0
    %3366 = vmatpush1.bf16.xpose.msra.mxu0 0
    %3367 = vmatprep.subr.bf16.mxu0 0
    %3368 = vmatpush1.bf16.xpose.msra.mxu0 0
    %3369 = vmatprep.subr.bf16.mxu0 0
    %3370 = vmatpush1.bf16.xpose.msra.mxu0 0
    %3371 = vmatprep.subr.bf16.mxu0 0
    %3372 = vmatpush1.bf16.xpose.msra.mxu0 0
    %3373 = vmatprep.subr.bf16.mxu0 0
    %3374 = vmatpush1.bf16.xpose.msra.mxu0 0
    %3375 = vmatprep.subr.bf16.mxu0 0
    %3376 = vmatpush1.bf16.xpose.msra.mxu0 0
    %3377 = vmatprep.subr.bf16.mxu0 0
    %3378 = vmatpush1.bf16.xpose.msra.mxu0 0
    %3379 = vmatprep.subr.bf16.mxu0 0
    %3380 = vmatpush1.bf16.xpose.msra.mxu0 0
    %3381 = vmatprep.subr.bf16.mxu0 0
    %3382 = vmatpush1.bf16.xpose.msra.mxu0 0
    %3383 = vmatprep.subr.bf16.mxu0 0
    %3384 = vmatpush1.bf16.xpose.msra.mxu0 0
    %3385 = vmatprep.subr.bf16.mxu0 0
    %3386 = vmatpush1.bf16.xpose.msra.mxu0 0
    %3387 = vmatprep.subr.bf16.mxu0 0
    %3388 = vmatpush1.bf16.xpose.msra.mxu0 0
    %3389 = vmatprep.subr.bf16.mxu0 0
    %3390 = vmatpush1.bf16.xpose.msra.mxu0 0
    %3391 = vmatprep.subr.bf16.mxu0 0
    %3392 = vmatpush1.bf16.xpose.msra.mxu0 0
    %3393 = vmatprep.mubr.bf16.mxu0 0
    %3394 = vmatmul.mubr.bf16.gmra.mrb[0].mxu0 %v3356
    %v3395 = vpop.f32.mrb[0].mxu0
    %v3396 = vadd.f32 0.0, %v3395
    %v3397 = vpop.f32.mrb[0].mxu0
    %v3398 = vpop.f32.mrb[0].mxu0
    %v3399 = vpop.f32.mrb[0].mxu0
    %3400 = vdwg.mxu0
    %v3401 = vsel %vm2066, %v3396, -1e+30
    %v3402 = vsel %vm2118, %v3401, -inf
    %3403 = vmax.xlane.f32.xlu0 %v3402
    %v3404 = vpop.xlane.xlu0 %3403
    %v3405 = vsub.f32 %v3401, %v3404
    %v3406 = vmul.f32 %v3405, 1.442695
    %v3407 = vpow.pop %v3406
    %v3408 = vsel %vm2118, %v3407, 0.0
    %3409 = vadd.xlane.f32.xlu0 %v3408
    %v3410 = vpop.xlane.xlu0 %3409
    %v3411 = vpack.c.bf16 %v3407, %v3407
    %3413 = vrot.lane.b32.xlu0 %v3298, 64
    %v3414 = vpop.permute.xlu0 %3413
    %v3416 = vsel %vm2118, %v3411, 0
    %v3419 = vsel %vm2133, %v3414, 0
    %3421 = vmatprep.subr.bf16.mxu0 0
    %3422 = vmatpush1.bf16.msra.mxu0 %v3419
    %3423 = vmatprep.subr.bf16.mxu0 0
    %3424 = vmatpush1.bf16.msra.mxu0 0
    %3425 = vmatprep.subr.bf16.mxu0 0
    %3426 = vmatpush1.bf16.msra.mxu0 0
    %3427 = vmatprep.subr.bf16.mxu0 0
    %3428 = vmatpush1.bf16.msra.mxu0 0
    %3429 = vmatprep.subr.bf16.mxu0 0
    %3430 = vmatpush1.bf16.msra.mxu0 0
    %3431 = vmatprep.subr.bf16.mxu0 0
    %3432 = vmatpush1.bf16.msra.mxu0 0
    %3433 = vmatprep.subr.bf16.mxu0 0
    %3434 = vmatpush1.bf16.msra.mxu0 0
    %3435 = vmatprep.subr.bf16.mxu0 0
    %3436 = vmatpush1.bf16.msra.mxu0 0
    %3437 = vmatprep.subr.bf16.mxu0 0
    %3438 = vmatpush1.bf16.msra.mxu0 0
    %3439 = vmatprep.subr.bf16.mxu0 0
    %3440 = vmatpush1.bf16.msra.mxu0 0
    %3441 = vmatprep.subr.bf16.mxu0 0
    %3442 = vmatpush1.bf16.msra.mxu0 0
    %3443 = vmatprep.subr.bf16.mxu0 0
    %3444 = vmatpush1.bf16.msra.mxu0 0
    %3445 = vmatprep.subr.bf16.mxu0 0
    %3446 = vmatpush1.bf16.msra.mxu0 0
    %3447 = vmatprep.subr.bf16.mxu0 0
    %3448 = vmatpush1.bf16.msra.mxu0 0
    %3449 = vmatprep.subr.bf16.mxu0 0
    %3450 = vmatpush1.bf16.msra.mxu0 0
    %3451 = vmatprep.subr.bf16.mxu0 0
    %3452 = vmatpush1.bf16.msra.mxu0 0
    %3453 = vmatprep.mubr.bf16.mxu0 0
    %3454 = vmatmul.mubr.bf16.gmra.mrb[0].mxu0 %v3416
    %v3455 = vpop.f32.mrb[0].mxu0
    %v3456 = vadd.f32 0.0, %v3455
    %v3457 = vpop.f32.mrb[0].mxu0
    %v3458 = vpop.f32.mrb[0].mxu0
    %v3459 = vpop.f32.mrb[0].mxu0
    %3460 = vdwg.mxu0
    %v3461 = vrcp.pop %v3410
    %v3462 = vmul.f32 %v3456, %v3461
    %v3463 = vpack.c.bf16 %v3462, %v3462
    %v3465 = vunpack.c.l.b16 %v3463
    %v3466 = vpack.c.b16 %v3465, %v3465
    %3467 = vrot.lane.b32.xlu0 %v3466, 64
    %v3468 = vpop.permute.xlu0 %3467
    %3470 = vst.msk [vmem:[%s2881 + $0x8] sm:$0xf] %vm2303, %v3468
    %v3471 = vld [vmem:[#allocation2] sm:$0xff]
    %v3472 = vld [vmem:[#allocation2 + $0x8] sm:$0xf]
    %v3473 = vld [vmem:[#allocation2 + $0xc] sm:$0xff]
    %v3474 = vld [vmem:[#allocation2 + $0x14] sm:$0xf]
    %v3475 = vld [vmem:[#allocation13] sm:$0xff]
    %v3476 = vld [vmem:[#allocation13 + $0x8] sm:$0xf]
    %v3477 = vld [vmem:[#allocation13 + $0xc] sm:$0xff]
    %v3478 = vld [vmem:[#allocation13 + $0x14] sm:$0xf]
    %v3479 = vld [vmem:[#allocation13 + $0x18] sm:$0xff]
    %v3480 = vld [vmem:[#allocation13 + $0x20] sm:$0xf]
    %v3481 = vld [vmem:[#allocation13 + $0x24] sm:$0xff]
    %v3482 = vld [vmem:[#allocation13 + $0x2c] sm:$0xf]
    %v3483 = vld [vmem:[#allocation13 + $0x30] sm:$0xff]
    %v3484 = vld [vmem:[#allocation13 + $0x38] sm:$0xf]
    %v3485 = vld [vmem:[#allocation13 + $0x3c] sm:$0xff]
    %v3486 = vld [vmem:[#allocation13 + $0x44] sm:$0xf]
    %v3487 = vld [vmem:[#allocation13 + $0x48] sm:$0xff]
    %v3488 = vld [vmem:[#allocation13 + $0x50] sm:$0xf]
    %v3489 = vld [vmem:[#allocation13 + $0x54] sm:$0xff]
    %v3490 = vld [vmem:[#allocation13 + $0x5c] sm:$0xf]
    %v3491 = vld [vmem:[#allocation13 + $0x60] sm:$0xff]
    %v3492 = vld [vmem:[#allocation13 + $0x68] sm:$0xf]
    %v3493 = vld [vmem:[#allocation13 + $0x6c] sm:$0xff]
    %v3494 = vld [vmem:[#allocation13 + $0x74] sm:$0xf]
    %v3495 = vld [vmem:[#allocation13 + $0x78] sm:$0xff]
    %v3496 = vld [vmem:[#allocation13 + $0x80] sm:$0xf]
    %v3497 = vld [vmem:[#allocation13 + $0x84] sm:$0xff]
    %v3498 = vld [vmem:[#allocation13 + $0x8c] sm:$0xf]
    %v3499 = vld [vmem:[#allocation13 + $0x90] sm:$0xff]
    %v3500 = vld [vmem:[#allocation13 + $0x98] sm:$0xf]
    %v3501 = vld [vmem:[#allocation13 + $0x9c] sm:$0xff]
    %v3502 = vld [vmem:[#allocation13 + $0xa4] sm:$0xf]
    %v3503 = vld [vmem:[#allocation13 + $0xa8] sm:$0xff]
    %v3504 = vld [vmem:[#allocation13 + $0xb0] sm:$0xf]
    %v3505 = vld [vmem:[#allocation13 + $0xb4] sm:$0xff]
    %v3506 = vld [vmem:[#allocation13 + $0xbc] sm:$0xf]
    %v3507 = vld [vmem:[#allocation13 + $0xc0] sm:$0xff]
    %v3508 = vld [vmem:[#allocation13 + $0xc8] sm:$0xf]
    %v3509 = vld [vmem:[#allocation13 + $0xcc] sm:$0xff]
    %v3510 = vld [vmem:[#allocation13 + $0xd4] sm:$0xf]
    %v3511 = vld [vmem:[#allocation13 + $0xd8] sm:$0xff]
    %v3512 = vld [vmem:[#allocation13 + $0xe0] sm:$0xf]
    %v3513 = vld [vmem:[#allocation13 + $0xe4] sm:$0xff]
    %v3514 = vld [vmem:[#allocation13 + $0xec] sm:$0xf]
    %v3515 = vld [vmem:[#allocation13 + $0xf0] sm:$0xff]
    %v3516 = vld [vmem:[#allocation13 + $0xf8] sm:$0xf]
    %v3517 = vld [vmem:[#allocation13 + $0xfc] sm:$0xff]
    %v3518 = vld [vmem:[#allocation13 + $0x104] sm:$0xf]
    %v3519 = vld [vmem:[#allocation13 + $0x108] sm:$0xff]
    %v3520 = vld [vmem:[#allocation13 + $0x110] sm:$0xf]
    %v3521 = vld [vmem:[#allocation13 + $0x114] sm:$0xff]
    %v3522 = vld [vmem:[#allocation13 + $0x11c] sm:$0xf]
    %v3523 = vld [vmem:[#allocation13 + $0x120] sm:$0xff]
    %v3524 = vld [vmem:[#allocation13 + $0x128] sm:$0xf]
    %v3525 = vld [vmem:[#allocation13 + $0x12c] sm:$0xff]
    %v3526 = vld [vmem:[#allocation13 + $0x134] sm:$0xf]
    %v3527 = vld [vmem:[#allocation13 + $0x138] sm:$0xff]
    %v3528 = vld [vmem:[#allocation13 + $0x140] sm:$0xf]
    %v3529 = vld [vmem:[#allocation13 + $0x144] sm:$0xff]
    %v3530 = vld [vmem:[#allocation13 + $0x14c] sm:$0xf]
    %v3531 = vld [vmem:[#allocation13 + $0x150] sm:$0xff]
    %v3532 = vld [vmem:[#allocation13 + $0x158] sm:$0xf]
    %v3533 = vld [vmem:[#allocation13 + $0x15c] sm:$0xff]
    %v3534 = vld [vmem:[#allocation13 + $0x164] sm:$0xf]
    %v3535 = vld [vmem:[#allocation13 + $0x168] sm:$0xff]
    %v3536 = vld [vmem:[#allocation13 + $0x170] sm:$0xf]
    %v3537 = vld [vmem:[#allocation13 + $0x174] sm:$0xff]
    %v3538 = vld [vmem:[#allocation13 + $0x17c] sm:$0xf]
    %v3539 = vld [vmem:[#allocation13 + $0x180] sm:$0xff]
    %v3540 = vld [vmem:[#allocation13 + $0x188] sm:$0xf]
    %v3541 = vld [vmem:[#allocation13 + $0x18c] sm:$0xff]
    %v3542 = vld [vmem:[#allocation13 + $0x194] sm:$0xf]
    %v3543 = vld [vmem:[#allocation13 + $0x198] sm:$0xff]
    %v3544 = vld [vmem:[#allocation13 + $0x1a0] sm:$0xf]
    %v3545 = vld [vmem:[#allocation13 + $0x1a4] sm:$0xff]
    %v3546 = vld [vmem:[#allocation13 + $0x1ac] sm:$0xf]
    %v3547 = vld [vmem:[#allocation13 + $0x1b0] sm:$0xff]
    %v3548 = vld [vmem:[#allocation13 + $0x1b8] sm:$0xf]
    %v3549 = vld [vmem:[#allocation13 + $0x1bc] sm:$0xff]
    %v3550 = vld [vmem:[#allocation13 + $0x1c4] sm:$0xf]
    %v3551 = vld [vmem:[#allocation13 + $0x1c8] sm:$0xff]
    %v3552 = vld [vmem:[#allocation13 + $0x1d0] sm:$0xf]
    %v3553 = vld [vmem:[#allocation13 + $0x1d4] sm:$0xff]
    %v3554 = vld [vmem:[#allocation13 + $0x1dc] sm:$0xf]
    %v3555 = vld [vmem:[#allocation13 + $0x1e0] sm:$0xff]
    %v3556 = vld [vmem:[#allocation13 + $0x1e8] sm:$0xf]
    %v3557 = vld [vmem:[#allocation13 + $0x1ec] sm:$0xff]
    %v3558 = vld [vmem:[#allocation13 + $0x1f4] sm:$0xf]
    %v3559 = vld [vmem:[#allocation13 + $0x1f8] sm:$0xff]
    %v3560 = vld [vmem:[#allocation13 + $0x200] sm:$0xf]
    %v3561 = vld [vmem:[#allocation13 + $0x204] sm:$0xff]
    %v3562 = vld [vmem:[#allocation13 + $0x20c] sm:$0xf]
    %v3563 = vld [vmem:[#allocation13 + $0x210] sm:$0xff]
    %v3564 = vld [vmem:[#allocation13 + $0x218] sm:$0xf]
    %v3565 = vld [vmem:[#allocation13 + $0x21c] sm:$0xff]
    %v3566 = vld [vmem:[#allocation13 + $0x224] sm:$0xf]
    %v3567 = vld [vmem:[#allocation13 + $0x228] sm:$0xff]
    %v3568 = vld [vmem:[#allocation13 + $0x230] sm:$0xf]
    %v3569 = vld [vmem:[#allocation13 + $0x234] sm:$0xff]
    %v3570 = vld [vmem:[#allocation13 + $0x23c] sm:$0xf]
    %v3571 = vld [vmem:[#allocation14] sm:$0x7]
    %v3573 = vlaneseq
    %v3574 = vshrl.u32 %v3573, 7
    %v3575 = vsub.s32 0, %v3574
    %v3576 = vrot.slane %v3571, %v3575
    %v3577 = vlaneseq
    %v3578 = vshrl.u32 %v3577, 7
    %v3579 = vsub.s32 1, %v3578
    %v3580 = vrot.slane %v3571, %v3579
    %v3581 = vlaneseq
    %v3582 = vshrl.u32 %v3581, 7
    %v3583 = vsub.s32 2, %v3582
    %v3584 = vrot.slane %v3571, %v3583
    %v3592 = vunpack.c.l.b16 %v3471
    %v3593 = vunpack.c.h.b16 %v3471
    %v3594 = vunpack.c.l.b16 %v3472
    %v3595 = vunpack.c.l.b16 %v3473
    %v3596 = vunpack.c.h.b16 %v3473
    %v3597 = vunpack.c.l.b16 %v3474
    %v3598 = vpack.c.b16 %v3595, %v3592
    %v3599 = vpack.c.b16 %v3596, %v3593
    %v3600 = vpack.c.b16 %v3597, %v3594
    %v3700 = vunpack.c.l.b16 %v3475
    %v3701 = vunpack.c.h.b16 %v3475
    %v3702 = vunpack.c.l.b16 %v3476
    %v3703 = vunpack.c.l.b16 %v3477
    %v3704 = vunpack.c.h.b16 %v3477
    %v3705 = vunpack.c.l.b16 %v3478
    %v3706 = vunpack.c.l.b16 %v3479
    %v3707 = vunpack.c.h.b16 %v3479
    %v3708 = vunpack.c.l.b16 %v3480
    %v3709 = vunpack.c.l.b16 %v3481
    %v3710 = vunpack.c.h.b16 %v3481
    %v3711 = vunpack.c.l.b16 %v3482
    %v3712 = vunpack.c.l.b16 %v3483
    %v3713 = vunpack.c.h.b16 %v3483
    %v3714 = vunpack.c.l.b16 %v3484
    %v3715 = vunpack.c.l.b16 %v3485
    %v3716 = vunpack.c.h.b16 %v3485
    %v3717 = vunpack.c.l.b16 %v3486
    %v3718 = vunpack.c.l.b16 %v3487
    %v3719 = vunpack.c.h.b16 %v3487
    %v3720 = vunpack.c.l.b16 %v3488
    %v3721 = vunpack.c.l.b16 %v3489
    %v3722 = vunpack.c.h.b16 %v3489
    %v3723 = vunpack.c.l.b16 %v3490
    %v3724 = vunpack.c.l.b16 %v3491
    %v3725 = vunpack.c.h.b16 %v3491
    %v3726 = vunpack.c.l.b16 %v3492
    %v3727 = vunpack.c.l.b16 %v3493
    %v3728 = vunpack.c.h.b16 %v3493
    %v3729 = vunpack.c.l.b16 %v3494
    %v3730 = vunpack.c.l.b16 %v3495
    %v3731 = vunpack.c.h.b16 %v3495
    %v3732 = vunpack.c.l.b16 %v3496
    %v3733 = vunpack.c.l.b16 %v3497
    %v3734 = vunpack.c.h.b16 %v3497
    %v3735 = vunpack.c.l.b16 %v3498
    %v3736 = vunpack.c.l.b16 %v3499
    %v3737 = vunpack.c.h.b16 %v3499
    %v3738 = vunpack.c.l.b16 %v3500
    %v3739 = vunpack.c.l.b16 %v3501
    %v3740 = vunpack.c.h.b16 %v3501
    %v3741 = vunpack.c.l.b16 %v3502
    %v3742 = vunpack.c.l.b16 %v3503
    %v3743 = vunpack.c.h.b16 %v3503
    %v3744 = vunpack.c.l.b16 %v3504
    %v3745 = vunpack.c.l.b16 %v3505
    %v3746 = vunpack.c.h.b16 %v3505
    %v3747 = vunpack.c.l.b16 %v3506
    %v3748 = vunpack.c.l.b16 %v3507
    %v3749 = vunpack.c.h.b16 %v3507
    %v3750 = vunpack.c.l.b16 %v3508
    %v3751 = vunpack.c.l.b16 %v3509
    %v3752 = vunpack.c.h.b16 %v3509
    %v3753 = vunpack.c.l.b16 %v3510
    %v3754 = vunpack.c.l.b16 %v3511
    %v3755 = vunpack.c.h.b16 %v3511
    %v3756 = vunpack.c.l.b16 %v3512
    %v3757 = vunpack.c.l.b16 %v3513
    %v3758 = vunpack.c.h.b16 %v3513
    %v3759 = vunpack.c.l.b16 %v3514
    %v3760 = vunpack.c.l.b16 %v3515
    %v3761 = vunpack.c.h.b16 %v3515
    %v3762 = vunpack.c.l.b16 %v3516
    %v3763 = vunpack.c.l.b16 %v3517
    %v3764 = vunpack.c.h.b16 %v3517
    %v3765 = vunpack.c.l.b16 %v3518
    %v3766 = vunpack.c.l.b16 %v3519
    %v3767 = vunpack.c.h.b16 %v3519
    %v3768 = vunpack.c.l.b16 %v3520
    %v3769 = vunpack.c.l.b16 %v3521
    %v3770 = vunpack.c.h.b16 %v3521
    %v3771 = vunpack.c.l.b16 %v3522
    %v3772 = vunpack.c.l.b16 %v3523
    %v3773 = vunpack.c.h.b16 %v3523
    %v3774 = vunpack.c.l.b16 %v3524
    %v3775 = vunpack.c.l.b16 %v3525
    %v3776 = vunpack.c.h.b16 %v3525
    %v3777 = vunpack.c.l.b16 %v3526
    %v3778 = vunpack.c.l.b16 %v3527
    %v3779 = vunpack.c.h.b16 %v3527
    %v3780 = vunpack.c.l.b16 %v3528
    %v3781 = vunpack.c.l.b16 %v3529
    %v3782 = vunpack.c.h.b16 %v3529
    %v3783 = vunpack.c.l.b16 %v3530
    %v3784 = vunpack.c.l.b16 %v3531
    %v3785 = vunpack.c.h.b16 %v3531
    %v3786 = vunpack.c.l.b16 %v3532
    %v3787 = vunpack.c.l.b16 %v3533
    %v3788 = vunpack.c.h.b16 %v3533
    %v3789 = vunpack.c.l.b16 %v3534
    %v3790 = vunpack.c.l.b16 %v3535
    %v3791 = vunpack.c.h.b16 %v3535
    %v3792 = vunpack.c.l.b16 %v3536
    %v3793 = vunpack.c.l.b16 %v3537
    %v3794 = vunpack.c.h.b16 %v3537
    %v3795 = vunpack.c.l.b16 %v3538
    %v3796 = vunpack.c.l.b16 %v3539
    %v3797 = vunpack.c.h.b16 %v3539
    %v3798 = vunpack.c.l.b16 %v3540
    %v3799 = vunpack.c.l.b16 %v3541
    %v3800 = vunpack.c.h.b16 %v3541
    %v3801 = vunpack.c.l.b16 %v3542
    %v3802 = vunpack.c.l.b16 %v3543
    %v3803 = vunpack.c.h.b16 %v3543
    %v3804 = vunpack.c.l.b16 %v3544
    %v3805 = vunpack.c.l.b16 %v3545
    %v3806 = vunpack.c.h.b16 %v3545
    %v3807 = vunpack.c.l.b16 %v3546
    %v3808 = vunpack.c.l.b16 %v3547
    %v3809 = vunpack.c.h.b16 %v3547
    %v3810 = vunpack.c.l.b16 %v3548
    %v3811 = vunpack.c.l.b16 %v3549
    %v3812 = vunpack.c.h.b16 %v3549
    %v3813 = vunpack.c.l.b16 %v3550
    %v3814 = vunpack.c.l.b16 %v3551
    %v3815 = vunpack.c.h.b16 %v3551
    %v3816 = vunpack.c.l.b16 %v3552
    %v3817 = vunpack.c.l.b16 %v3553
    %v3818 = vunpack.c.h.b16 %v3553
    %v3819 = vunpack.c.l.b16 %v3554
    %v3820 = vunpack.c.l.b16 %v3555
    %v3821 = vunpack.c.h.b16 %v3555
    %v3822 = vunpack.c.l.b16 %v3556
    %v3823 = vunpack.c.l.b16 %v3557
    %v3824 = vunpack.c.h.b16 %v3557
    %v3825 = vunpack.c.l.b16 %v3558
    %v3826 = vunpack.c.l.b16 %v3559
    %v3827 = vunpack.c.h.b16 %v3559
    %v3828 = vunpack.c.l.b16 %v3560
    %v3829 = vunpack.c.l.b16 %v3561
    %v3830 = vunpack.c.h.b16 %v3561
    %v3831 = vunpack.c.l.b16 %v3562
    %v3832 = vunpack.c.l.b16 %v3563
    %v3833 = vunpack.c.h.b16 %v3563
    %v3834 = vunpack.c.l.b16 %v3564
    %v3835 = vunpack.c.l.b16 %v3565
    %v3836 = vunpack.c.h.b16 %v3565
    %v3837 = vunpack.c.l.b16 %v3566
    %v3838 = vunpack.c.l.b16 %v3567
    %v3839 = vunpack.c.h.b16 %v3567
    %v3840 = vunpack.c.l.b16 %v3568
    %v3841 = vunpack.c.l.b16 %v3569
    %v3842 = vunpack.c.h.b16 %v3569
    %v3843 = vunpack.c.l.b16 %v3570
    %v3844 = vpack.c.b16 %v3703, %v3700
    %v3845 = vpack.c.b16 %v3704, %v3701
    %v3846 = vpack.c.b16 %v3705, %v3702
    %v3847 = vpack.c.b16 %v3709, %v3706
    %v3848 = vpack.c.b16 %v3710, %v3707
    %v3849 = vpack.c.b16 %v3711, %v3708
    %v3850 = vpack.c.b16 %v3715, %v3712
    %v3851 = vpack.c.b16 %v3716, %v3713
    %v3852 = vpack.c.b16 %v3717, %v3714
    %v3853 = vpack.c.b16 %v3721, %v3718
    %v3854 = vpack.c.b16 %v3722, %v3719
    %v3855 = vpack.c.b16 %v3723, %v3720
    %v3856 = vpack.c.b16 %v3727, %v3724
    %v3857 = vpack.c.b16 %v3728, %v3725
    %v3858 = vpack.c.b16 %v3729, %v3726
    %v3859 = vpack.c.b16 %v3733, %v3730
    %v3860 = vpack.c.b16 %v3734, %v3731
    %v3861 = vpack.c.b16 %v3735, %v3732
    %v3862 = vpack.c.b16 %v3739, %v3736
    %v3863 = vpack.c.b16 %v3740, %v3737
    %v3864 = vpack.c.b16 %v3741, %v3738
    %v3865 = vpack.c.b16 %v3745, %v3742
    %v3866 = vpack.c.b16 %v3746, %v3743
    %v3867 = vpack.c.b16 %v3747, %v3744
    %v3868 = vpack.c.b16 %v3751, %v3748
    %v3869 = vpack.c.b16 %v3752, %v3749
    %v3870 = vpack.c.b16 %v3753, %v3750
    %v3871 = vpack.c.b16 %v3757, %v3754
    %v3872 = vpack.c.b16 %v3758, %v3755
    %v3873 = vpack.c.b16 %v3759, %v3756
    %v3874 = vpack.c.b16 %v3763, %v3760
    %v3875 = vpack.c.b16 %v3764, %v3761
    %v3876 = vpack.c.b16 %v3765, %v3762
    %v3877 = vpack.c.b16 %v3769, %v3766
    %v3878 = vpack.c.b16 %v3770, %v3767
    %v3879 = vpack.c.b16 %v3771, %v3768
    %v3880 = vpack.c.b16 %v3775, %v3772
    %v3881 = vpack.c.b16 %v3776, %v3773
    %v3882 = vpack.c.b16 %v3777, %v3774
    %v3883 = vpack.c.b16 %v3781, %v3778
    %v3884 = vpack.c.b16 %v3782, %v3779
    %v3885 = vpack.c.b16 %v3783, %v3780
    %v3886 = vpack.c.b16 %v3787, %v3784
    %v3887 = vpack.c.b16 %v3788, %v3785
    %v3888 = vpack.c.b16 %v3789, %v3786
    %v3889 = vpack.c.b16 %v3793, %v3790
    %v3890 = vpack.c.b16 %v3794, %v3791
    %v3891 = vpack.c.b16 %v3795, %v3792
    %v3892 = vpack.c.b16 %v3799, %v3796
    %v3893 = vpack.c.b16 %v3800, %v3797
    %v3894 = vpack.c.b16 %v3801, %v3798
    %v3895 = vpack.c.b16 %v3805, %v3802
    %v3896 = vpack.c.b16 %v3806, %v3803
    %v3897 = vpack.c.b16 %v3807, %v3804
    %v3898 = vpack.c.b16 %v3811, %v3808
    %v3899 = vpack.c.b16 %v3812, %v3809
    %v3900 = vpack.c.b16 %v3813, %v3810
    %v3901 = vpack.c.b16 %v3817, %v3814
    %v3902 = vpack.c.b16 %v3818, %v3815
    %v3903 = vpack.c.b16 %v3819, %v3816
    %v3904 = vpack.c.b16 %v3823, %v3820
    %v3905 = vpack.c.b16 %v3824, %v3821
    %v3906 = vpack.c.b16 %v3825, %v3822
    %v3907 = vpack.c.b16 %v3829, %v3826
    %v3908 = vpack.c.b16 %v3830, %v3827
    %v3909 = vpack.c.b16 %v3831, %v3828
    %v3910 = vpack.c.b16 %v3835, %v3832
    %v3911 = vpack.c.b16 %v3836, %v3833
    %v3912 = vpack.c.b16 %v3837, %v3834
    %v3913 = vpack.c.b16 %v3841, %v3838
    %v3914 = vpack.c.b16 %v3842, %v3839
    %v3915 = vpack.c.b16 %v3843, %v3840
    %3988 = vmatprep.subr.bf16.mxu0 %v3845
    %3989 = vmatpush1.bf16.msra.mxu0 %v3844
    %3990 = vmatprep.subr.bf16.mxu0 %v3848
    %3991 = vmatpush1.bf16.msra.mxu0 %v3847
    %3992 = vmatprep.subr.bf16.mxu0 %v3851
    %3993 = vmatpush1.bf16.msra.mxu0 %v3850
    %3994 = vmatprep.subr.bf16.mxu0 %v3854
    %3995 = vmatpush1.bf16.msra.mxu0 %v3853
    %3996 = vmatprep.subr.bf16.mxu0 %v3857
    %3997 = vmatpush1.bf16.msra.mxu0 %v3856
    %3998 = vmatprep.subr.bf16.mxu0 %v3860
    %3999 = vmatpush1.bf16.msra.mxu0 %v3859
    %4000 = vmatprep.subr.bf16.mxu0 %v3863
    %4001 = vmatpush1.bf16.msra.mxu0 %v3862
    %4002 = vmatprep.subr.bf16.mxu0 %v3866
    %4003 = vmatpush1.bf16.msra.mxu0 %v3865
    %4004 = vmatprep.subr.bf16.mxu0 %v3869
    %4005 = vmatpush1.bf16.msra.mxu0 %v3868
    %4006 = vmatprep.subr.bf16.mxu0 %v3872
    %4007 = vmatpush1.bf16.msra.mxu0 %v3871
    %4008 = vmatprep.subr.bf16.mxu0 %v3875
    %4009 = vmatpush1.bf16.msra.mxu0 %v3874
    %4010 = vmatprep.subr.bf16.mxu0 %v3878
    %4011 = vmatpush1.bf16.msra.mxu0 %v3877
    %4012 = vmatprep.subr.bf16.mxu0 %v3881
    %4013 = vmatpush1.bf16.msra.mxu0 %v3880
    %4014 = vmatprep.subr.bf16.mxu0 %v3884
    %4015 = vmatpush1.bf16.msra.mxu0 %v3883
    %4016 = vmatprep.subr.bf16.mxu0 %v3887
    %4017 = vmatpush1.bf16.msra.mxu0 %v3886
    %4018 = vmatprep.subr.bf16.mxu0 %v3890
    %4019 = vmatpush1.bf16.msra.mxu0 %v3889
    %4020 = vmatprep.mubr.bf16.mxu0 %v3599
    %4021 = vmatmul.mubr.bf16.gmra.mrb[0].mxu0 %v3598
    %v4022 = vpop.f32.mrb[0].mxu0
    %v4023 = vadd.f32 %v3576, %v4022
    %v4024 = vpop.f32.mrb[0].mxu0
    %v4025 = vadd.f32 %v3580, %v4024
    %v4026 = vpop.f32.mrb[0].mxu0
    %v4027 = vadd.f32 %v3576, %v4026
    %v4028 = vpop.f32.mrb[0].mxu0
    %v4029 = vadd.f32 %v3580, %v4028
    %4030 = vdwg.mxu0
    %4031 = vmatprep.subr.bf16.mxu0 %v3893
    %4032 = vmatpush1.bf16.msra.mxu0 %v3892
    %4033 = vmatprep.subr.bf16.mxu0 %v3896
    %4034 = vmatpush1.bf16.msra.mxu0 %v3895
    %4035 = vmatprep.subr.bf16.mxu0 %v3899
    %4036 = vmatpush1.bf16.msra.mxu0 %v3898
    %4037 = vmatprep.subr.bf16.mxu0 %v3902
    %4038 = vmatpush1.bf16.msra.mxu0 %v3901
    %4039 = vmatprep.subr.bf16.mxu0 %v3905
    %4040 = vmatpush1.bf16.msra.mxu0 %v3904
    %4041 = vmatprep.subr.bf16.mxu0 %v3908
    %4042 = vmatpush1.bf16.msra.mxu0 %v3907
    %4043 = vmatprep.subr.bf16.mxu0 %v3911
    %4044 = vmatpush1.bf16.msra.mxu0 %v3910
    %4045 = vmatprep.subr.bf16.mxu0 %v3914
    %4046 = vmatpush1.bf16.msra.mxu0 %v3913
    %4047 = vmatprep.subr.bf16.mxu0 0
    %4048 = vmatpush1.bf16.msra.mxu0 0
    %4049 = vmatprep.subr.bf16.mxu0 0
    %4050 = vmatpush1.bf16.msra.mxu0 0
    %4051 = vmatprep.subr.bf16.mxu0 0
    %4052 = vmatpush1.bf16.msra.mxu0 0
    %4053 = vmatprep.subr.bf16.mxu0 0
    %4054 = vmatpush1.bf16.msra.mxu0 0
    %4055 = vmatprep.subr.bf16.mxu0 0
    %4056 = vmatpush1.bf16.msra.mxu0 0
    %4057 = vmatprep.subr.bf16.mxu0 0
    %4058 = vmatpush1.bf16.msra.mxu0 0
    %4059 = vmatprep.subr.bf16.mxu0 0
    %4060 = vmatpush1.bf16.msra.mxu0 0
    %4061 = vmatprep.subr.bf16.mxu0 0
    %4062 = vmatpush1.bf16.msra.mxu0 0
    %4063 = vmatprep.mubr.bf16.mxu0 0
    %4064 = vmatmul.mubr.bf16.gmra.mrb[0].mxu0 %v3600
    %v4065 = vpop.f32.mrb[0].mxu0
    %v4066 = vadd.f32 %v4023, %v4065
    %v4067 = vpop.f32.mrb[0].mxu0
    %v4068 = vadd.f32 %v4025, %v4067
    %v4069 = vpop.f32.mrb[0].mxu0
    %v4070 = vadd.f32 %v4027, %v4069
    %v4071 = vpop.f32.mrb[0].mxu0
    %v4072 = vadd.f32 %v4029, %v4071
    %4073 = vdwg.mxu0
    %4074 = vmatprep.subr.bf16.mxu0 0
    %4075 = vmatpush1.bf16.msra.mxu0 %v3846
    %4076 = vmatprep.subr.bf16.mxu0 0
    %4077 = vmatpush1.bf16.msra.mxu0 %v3849
    %4078 = vmatprep.subr.bf16.mxu0 0
    %4079 = vmatpush1.bf16.msra.mxu0 %v3852
    %4080 = vmatprep.subr.bf16.mxu0 0
    %4081 = vmatpush1.bf16.msra.mxu0 %v3855
    %4082 = vmatprep.subr.bf16.mxu0 0
    %4083 = vmatpush1.bf16.msra.mxu0 %v3858
    %4084 = vmatprep.subr.bf16.mxu0 0
    %4085 = vmatpush1.bf16.msra.mxu0 %v3861
    %4086 = vmatprep.subr.bf16.mxu0 0
    %4087 = vmatpush1.bf16.msra.mxu0 %v3864
    %4088 = vmatprep.subr.bf16.mxu0 0
    %4089 = vmatpush1.bf16.msra.mxu0 %v3867
    %4090 = vmatprep.subr.bf16.mxu0 0
    %4091 = vmatpush1.bf16.msra.mxu0 %v3870
    %4092 = vmatprep.subr.bf16.mxu0 0
    %4093 = vmatpush1.bf16.msra.mxu0 %v3873
    %4094 = vmatprep.subr.bf16.mxu0 0
    %4095 = vmatpush1.bf16.msra.mxu0 %v3876
    %4096 = vmatprep.subr.bf16.mxu0 0
    %4097 = vmatpush1.bf16.msra.mxu0 %v3879
    %4098 = vmatprep.subr.bf16.mxu0 0
    %4099 = vmatpush1.bf16.msra.mxu0 %v3882
    %4100 = vmatprep.subr.bf16.mxu0 0
    %4101 = vmatpush1.bf16.msra.mxu0 %v3885
    %4102 = vmatprep.subr.bf16.mxu0 0
    %4103 = vmatpush1.bf16.msra.mxu0 %v3888
    %4104 = vmatprep.subr.bf16.mxu0 0
    %4105 = vmatpush1.bf16.msra.mxu0 %v3891
    %4106 = vmatprep.mubr.bf16.mxu0 %v3599
    %4107 = vmatmul.mubr.bf16.gmra.mrb[0].mxu0 %v3598
    %v4108 = vpop.f32.mrb[0].mxu0
    %v4109 = vadd.f32 %v3584, %v4108
    %v4110 = vpop.f32.mrb[0].mxu0
    %v4111 = vpop.f32.mrb[0].mxu0
    %v4112 = vadd.f32 %v3584, %v4111
    %v4113 = vpop.f32.mrb[0].mxu0
    %4114 = vdwg.mxu0
    %4115 = vmatprep.subr.bf16.mxu0 0
    %4116 = vmatpush1.bf16.msra.mxu0 %v3894
    %4117 = vmatprep.subr.bf16.mxu0 0
    %4118 = vmatpush1.bf16.msra.mxu0 %v3897
    %4119 = vmatprep.subr.bf16.mxu0 0
    %4120 = vmatpush1.bf16.msra.mxu0 %v3900
    %4121 = vmatprep.subr.bf16.mxu0 0
    %4122 = vmatpush1.bf16.msra.mxu0 %v3903
    %4123 = vmatprep.subr.bf16.mxu0 0
    %4124 = vmatpush1.bf16.msra.mxu0 %v3906
    %4125 = vmatprep.subr.bf16.mxu0 0
    %4126 = vmatpush1.bf16.msra.mxu0 %v3909
    %4127 = vmatprep.subr.bf16.mxu0 0
    %4128 = vmatpush1.bf16.msra.mxu0 %v3912
    %4129 = vmatprep.subr.bf16.mxu0 0
    %4130 = vmatpush1.bf16.msra.mxu0 %v3915
    %4131 = vmatprep.subr.bf16.mxu0 0
    %4132 = vmatpush1.bf16.msra.mxu0 0
    %4133 = vmatprep.subr.bf16.mxu0 0
    %4134 = vmatpush1.bf16.msra.mxu0 0
    %4135 = vmatprep.subr.bf16.mxu0 0
    %4136 = vmatpush1.bf16.msra.mxu0 0
    %4137 = vmatprep.subr.bf16.mxu0 0
    %4138 = vmatpush1.bf16.msra.mxu0 0
    %4139 = vmatprep.subr.bf16.mxu0 0
    %4140 = vmatpush1.bf16.msra.mxu0 0
    %4141 = vmatprep.subr.bf16.mxu0 0
    %4142 = vmatpush1.bf16.msra.mxu0 0
    %4143 = vmatprep.subr.bf16.mxu0 0
    %4144 = vmatpush1.bf16.msra.mxu0 0
    %4145 = vmatprep.subr.bf16.mxu0 0
    %4146 = vmatpush1.bf16.msra.mxu0 0
    %4147 = vmatprep.mubr.bf16.mxu0 0
    %4148 = vmatmul.mubr.bf16.gmra.mrb[0].mxu0 %v3600
    %v4149 = vpop.f32.mrb[0].mxu0
    %v4150 = vadd.f32 %v4109, %v4149
    %v4151 = vpop.f32.mrb[0].mxu0
    %v4152 = vpop.f32.mrb[0].mxu0
    %v4153 = vadd.f32 %v4112, %v4152
    %v4154 = vpop.f32.mrb[0].mxu0
    %4155 = vdwg.mxu0
    %v4156 = vadd.f32 %v194, %v4066
    %v4157 = vadd.f32 %v195, %v4068
    %v4158 = vadd.f32 %v196, %v4150
    %v4159 = vadd.f32 %v197, %v4070
    %v4160 = vadd.f32 %v198, %v4072
    %v4161 = vadd.f32 %v199, %v4153
    %v4162 = vld [vmem:[#allocation16] sm:$0x7]
    %v4163 = vld [vmem:[#allocation17] sm:$0x7]
    %v4164 = vadd.f32 %v4156, %v4157
    %v4165 = vadd.f32 %v4164, %v4158
    %4166 = vadd.xlane.f32.xlu0 %v4165
    %v4167 = vpop.xlane.xlu0 %4166
    %v4168 = vadd.f32 %v4159, %v4160
    %v4169 = vadd.f32 %v4168, %v4161
    %4170 = vadd.xlane.f32.xlu0 %v4169
    %v4171 = vpop.xlane.xlu0 %4170
    %v4172 = vmul.f32 %v4167, %v210
    %v4173 = vmul.f32 %v4171, %v210
    %v4174 = vsub.f32 %v4156, %v4172
    %v4175 = vsub.f32 %v4157, %v4172
    %v4176 = vsub.f32 %v4158, %v4172
    %v4177 = vsub.f32 %v4159, %v4173
    %v4178 = vsub.f32 %v4160, %v4173
    %v4179 = vsub.f32 %v4161, %v4173
    %v4180 = vmul.f32 %v4174, %v4174
    %v4181 = vmul.f32 %v4175, %v4175
    %v4182 = vmul.f32 %v4176, %v4176
    %v4183 = vmul.f32 %v4177, %v4177
    %v4184 = vmul.f32 %v4178, %v4178
    %v4185 = vmul.f32 %v4179, %v4179
    %v4186 = vadd.f32 %v4180, %v4181
    %v4187 = vadd.f32 %v4186, %v4182
    %4188 = vadd.xlane.f32.xlu0 %v4187
    %v4189 = vpop.xlane.xlu0 %4188
    %v4190 = vadd.f32 %v4183, %v4184
    %v4191 = vadd.f32 %v4190, %v4185
    %4192 = vadd.xlane.f32.xlu0 %v4191
    %v4193 = vpop.xlane.xlu0 %4192
    %v4194 = vmul.f32 %v4189, %v210
    %v4195 = vmul.f32 %v4193, %v210
    %v4196 = vadd.f32 %v4194, 1e-05
    %v4197 = vadd.f32 %v4195, 1e-05
    %v4198 = vrsqrt.pop %v4196
    %v4199 = vrsqrt.pop %v4197
    %v4200 = vmul.f32 %v4174, %v4198
    %v4201 = vmul.f32 %v4175, %v4198
    %v4202 = vmul.f32 %v4176, %v4198
    %v4203 = vmul.f32 %v4177, %v4199
    %v4204 = vmul.f32 %v4178, %v4199
    %v4205 = vmul.f32 %v4179, %v4199
    %v4207 = vlaneseq
    %v4208 = vshrl.u32 %v4207, 7
    %v4209 = vsub.s32 0, %v4208
    %v4210 = vrot.slane %v4162, %v4209
    %v4211 = vlaneseq
    %v4212 = vshrl.u32 %v4211, 7
    %v4213 = vsub.s32 1, %v4212
    %v4214 = vrot.slane %v4162, %v4213
    %v4215 = vlaneseq
    %v4216 = vshrl.u32 %v4215, 7
    %v4217 = vsub.s32 2, %v4216
    %v4218 = vrot.slane %v4162, %v4217
    %v4222 = vmul.f32 %v4200, %v4210
    %v4223 = vmul.f32 %v4201, %v4214
    %v4224 = vmul.f32 %v4202, %v4218
    %v4225 = vmul.f32 %v4203, %v4210
    %v4226 = vmul.f32 %v4204, %v4214
    %v4227 = vmul.f32 %v4205, %v4218
    %v4229 = vlaneseq
    %v4230 = vshrl.u32 %v4229, 7
    %v4231 = vsub.s32 0, %v4230
    %v4232 = vrot.slane %v4163, %v4231
    %v4233 = vlaneseq
    %v4234 = vshrl.u32 %v4233, 7
    %v4235 = vsub.s32 1, %v4234
    %v4236 = vrot.slane %v4163, %v4235
    %v4237 = vlaneseq
    %v4238 = vshrl.u32 %v4237, 7
    %v4239 = vsub.s32 2, %v4238
    %v4240 = vrot.slane %v4163, %v4239
    %v4244 = vadd.f32 %v4222, %v4232
    %v4245 = vadd.f32 %v4223, %v4236
    %v4246 = vadd.f32 %v4224, %v4240
    %v4247 = vadd.f32 %v4225, %v4232
    %v4248 = vadd.f32 %v4226, %v4236
    %v4249 = vadd.f32 %v4227, %v4240
    %v4250 = vpack.c.bf16 %v4247, %v4244
    %v4251 = vpack.c.bf16 %v4248, %v4245
    %v4252 = vpack.c.bf16 %v4249, %v4246
    %v4253 = vld [vmem:[#allocation19] sm:$0xff]
    %v4254 = vld [vmem:[#allocation19 + $0x8] sm:$0xff]
    %v4255 = vld [vmem:[#allocation19 + $0x10] sm:$0xff]
    %v4256 = vld [vmem:[#allocation19 + $0x18] sm:$0xff]
    %v4257 = vld [vmem:[#allocation19 + $0x20] sm:$0xff]
    %v4258 = vld [vmem:[#allocation19 + $0x28] sm:$0xff]
    %v4259 = vld [vmem:[#allocation19 + $0x30] sm:$0xff]
    %v4260 = vld [vmem:[#allocation19 + $0x38] sm:$0xff]
    %v4261 = vld [vmem:[#allocation19 + $0x40] sm:$0xff]
    %v4262 = vld [vmem:[#allocation19 + $0x48] sm:$0xff]
    %v4263 = vld [vmem:[#allocation19 + $0x50] sm:$0xff]
    %v4264 = vld [vmem:[#allocation19 + $0x58] sm:$0xff]
    %v4265 = vld [vmem:[#allocation19 + $0x60] sm:$0xff]
    %v4266 = vld [vmem:[#allocation19 + $0x68] sm:$0xff]
    %v4267 = vld [vmem:[#allocation19 + $0x70] sm:$0xff]
    %v4268 = vld [vmem:[#allocation19 + $0x78] sm:$0xff]
    %v4269 = vld [vmem:[#allocation19 + $0x80] sm:$0xff]
    %v4270 = vld [vmem:[#allocation19 + $0x88] sm:$0xff]
    %v4271 = vld [vmem:[#allocation19 + $0x90] sm:$0xff]
    %v4272 = vld [vmem:[#allocation19 + $0x98] sm:$0xff]
    %v4273 = vld [vmem:[#allocation19 + $0xa0] sm:$0xff]
    %v4274 = vld [vmem:[#allocation19 + $0xa8] sm:$0xff]
    %v4275 = vld [vmem:[#allocation19 + $0xb0] sm:$0xff]
    %v4276 = vld [vmem:[#allocation19 + $0xb8] sm:$0xff]
    %v4277 = vld [vmem:[#allocation19 + $0xc0] sm:$0xff]
    %v4278 = vld [vmem:[#allocation19 + $0xc8] sm:$0xff]
    %v4279 = vld [vmem:[#allocation19 + $0xd0] sm:$0xff]
    %v4280 = vld [vmem:[#allocation19 + $0xd8] sm:$0xff]
    %v4281 = vld [vmem:[#allocation19 + $0xe0] sm:$0xff]
    %v4282 = vld [vmem:[#allocation19 + $0xe8] sm:$0xff]
    %v4283 = vld [vmem:[#allocation19 + $0xf0] sm:$0xff]
    %v4284 = vld [vmem:[#allocation19 + $0xf8] sm:$0xff]
    %v4285 = vld [vmem:[#allocation19 + $0x100] sm:$0xff]
    %v4286 = vld [vmem:[#allocation19 + $0x108] sm:$0xff]
    %v4287 = vld [vmem:[#allocation19 + $0x110] sm:$0xff]
    %v4288 = vld [vmem:[#allocation19 + $0x118] sm:$0xff]
    %v4289 = vld [vmem:[#allocation19 + $0x120] sm:$0xff]
    %v4290 = vld [vmem:[#allocation19 + $0x128] sm:$0xff]
    %v4291 = vld [vmem:[#allocation19 + $0x130] sm:$0xff]
    %v4292 = vld [vmem:[#allocation19 + $0x138] sm:$0xff]
    %v4293 = vld [vmem:[#allocation19 + $0x140] sm:$0xff]
    %v4294 = vld [vmem:[#allocation19 + $0x148] sm:$0xff]
    %v4295 = vld [vmem:[#allocation19 + $0x150] sm:$0xff]
    %v4296 = vld [vmem:[#allocation19 + $0x158] sm:$0xff]
    %v4297 = vld [vmem:[#allocation19 + $0x160] sm:$0xff]
    %v4298 = vld [vmem:[#allocation19 + $0x168] sm:$0xff]
    %v4299 = vld [vmem:[#allocation19 + $0x170] sm:$0xff]
    %v4300 = vld [vmem:[#allocation19 + $0x178] sm:$0xff]
    %v4301 = vld [vmem:[#allocation19 + $0x180] sm:$0xff]
    %v4302 = vld [vmem:[#allocation19 + $0x188] sm:$0xff]
    %v4303 = vld [vmem:[#allocation19 + $0x190] sm:$0xff]
    %v4304 = vld [vmem:[#allocation19 + $0x198] sm:$0xff]
    %v4305 = vld [vmem:[#allocation19 + $0x1a0] sm:$0xff]
    %v4306 = vld [vmem:[#allocation19 + $0x1a8] sm:$0xff]
    %v4307 = vld [vmem:[#allocation19 + $0x1b0] sm:$0xff]
    %v4308 = vld [vmem:[#allocation19 + $0x1b8] sm:$0xff]
    %v4309 = vld [vmem:[#allocation19 + $0x1c0] sm:$0xff]
    %v4310 = vld [vmem:[#allocation19 + $0x1c8] sm:$0xff]
    %v4311 = vld [vmem:[#allocation19 + $0x1d0] sm:$0xff]
    %v4312 = vld [vmem:[#allocation19 + $0x1d8] sm:$0xff]
    %v4313 = vld [vmem:[#allocation19 + $0x1e0] sm:$0xff]
    %v4314 = vld [vmem:[#allocation19 + $0x1e8] sm:$0xff]
    %v4315 = vld [vmem:[#allocation19 + $0x1f0] sm:$0xff]
    %v4316 = vld [vmem:[#allocation19 + $0x1f8] sm:$0xff]
    %v4317 = vld [vmem:[#allocation19 + $0x200] sm:$0xff]
    %v4318 = vld [vmem:[#allocation19 + $0x208] sm:$0xff]
    %v4319 = vld [vmem:[#allocation19 + $0x210] sm:$0xff]
    %v4320 = vld [vmem:[#allocation19 + $0x218] sm:$0xff]
    %v4321 = vld [vmem:[#allocation19 + $0x220] sm:$0xff]
    %v4322 = vld [vmem:[#allocation19 + $0x228] sm:$0xff]
    %v4323 = vld [vmem:[#allocation19 + $0x230] sm:$0xff]
    %v4324 = vld [vmem:[#allocation19 + $0x238] sm:$0xff]
    %v4325 = vld [vmem:[#allocation19 + $0x240] sm:$0xff]
    %v4326 = vld [vmem:[#allocation19 + $0x248] sm:$0xff]
    %v4327 = vld [vmem:[#allocation19 + $0x250] sm:$0xff]
    %v4328 = vld [vmem:[#allocation19 + $0x258] sm:$0xff]
    %v4329 = vld [vmem:[#allocation19 + $0x260] sm:$0xff]
    %v4330 = vld [vmem:[#allocation19 + $0x268] sm:$0xff]
    %v4331 = vld [vmem:[#allocation19 + $0x270] sm:$0xff]
    %v4332 = vld [vmem:[#allocation19 + $0x278] sm:$0xff]
    %v4333 = vld [vmem:[#allocation19 + $0x280] sm:$0xff]
    %v4334 = vld [vmem:[#allocation19 + $0x288] sm:$0xff]
    %v4335 = vld [vmem:[#allocation19 + $0x290] sm:$0xff]
    %v4336 = vld [vmem:[#allocation19 + $0x298] sm:$0xff]
    %v4337 = vld [vmem:[#allocation19 + $0x2a0] sm:$0xff]
    %v4338 = vld [vmem:[#allocation19 + $0x2a8] sm:$0xff]
    %v4339 = vld [vmem:[#allocation19 + $0x2b0] sm:$0xff]
    %v4340 = vld [vmem:[#allocation19 + $0x2b8] sm:$0xff]
    %v4341 = vld [vmem:[#allocation19 + $0x2c0] sm:$0xff]
    %v4342 = vld [vmem:[#allocation19 + $0x2c8] sm:$0xff]
    %v4343 = vld [vmem:[#allocation19 + $0x2d0] sm:$0xff]
    %v4344 = vld [vmem:[#allocation19 + $0x2d8] sm:$0xff]
    %v4345 = vld [vmem:[#allocation19 + $0x2e0] sm:$0xff]
    %v4346 = vld [vmem:[#allocation19 + $0x2e8] sm:$0xff]
    %v4347 = vld [vmem:[#allocation19 + $0x2f0] sm:$0xff]
    %v4348 = vld [vmem:[#allocation19 + $0x2f8] sm:$0xff]
    %v4349 = vld [vmem:[#allocation19 + $0x300] sm:$0xff]
    %v4350 = vld [vmem:[#allocation19 + $0x308] sm:$0xff]
    %v4351 = vld [vmem:[#allocation19 + $0x310] sm:$0xff]
    %v4352 = vld [vmem:[#allocation19 + $0x318] sm:$0xff]
    %v4353 = vld [vmem:[#allocation19 + $0x320] sm:$0xff]
    %v4354 = vld [vmem:[#allocation19 + $0x328] sm:$0xff]
    %v4355 = vld [vmem:[#allocation19 + $0x330] sm:$0xff]
    %v4356 = vld [vmem:[#allocation19 + $0x338] sm:$0xff]
    %v4357 = vld [vmem:[#allocation19 + $0x340] sm:$0xff]
    %v4358 = vld [vmem:[#allocation19 + $0x348] sm:$0xff]
    %v4359 = vld [vmem:[#allocation19 + $0x350] sm:$0xff]
    %v4360 = vld [vmem:[#allocation19 + $0x358] sm:$0xff]
    %v4361 = vld [vmem:[#allocation19 + $0x360] sm:$0xff]
    %v4362 = vld [vmem:[#allocation19 + $0x368] sm:$0xff]
    %v4363 = vld [vmem:[#allocation19 + $0x370] sm:$0xff]
    %v4364 = vld [vmem:[#allocation19 + $0x378] sm:$0xff]
    %v4365 = vld [vmem:[#allocation19 + $0x380] sm:$0xff]
    %v4366 = vld [vmem:[#allocation19 + $0x388] sm:$0xff]
    %v4367 = vld [vmem:[#allocation19 + $0x390] sm:$0xff]
    %v4368 = vld [vmem:[#allocation19 + $0x398] sm:$0xff]
    %v4369 = vld [vmem:[#allocation19 + $0x3a0] sm:$0xff]
    %v4370 = vld [vmem:[#allocation19 + $0x3a8] sm:$0xff]
    %v4371 = vld [vmem:[#allocation19 + $0x3b0] sm:$0xff]
    %v4372 = vld [vmem:[#allocation19 + $0x3b8] sm:$0xff]
    %v4373 = vld [vmem:[#allocation19 + $0x3c0] sm:$0xff]
    %v4374 = vld [vmem:[#allocation19 + $0x3c8] sm:$0xff]
    %v4375 = vld [vmem:[#allocation19 + $0x3d0] sm:$0xff]
    %v4376 = vld [vmem:[#allocation19 + $0x3d8] sm:$0xff]
    %v4377 = vld [vmem:[#allocation19 + $0x3e0] sm:$0xff]
    %v4378 = vld [vmem:[#allocation19 + $0x3e8] sm:$0xff]
    %v4379 = vld [vmem:[#allocation19 + $0x3f0] sm:$0xff]
    %v4380 = vld [vmem:[#allocation19 + $0x3f8] sm:$0xff]
    %v4381 = vld [vmem:[#allocation19 + $0x400] sm:$0xff]
    %v4382 = vld [vmem:[#allocation19 + $0x408] sm:$0xff]
    %v4383 = vld [vmem:[#allocation19 + $0x410] sm:$0xff]
    %v4384 = vld [vmem:[#allocation19 + $0x418] sm:$0xff]
    %v4385 = vld [vmem:[#allocation19 + $0x420] sm:$0xff]
    %v4386 = vld [vmem:[#allocation19 + $0x428] sm:$0xff]
    %v4387 = vld [vmem:[#allocation19 + $0x430] sm:$0xff]
    %v4388 = vld [vmem:[#allocation19 + $0x438] sm:$0xff]
    %v4389 = vld [vmem:[#allocation19 + $0x440] sm:$0xff]
    %v4390 = vld [vmem:[#allocation19 + $0x448] sm:$0xff]
    %v4391 = vld [vmem:[#allocation19 + $0x450] sm:$0xff]
    %v4392 = vld [vmem:[#allocation19 + $0x458] sm:$0xff]
    %v4393 = vld [vmem:[#allocation19 + $0x460] sm:$0xff]
    %v4394 = vld [vmem:[#allocation19 + $0x468] sm:$0xff]
    %v4395 = vld [vmem:[#allocation19 + $0x470] sm:$0xff]
    %v4396 = vld [vmem:[#allocation19 + $0x478] sm:$0xff]
    %v4397 = vld [vmem:[#allocation19 + $0x480] sm:$0xff]
    %v4398 = vld [vmem:[#allocation19 + $0x488] sm:$0xff]
    %v4399 = vld [vmem:[#allocation19 + $0x490] sm:$0xff]
    %v4400 = vld [vmem:[#allocation19 + $0x498] sm:$0xff]
    %v4401 = vld [vmem:[#allocation19 + $0x4a0] sm:$0xff]
    %v4402 = vld [vmem:[#allocation19 + $0x4a8] sm:$0xff]
    %v4403 = vld [vmem:[#allocation19 + $0x4b0] sm:$0xff]
    %v4404 = vld [vmem:[#allocation19 + $0x4b8] sm:$0xff]
    %v4405 = vld [vmem:[#allocation19 + $0x4c0] sm:$0xff]
    %v4406 = vld [vmem:[#allocation19 + $0x4c8] sm:$0xff]
    %v4407 = vld [vmem:[#allocation19 + $0x4d0] sm:$0xff]
    %v4408 = vld [vmem:[#allocation19 + $0x4d8] sm:$0xff]
    %v4409 = vld [vmem:[#allocation19 + $0x4e0] sm:$0xff]
    %v4410 = vld [vmem:[#allocation19 + $0x4e8] sm:$0xff]
    %v4411 = vld [vmem:[#allocation19 + $0x4f0] sm:$0xff]
    %v4412 = vld [vmem:[#allocation19 + $0x4f8] sm:$0xff]
    %v4413 = vld [vmem:[#allocation19 + $0x500] sm:$0xff]
    %v4414 = vld [vmem:[#allocation19 + $0x508] sm:$0xff]
    %v4415 = vld [vmem:[#allocation19 + $0x510] sm:$0xff]
    %v4416 = vld [vmem:[#allocation19 + $0x518] sm:$0xff]
    %v4417 = vld [vmem:[#allocation19 + $0x520] sm:$0xff]
    %v4418 = vld [vmem:[#allocation19 + $0x528] sm:$0xff]
    %v4419 = vld [vmem:[#allocation19 + $0x530] sm:$0xff]
    %v4420 = vld [vmem:[#allocation19 + $0x538] sm:$0xff]
    %v4421 = vld [vmem:[#allocation19 + $0x540] sm:$0xff]
    %v4422 = vld [vmem:[#allocation19 + $0x548] sm:$0xff]
    %v4423 = vld [vmem:[#allocation19 + $0x550] sm:$0xff]
    %v4424 = vld [vmem:[#allocation19 + $0x558] sm:$0xff]
    %v4425 = vld [vmem:[#allocation19 + $0x560] sm:$0xff]
    %v4426 = vld [vmem:[#allocation19 + $0x568] sm:$0xff]
    %v4427 = vld [vmem:[#allocation19 + $0x570] sm:$0xff]
    %v4428 = vld [vmem:[#allocation19 + $0x578] sm:$0xff]
    %v4429 = vld [vmem:[#allocation19 + $0x580] sm:$0xff]
    %v4430 = vld [vmem:[#allocation19 + $0x588] sm:$0xff]
    %v4431 = vld [vmem:[#allocation19 + $0x590] sm:$0xff]
    %v4432 = vld [vmem:[#allocation19 + $0x598] sm:$0xff]
    %v4433 = vld [vmem:[#allocation19 + $0x5a0] sm:$0xff]
    %v4434 = vld [vmem:[#allocation19 + $0x5a8] sm:$0xff]
    %v4435 = vld [vmem:[#allocation19 + $0x5b0] sm:$0xff]
    %v4436 = vld [vmem:[#allocation19 + $0x5b8] sm:$0xff]
    %v4437 = vld [vmem:[#allocation19 + $0x5c0] sm:$0xff]
    %v4438 = vld [vmem:[#allocation19 + $0x5c8] sm:$0xff]
    %v4439 = vld [vmem:[#allocation19 + $0x5d0] sm:$0xff]
    %v4440 = vld [vmem:[#allocation19 + $0x5d8] sm:$0xff]
    %v4441 = vld [vmem:[#allocation19 + $0x5e0] sm:$0xff]
    %v4442 = vld [vmem:[#allocation19 + $0x5e8] sm:$0xff]
    %v4443 = vld [vmem:[#allocation19 + $0x5f0] sm:$0xff]
    %v4444 = vld [vmem:[#allocation19 + $0x5f8] sm:$0xff]
    %v4445 = vld [vmem:[#allocation19 + $0x600] sm:$0xff]
    %v4446 = vld [vmem:[#allocation19 + $0x608] sm:$0xff]
    %v4447 = vld [vmem:[#allocation19 + $0x610] sm:$0xff]
    %v4448 = vld [vmem:[#allocation19 + $0x618] sm:$0xff]
    %v4449 = vld [vmem:[#allocation19 + $0x620] sm:$0xff]
    %v4450 = vld [vmem:[#allocation19 + $0x628] sm:$0xff]
    %v4451 = vld [vmem:[#allocation19 + $0x630] sm:$0xff]
    %v4452 = vld [vmem:[#allocation19 + $0x638] sm:$0xff]
    %v4453 = vld [vmem:[#allocation19 + $0x640] sm:$0xff]
    %v4454 = vld [vmem:[#allocation19 + $0x648] sm:$0xff]
    %v4455 = vld [vmem:[#allocation19 + $0x650] sm:$0xff]
    %v4456 = vld [vmem:[#allocation19 + $0x658] sm:$0xff]
    %v4457 = vld [vmem:[#allocation19 + $0x660] sm:$0xff]
    %v4458 = vld [vmem:[#allocation19 + $0x668] sm:$0xff]
    %v4459 = vld [vmem:[#allocation19 + $0x670] sm:$0xff]
    %v4460 = vld [vmem:[#allocation19 + $0x678] sm:$0xff]
    %v4461 = vld [vmem:[#allocation19 + $0x680] sm:$0xff]
    %v4462 = vld [vmem:[#allocation19 + $0x688] sm:$0xff]
    %v4463 = vld [vmem:[#allocation19 + $0x690] sm:$0xff]
    %v4464 = vld [vmem:[#allocation19 + $0x698] sm:$0xff]
    %v4465 = vld [vmem:[#allocation19 + $0x6a0] sm:$0xff]
    %v4466 = vld [vmem:[#allocation19 + $0x6a8] sm:$0xff]
    %v4467 = vld [vmem:[#allocation19 + $0x6b0] sm:$0xff]
    %v4468 = vld [vmem:[#allocation19 + $0x6b8] sm:$0xff]
    %v4469 = vld [vmem:[#allocation19 + $0x6c0] sm:$0xff]
    %v4470 = vld [vmem:[#allocation19 + $0x6c8] sm:$0xff]
    %v4471 = vld [vmem:[#allocation19 + $0x6d0] sm:$0xff]
    %v4472 = vld [vmem:[#allocation19 + $0x6d8] sm:$0xff]
    %v4473 = vld [vmem:[#allocation19 + $0x6e0] sm:$0xff]
    %v4474 = vld [vmem:[#allocation19 + $0x6e8] sm:$0xff]
    %v4475 = vld [vmem:[#allocation19 + $0x6f0] sm:$0xff]
    %v4476 = vld [vmem:[#allocation19 + $0x6f8] sm:$0xff]
    %v4477 = vld [vmem:[#allocation19 + $0x700] sm:$0xff]
    %v4478 = vld [vmem:[#allocation19 + $0x708] sm:$0xff]
    %v4479 = vld [vmem:[#allocation19 + $0x710] sm:$0xff]
    %v4480 = vld [vmem:[#allocation19 + $0x718] sm:$0xff]
    %v4481 = vld [vmem:[#allocation19 + $0x720] sm:$0xff]
    %v4482 = vld [vmem:[#allocation19 + $0x728] sm:$0xff]
    %v4483 = vld [vmem:[#allocation19 + $0x730] sm:$0xff]
    %v4484 = vld [vmem:[#allocation19 + $0x738] sm:$0xff]
    %v4485 = vld [vmem:[#allocation19 + $0x740] sm:$0xff]
    %v4486 = vld [vmem:[#allocation19 + $0x748] sm:$0xff]
    %v4487 = vld [vmem:[#allocation19 + $0x750] sm:$0xff]
    %v4488 = vld [vmem:[#allocation19 + $0x758] sm:$0xff]
    %v4489 = vld [vmem:[#allocation19 + $0x760] sm:$0xff]
    %v4490 = vld [vmem:[#allocation19 + $0x768] sm:$0xff]
    %v4491 = vld [vmem:[#allocation19 + $0x770] sm:$0xff]
    %v4492 = vld [vmem:[#allocation19 + $0x778] sm:$0xff]
    %v4493 = vld [vmem:[#allocation19 + $0x780] sm:$0xff]
    %v4494 = vld [vmem:[#allocation19 + $0x788] sm:$0xff]
    %v4495 = vld [vmem:[#allocation19 + $0x790] sm:$0xff]
    %v4496 = vld [vmem:[#allocation19 + $0x798] sm:$0xff]
    %v4497 = vld [vmem:[#allocation19 + $0x7a0] sm:$0xff]
    %v4498 = vld [vmem:[#allocation19 + $0x7a8] sm:$0xff]
    %v4499 = vld [vmem:[#allocation19 + $0x7b0] sm:$0xff]
    %v4500 = vld [vmem:[#allocation19 + $0x7b8] sm:$0xff]
    %v4501 = vld [vmem:[#allocation19 + $0x7c0] sm:$0xff]
    %v4502 = vld [vmem:[#allocation19 + $0x7c8] sm:$0xff]
    %v4503 = vld [vmem:[#allocation19 + $0x7d0] sm:$0xff]
    %v4504 = vld [vmem:[#allocation19 + $0x7d8] sm:$0xff]
    %v4505 = vld [vmem:[#allocation19 + $0x7e0] sm:$0xff]
    %v4506 = vld [vmem:[#allocation19 + $0x7e8] sm:$0xff]
    %v4507 = vld [vmem:[#allocation19 + $0x7f0] sm:$0xff]
    %v4508 = vld [vmem:[#allocation19 + $0x7f8] sm:$0xff]
    %v4509 = vld [vmem:[#allocation19 + $0x800] sm:$0xff]
    %v4510 = vld [vmem:[#allocation19 + $0x808] sm:$0xff]
    %v4511 = vld [vmem:[#allocation19 + $0x810] sm:$0xff]
    %v4512 = vld [vmem:[#allocation19 + $0x818] sm:$0xff]
    %v4513 = vld [vmem:[#allocation19 + $0x820] sm:$0xff]
    %v4514 = vld [vmem:[#allocation19 + $0x828] sm:$0xff]
    %v4515 = vld [vmem:[#allocation19 + $0x830] sm:$0xff]
    %v4516 = vld [vmem:[#allocation19 + $0x838] sm:$0xff]
    %v4517 = vld [vmem:[#allocation19 + $0x840] sm:$0xff]
    %v4518 = vld [vmem:[#allocation19 + $0x848] sm:$0xff]
    %v4519 = vld [vmem:[#allocation19 + $0x850] sm:$0xff]
    %v4520 = vld [vmem:[#allocation19 + $0x858] sm:$0xff]
    %v4521 = vld [vmem:[#allocation19 + $0x860] sm:$0xff]
    %v4522 = vld [vmem:[#allocation19 + $0x868] sm:$0xff]
    %v4523 = vld [vmem:[#allocation19 + $0x870] sm:$0xff]
    %v4524 = vld [vmem:[#allocation19 + $0x878] sm:$0xff]
    %v4525 = vld [vmem:[#allocation19 + $0x880] sm:$0xff]
    %v4526 = vld [vmem:[#allocation19 + $0x888] sm:$0xff]
    %v4527 = vld [vmem:[#allocation19 + $0x890] sm:$0xff]
    %v4528 = vld [vmem:[#allocation19 + $0x898] sm:$0xff]
    %v4529 = vld [vmem:[#allocation19 + $0x8a0] sm:$0xff]
    %v4530 = vld [vmem:[#allocation19 + $0x8a8] sm:$0xff]
    %v4531 = vld [vmem:[#allocation19 + $0x8b0] sm:$0xff]
    %v4532 = vld [vmem:[#allocation19 + $0x8b8] sm:$0xff]
    %v4533 = vld [vmem:[#allocation19 + $0x8c0] sm:$0xff]
    %v4534 = vld [vmem:[#allocation19 + $0x8c8] sm:$0xff]
    %v4535 = vld [vmem:[#allocation19 + $0x8d0] sm:$0xff]
    %v4536 = vld [vmem:[#allocation19 + $0x8d8] sm:$0xff]
    %v4537 = vld [vmem:[#allocation19 + $0x8e0] sm:$0xff]
    %v4538 = vld [vmem:[#allocation19 + $0x8e8] sm:$0xff]
    %v4539 = vld [vmem:[#allocation19 + $0x8f0] sm:$0xff]
    %v4540 = vld [vmem:[#allocation19 + $0x8f8] sm:$0xff]
    %v4541 = vld [vmem:[#allocation20] sm:$0xff]
    %v4542 = vld [vmem:[#allocation20 + $0x8] sm:$0xf]
    %v4545 = vlaneseq
    %v4546 = vshrl.u32 %v4545, 7
    %v4547 = vsub.s32 0, %v4546
    %v4548 = vrot.slane %v4541, %v4547
    %v4549 = vlaneseq
    %v4550 = vshrl.u32 %v4549, 7
    %v4551 = vsub.s32 1, %v4550
    %v4552 = vrot.slane %v4541, %v4551
    %v4553 = vlaneseq
    %v4554 = vshrl.u32 %v4553, 7
    %v4555 = vsub.s32 2, %v4554
    %v4556 = vrot.slane %v4541, %v4555
    %v4557 = vlaneseq
    %v4558 = vshrl.u32 %v4557, 7
    %v4559 = vsub.s32 3, %v4558
    %v4560 = vrot.slane %v4541, %v4559
    %v4561 = vlaneseq
    %v4562 = vshrl.u32 %v4561, 7
    %v4563 = vsub.s32 4, %v4562
    %v4564 = vrot.slane %v4541, %v4563
    %v4565 = vlaneseq
    %v4566 = vshrl.u32 %v4565, 7
    %v4567 = vsub.s32 5, %v4566
    %v4568 = vrot.slane %v4541, %v4567
    %v4569 = vlaneseq
    %v4570 = vshrl.u32 %v4569, 7
    %v4571 = vsub.s32 6, %v4570
    %v4572 = vrot.slane %v4541, %v4571
    %v4573 = vlaneseq
    %v4574 = vshrl.u32 %v4573, 7
    %v4575 = vsub.s32 7, %v4574
    %v4576 = vrot.slane %v4541, %v4575
    %v4577 = vlaneseq
    %v4578 = vshrl.u32 %v4577, 7
    %v4579 = vsub.s32 0, %v4578
    %v4580 = vrot.slane %v4542, %v4579
    %v4581 = vlaneseq
    %v4582 = vshrl.u32 %v4581, 7
    %v4583 = vsub.s32 1, %v4582
    %v4584 = vrot.slane %v4542, %v4583
    %v4585 = vlaneseq
    %v4586 = vshrl.u32 %v4585, 7
    %v4587 = vsub.s32 2, %v4586
    %v4588 = vrot.slane %v4542, %v4587
    %v4589 = vlaneseq
    %v4590 = vshrl.u32 %v4589, 7
    %v4591 = vsub.s32 3, %v4590
    %v4592 = vrot.slane %v4542, %v4591
    %v4893 = vunpack.c.l.b16 %v4253
    %v4894 = vunpack.c.h.b16 %v4253
    %v4895 = vunpack.c.l.b16 %v4254
    %v4896 = vunpack.c.h.b16 %v4254
    %v4897 = vunpack.c.l.b16 %v4255
    %v4898 = vunpack.c.h.b16 %v4255
    %v4899 = vunpack.c.l.b16 %v4256
    %v4900 = vunpack.c.h.b16 %v4256
    %v4901 = vunpack.c.l.b16 %v4257
    %v4902 = vunpack.c.h.b16 %v4257
    %v4903 = vunpack.c.l.b16 %v4258
    %v4904 = vunpack.c.h.b16 %v4258
    %v4905 = vunpack.c.l.b16 %v4259
    %v4906 = vunpack.c.h.b16 %v4259
    %v4907 = vunpack.c.l.b16 %v4260
    %v4908 = vunpack.c.h.b16 %v4260
    %v4909 = vunpack.c.l.b16 %v4261
    %v4910 = vunpack.c.h.b16 %v4261
    %v4911 = vunpack.c.l.b16 %v4262
    %v4912 = vunpack.c.h.b16 %v4262
    %v4913 = vunpack.c.l.b16 %v4263
    %v4914 = vunpack.c.h.b16 %v4263
    %v4915 = vunpack.c.l.b16 %v4264
    %v4916 = vunpack.c.h.b16 %v4264
    %v4917 = vunpack.c.l.b16 %v4265
    %v4918 = vunpack.c.h.b16 %v4265
    %v4919 = vunpack.c.l.b16 %v4266
    %v4920 = vunpack.c.h.b16 %v4266
    %v4921 = vunpack.c.l.b16 %v4267
    %v4922 = vunpack.c.h.b16 %v4267
    %v4923 = vunpack.c.l.b16 %v4268
    %v4924 = vunpack.c.h.b16 %v4268
    %v4925 = vunpack.c.l.b16 %v4269
    %v4926 = vunpack.c.h.b16 %v4269
    %v4927 = vunpack.c.l.b16 %v4270
    %v4928 = vunpack.c.h.b16 %v4270
    %v4929 = vunpack.c.l.b16 %v4271
    %v4930 = vunpack.c.h.b16 %v4271
    %v4931 = vunpack.c.l.b16 %v4272
    %v4932 = vunpack.c.h.b16 %v4272
    %v4933 = vunpack.c.l.b16 %v4273
    %v4934 = vunpack.c.h.b16 %v4273
    %v4935 = vunpack.c.l.b16 %v4274
    %v4936 = vunpack.c.h.b16 %v4274
    %v4937 = vunpack.c.l.b16 %v4275
    %v4938 = vunpack.c.h.b16 %v4275
    %v4939 = vunpack.c.l.b16 %v4276
    %v4940 = vunpack.c.h.b16 %v4276
    %v4941 = vunpack.c.l.b16 %v4277
    %v4942 = vunpack.c.h.b16 %v4277
    %v4943 = vunpack.c.l.b16 %v4278
    %v4944 = vunpack.c.h.b16 %v4278
    %v4945 = vunpack.c.l.b16 %v4279
    %v4946 = vunpack.c.h.b16 %v4279
    %v4947 = vunpack.c.l.b16 %v4280
    %v4948 = vunpack.c.h.b16 %v4280
    %v4949 = vunpack.c.l.b16 %v4281
    %v4950 = vunpack.c.h.b16 %v4281
    %v4951 = vunpack.c.l.b16 %v4282
    %v4952 = vunpack.c.h.b16 %v4282
    %v4953 = vunpack.c.l.b16 %v4283
    %v4954 = vunpack.c.h.b16 %v4283
    %v4955 = vunpack.c.l.b16 %v4284
    %v4956 = vunpack.c.h.b16 %v4284
    %v4957 = vunpack.c.l.b16 %v4285
    %v4958 = vunpack.c.h.b16 %v4285
    %v4959 = vunpack.c.l.b16 %v4286
    %v4960 = vunpack.c.h.b16 %v4286
    %v4961 = vunpack.c.l.b16 %v4287
    %v4962 = vunpack.c.h.b16 %v4287
    %v4963 = vunpack.c.l.b16 %v4288
    %v4964 = vunpack.c.h.b16 %v4288
    %v4965 = vunpack.c.l.b16 %v4289
    %v4966 = vunpack.c.h.b16 %v4289
    %v4967 = vunpack.c.l.b16 %v4290
    %v4968 = vunpack.c.h.b16 %v4290
    %v4969 = vunpack.c.l.b16 %v4291
    %v4970 = vunpack.c.h.b16 %v4291
    %v4971 = vunpack.c.l.b16 %v4292
    %v4972 = vunpack.c.h.b16 %v4292
    %v4973 = vunpack.c.l.b16 %v4293
    %v4974 = vunpack.c.h.b16 %v4293
    %v4975 = vunpack.c.l.b16 %v4294
    %v4976 = vunpack.c.h.b16 %v4294
    %v4977 = vunpack.c.l.b16 %v4295
    %v4978 = vunpack.c.h.b16 %v4295
    %v4979 = vunpack.c.l.b16 %v4296
    %v4980 = vunpack.c.h.b16 %v4296
    %v4981 = vunpack.c.l.b16 %v4297
    %v4982 = vunpack.c.h.b16 %v4297
    %v4983 = vunpack.c.l.b16 %v4298
    %v4984 = vunpack.c.h.b16 %v4298
    %v4985 = vunpack.c.l.b16 %v4299
    %v4986 = vunpack.c.h.b16 %v4299
    %v4987 = vunpack.c.l.b16 %v4300
    %v4988 = vunpack.c.h.b16 %v4300
    %v4989 = vunpack.c.l.b16 %v4301
    %v4990 = vunpack.c.h.b16 %v4301
    %v4991 = vunpack.c.l.b16 %v4302
    %v4992 = vunpack.c.h.b16 %v4302
    %v4993 = vunpack.c.l.b16 %v4303
    %v4994 = vunpack.c.h.b16 %v4303
    %v4995 = vunpack.c.l.b16 %v4304
    %v4996 = vunpack.c.h.b16 %v4304
    %v4997 = vunpack.c.l.b16 %v4305
    %v4998 = vunpack.c.h.b16 %v4305
    %v4999 = vunpack.c.l.b16 %v4306
    %v5000 = vunpack.c.h.b16 %v4306
    %v5001 = vunpack.c.l.b16 %v4307
    %v5002 = vunpack.c.h.b16 %v4307
    %v5003 = vunpack.c.l.b16 %v4308
    %v5004 = vunpack.c.h.b16 %v4308
    %v5005 = vunpack.c.l.b16 %v4309
    %v5006 = vunpack.c.h.b16 %v4309
    %v5007 = vunpack.c.l.b16 %v4310
    %v5008 = vunpack.c.h.b16 %v4310
    %v5009 = vunpack.c.l.b16 %v4311
    %v5010 = vunpack.c.h.b16 %v4311
    %v5011 = vunpack.c.l.b16 %v4312
    %v5012 = vunpack.c.h.b16 %v4312
    %v5013 = vunpack.c.l.b16 %v4313
    %v5014 = vunpack.c.h.b16 %v4313
    %v5015 = vunpack.c.l.b16 %v4314
    %v5016 = vunpack.c.h.b16 %v4314
    %v5017 = vunpack.c.l.b16 %v4315
    %v5018 = vunpack.c.h.b16 %v4315
    %v5019 = vunpack.c.l.b16 %v4316
    %v5020 = vunpack.c.h.b16 %v4316
    %v5021 = vunpack.c.l.b16 %v4317
    %v5022 = vunpack.c.h.b16 %v4317
    %v5023 = vunpack.c.l.b16 %v4318
    %v5024 = vunpack.c.h.b16 %v4318
    %v5025 = vunpack.c.l.b16 %v4319
    %v5026 = vunpack.c.h.b16 %v4319
    %v5027 = vunpack.c.l.b16 %v4320
    %v5028 = vunpack.c.h.b16 %v4320
    %v5029 = vunpack.c.l.b16 %v4321
    %v5030 = vunpack.c.h.b16 %v4321
    %v5031 = vunpack.c.l.b16 %v4322
    %v5032 = vunpack.c.h.b16 %v4322
    %v5033 = vunpack.c.l.b16 %v4323
    %v5034 = vunpack.c.h.b16 %v4323
    %v5035 = vunpack.c.l.b16 %v4324
    %v5036 = vunpack.c.h.b16 %v4324
    %v5037 = vunpack.c.l.b16 %v4325
    %v5038 = vunpack.c.h.b16 %v4325
    %v5039 = vunpack.c.l.b16 %v4326
    %v5040 = vunpack.c.h.b16 %v4326
    %v5041 = vunpack.c.l.b16 %v4327
    %v5042 = vunpack.c.h.b16 %v4327
    %v5043 = vunpack.c.l.b16 %v4328
    %v5044 = vunpack.c.h.b16 %v4328
    %v5045 = vunpack.c.l.b16 %v4329
    %v5046 = vunpack.c.h.b16 %v4329
    %v5047 = vunpack.c.l.b16 %v4330
    %v5048 = vunpack.c.h.b16 %v4330
    %v5049 = vunpack.c.l.b16 %v4331
    %v5050 = vunpack.c.h.b16 %v4331
    %v5051 = vunpack.c.l.b16 %v4332
    %v5052 = vunpack.c.h.b16 %v4332
    %v5053 = vunpack.c.l.b16 %v4333
    %v5054 = vunpack.c.h.b16 %v4333
    %v5055 = vunpack.c.l.b16 %v4334
    %v5056 = vunpack.c.h.b16 %v4334
    %v5057 = vunpack.c.l.b16 %v4335
    %v5058 = vunpack.c.h.b16 %v4335
    %v5059 = vunpack.c.l.b16 %v4336
    %v5060 = vunpack.c.h.b16 %v4336
    %v5061 = vunpack.c.l.b16 %v4337
    %v5062 = vunpack.c.h.b16 %v4337
    %v5063 = vunpack.c.l.b16 %v4338
    %v5064 = vunpack.c.h.b16 %v4338
    %v5065 = vunpack.c.l.b16 %v4339
    %v5066 = vunpack.c.h.b16 %v4339
    %v5067 = vunpack.c.l.b16 %v4340
    %v5068 = vunpack.c.h.b16 %v4340
    %v5069 = vunpack.c.l.b16 %v4341
    %v5070 = vunpack.c.h.b16 %v4341
    %v5071 = vunpack.c.l.b16 %v4342
    %v5072 = vunpack.c.h.b16 %v4342
    %v5073 = vunpack.c.l.b16 %v4343
    %v5074 = vunpack.c.h.b16 %v4343
    %v5075 = vunpack.c.l.b16 %v4344
    %v5076 = vunpack.c.h.b16 %v4344
    %v5077 = vunpack.c.l.b16 %v4345
    %v5078 = vunpack.c.h.b16 %v4345
    %v5079 = vunpack.c.l.b16 %v4346
    %v5080 = vunpack.c.h.b16 %v4346
    %v5081 = vunpack.c.l.b16 %v4347
    %v5082 = vunpack.c.h.b16 %v4347
    %v5083 = vunpack.c.l.b16 %v4348
    %v5084 = vunpack.c.h.b16 %v4348
    %v5085 = vunpack.c.l.b16 %v4349
    %v5086 = vunpack.c.h.b16 %v4349
    %v5087 = vunpack.c.l.b16 %v4350
    %v5088 = vunpack.c.h.b16 %v4350
    %v5089 = vunpack.c.l.b16 %v4351
    %v5090 = vunpack.c.h.b16 %v4351
    %v5091 = vunpack.c.l.b16 %v4352
    %v5092 = vunpack.c.h.b16 %v4352
    %v5093 = vunpack.c.l.b16 %v4353
    %v5094 = vunpack.c.h.b16 %v4353
    %v5095 = vunpack.c.l.b16 %v4354
    %v5096 = vunpack.c.h.b16 %v4354
    %v5097 = vunpack.c.l.b16 %v4355
    %v5098 = vunpack.c.h.b16 %v4355
    %v5099 = vunpack.c.l.b16 %v4356
    %v5100 = vunpack.c.h.b16 %v4356
    %v5101 = vunpack.c.l.b16 %v4357
    %v5102 = vunpack.c.h.b16 %v4357
    %v5103 = vunpack.c.l.b16 %v4358
    %v5104 = vunpack.c.h.b16 %v4358
    %v5105 = vunpack.c.l.b16 %v4359
    %v5106 = vunpack.c.h.b16 %v4359
    %v5107 = vunpack.c.l.b16 %v4360
    %v5108 = vunpack.c.h.b16 %v4360
    %v5109 = vunpack.c.l.b16 %v4361
    %v5110 = vunpack.c.h.b16 %v4361
    %v5111 = vunpack.c.l.b16 %v4362
    %v5112 = vunpack.c.h.b16 %v4362
    %v5113 = vunpack.c.l.b16 %v4363
    %v5114 = vunpack.c.h.b16 %v4363
    %v5115 = vunpack.c.l.b16 %v4364
    %v5116 = vunpack.c.h.b16 %v4364
    %v5117 = vunpack.c.l.b16 %v4365
    %v5118 = vunpack.c.h.b16 %v4365
    %v5119 = vunpack.c.l.b16 %v4366
    %v5120 = vunpack.c.h.b16 %v4366
    %v5121 = vunpack.c.l.b16 %v4367
    %v5122 = vunpack.c.h.b16 %v4367
    %v5123 = vunpack.c.l.b16 %v4368
    %v5124 = vunpack.c.h.b16 %v4368
    %v5125 = vunpack.c.l.b16 %v4369
    %v5126 = vunpack.c.h.b16 %v4369
    %v5127 = vunpack.c.l.b16 %v4370
    %v5128 = vunpack.c.h.b16 %v4370
    %v5129 = vunpack.c.l.b16 %v4371
    %v5130 = vunpack.c.h.b16 %v4371
    %v5131 = vunpack.c.l.b16 %v4372
    %v5132 = vunpack.c.h.b16 %v4372
    %v5133 = vunpack.c.l.b16 %v4373
    %v5134 = vunpack.c.h.b16 %v4373
    %v5135 = vunpack.c.l.b16 %v4374
    %v5136 = vunpack.c.h.b16 %v4374
    %v5137 = vunpack.c.l.b16 %v4375
    %v5138 = vunpack.c.h.b16 %v4375
    %v5139 = vunpack.c.l.b16 %v4376
    %v5140 = vunpack.c.h.b16 %v4376
    %v5141 = vunpack.c.l.b16 %v4377
    %v5142 = vunpack.c.h.b16 %v4377
    %v5143 = vunpack.c.l.b16 %v4378
    %v5144 = vunpack.c.h.b16 %v4378
    %v5145 = vunpack.c.l.b16 %v4379
    %v5146 = vunpack.c.h.b16 %v4379
    %v5147 = vunpack.c.l.b16 %v4380
    %v5148 = vunpack.c.h.b16 %v4380
    %v5149 = vunpack.c.l.b16 %v4381
    %v5150 = vunpack.c.h.b16 %v4381
    %v5151 = vunpack.c.l.b16 %v4382
    %v5152 = vunpack.c.h.b16 %v4382
    %v5153 = vunpack.c.l.b16 %v4383
    %v5154 = vunpack.c.h.b16 %v4383
    %v5155 = vunpack.c.l.b16 %v4384
    %v5156 = vunpack.c.h.b16 %v4384
    %v5157 = vunpack.c.l.b16 %v4385
    %v5158 = vunpack.c.h.b16 %v4385
    %v5159 = vunpack.c.l.b16 %v4386
    %v5160 = vunpack.c.h.b16 %v4386
    %v5161 = vunpack.c.l.b16 %v4387
    %v5162 = vunpack.c.h.b16 %v4387
    %v5163 = vunpack.c.l.b16 %v4388
    %v5164 = vunpack.c.h.b16 %v4388
    %v5165 = vunpack.c.l.b16 %v4389
    %v5166 = vunpack.c.h.b16 %v4389
    %v5167 = vunpack.c.l.b16 %v4390
    %v5168 = vunpack.c.h.b16 %v4390
    %v5169 = vunpack.c.l.b16 %v4391
    %v5170 = vunpack.c.h.b16 %v4391
    %v5171 = vunpack.c.l.b16 %v4392
    %v5172 = vunpack.c.h.b16 %v4392
    %v5173 = vunpack.c.l.b16 %v4393
    %v5174 = vunpack.c.h.b16 %v4393
    %v5175 = vunpack.c.l.b16 %v4394
    %v5176 = vunpack.c.h.b16 %v4394
    %v5177 = vunpack.c.l.b16 %v4395
    %v5178 = vunpack.c.h.b16 %v4395
    %v5179 = vunpack.c.l.b16 %v4396
    %v5180 = vunpack.c.h.b16 %v4396
    %v5181 = vunpack.c.l.b16 %v4397
    %v5182 = vunpack.c.h.b16 %v4397
    %v5183 = vunpack.c.l.b16 %v4398
    %v5184 = vunpack.c.h.b16 %v4398
    %v5185 = vunpack.c.l.b16 %v4399
    %v5186 = vunpack.c.h.b16 %v4399
    %v5187 = vunpack.c.l.b16 %v4400
    %v5188 = vunpack.c.h.b16 %v4400
    %v5189 = vunpack.c.l.b16 %v4401
    %v5190 = vunpack.c.h.b16 %v4401
    %v5191 = vunpack.c.l.b16 %v4402
    %v5192 = vunpack.c.h.b16 %v4402
    %v5193 = vunpack.c.l.b16 %v4403
    %v5194 = vunpack.c.h.b16 %v4403
    %v5195 = vunpack.c.l.b16 %v4404
    %v5196 = vunpack.c.h.b16 %v4404
    %v5197 = vunpack.c.l.b16 %v4405
    %v5198 = vunpack.c.h.b16 %v4405
    %v5199 = vunpack.c.l.b16 %v4406
    %v5200 = vunpack.c.h.b16 %v4406
    %v5201 = vunpack.c.l.b16 %v4407
    %v5202 = vunpack.c.h.b16 %v4407
    %v5203 = vunpack.c.l.b16 %v4408
    %v5204 = vunpack.c.h.b16 %v4408
    %v5205 = vunpack.c.l.b16 %v4409
    %v5206 = vunpack.c.h.b16 %v4409
    %v5207 = vunpack.c.l.b16 %v4410
    %v5208 = vunpack.c.h.b16 %v4410
    %v5209 = vunpack.c.l.b16 %v4411
    %v5210 = vunpack.c.h.b16 %v4411
    %v5211 = vunpack.c.l.b16 %v4412
    %v5212 = vunpack.c.h.b16 %v4412
    %v5213 = vunpack.c.l.b16 %v4413
    %v5214 = vunpack.c.h.b16 %v4413
    %v5215 = vunpack.c.l.b16 %v4414
    %v5216 = vunpack.c.h.b16 %v4414
    %v5217 = vunpack.c.l.b16 %v4415
    %v5218 = vunpack.c.h.b16 %v4415
    %v5219 = vunpack.c.l.b16 %v4416
    %v5220 = vunpack.c.h.b16 %v4416
    %v5221 = vunpack.c.l.b16 %v4417
    %v5222 = vunpack.c.h.b16 %v4417
    %v5223 = vunpack.c.l.b16 %v4418
    %v5224 = vunpack.c.h.b16 %v4418
    %v5225 = vunpack.c.l.b16 %v4419
    %v5226 = vunpack.c.h.b16 %v4419
    %v5227 = vunpack.c.l.b16 %v4420
    %v5228 = vunpack.c.h.b16 %v4420
    %v5229 = vunpack.c.l.b16 %v4421
    %v5230 = vunpack.c.h.b16 %v4421
    %v5231 = vunpack.c.l.b16 %v4422
    %v5232 = vunpack.c.h.b16 %v4422
    %v5233 = vunpack.c.l.b16 %v4423
    %v5234 = vunpack.c.h.b16 %v4423
    %v5235 = vunpack.c.l.b16 %v4424
    %v5236 = vunpack.c.h.b16 %v4424
    %v5237 = vunpack.c.l.b16 %v4425
    %v5238 = vunpack.c.h.b16 %v4425
    %v5239 = vunpack.c.l.b16 %v4426
    %v5240 = vunpack.c.h.b16 %v4426
    %v5241 = vunpack.c.l.b16 %v4427
    %v5242 = vunpack.c.h.b16 %v4427
    %v5243 = vunpack.c.l.b16 %v4428
    %v5244 = vunpack.c.h.b16 %v4428
    %v5245 = vunpack.c.l.b16 %v4429
    %v5246 = vunpack.c.h.b16 %v4429
    %v5247 = vunpack.c.l.b16 %v4430
    %v5248 = vunpack.c.h.b16 %v4430
    %v5249 = vunpack.c.l.b16 %v4431
    %v5250 = vunpack.c.h.b16 %v4431
    %v5251 = vunpack.c.l.b16 %v4432
    %v5252 = vunpack.c.h.b16 %v4432
    %v5253 = vunpack.c.l.b16 %v4433
    %v5254 = vunpack.c.h.b16 %v4433
    %v5255 = vunpack.c.l.b16 %v4434
    %v5256 = vunpack.c.h.b16 %v4434
    %v5257 = vunpack.c.l.b16 %v4435
    %v5258 = vunpack.c.h.b16 %v4435
    %v5259 = vunpack.c.l.b16 %v4436
    %v5260 = vunpack.c.h.b16 %v4436
    %v5261 = vunpack.c.l.b16 %v4437
    %v5262 = vunpack.c.h.b16 %v4437
    %v5263 = vunpack.c.l.b16 %v4438
    %v5264 = vunpack.c.h.b16 %v4438
    %v5265 = vunpack.c.l.b16 %v4439
    %v5266 = vunpack.c.h.b16 %v4439
    %v5267 = vunpack.c.l.b16 %v4440
    %v5268 = vunpack.c.h.b16 %v4440
    %v5269 = vunpack.c.l.b16 %v4441
    %v5270 = vunpack.c.h.b16 %v4441
    %v5271 = vunpack.c.l.b16 %v4442
    %v5272 = vunpack.c.h.b16 %v4442
    %v5273 = vunpack.c.l.b16 %v4443
    %v5274 = vunpack.c.h.b16 %v4443
    %v5275 = vunpack.c.l.b16 %v4444
    %v5276 = vunpack.c.h.b16 %v4444
    %v5277 = vunpack.c.l.b16 %v4445
    %v5278 = vunpack.c.h.b16 %v4445
    %v5279 = vunpack.c.l.b16 %v4446
    %v5280 = vunpack.c.h.b16 %v4446
    %v5281 = vunpack.c.l.b16 %v4447
    %v5282 = vunpack.c.h.b16 %v4447
    %v5283 = vunpack.c.l.b16 %v4448
    %v5284 = vunpack.c.h.b16 %v4448
    %v5285 = vunpack.c.l.b16 %v4449
    %v5286 = vunpack.c.h.b16 %v4449
    %v5287 = vunpack.c.l.b16 %v4450
    %v5288 = vunpack.c.h.b16 %v4450
    %v5289 = vunpack.c.l.b16 %v4451
    %v5290 = vunpack.c.h.b16 %v4451
    %v5291 = vunpack.c.l.b16 %v4452
    %v5292 = vunpack.c.h.b16 %v4452
    %v5293 = vunpack.c.l.b16 %v4453
    %v5294 = vunpack.c.h.b16 %v4453
    %v5295 = vunpack.c.l.b16 %v4454
    %v5296 = vunpack.c.h.b16 %v4454
    %v5297 = vunpack.c.l.b16 %v4455
    %v5298 = vunpack.c.h.b16 %v4455
    %v5299 = vunpack.c.l.b16 %v4456
    %v5300 = vunpack.c.h.b16 %v4456
    %v5301 = vunpack.c.l.b16 %v4457
    %v5302 = vunpack.c.h.b16 %v4457
    %v5303 = vunpack.c.l.b16 %v4458
    %v5304 = vunpack.c.h.b16 %v4458
    %v5305 = vunpack.c.l.b16 %v4459
    %v5306 = vunpack.c.h.b16 %v4459
    %v5307 = vunpack.c.l.b16 %v4460
    %v5308 = vunpack.c.h.b16 %v4460
    %v5309 = vunpack.c.l.b16 %v4461
    %v5310 = vunpack.c.h.b16 %v4461
    %v5311 = vunpack.c.l.b16 %v4462
    %v5312 = vunpack.c.h.b16 %v4462
    %v5313 = vunpack.c.l.b16 %v4463
    %v5314 = vunpack.c.h.b16 %v4463
    %v5315 = vunpack.c.l.b16 %v4464
    %v5316 = vunpack.c.h.b16 %v4464
    %v5317 = vunpack.c.l.b16 %v4465
    %v5318 = vunpack.c.h.b16 %v4465
    %v5319 = vunpack.c.l.b16 %v4466
    %v5320 = vunpack.c.h.b16 %v4466
    %v5321 = vunpack.c.l.b16 %v4467
    %v5322 = vunpack.c.h.b16 %v4467
    %v5323 = vunpack.c.l.b16 %v4468
    %v5324 = vunpack.c.h.b16 %v4468
    %v5325 = vunpack.c.l.b16 %v4469
    %v5326 = vunpack.c.h.b16 %v4469
    %v5327 = vunpack.c.l.b16 %v4470
    %v5328 = vunpack.c.h.b16 %v4470
    %v5329 = vunpack.c.l.b16 %v4471
    %v5330 = vunpack.c.h.b16 %v4471
    %v5331 = vunpack.c.l.b16 %v4472
    %v5332 = vunpack.c.h.b16 %v4472
    %v5333 = vunpack.c.l.b16 %v4473
    %v5334 = vunpack.c.h.b16 %v4473
    %v5335 = vunpack.c.l.b16 %v4474
    %v5336 = vunpack.c.h.b16 %v4474
    %v5337 = vunpack.c.l.b16 %v4475
    %v5338 = vunpack.c.h.b16 %v4475
    %v5339 = vunpack.c.l.b16 %v4476
    %v5340 = vunpack.c.h.b16 %v4476
    %v5341 = vunpack.c.l.b16 %v4477
    %v5342 = vunpack.c.h.b16 %v4477
    %v5343 = vunpack.c.l.b16 %v4478
    %v5344 = vunpack.c.h.b16 %v4478
    %v5345 = vunpack.c.l.b16 %v4479
    %v5346 = vunpack.c.h.b16 %v4479
    %v5347 = vunpack.c.l.b16 %v4480
    %v5348 = vunpack.c.h.b16 %v4480
    %v5349 = vunpack.c.l.b16 %v4481
    %v5350 = vunpack.c.h.b16 %v4481
    %v5351 = vunpack.c.l.b16 %v4482
    %v5352 = vunpack.c.h.b16 %v4482
    %v5353 = vunpack.c.l.b16 %v4483
    %v5354 = vunpack.c.h.b16 %v4483
    %v5355 = vunpack.c.l.b16 %v4484
    %v5356 = vunpack.c.h.b16 %v4484
    %v5357 = vunpack.c.l.b16 %v4485
    %v5358 = vunpack.c.h.b16 %v4485
    %v5359 = vunpack.c.l.b16 %v4486
    %v5360 = vunpack.c.h.b16 %v4486
    %v5361 = vunpack.c.l.b16 %v4487
    %v5362 = vunpack.c.h.b16 %v4487
    %v5363 = vunpack.c.l.b16 %v4488
    %v5364 = vunpack.c.h.b16 %v4488
    %v5365 = vunpack.c.l.b16 %v4489
    %v5366 = vunpack.c.h.b16 %v4489
    %v5367 = vunpack.c.l.b16 %v4490
    %v5368 = vunpack.c.h.b16 %v4490
    %v5369 = vunpack.c.l.b16 %v4491
    %v5370 = vunpack.c.h.b16 %v4491
    %v5371 = vunpack.c.l.b16 %v4492
    %v5372 = vunpack.c.h.b16 %v4492
    %v5373 = vunpack.c.l.b16 %v4493
    %v5374 = vunpack.c.h.b16 %v4493
    %v5375 = vunpack.c.l.b16 %v4494
    %v5376 = vunpack.c.h.b16 %v4494
    %v5377 = vunpack.c.l.b16 %v4495
    %v5378 = vunpack.c.h.b16 %v4495
    %v5379 = vunpack.c.l.b16 %v4496
    %v5380 = vunpack.c.h.b16 %v4496
    %v5381 = vunpack.c.l.b16 %v4497
    %v5382 = vunpack.c.h.b16 %v4497
    %v5383 = vunpack.c.l.b16 %v4498
    %v5384 = vunpack.c.h.b16 %v4498
    %v5385 = vunpack.c.l.b16 %v4499
    %v5386 = vunpack.c.h.b16 %v4499
    %v5387 = vunpack.c.l.b16 %v4500
    %v5388 = vunpack.c.h.b16 %v4500
    %v5389 = vunpack.c.l.b16 %v4501
    %v5390 = vunpack.c.h.b16 %v4501
    %v5391 = vunpack.c.l.b16 %v4502
    %v5392 = vunpack.c.h.b16 %v4502
    %v5393 = vunpack.c.l.b16 %v4503
    %v5394 = vunpack.c.h.b16 %v4503
    %v5395 = vunpack.c.l.b16 %v4504
    %v5396 = vunpack.c.h.b16 %v4504
    %v5397 = vunpack.c.l.b16 %v4505
    %v5398 = vunpack.c.h.b16 %v4505
    %v5399 = vunpack.c.l.b16 %v4506
    %v5400 = vunpack.c.h.b16 %v4506
    %v5401 = vunpack.c.l.b16 %v4507
    %v5402 = vunpack.c.h.b16 %v4507
    %v5403 = vunpack.c.l.b16 %v4508
    %v5404 = vunpack.c.h.b16 %v4508
    %v5405 = vunpack.c.l.b16 %v4509
    %v5406 = vunpack.c.h.b16 %v4509
    %v5407 = vunpack.c.l.b16 %v4510
    %v5408 = vunpack.c.h.b16 %v4510
    %v5409 = vunpack.c.l.b16 %v4511
    %v5410 = vunpack.c.h.b16 %v4511
    %v5411 = vunpack.c.l.b16 %v4512
    %v5412 = vunpack.c.h.b16 %v4512
    %v5413 = vunpack.c.l.b16 %v4513
    %v5414 = vunpack.c.h.b16 %v4513
    %v5415 = vunpack.c.l.b16 %v4514
    %v5416 = vunpack.c.h.b16 %v4514
    %v5417 = vunpack.c.l.b16 %v4515
    %v5418 = vunpack.c.h.b16 %v4515
    %v5419 = vunpack.c.l.b16 %v4516
    %v5420 = vunpack.c.h.b16 %v4516
    %v5421 = vunpack.c.l.b16 %v4517
    %v5422 = vunpack.c.h.b16 %v4517
    %v5423 = vunpack.c.l.b16 %v4518
    %v5424 = vunpack.c.h.b16 %v4518
    %v5425 = vunpack.c.l.b16 %v4519
    %v5426 = vunpack.c.h.b16 %v4519
    %v5427 = vunpack.c.l.b16 %v4520
    %v5428 = vunpack.c.h.b16 %v4520
    %v5429 = vunpack.c.l.b16 %v4521
    %v5430 = vunpack.c.h.b16 %v4521
    %v5431 = vunpack.c.l.b16 %v4522
    %v5432 = vunpack.c.h.b16 %v4522
    %v5433 = vunpack.c.l.b16 %v4523
    %v5434 = vunpack.c.h.b16 %v4523
    %v5435 = vunpack.c.l.b16 %v4524
    %v5436 = vunpack.c.h.b16 %v4524
    %v5437 = vunpack.c.l.b16 %v4525
    %v5438 = vunpack.c.h.b16 %v4525
    %v5439 = vunpack.c.l.b16 %v4526
    %v5440 = vunpack.c.h.b16 %v4526
    %v5441 = vunpack.c.l.b16 %v4527
    %v5442 = vunpack.c.h.b16 %v4527
    %v5443 = vunpack.c.l.b16 %v4528
    %v5444 = vunpack.c.h.b16 %v4528
    %v5445 = vunpack.c.l.b16 %v4529
    %v5446 = vunpack.c.h.b16 %v4529
    %v5447 = vunpack.c.l.b16 %v4530
    %v5448 = vunpack.c.h.b16 %v4530
    %v5449 = vunpack.c.l.b16 %v4531
    %v5450 = vunpack.c.h.b16 %v4531
    %v5451 = vunpack.c.l.b16 %v4532
    %v5452 = vunpack.c.h.b16 %v4532
    %v5453 = vunpack.c.l.b16 %v4533
    %v5454 = vunpack.c.h.b16 %v4533
    %v5455 = vunpack.c.l.b16 %v4534
    %v5456 = vunpack.c.h.b16 %v4534
    %v5457 = vunpack.c.l.b16 %v4535
    %v5458 = vunpack.c.h.b16 %v4535
    %v5459 = vunpack.c.l.b16 %v4536
    %v5460 = vunpack.c.h.b16 %v4536
    %v5461 = vunpack.c.l.b16 %v4537
    %v5462 = vunpack.c.h.b16 %v4537
    %v5463 = vunpack.c.l.b16 %v4538
    %v5464 = vunpack.c.h.b16 %v4538
    %v5465 = vunpack.c.l.b16 %v4539
    %v5466 = vunpack.c.h.b16 %v4539
    %v5467 = vunpack.c.l.b16 %v4540
    %v5468 = vunpack.c.h.b16 %v4540
    %v5469 = vpack.c.b16 %v4905, %v4893
    %v5470 = vpack.c.b16 %v4906, %v4894
    %v5471 = vpack.c.b16 %v4907, %v4895
    %v5472 = vpack.c.b16 %v4908, %v4896
    %v5473 = vpack.c.b16 %v4909, %v4897
    %v5474 = vpack.c.b16 %v4910, %v4898
    %v5475 = vpack.c.b16 %v4911, %v4899
    %v5476 = vpack.c.b16 %v4912, %v4900
    %v5477 = vpack.c.b16 %v4913, %v4901
    %v5478 = vpack.c.b16 %v4914, %v4902
    %v5479 = vpack.c.b16 %v4915, %v4903
    %v5480 = vpack.c.b16 %v4916, %v4904
    %v5481 = vpack.c.b16 %v4929, %v4917
    %v5482 = vpack.c.b16 %v4930, %v4918
    %v5483 = vpack.c.b16 %v4931, %v4919
    %v5484 = vpack.c.b16 %v4932, %v4920
    %v5485 = vpack.c.b16 %v4933, %v4921
    %v5486 = vpack.c.b16 %v4934, %v4922
    %v5487 = vpack.c.b16 %v4935, %v4923
    %v5488 = vpack.c.b16 %v4936, %v4924
    %v5489 = vpack.c.b16 %v4937, %v4925
    %v5490 = vpack.c.b16 %v4938, %v4926
    %v5491 = vpack.c.b16 %v4939, %v4927
    %v5492 = vpack.c.b16 %v4940, %v4928
    %v5493 = vpack.c.b16 %v4953, %v4941
    %v5494 = vpack.c.b16 %v4954, %v4942
    %v5495 = vpack.c.b16 %v4955, %v4943
    %v5496 = vpack.c.b16 %v4956, %v4944
    %v5497 = vpack.c.b16 %v4957, %v4945
    %v5498 = vpack.c.b16 %v4958, %v4946
    %v5499 = vpack.c.b16 %v4959, %v4947
    %v5500 = vpack.c.b16 %v4960, %v4948
    %v5501 = vpack.c.b16 %v4961, %v4949
    %v5502 = vpack.c.b16 %v4962, %v4950
    %v5503 = vpack.c.b16 %v4963, %v4951
    %v5504 = vpack.c.b16 %v4964, %v4952
    %v5505 = vpack.c.b16 %v4977, %v4965
    %v5506 = vpack.c.b16 %v4978, %v4966
    %v5507 = vpack.c.b16 %v4979, %v4967
    %v5508 = vpack.c.b16 %v4980, %v4968
    %v5509 = vpack.c.b16 %v4981, %v4969
    %v5510 = vpack.c.b16 %v4982, %v4970
    %v5511 = vpack.c.b16 %v4983, %v4971
    %v5512 = vpack.c.b16 %v4984, %v4972
    %v5513 = vpack.c.b16 %v4985, %v4973
    %v5514 = vpack.c.b16 %v4986, %v4974
    %v5515 = vpack.c.b16 %v4987, %v4975
    %v5516 = vpack.c.b16 %v4988, %v4976
    %v5517 = vpack.c.b16 %v5001, %v4989
    %v5518 = vpack.c.b16 %v5002, %v4990
    %v5519 = vpack.c.b16 %v5003, %v4991
    %v5520 = vpack.c.b16 %v5004, %v4992
    %v5521 = vpack.c.b16 %v5005, %v4993
    %v5522 = vpack.c.b16 %v5006, %v4994
    %v5523 = vpack.c.b16 %v5007, %v4995
    %v5524 = vpack.c.b16 %v5008, %v4996
    %v5525 = vpack.c.b16 %v5009, %v4997
    %v5526 = vpack.c.b16 %v5010, %v4998
    %v5527 = vpack.c.b16 %v5011, %v4999
    %v5528 = vpack.c.b16 %v5012, %v5000
    %v5529 = vpack.c.b16 %v5025, %v5013
    %v5530 = vpack.c.b16 %v5026, %v5014
    %v5531 = vpack.c.b16 %v5027, %v5015
    %v5532 = vpack.c.b16 %v5028, %v5016
    %v5533 = vpack.c.b16 %v5029, %v5017
    %v5534 = vpack.c.b16 %v5030, %v5018
    %v5535 = vpack.c.b16 %v5031, %v5019
    %v5536 = vpack.c.b16 %v5032, %v5020
    %v5537 = vpack.c.b16 %v5033, %v5021
    %v5538 = vpack.c.b16 %v5034, %v5022
    %v5539 = vpack.c.b16 %v5035, %v5023
    %v5540 = vpack.c.b16 %v5036, %v5024
    %v5541 = vpack.c.b16 %v5049, %v5037
    %v5542 = vpack.c.b16 %v5050, %v5038
    %v5543 = vpack.c.b16 %v5051, %v5039
    %v5544 = vpack.c.b16 %v5052, %v5040
    %v5545 = vpack.c.b16 %v5053, %v5041
    %v5546 = vpack.c.b16 %v5054, %v5042
    %v5547 = vpack.c.b16 %v5055, %v5043
    %v5548 = vpack.c.b16 %v5056, %v5044
    %v5549 = vpack.c.b16 %v5057, %v5045
    %v5550 = vpack.c.b16 %v5058, %v5046
    %v5551 = vpack.c.b16 %v5059, %v5047
    %v5552 = vpack.c.b16 %v5060, %v5048
    %v5553 = vpack.c.b16 %v5073, %v5061
    %v5554 = vpack.c.b16 %v5074, %v5062
    %v5555 = vpack.c.b16 %v5075, %v5063
    %v5556 = vpack.c.b16 %v5076, %v5064
    %v5557 = vpack.c.b16 %v5077, %v5065
    %v5558 = vpack.c.b16 %v5078, %v5066
    %v5559 = vpack.c.b16 %v5079, %v5067
    %v5560 = vpack.c.b16 %v5080, %v5068
    %v5561 = vpack.c.b16 %v5081, %v5069
    %v5562 = vpack.c.b16 %v5082, %v5070
    %v5563 = vpack.c.b16 %v5083, %v5071
    %v5564 = vpack.c.b16 %v5084, %v5072
    %v5565 = vpack.c.b16 %v5097, %v5085
    %v5566 = vpack.c.b16 %v5098, %v5086
    %v5567 = vpack.c.b16 %v5099, %v5087
    %v5568 = vpack.c.b16 %v5100, %v5088
    %v5569 = vpack.c.b16 %v5101, %v5089
    %v5570 = vpack.c.b16 %v5102, %v5090
    %v5571 = vpack.c.b16 %v5103, %v5091
    %v5572 = vpack.c.b16 %v5104, %v5092
    %v5573 = vpack.c.b16 %v5105, %v5093
    %v5574 = vpack.c.b16 %v5106, %v5094
    %v5575 = vpack.c.b16 %v5107, %v5095
    %v5576 = vpack.c.b16 %v5108, %v5096
    %v5577 = vpack.c.b16 %v5121, %v5109
    %v5578 = vpack.c.b16 %v5122, %v5110
    %v5579 = vpack.c.b16 %v5123, %v5111
    %v5580 = vpack.c.b16 %v5124, %v5112
    %v5581 = vpack.c.b16 %v5125, %v5113
    %v5582 = vpack.c.b16 %v5126, %v5114
    %v5583 = vpack.c.b16 %v5127, %v5115
    %v5584 = vpack.c.b16 %v5128, %v5116
    %v5585 = vpack.c.b16 %v5129, %v5117
    %v5586 = vpack.c.b16 %v5130, %v5118
    %v5587 = vpack.c.b16 %v5131, %v5119
    %v5588 = vpack.c.b16 %v5132, %v5120
    %v5589 = vpack.c.b16 %v5145, %v5133
    %v5590 = vpack.c.b16 %v5146, %v5134
    %v5591 = vpack.c.b16 %v5147, %v5135
    %v5592 = vpack.c.b16 %v5148, %v5136
    %v5593 = vpack.c.b16 %v5149, %v5137
    %v5594 = vpack.c.b16 %v5150, %v5138
    %v5595 = vpack.c.b16 %v5151, %v5139
    %v5596 = vpack.c.b16 %v5152, %v5140
    %v5597 = vpack.c.b16 %v5153, %v5141
    %v5598 = vpack.c.b16 %v5154, %v5142
    %v5599 = vpack.c.b16 %v5155, %v5143
    %v5600 = vpack.c.b16 %v5156, %v5144
    %v5601 = vpack.c.b16 %v5169, %v5157
    %v5602 = vpack.c.b16 %v5170, %v5158
    %v5603 = vpack.c.b16 %v5171, %v5159
    %v5604 = vpack.c.b16 %v5172, %v5160
    %v5605 = vpack.c.b16 %v5173, %v5161
    %v5606 = vpack.c.b16 %v5174, %v5162
    %v5607 = vpack.c.b16 %v5175, %v5163
    %v5608 = vpack.c.b16 %v5176, %v5164
    %v5609 = vpack.c.b16 %v5177, %v5165
    %v5610 = vpack.c.b16 %v5178, %v5166
    %v5611 = vpack.c.b16 %v5179, %v5167
    %v5612 = vpack.c.b16 %v5180, %v5168
    %v5613 = vpack.c.b16 %v5193, %v5181
    %v5614 = vpack.c.b16 %v5194, %v5182
    %v5615 = vpack.c.b16 %v5195, %v5183
    %v5616 = vpack.c.b16 %v5196, %v5184
    %v5617 = vpack.c.b16 %v5197, %v5185
    %v5618 = vpack.c.b16 %v5198, %v5186
    %v5619 = vpack.c.b16 %v5199, %v5187
    %v5620 = vpack.c.b16 %v5200, %v5188
    %v5621 = vpack.c.b16 %v5201, %v5189
    %v5622 = vpack.c.b16 %v5202, %v5190
    %v5623 = vpack.c.b16 %v5203, %v5191
    %v5624 = vpack.c.b16 %v5204, %v5192
    %v5625 = vpack.c.b16 %v5217, %v5205
    %v5626 = vpack.c.b16 %v5218, %v5206
    %v5627 = vpack.c.b16 %v5219, %v5207
    %v5628 = vpack.c.b16 %v5220, %v5208
    %v5629 = vpack.c.b16 %v5221, %v5209
    %v5630 = vpack.c.b16 %v5222, %v5210
    %v5631 = vpack.c.b16 %v5223, %v5211
    %v5632 = vpack.c.b16 %v5224, %v5212
    %v5633 = vpack.c.b16 %v5225, %v5213
    %v5634 = vpack.c.b16 %v5226, %v5214
    %v5635 = vpack.c.b16 %v5227, %v5215
    %v5636 = vpack.c.b16 %v5228, %v5216
    %v5637 = vpack.c.b16 %v5241, %v5229
    %v5638 = vpack.c.b16 %v5242, %v5230
    %v5639 = vpack.c.b16 %v5243, %v5231
    %v5640 = vpack.c.b16 %v5244, %v5232
    %v5641 = vpack.c.b16 %v5245, %v5233
    %v5642 = vpack.c.b16 %v5246, %v5234
    %v5643 = vpack.c.b16 %v5247, %v5235
    %v5644 = vpack.c.b16 %v5248, %v5236
    %v5645 = vpack.c.b16 %v5249, %v5237
    %v5646 = vpack.c.b16 %v5250, %v5238
    %v5647 = vpack.c.b16 %v5251, %v5239
    %v5648 = vpack.c.b16 %v5252, %v5240
    %v5649 = vpack.c.b16 %v5265, %v5253
    %v5650 = vpack.c.b16 %v5266, %v5254
    %v5651 = vpack.c.b16 %v5267, %v5255
    %v5652 = vpack.c.b16 %v5268, %v5256
    %v5653 = vpack.c.b16 %v5269, %v5257
    %v5654 = vpack.c.b16 %v5270, %v5258
    %v5655 = vpack.c.b16 %v5271, %v5259
    %v5656 = vpack.c.b16 %v5272, %v5260
    %v5657 = vpack.c.b16 %v5273, %v5261
    %v5658 = vpack.c.b16 %v5274, %v5262
    %v5659 = vpack.c.b16 %v5275, %v5263
    %v5660 = vpack.c.b16 %v5276, %v5264
    %v5661 = vpack.c.b16 %v5289, %v5277
    %v5662 = vpack.c.b16 %v5290, %v5278
    %v5663 = vpack.c.b16 %v5291, %v5279
    %v5664 = vpack.c.b16 %v5292, %v5280
    %v5665 = vpack.c.b16 %v5293, %v5281
    %v5666 = vpack.c.b16 %v5294, %v5282
    %v5667 = vpack.c.b16 %v5295, %v5283
    %v5668 = vpack.c.b16 %v5296, %v5284
    %v5669 = vpack.c.b16 %v5297, %v5285
    %v5670 = vpack.c.b16 %v5298, %v5286
    %v5671 = vpack.c.b16 %v5299, %v5287
    %v5672 = vpack.c.b16 %v5300, %v5288
    %v5673 = vpack.c.b16 %v5313, %v5301
    %v5674 = vpack.c.b16 %v5314, %v5302
    %v5675 = vpack.c.b16 %v5315, %v5303
    %v5676 = vpack.c.b16 %v5316, %v5304
    %v5677 = vpack.c.b16 %v5317, %v5305
    %v5678 = vpack.c.b16 %v5318, %v5306
    %v5679 = vpack.c.b16 %v5319, %v5307
    %v5680 = vpack.c.b16 %v5320, %v5308
    %v5681 = vpack.c.b16 %v5321, %v5309
    %v5682 = vpack.c.b16 %v5322, %v5310
    %v5683 = vpack.c.b16 %v5323, %v5311
    %v5684 = vpack.c.b16 %v5324, %v5312
    %v5685 = vpack.c.b16 %v5337, %v5325
    %v5686 = vpack.c.b16 %v5338, %v5326
    %v5687 = vpack.c.b16 %v5339, %v5327
    %v5688 = vpack.c.b16 %v5340, %v5328
    %v5689 = vpack.c.b16 %v5341, %v5329
    %v5690 = vpack.c.b16 %v5342, %v5330
    %v5691 = vpack.c.b16 %v5343, %v5331
    %v5692 = vpack.c.b16 %v5344, %v5332
    %v5693 = vpack.c.b16 %v5345, %v5333
    %v5694 = vpack.c.b16 %v5346, %v5334
    %v5695 = vpack.c.b16 %v5347, %v5335
    %v5696 = vpack.c.b16 %v5348, %v5336
    %v5697 = vpack.c.b16 %v5361, %v5349
    %v5698 = vpack.c.b16 %v5362, %v5350
    %v5699 = vpack.c.b16 %v5363, %v5351
    %v5700 = vpack.c.b16 %v5364, %v5352
    %v5701 = vpack.c.b16 %v5365, %v5353
    %v5702 = vpack.c.b16 %v5366, %v5354
    %v5703 = vpack.c.b16 %v5367, %v5355
    %v5704 = vpack.c.b16 %v5368, %v5356
    %v5705 = vpack.c.b16 %v5369, %v5357
    %v5706 = vpack.c.b16 %v5370, %v5358
    %v5707 = vpack.c.b16 %v5371, %v5359
    %v5708 = vpack.c.b16 %v5372, %v5360
    %v5709 = vpack.c.b16 %v5385, %v5373
    %v5710 = vpack.c.b16 %v5386, %v5374
    %v5711 = vpack.c.b16 %v5387, %v5375
    %v5712 = vpack.c.b16 %v5388, %v5376
    %v5713 = vpack.c.b16 %v5389, %v5377
    %v5714 = vpack.c.b16 %v5390, %v5378
    %v5715 = vpack.c.b16 %v5391, %v5379
    %v5716 = vpack.c.b16 %v5392, %v5380
    %v5717 = vpack.c.b16 %v5393, %v5381
    %v5718 = vpack.c.b16 %v5394, %v5382
    %v5719 = vpack.c.b16 %v5395, %v5383
    %v5720 = vpack.c.b16 %v5396, %v5384
    %v5721 = vpack.c.b16 %v5409, %v5397
    %v5722 = vpack.c.b16 %v5410, %v5398
    %v5723 = vpack.c.b16 %v5411, %v5399
    %v5724 = vpack.c.b16 %v5412, %v5400
    %v5725 = vpack.c.b16 %v5413, %v5401
    %v5726 = vpack.c.b16 %v5414, %v5402
    %v5727 = vpack.c.b16 %v5415, %v5403
    %v5728 = vpack.c.b16 %v5416, %v5404
    %v5729 = vpack.c.b16 %v5417, %v5405
    %v5730 = vpack.c.b16 %v5418, %v5406
    %v5731 = vpack.c.b16 %v5419, %v5407
    %v5732 = vpack.c.b16 %v5420, %v5408
    %v5733 = vpack.c.b16 %v5433, %v5421
    %v5734 = vpack.c.b16 %v5434, %v5422
    %v5735 = vpack.c.b16 %v5435, %v5423
    %v5736 = vpack.c.b16 %v5436, %v5424
    %v5737 = vpack.c.b16 %v5437, %v5425
    %v5738 = vpack.c.b16 %v5438, %v5426
    %v5739 = vpack.c.b16 %v5439, %v5427
    %v5740 = vpack.c.b16 %v5440, %v5428
    %v5741 = vpack.c.b16 %v5441, %v5429
    %v5742 = vpack.c.b16 %v5442, %v5430
    %v5743 = vpack.c.b16 %v5443, %v5431
    %v5744 = vpack.c.b16 %v5444, %v5432
    %v5745 = vpack.c.b16 %v5457, %v5445
    %v5746 = vpack.c.b16 %v5458, %v5446
    %v5747 = vpack.c.b16 %v5459, %v5447
    %v5748 = vpack.c.b16 %v5460, %v5448
    %v5749 = vpack.c.b16 %v5461, %v5449
    %v5750 = vpack.c.b16 %v5462, %v5450
    %v5751 = vpack.c.b16 %v5463, %v5451
    %v5752 = vpack.c.b16 %v5464, %v5452
    %v5753 = vpack.c.b16 %v5465, %v5453
    %v5754 = vpack.c.b16 %v5466, %v5454
    %v5755 = vpack.c.b16 %v5467, %v5455
    %v5756 = vpack.c.b16 %v5468, %v5456
    %6045 = vmatprep.subr.bf16.mxu0 %v5470
    %6046 = vmatpush1.bf16.msra.mxu0 %v5469
    %6047 = vmatprep.subr.bf16.mxu0 %v5482
    %6048 = vmatpush1.bf16.msra.mxu0 %v5481
    %6049 = vmatprep.subr.bf16.mxu0 %v5494
    %6050 = vmatpush1.bf16.msra.mxu0 %v5493
    %6051 = vmatprep.subr.bf16.mxu0 %v5506
    %6052 = vmatpush1.bf16.msra.mxu0 %v5505
    %6053 = vmatprep.subr.bf16.mxu0 %v5518
    %6054 = vmatpush1.bf16.msra.mxu0 %v5517
    %6055 = vmatprep.subr.bf16.mxu0 %v5530
    %6056 = vmatpush1.bf16.msra.mxu0 %v5529
    %6057 = vmatprep.subr.bf16.mxu0 %v5542
    %6058 = vmatpush1.bf16.msra.mxu0 %v5541
    %6059 = vmatprep.subr.bf16.mxu0 %v5554
    %6060 = vmatpush1.bf16.msra.mxu0 %v5553
    %6061 = vmatprep.subr.bf16.mxu0 %v5566
    %6062 = vmatpush1.bf16.msra.mxu0 %v5565
    %6063 = vmatprep.subr.bf16.mxu0 %v5578
    %6064 = vmatpush1.bf16.msra.mxu0 %v5577
    %6065 = vmatprep.subr.bf16.mxu0 %v5590
    %6066 = vmatpush1.bf16.msra.mxu0 %v5589
    %6067 = vmatprep.subr.bf16.mxu0 %v5602
    %6068 = vmatpush1.bf16.msra.mxu0 %v5601
    %6069 = vmatprep.subr.bf16.mxu0 %v5614
    %6070 = vmatpush1.bf16.msra.mxu0 %v5613
    %6071 = vmatprep.subr.bf16.mxu0 %v5626
    %6072 = vmatpush1.bf16.msra.mxu0 %v5625
    %6073 = vmatprep.subr.bf16.mxu0 %v5638
    %6074 = vmatpush1.bf16.msra.mxu0 %v5637
    %6075 = vmatprep.subr.bf16.mxu0 %v5650
    %6076 = vmatpush1.bf16.msra.mxu0 %v5649
    %6077 = vmatprep.mubr.bf16.mxu0 %v4251
    %6078 = vmatmul.mubr.bf16.gmra.mrb[0].mxu0 %v4250
    %v6079 = vpop.f32.mrb[0].mxu0
    %v6080 = vadd.f32 %v4548, %v6079
    %v6081 = vpop.f32.mrb[0].mxu0
    %v6082 = vadd.f32 %v4552, %v6081
    %v6083 = vpop.f32.mrb[0].mxu0
    %v6084 = vadd.f32 %v4548, %v6083
    %v6085 = vpop.f32.mrb[0].mxu0
    %v6086 = vadd.f32 %v4552, %v6085
    %6087 = vdwg.mxu0
    %6088 = vmatprep.subr.bf16.mxu0 %v5662
    %6089 = vmatpush1.bf16.msra.mxu0 %v5661
    %6090 = vmatprep.subr.bf16.mxu0 %v5674
    %6091 = vmatpush1.bf16.msra.mxu0 %v5673
    %6092 = vmatprep.subr.bf16.mxu0 %v5686
    %6093 = vmatpush1.bf16.msra.mxu0 %v5685
    %6094 = vmatprep.subr.bf16.mxu0 %v5698
    %6095 = vmatpush1.bf16.msra.mxu0 %v5697
    %6096 = vmatprep.subr.bf16.mxu0 %v5710
    %6097 = vmatpush1.bf16.msra.mxu0 %v5709
    %6098 = vmatprep.subr.bf16.mxu0 %v5722
    %6099 = vmatpush1.bf16.msra.mxu0 %v5721
    %6100 = vmatprep.subr.bf16.mxu0 %v5734
    %6101 = vmatpush1.bf16.msra.mxu0 %v5733
    %6102 = vmatprep.subr.bf16.mxu0 %v5746
    %6103 = vmatpush1.bf16.msra.mxu0 %v5745
    %6104 = vmatprep.subr.bf16.mxu0 0
    %6105 = vmatpush1.bf16.msra.mxu0 0
    %6106 = vmatprep.subr.bf16.mxu0 0
    %6107 = vmatpush1.bf16.msra.mxu0 0
    %6108 = vmatprep.subr.bf16.mxu0 0
    %6109 = vmatpush1.bf16.msra.mxu0 0
    %6110 = vmatprep.subr.bf16.mxu0 0
    %6111 = vmatpush1.bf16.msra.mxu0 0
    %6112 = vmatprep.subr.bf16.mxu0 0
    %6113 = vmatpush1.bf16.msra.mxu0 0
    %6114 = vmatprep.subr.bf16.mxu0 0
    %6115 = vmatpush1.bf16.msra.mxu0 0
    %6116 = vmatprep.subr.bf16.mxu0 0
    %6117 = vmatpush1.bf16.msra.mxu0 0
    %6118 = vmatprep.subr.bf16.mxu0 0
    %6119 = vmatpush1.bf16.msra.mxu0 0
    %6120 = vmatprep.mubr.bf16.mxu0 0
    %6121 = vmatmul.mubr.bf16.gmra.mrb[0].mxu0 %v4252
    %v6122 = vpop.f32.mrb[0].mxu0
    %v6123 = vadd.f32 %v6080, %v6122
    %v6124 = vpop.f32.mrb[0].mxu0
    %v6125 = vadd.f32 %v6082, %v6124
    %v6126 = vpop.f32.mrb[0].mxu0
    %v6127 = vadd.f32 %v6084, %v6126
    %v6128 = vpop.f32.mrb[0].mxu0
    %v6129 = vadd.f32 %v6086, %v6128
    %6130 = vdwg.mxu0
    %6131 = vmatprep.subr.bf16.mxu0 %v5472
    %6132 = vmatpush1.bf16.msra.mxu0 %v5471
    %6133 = vmatprep.subr.bf16.mxu0 %v5484
    %6134 = vmatpush1.bf16.msra.mxu0 %v5483
    %6135 = vmatprep.subr.bf16.mxu0 %v5496
    %6136 = vmatpush1.bf16.msra.mxu0 %v5495
    %6137 = vmatprep.subr.bf16.mxu0 %v5508
    %6138 = vmatpush1.bf16.msra.mxu0 %v5507
    %6139 = vmatprep.subr.bf16.mxu0 %v5520
    %6140 = vmatpush1.bf16.msra.mxu0 %v5519
    %6141 = vmatprep.subr.bf16.mxu0 %v5532
    %6142 = vmatpush1.bf16.msra.mxu0 %v5531
    %6143 = vmatprep.subr.bf16.mxu0 %v5544
    %6144 = vmatpush1.bf16.msra.mxu0 %v5543
    %6145 = vmatprep.subr.bf16.mxu0 %v5556
    %6146 = vmatpush1.bf16.msra.mxu0 %v5555
    %6147 = vmatprep.subr.bf16.mxu0 %v5568
    %6148 = vmatpush1.bf16.msra.mxu0 %v5567
    %6149 = vmatprep.subr.bf16.mxu0 %v5580
    %6150 = vmatpush1.bf16.msra.mxu0 %v5579
    %6151 = vmatprep.subr.bf16.mxu0 %v5592
    %6152 = vmatpush1.bf16.msra.mxu0 %v5591
    %6153 = vmatprep.subr.bf16.mxu0 %v5604
    %6154 = vmatpush1.bf16.msra.mxu0 %v5603
    %6155 = vmatprep.subr.bf16.mxu0 %v5616
    %6156 = vmatpush1.bf16.msra.mxu0 %v5615
    %6157 = vmatprep.subr.bf16.mxu0 %v5628
    %6158 = vmatpush1.bf16.msra.mxu0 %v5627
    %6159 = vmatprep.subr.bf16.mxu0 %v5640
    %6160 = vmatpush1.bf16.msra.mxu0 %v5639
    %6161 = vmatprep.subr.bf16.mxu0 %v5652
    %6162 = vmatpush1.bf16.msra.mxu0 %v5651
    %6163 = vmatprep.mubr.bf16.mxu0 %v4251
    %6164 = vmatmul.mubr.bf16.gmra.mrb[0].mxu0 %v4250
    %v6165 = vpop.f32.mrb[0].mxu0
    %v6166 = vadd.f32 %v4556, %v6165
    %v6167 = vpop.f32.mrb[0].mxu0
    %v6168 = vadd.f32 %v4560, %v6167
    %v6169 = vpop.f32.mrb[0].mxu0
    %v6170 = vadd.f32 %v4556, %v6169
    %v6171 = vpop.f32.mrb[0].mxu0
    %v6172 = vadd.f32 %v4560, %v6171
    %6173 = vdwg.mxu0
    %6174 = vmatprep.subr.bf16.mxu0 %v5664
    %6175 = vmatpush1.bf16.msra.mxu0 %v5663
    %6176 = vmatprep.subr.bf16.mxu0 %v5676
    %6177 = vmatpush1.bf16.msra.mxu0 %v5675
    %6178 = vmatprep.subr.bf16.mxu0 %v5688
    %6179 = vmatpush1.bf16.msra.mxu0 %v5687
    %6180 = vmatprep.subr.bf16.mxu0 %v5700
    %6181 = vmatpush1.bf16.msra.mxu0 %v5699
    %6182 = vmatprep.subr.bf16.mxu0 %v5712
    %6183 = vmatpush1.bf16.msra.mxu0 %v5711
    %6184 = vmatprep.subr.bf16.mxu0 %v5724
    %6185 = vmatpush1.bf16.msra.mxu0 %v5723
    %6186 = vmatprep.subr.bf16.mxu0 %v5736
    %6187 = vmatpush1.bf16.msra.mxu0 %v5735
    %6188 = vmatprep.subr.bf16.mxu0 %v5748
    %6189 = vmatpush1.bf16.msra.mxu0 %v5747
    %6190 = vmatprep.subr.bf16.mxu0 0
    %6191 = vmatpush1.bf16.msra.mxu0 0
    %6192 = vmatprep.subr.bf16.mxu0 0
    %6193 = vmatpush1.bf16.msra.mxu0 0
    %6194 = vmatprep.subr.bf16.mxu0 0
    %6195 = vmatpush1.bf16.msra.mxu0 0
    %6196 = vmatprep.subr.bf16.mxu0 0
    %6197 = vmatpush1.bf16.msra.mxu0 0
    %6198 = vmatprep.subr.bf16.mxu0 0
    %6199 = vmatpush1.bf16.msra.mxu0 0
    %6200 = vmatprep.subr.bf16.mxu0 0
    %6201 = vmatpush1.bf16.msra.mxu0 0
    %6202 = vmatprep.subr.bf16.mxu0 0
    %6203 = vmatpush1.bf16.msra.mxu0 0
    %6204 = vmatprep.subr.bf16.mxu0 0
    %6205 = vmatpush1.bf16.msra.mxu0 0
    %6206 = vmatprep.mubr.bf16.mxu0 0
    %6207 = vmatmul.mubr.bf16.gmra.mrb[0].mxu0 %v4252
    %v6208 = vpop.f32.mrb[0].mxu0
    %v6209 = vadd.f32 %v6166, %v6208
    %v6210 = vpop.f32.mrb[0].mxu0
    %v6211 = vadd.f32 %v6168, %v6210
    %v6212 = vpop.f32.mrb[0].mxu0
    %v6213 = vadd.f32 %v6170, %v6212
    %v6214 = vpop.f32.mrb[0].mxu0
    %v6215 = vadd.f32 %v6172, %v6214
    %6216 = vdwg.mxu0
    %6217 = vmatprep.subr.bf16.mxu0 %v5474
    %6218 = vmatpush1.bf16.msra.mxu0 %v5473
    %6219 = vmatprep.subr.bf16.mxu0 %v5486
    %6220 = vmatpush1.bf16.msra.mxu0 %v5485
    %6221 = vmatprep.subr.bf16.mxu0 %v5498
    %6222 = vmatpush1.bf16.msra.mxu0 %v5497
    %6223 = vmatprep.subr.bf16.mxu0 %v5510
    %6224 = vmatpush1.bf16.msra.mxu0 %v5509
    %6225 = vmatprep.subr.bf16.mxu0 %v5522
    %6226 = vmatpush1.bf16.msra.mxu0 %v5521
    %6227 = vmatprep.subr.bf16.mxu0 %v5534
    %6228 = vmatpush1.bf16.msra.mxu0 %v5533
    %6229 = vmatprep.subr.bf16.mxu0 %v5546
    %6230 = vmatpush1.bf16.msra.mxu0 %v5545
    %6231 = vmatprep.subr.bf16.mxu0 %v5558
    %6232 = vmatpush1.bf16.msra.mxu0 %v5557
    %6233 = vmatprep.subr.bf16.mxu0 %v5570
    %6234 = vmatpush1.bf16.msra.mxu0 %v5569
    %6235 = vmatprep.subr.bf16.mxu0 %v5582
    %6236 = vmatpush1.bf16.msra.mxu0 %v5581
    %6237 = vmatprep.subr.bf16.mxu0 %v5594
    %6238 = vmatpush1.bf16.msra.mxu0 %v5593
    %6239 = vmatprep.subr.bf16.mxu0 %v5606
    %6240 = vmatpush1.bf16.msra.mxu0 %v5605
    %6241 = vmatprep.subr.bf16.mxu0 %v5618
    %6242 = vmatpush1.bf16.msra.mxu0 %v5617
    %6243 = vmatprep.subr.bf16.mxu0 %v5630
    %6244 = vmatpush1.bf16.msra.mxu0 %v5629
    %6245 = vmatprep.subr.bf16.mxu0 %v5642
    %6246 = vmatpush1.bf16.msra.mxu0 %v5641
    %6247 = vmatprep.subr.bf16.mxu0 %v5654
    %6248 = vmatpush1.bf16.msra.mxu0 %v5653
    %6249 = vmatprep.mubr.bf16.mxu0 %v4251
    %6250 = vmatmul.mubr.bf16.gmra.mrb[0].mxu0 %v4250
    %v6251 = vpop.f32.mrb[0].mxu0
    %v6252 = vadd.f32 %v4564, %v6251
    %v6253 = vpop.f32.mrb[0].mxu0
    %v6254 = vadd.f32 %v4568, %v6253
    %v6255 = vpop.f32.mrb[0].mxu0
    %v6256 = vadd.f32 %v4564, %v6255
    %v6257 = vpop.f32.mrb[0].mxu0
    %v6258 = vadd.f32 %v4568, %v6257
    %6259 = vdwg.mxu0
    %6260 = vmatprep.subr.bf16.mxu0 %v5666
    %6261 = vmatpush1.bf16.msra.mxu0 %v5665
    %6262 = vmatprep.subr.bf16.mxu0 %v5678
    %6263 = vmatpush1.bf16.msra.mxu0 %v5677
    %6264 = vmatprep.subr.bf16.mxu0 %v5690
    %6265 = vmatpush1.bf16.msra.mxu0 %v5689
    %6266 = vmatprep.subr.bf16.mxu0 %v5702
    %6267 = vmatpush1.bf16.msra.mxu0 %v5701
    %6268 = vmatprep.subr.bf16.mxu0 %v5714
    %6269 = vmatpush1.bf16.msra.mxu0 %v5713
    %6270 = vmatprep.subr.bf16.mxu0 %v5726
    %6271 = vmatpush1.bf16.msra.mxu0 %v5725
    %6272 = vmatprep.subr.bf16.mxu0 %v5738
    %6273 = vmatpush1.bf16.msra.mxu0 %v5737
    %6274 = vmatprep.subr.bf16.mxu0 %v5750
    %6275 = vmatpush1.bf16.msra.mxu0 %v5749
    %6276 = vmatprep.subr.bf16.mxu0 0
    %6277 = vmatpush1.bf16.msra.mxu0 0
    %6278 = vmatprep.subr.bf16.mxu0 0
    %6279 = vmatpush1.bf16.msra.mxu0 0
    %6280 = vmatprep.subr.bf16.mxu0 0
    %6281 = vmatpush1.bf16.msra.mxu0 0
    %6282 = vmatprep.subr.bf16.mxu0 0
    %6283 = vmatpush1.bf16.msra.mxu0 0
    %6284 = vmatprep.subr.bf16.mxu0 0
    %6285 = vmatpush1.bf16.msra.mxu0 0
    %6286 = vmatprep.subr.bf16.mxu0 0
    %6287 = vmatpush1.bf16.msra.mxu0 0
    %6288 = vmatprep.subr.bf16.mxu0 0
    %6289 = vmatpush1.bf16.msra.mxu0 0
    %6290 = vmatprep.subr.bf16.mxu0 0
    %6291 = vmatpush1.bf16.msra.mxu0 0
    %6292 = vmatprep.mubr.bf16.mxu0 0
    %6293 = vmatmul.mubr.bf16.gmra.mrb[0].mxu0 %v4252
    %v6294 = vpop.f32.mrb[0].mxu0
    %v6295 = vadd.f32 %v6252, %v6294
    %v6296 = vpop.f32.mrb[0].mxu0
    %v6297 = vadd.f32 %v6254, %v6296
    %v6298 = vpop.f32.mrb[0].mxu0
    %v6299 = vadd.f32 %v6256, %v6298
    %v6300 = vpop.f32.mrb[0].mxu0
    %v6301 = vadd.f32 %v6258, %v6300
    %6302 = vdwg.mxu0
    %6303 = vmatprep.subr.bf16.mxu0 %v5476
    %6304 = vmatpush1.bf16.msra.mxu0 %v5475
    %6305 = vmatprep.subr.bf16.mxu0 %v5488
    %6306 = vmatpush1.bf16.msra.mxu0 %v5487
    %6307 = vmatprep.subr.bf16.mxu0 %v5500
    %6308 = vmatpush1.bf16.msra.mxu0 %v5499
    %6309 = vmatprep.subr.bf16.mxu0 %v5512
    %6310 = vmatpush1.bf16.msra.mxu0 %v5511
    %6311 = vmatprep.subr.bf16.mxu0 %v5524
    %6312 = vmatpush1.bf16.msra.mxu0 %v5523
    %6313 = vmatprep.subr.bf16.mxu0 %v5536
    %6314 = vmatpush1.bf16.msra.mxu0 %v5535
    %6315 = vmatprep.subr.bf16.mxu0 %v5548
    %6316 = vmatpush1.bf16.msra.mxu0 %v5547
    %6317 = vmatprep.subr.bf16.mxu0 %v5560
    %6318 = vmatpush1.bf16.msra.mxu0 %v5559
    %6319 = vmatprep.subr.bf16.mxu0 %v5572
    %6320 = vmatpush1.bf16.msra.mxu0 %v5571
    %6321 = vmatprep.subr.bf16.mxu0 %v5584
    %6322 = vmatpush1.bf16.msra.mxu0 %v5583
    %6323 = vmatprep.subr.bf16.mxu0 %v5596
    %6324 = vmatpush1.bf16.msra.mxu0 %v5595
    %6325 = vmatprep.subr.bf16.mxu0 %v5608
    %6326 = vmatpush1.bf16.msra.mxu0 %v5607
    %6327 = vmatprep.subr.bf16.mxu0 %v5620
    %6328 = vmatpush1.bf16.msra.mxu0 %v5619
    %6329 = vmatprep.subr.bf16.mxu0 %v5632
    %6330 = vmatpush1.bf16.msra.mxu0 %v5631
    %6331 = vmatprep.subr.bf16.mxu0 %v5644
    %6332 = vmatpush1.bf16.msra.mxu0 %v5643
    %6333 = vmatprep.subr.bf16.mxu0 %v5656
    %6334 = vmatpush1.bf16.msra.mxu0 %v5655
    %6335 = vmatprep.mubr.bf16.mxu0 %v4251
    %6336 = vmatmul.mubr.bf16.gmra.mrb[0].mxu0 %v4250
    %v6337 = vpop.f32.mrb[0].mxu0
    %v6338 = vadd.f32 %v4572, %v6337
    %v6339 = vpop.f32.mrb[0].mxu0
    %v6340 = vadd.f32 %v4576, %v6339
    %v6341 = vpop.f32.mrb[0].mxu0
    %v6342 = vadd.f32 %v4572, %v6341
    %v6343 = vpop.f32.mrb[0].mxu0
    %v6344 = vadd.f32 %v4576, %v6343
    %6345 = vdwg.mxu0
    %6346 = vmatprep.subr.bf16.mxu0 %v5668
    %6347 = vmatpush1.bf16.msra.mxu0 %v5667
    %6348 = vmatprep.subr.bf16.mxu0 %v5680
    %6349 = vmatpush1.bf16.msra.mxu0 %v5679
    %6350 = vmatprep.subr.bf16.mxu0 %v5692
    %6351 = vmatpush1.bf16.msra.mxu0 %v5691
    %6352 = vmatprep.subr.bf16.mxu0 %v5704
    %6353 = vmatpush1.bf16.msra.mxu0 %v5703
    %6354 = vmatprep.subr.bf16.mxu0 %v5716
    %6355 = vmatpush1.bf16.msra.mxu0 %v5715
    %6356 = vmatprep.subr.bf16.mxu0 %v5728
    %6357 = vmatpush1.bf16.msra.mxu0 %v5727
    %6358 = vmatprep.subr.bf16.mxu0 %v5740
    %6359 = vmatpush1.bf16.msra.mxu0 %v5739
    %6360 = vmatprep.subr.bf16.mxu0 %v5752
    %6361 = vmatpush1.bf16.msra.mxu0 %v5751
    %6362 = vmatprep.subr.bf16.mxu0 0
    %6363 = vmatpush1.bf16.msra.mxu0 0
    %6364 = vmatprep.subr.bf16.mxu0 0
    %6365 = vmatpush1.bf16.msra.mxu0 0
    %6366 = vmatprep.subr.bf16.mxu0 0
    %6367 = vmatpush1.bf16.msra.mxu0 0
    %6368 = vmatprep.subr.bf16.mxu0 0
    %6369 = vmatpush1.bf16.msra.mxu0 0
    %6370 = vmatprep.subr.bf16.mxu0 0
    %6371 = vmatpush1.bf16.msra.mxu0 0
    %6372 = vmatprep.subr.bf16.mxu0 0
    %6373 = vmatpush1.bf16.msra.mxu0 0
    %6374 = vmatprep.subr.bf16.mxu0 0
    %6375 = vmatpush1.bf16.msra.mxu0 0
    %6376 = vmatprep.subr.bf16.mxu0 0
    %6377 = vmatpush1.bf16.msra.mxu0 0
    %6378 = vmatprep.mubr.bf16.mxu0 0
    %6379 = vmatmul.mubr.bf16.gmra.mrb[0].mxu0 %v4252
    %v6380 = vpop.f32.mrb[0].mxu0
    %v6381 = vadd.f32 %v6338, %v6380
    %v6382 = vpop.f32.mrb[0].mxu0
    %v6383 = vadd.f32 %v6340, %v6382
    %v6384 = vpop.f32.mrb[0].mxu0
    %v6385 = vadd.f32 %v6342, %v6384
    %v6386 = vpop.f32.mrb[0].mxu0
    %v6387 = vadd.f32 %v6344, %v6386
    %6388 = vdwg.mxu0
    %6389 = vmatprep.subr.bf16.mxu0 %v5478
    %6390 = vmatpush1.bf16.msra.mxu0 %v5477
    %6391 = vmatprep.subr.bf16.mxu0 %v5490
    %6392 = vmatpush1.bf16.msra.mxu0 %v5489
    %6393 = vmatprep.subr.bf16.mxu0 %v5502
    %6394 = vmatpush1.bf16.msra.mxu0 %v5501
    %6395 = vmatprep.subr.bf16.mxu0 %v5514
    %6396 = vmatpush1.bf16.msra.mxu0 %v5513
    %6397 = vmatprep.subr.bf16.mxu0 %v5526
    %6398 = vmatpush1.bf16.msra.mxu0 %v5525
    %6399 = vmatprep.subr.bf16.mxu0 %v5538
    %6400 = vmatpush1.bf16.msra.mxu0 %v5537
    %6401 = vmatprep.subr.bf16.mxu0 %v5550
    %6402 = vmatpush1.bf16.msra.mxu0 %v5549
    %6403 = vmatprep.subr.bf16.mxu0 %v5562
    %6404 = vmatpush1.bf16.msra.mxu0 %v5561
    %6405 = vmatprep.subr.bf16.mxu0 %v5574
    %6406 = vmatpush1.bf16.msra.mxu0 %v5573
    %6407 = vmatprep.subr.bf16.mxu0 %v5586
    %6408 = vmatpush1.bf16.msra.mxu0 %v5585
    %6409 = vmatprep.subr.bf16.mxu0 %v5598
    %6410 = vmatpush1.bf16.msra.mxu0 %v5597
    %6411 = vmatprep.subr.bf16.mxu0 %v5610
    %6412 = vmatpush1.bf16.msra.mxu0 %v5609
    %6413 = vmatprep.subr.bf16.mxu0 %v5622
    %6414 = vmatpush1.bf16.msra.mxu0 %v5621
    %6415 = vmatprep.subr.bf16.mxu0 %v5634
    %6416 = vmatpush1.bf16.msra.mxu0 %v5633
    %6417 = vmatprep.subr.bf16.mxu0 %v5646
    %6418 = vmatpush1.bf16.msra.mxu0 %v5645
    %6419 = vmatprep.subr.bf16.mxu0 %v5658
    %6420 = vmatpush1.bf16.msra.mxu0 %v5657
    %6421 = vmatprep.mubr.bf16.mxu0 %v4251
    %6422 = vmatmul.mubr.bf16.gmra.mrb[0].mxu0 %v4250
    %v6423 = vpop.f32.mrb[0].mxu0
    %v6424 = vadd.f32 %v4580, %v6423
    %v6425 = vpop.f32.mrb[0].mxu0
    %v6426 = vadd.f32 %v4584, %v6425
    %v6427 = vpop.f32.mrb[0].mxu0
    %v6428 = vadd.f32 %v4580, %v6427
    %v6429 = vpop.f32.mrb[0].mxu0
    %v6430 = vadd.f32 %v4584, %v6429
    %6431 = vdwg.mxu0
    %6432 = vmatprep.subr.bf16.mxu0 %v5670
    %6433 = vmatpush1.bf16.msra.mxu0 %v5669
    %6434 = vmatprep.subr.bf16.mxu0 %v5682
    %6435 = vmatpush1.bf16.msra.mxu0 %v5681
    %6436 = vmatprep.subr.bf16.mxu0 %v5694
    %6437 = vmatpush1.bf16.msra.mxu0 %v5693
    %6438 = vmatprep.subr.bf16.mxu0 %v5706
    %6439 = vmatpush1.bf16.msra.mxu0 %v5705
    %6440 = vmatprep.subr.bf16.mxu0 %v5718
    %6441 = vmatpush1.bf16.msra.mxu0 %v5717
    %6442 = vmatprep.subr.bf16.mxu0 %v5730
    %6443 = vmatpush1.bf16.msra.mxu0 %v5729
    %6444 = vmatprep.subr.bf16.mxu0 %v5742
    %6445 = vmatpush1.bf16.msra.mxu0 %v5741
    %6446 = vmatprep.subr.bf16.mxu0 %v5754
    %6447 = vmatpush1.bf16.msra.mxu0 %v5753
    %6448 = vmatprep.subr.bf16.mxu0 0
    %6449 = vmatpush1.bf16.msra.mxu0 0
    %6450 = vmatprep.subr.bf16.mxu0 0
    %6451 = vmatpush1.bf16.msra.mxu0 0
    %6452 = vmatprep.subr.bf16.mxu0 0
    %6453 = vmatpush1.bf16.msra.mxu0 0
    %6454 = vmatprep.subr.bf16.mxu0 0
    %6455 = vmatpush1.bf16.msra.mxu0 0
    %6456 = vmatprep.subr.bf16.mxu0 0
    %6457 = vmatpush1.bf16.msra.mxu0 0
    %6458 = vmatprep.subr.bf16.mxu0 0
    %6459 = vmatpush1.bf16.msra.mxu0 0
    %6460 = vmatprep.subr.bf16.mxu0 0
    %6461 = vmatpush1.bf16.msra.mxu0 0
    %6462 = vmatprep.subr.bf16.mxu0 0
    %6463 = vmatpush1.bf16.msra.mxu0 0
    %6464 = vmatprep.mubr.bf16.mxu0 0
    %6465 = vmatmul.mubr.bf16.gmra.mrb[0].mxu0 %v4252
    %v6466 = vpop.f32.mrb[0].mxu0
    %v6467 = vadd.f32 %v6424, %v6466
    %v6468 = vpop.f32.mrb[0].mxu0
    %v6469 = vadd.f32 %v6426, %v6468
    %v6470 = vpop.f32.mrb[0].mxu0
    %v6471 = vadd.f32 %v6428, %v6470
    %v6472 = vpop.f32.mrb[0].mxu0
    %v6473 = vadd.f32 %v6430, %v6472
    %6474 = vdwg.mxu0
    %6475 = vmatprep.subr.bf16.mxu0 %v5480
    %6476 = vmatpush1.bf16.msra.mxu0 %v5479
    %6477 = vmatprep.subr.bf16.mxu0 %v5492
    %6478 = vmatpush1.bf16.msra.mxu0 %v5491
    %6479 = vmatprep.subr.bf16.mxu0 %v5504
    %6480 = vmatpush1.bf16.msra.mxu0 %v5503
    %6481 = vmatprep.subr.bf16.mxu0 %v5516
    %6482 = vmatpush1.bf16.msra.mxu0 %v5515
    %6483 = vmatprep.subr.bf16.mxu0 %v5528
    %6484 = vmatpush1.bf16.msra.mxu0 %v5527
    %6485 = vmatprep.subr.bf16.mxu0 %v5540
    %6486 = vmatpush1.bf16.msra.mxu0 %v5539
    %6487 = vmatprep.subr.bf16.mxu0 %v5552
    %6488 = vmatpush1.bf16.msra.mxu0 %v5551
    %6489 = vmatprep.subr.bf16.mxu0 %v5564
    %6490 = vmatpush1.bf16.msra.mxu0 %v5563
    %6491 = vmatprep.subr.bf16.mxu0 %v5576
    %6492 = vmatpush1.bf16.msra.mxu0 %v5575
    %6493 = vmatprep.subr.bf16.mxu0 %v5588
    %6494 = vmatpush1.bf16.msra.mxu0 %v5587
    %6495 = vmatprep.subr.bf16.mxu0 %v5600
    %6496 = vmatpush1.bf16.msra.mxu0 %v5599
    %6497 = vmatprep.subr.bf16.mxu0 %v5612
    %6498 = vmatpush1.bf16.msra.mxu0 %v5611
    %6499 = vmatprep.subr.bf16.mxu0 %v5624
    %6500 = vmatpush1.bf16.msra.mxu0 %v5623
    %6501 = vmatprep.subr.bf16.mxu0 %v5636
    %6502 = vmatpush1.bf16.msra.mxu0 %v5635
    %6503 = vmatprep.subr.bf16.mxu0 %v5648
    %6504 = vmatpush1.bf16.msra.mxu0 %v5647
    %6505 = vmatprep.subr.bf16.mxu0 %v5660
    %6506 = vmatpush1.bf16.msra.mxu0 %v5659
    %6507 = vmatprep.mubr.bf16.mxu0 %v4251
    %6508 = vmatmul.mubr.bf16.gmra.mrb[0].mxu0 %v4250
    %v6509 = vpop.f32.mrb[0].mxu0
    %v6510 = vadd.f32 %v4588, %v6509
    %v6511 = vpop.f32.mrb[0].mxu0
    %v6512 = vadd.f32 %v4592, %v6511
    %v6513 = vpop.f32.mrb[0].mxu0
    %v6514 = vadd.f32 %v4588, %v6513
    %v6515 = vpop.f32.mrb[0].mxu0
    %v6516 = vadd.f32 %v4592, %v6515
    %6517 = vdwg.mxu0
    %6518 = vmatprep.subr.bf16.mxu0 %v5672
    %6519 = vmatpush1.bf16.msra.mxu0 %v5671
    %6520 = vmatprep.subr.bf16.mxu0 %v5684
    %6521 = vmatpush1.bf16.msra.mxu0 %v5683
    %6522 = vmatprep.subr.bf16.mxu0 %v5696
    %6523 = vmatpush1.bf16.msra.mxu0 %v5695
    %6524 = vmatprep.subr.bf16.mxu0 %v5708
    %6525 = vmatpush1.bf16.msra.mxu0 %v5707
    %6526 = vmatprep.subr.bf16.mxu0 %v5720
    %6527 = vmatpush1.bf16.msra.mxu0 %v5719
    %6528 = vmatprep.subr.bf16.mxu0 %v5732
    %6529 = vmatpush1.bf16.msra.mxu0 %v5731
    %6530 = vmatprep.subr.bf16.mxu0 %v5744
    %6531 = vmatpush1.bf16.msra.mxu0 %v5743
    %6532 = vmatprep.subr.bf16.mxu0 %v5756
    %6533 = vmatpush1.bf16.msra.mxu0 %v5755
    %6534 = vmatprep.subr.bf16.mxu0 0
    %6535 = vmatpush1.bf16.msra.mxu0 0
    %6536 = vmatprep.subr.bf16.mxu0 0
    %6537 = vmatpush1.bf16.msra.mxu0 0
    %6538 = vmatprep.subr.bf16.mxu0 0
    %6539 = vmatpush1.bf16.msra.mxu0 0
    %6540 = vmatprep.subr.bf16.mxu0 0
    %6541 = vmatpush1.bf16.msra.mxu0 0
    %6542 = vmatprep.subr.bf16.mxu0 0
    %6543 = vmatpush1.bf16.msra.mxu0 0
    %6544 = vmatprep.subr.bf16.mxu0 0
    %6545 = vmatpush1.bf16.msra.mxu0 0
    %6546 = vmatprep.subr.bf16.mxu0 0
    %6547 = vmatpush1.bf16.msra.mxu0 0
    %6548 = vmatprep.subr.bf16.mxu0 0
    %6549 = vmatpush1.bf16.msra.mxu0 0
    %6550 = vmatprep.mubr.bf16.mxu0 0
    %6551 = vmatmul.mubr.bf16.gmra.mrb[0].mxu0 %v4252
    %v6552 = vpop.f32.mrb[0].mxu0
    %v6553 = vadd.f32 %v6510, %v6552
    %v6554 = vpop.f32.mrb[0].mxu0
    %v6555 = vadd.f32 %v6512, %v6554
    %v6556 = vpop.f32.mrb[0].mxu0
    %v6557 = vadd.f32 %v6514, %v6556
    %v6558 = vpop.f32.mrb[0].mxu0
    %v6559 = vadd.f32 %v6516, %v6558
    %6560 = vdwg.mxu0
    %v6561 = vmax.f32 %v6123, 0.0
    %v6562 = vmax.f32 %v6125, 0.0
    %v6563 = vmax.f32 %v6209, 0.0
    %v6564 = vmax.f32 %v6211, 0.0
    %v6565 = vmax.f32 %v6295, 0.0
    %v6566 = vmax.f32 %v6297, 0.0
    %v6567 = vmax.f32 %v6381, 0.0
    %v6568 = vmax.f32 %v6383, 0.0
    %v6569 = vmax.f32 %v6467, 0.0
    %v6570 = vmax.f32 %v6469, 0.0
    %v6571 = vmax.f32 %v6553, 0.0
    %v6572 = vmax.f32 %v6555, 0.0
    %v6573 = vmax.f32 %v6127, 0.0
    %v6574 = vmax.f32 %v6129, 0.0
    %v6575 = vmax.f32 %v6213, 0.0
    %v6576 = vmax.f32 %v6215, 0.0
    %v6577 = vmax.f32 %v6299, 0.0
    %v6578 = vmax.f32 %v6301, 0.0
    %v6579 = vmax.f32 %v6385, 0.0
    %v6580 = vmax.f32 %v6387, 0.0
    %v6581 = vmax.f32 %v6471, 0.0
    %v6582 = vmax.f32 %v6473, 0.0
    %v6583 = vmax.f32 %v6557, 0.0
    %v6584 = vmax.f32 %v6559, 0.0
    %v6585 = vpack.c.bf16 %v6573, %v6561
    %v6586 = vpack.c.bf16 %v6574, %v6562
    %v6587 = vpack.c.bf16 %v6575, %v6563
    %v6588 = vpack.c.bf16 %v6576, %v6564
    %v6589 = vpack.c.bf16 %v6577, %v6565
    %v6590 = vpack.c.bf16 %v6578, %v6566
    %v6591 = vpack.c.bf16 %v6579, %v6567
    %v6592 = vpack.c.bf16 %v6580, %v6568
    %v6593 = vpack.c.bf16 %v6581, %v6569
    %v6594 = vpack.c.bf16 %v6582, %v6570
    %v6595 = vpack.c.bf16 %v6583, %v6571
    %v6596 = vpack.c.bf16 %v6584, %v6572
    %v6597 = vld [vmem:[#allocation22] sm:$0xff]
    %v6598 = vld [vmem:[#allocation22 + $0x8] sm:$0xf]
    %v6599 = vld [vmem:[#allocation22 + $0xc] sm:$0xff]
    %v6600 = vld [vmem:[#allocation22 + $0x14] sm:$0xf]
    %v6601 = vld [vmem:[#allocation22 + $0x18] sm:$0xff]
    %v6602 = vld [vmem:[#allocation22 + $0x20] sm:$0xf]
    %v6603 = vld [vmem:[#allocation22 + $0x24] sm:$0xff]
    %v6604 = vld [vmem:[#allocation22 + $0x2c] sm:$0xf]
    %v6605 = vld [vmem:[#allocation22 + $0x30] sm:$0xff]
    %v6606 = vld [vmem:[#allocation22 + $0x38] sm:$0xf]
    %v6607 = vld [vmem:[#allocation22 + $0x3c] sm:$0xff]
    %v6608 = vld [vmem:[#allocation22 + $0x44] sm:$0xf]
    %v6609 = vld [vmem:[#allocation22 + $0x48] sm:$0xff]
    %v6610 = vld [vmem:[#allocation22 + $0x50] sm:$0xf]
    %v6611 = vld [vmem:[#allocation22 + $0x54] sm:$0xff]
    %v6612 = vld [vmem:[#allocation22 + $0x5c] sm:$0xf]
    %v6613 = vld [vmem:[#allocation22 + $0x60] sm:$0xff]
    %v6614 = vld [vmem:[#allocation22 + $0x68] sm:$0xf]
    %v6615 = vld [vmem:[#allocation22 + $0x6c] sm:$0xff]
    %v6616 = vld [vmem:[#allocation22 + $0x74] sm:$0xf]
    %v6617 = vld [vmem:[#allocation22 + $0x78] sm:$0xff]
    %v6618 = vld [vmem:[#allocation22 + $0x80] sm:$0xf]
    %v6619 = vld [vmem:[#allocation22 + $0x84] sm:$0xff]
    %v6620 = vld [vmem:[#allocation22 + $0x8c] sm:$0xf]
    %v6621 = vld [vmem:[#allocation22 + $0x90] sm:$0xff]
    %v6622 = vld [vmem:[#allocation22 + $0x98] sm:$0xf]
    %v6623 = vld [vmem:[#allocation22 + $0x9c] sm:$0xff]
    %v6624 = vld [vmem:[#allocation22 + $0xa4] sm:$0xf]
    %v6625 = vld [vmem:[#allocation22 + $0xa8] sm:$0xff]
    %v6626 = vld [vmem:[#allocation22 + $0xb0] sm:$0xf]
    %v6627 = vld [vmem:[#allocation22 + $0xb4] sm:$0xff]
    %v6628 = vld [vmem:[#allocation22 + $0xbc] sm:$0xf]
    %v6629 = vld [vmem:[#allocation22 + $0xc0] sm:$0xff]
    %v6630 = vld [vmem:[#allocation22 + $0xc8] sm:$0xf]
    %v6631 = vld [vmem:[#allocation22 + $0xcc] sm:$0xff]
    %v6632 = vld [vmem:[#allocation22 + $0xd4] sm:$0xf]
    %v6633 = vld [vmem:[#allocation22 + $0xd8] sm:$0xff]
    %v6634 = vld [vmem:[#allocation22 + $0xe0] sm:$0xf]
    %v6635 = vld [vmem:[#allocation22 + $0xe4] sm:$0xff]
    %v6636 = vld [vmem:[#allocation22 + $0xec] sm:$0xf]
    %v6637 = vld [vmem:[#allocation22 + $0xf0] sm:$0xff]
    %v6638 = vld [vmem:[#allocation22 + $0xf8] sm:$0xf]
    %v6639 = vld [vmem:[#allocation22 + $0xfc] sm:$0xff]
    %v6640 = vld [vmem:[#allocation22 + $0x104] sm:$0xf]
    %v6641 = vld [vmem:[#allocation22 + $0x108] sm:$0xff]
    %v6642 = vld [vmem:[#allocation22 + $0x110] sm:$0xf]
    %v6643 = vld [vmem:[#allocation22 + $0x114] sm:$0xff]
    %v6644 = vld [vmem:[#allocation22 + $0x11c] sm:$0xf]
    %v6645 = vld [vmem:[#allocation22 + $0x120] sm:$0xff]
    %v6646 = vld [vmem:[#allocation22 + $0x128] sm:$0xf]
    %v6647 = vld [vmem:[#allocation22 + $0x12c] sm:$0xff]
    %v6648 = vld [vmem:[#allocation22 + $0x134] sm:$0xf]
    %v6649 = vld [vmem:[#allocation22 + $0x138] sm:$0xff]
    %v6650 = vld [vmem:[#allocation22 + $0x140] sm:$0xf]
    %v6651 = vld [vmem:[#allocation22 + $0x144] sm:$0xff]
    %v6652 = vld [vmem:[#allocation22 + $0x14c] sm:$0xf]
    %v6653 = vld [vmem:[#allocation22 + $0x150] sm:$0xff]
    %v6654 = vld [vmem:[#allocation22 + $0x158] sm:$0xf]
    %v6655 = vld [vmem:[#allocation22 + $0x15c] sm:$0xff]
    %v6656 = vld [vmem:[#allocation22 + $0x164] sm:$0xf]
    %v6657 = vld [vmem:[#allocation22 + $0x168] sm:$0xff]
    %v6658 = vld [vmem:[#allocation22 + $0x170] sm:$0xf]
    %v6659 = vld [vmem:[#allocation22 + $0x174] sm:$0xff]
    %v6660 = vld [vmem:[#allocation22 + $0x17c] sm:$0xf]
    %v6661 = vld [vmem:[#allocation22 + $0x180] sm:$0xff]
    %v6662 = vld [vmem:[#allocation22 + $0x188] sm:$0xf]
    %v6663 = vld [vmem:[#allocation22 + $0x18c] sm:$0xff]
    %v6664 = vld [vmem:[#allocation22 + $0x194] sm:$0xf]
    %v6665 = vld [vmem:[#allocation22 + $0x198] sm:$0xff]
    %v6666 = vld [vmem:[#allocation22 + $0x1a0] sm:$0xf]
    %v6667 = vld [vmem:[#allocation22 + $0x1a4] sm:$0xff]
    %v6668 = vld [vmem:[#allocation22 + $0x1ac] sm:$0xf]
    %v6669 = vld [vmem:[#allocation22 + $0x1b0] sm:$0xff]
    %v6670 = vld [vmem:[#allocation22 + $0x1b8] sm:$0xf]
    %v6671 = vld [vmem:[#allocation22 + $0x1bc] sm:$0xff]
    %v6672 = vld [vmem:[#allocation22 + $0x1c4] sm:$0xf]
    %v6673 = vld [vmem:[#allocation22 + $0x1c8] sm:$0xff]
    %v6674 = vld [vmem:[#allocation22 + $0x1d0] sm:$0xf]
    %v6675 = vld [vmem:[#allocation22 + $0x1d4] sm:$0xff]
    %v6676 = vld [vmem:[#allocation22 + $0x1dc] sm:$0xf]
    %v6677 = vld [vmem:[#allocation22 + $0x1e0] sm:$0xff]
    %v6678 = vld [vmem:[#allocation22 + $0x1e8] sm:$0xf]
    %v6679 = vld [vmem:[#allocation22 + $0x1ec] sm:$0xff]
    %v6680 = vld [vmem:[#allocation22 + $0x1f4] sm:$0xf]
    %v6681 = vld [vmem:[#allocation22 + $0x1f8] sm:$0xff]
    %v6682 = vld [vmem:[#allocation22 + $0x200] sm:$0xf]
    %v6683 = vld [vmem:[#allocation22 + $0x204] sm:$0xff]
    %v6684 = vld [vmem:[#allocation22 + $0x20c] sm:$0xf]
    %v6685 = vld [vmem:[#allocation22 + $0x210] sm:$0xff]
    %v6686 = vld [vmem:[#allocation22 + $0x218] sm:$0xf]
    %v6687 = vld [vmem:[#allocation22 + $0x21c] sm:$0xff]
    %v6688 = vld [vmem:[#allocation22 + $0x224] sm:$0xf]
    %v6689 = vld [vmem:[#allocation22 + $0x228] sm:$0xff]
    %v6690 = vld [vmem:[#allocation22 + $0x230] sm:$0xf]
    %v6691 = vld [vmem:[#allocation22 + $0x234] sm:$0xff]
    %v6692 = vld [vmem:[#allocation22 + $0x23c] sm:$0xf]
    %v6693 = vld [vmem:[#allocation22 + $0x240] sm:$0xff]
    %v6694 = vld [vmem:[#allocation22 + $0x248] sm:$0xf]
    %v6695 = vld [vmem:[#allocation22 + $0x24c] sm:$0xff]
    %v6696 = vld [vmem:[#allocation22 + $0x254] sm:$0xf]
    %v6697 = vld [vmem:[#allocation22 + $0x258] sm:$0xff]
    %v6698 = vld [vmem:[#allocation22 + $0x260] sm:$0xf]
    %v6699 = vld [vmem:[#allocation22 + $0x264] sm:$0xff]
    %v6700 = vld [vmem:[#allocation22 + $0x26c] sm:$0xf]
    %v6701 = vld [vmem:[#allocation22 + $0x270] sm:$0xff]
    %v6702 = vld [vmem:[#allocation22 + $0x278] sm:$0xf]
    %v6703 = vld [vmem:[#allocation22 + $0x27c] sm:$0xff]
    %v6704 = vld [vmem:[#allocation22 + $0x284] sm:$0xf]
    %v6705 = vld [vmem:[#allocation22 + $0x288] sm:$0xff]
    %v6706 = vld [vmem:[#allocation22 + $0x290] sm:$0xf]
    %v6707 = vld [vmem:[#allocation22 + $0x294] sm:$0xff]
    %v6708 = vld [vmem:[#allocation22 + $0x29c] sm:$0xf]
    %v6709 = vld [vmem:[#allocation22 + $0x2a0] sm:$0xff]
    %v6710 = vld [vmem:[#allocation22 + $0x2a8] sm:$0xf]
    %v6711 = vld [vmem:[#allocation22 + $0x2ac] sm:$0xff]
    %v6712 = vld [vmem:[#allocation22 + $0x2b4] sm:$0xf]
    %v6713 = vld [vmem:[#allocation22 + $0x2b8] sm:$0xff]
    %v6714 = vld [vmem:[#allocation22 + $0x2c0] sm:$0xf]
    %v6715 = vld [vmem:[#allocation22 + $0x2c4] sm:$0xff]
    %v6716 = vld [vmem:[#allocation22 + $0x2cc] sm:$0xf]
    %v6717 = vld [vmem:[#allocation22 + $0x2d0] sm:$0xff]
    %v6718 = vld [vmem:[#allocation22 + $0x2d8] sm:$0xf]
    %v6719 = vld [vmem:[#allocation22 + $0x2dc] sm:$0xff]
    %v6720 = vld [vmem:[#allocation22 + $0x2e4] sm:$0xf]
    %v6721 = vld [vmem:[#allocation22 + $0x2e8] sm:$0xff]
    %v6722 = vld [vmem:[#allocation22 + $0x2f0] sm:$0xf]
    %v6723 = vld [vmem:[#allocation22 + $0x2f4] sm:$0xff]
    %v6724 = vld [vmem:[#allocation22 + $0x2fc] sm:$0xf]
    %v6725 = vld [vmem:[#allocation22 + $0x300] sm:$0xff]
    %v6726 = vld [vmem:[#allocation22 + $0x308] sm:$0xf]
    %v6727 = vld [vmem:[#allocation22 + $0x30c] sm:$0xff]
    %v6728 = vld [vmem:[#allocation22 + $0x314] sm:$0xf]
    %v6729 = vld [vmem:[#allocation22 + $0x318] sm:$0xff]
    %v6730 = vld [vmem:[#allocation22 + $0x320] sm:$0xf]
    %v6731 = vld [vmem:[#allocation22 + $0x324] sm:$0xff]
    %v6732 = vld [vmem:[#allocation22 + $0x32c] sm:$0xf]
    %v6733 = vld [vmem:[#allocation22 + $0x330] sm:$0xff]
    %v6734 = vld [vmem:[#allocation22 + $0x338] sm:$0xf]
    %v6735 = vld [vmem:[#allocation22 + $0x33c] sm:$0xff]
    %v6736 = vld [vmem:[#allocation22 + $0x344] sm:$0xf]
    %v6737 = vld [vmem:[#allocation22 + $0x348] sm:$0xff]
    %v6738 = vld [vmem:[#allocation22 + $0x350] sm:$0xf]
    %v6739 = vld [vmem:[#allocation22 + $0x354] sm:$0xff]
    %v6740 = vld [vmem:[#allocation22 + $0x35c] sm:$0xf]
    %v6741 = vld [vmem:[#allocation22 + $0x360] sm:$0xff]
    %v6742 = vld [vmem:[#allocation22 + $0x368] sm:$0xf]
    %v6743 = vld [vmem:[#allocation22 + $0x36c] sm:$0xff]
    %v6744 = vld [vmem:[#allocation22 + $0x374] sm:$0xf]
    %v6745 = vld [vmem:[#allocation22 + $0x378] sm:$0xff]
    %v6746 = vld [vmem:[#allocation22 + $0x380] sm:$0xf]
    %v6747 = vld [vmem:[#allocation22 + $0x384] sm:$0xff]
    %v6748 = vld [vmem:[#allocation22 + $0x38c] sm:$0xf]
    %v6749 = vld [vmem:[#allocation22 + $0x390] sm:$0xff]
    %v6750 = vld [vmem:[#allocation22 + $0x398] sm:$0xf]
    %v6751 = vld [vmem:[#allocation22 + $0x39c] sm:$0xff]
    %v6752 = vld [vmem:[#allocation22 + $0x3a4] sm:$0xf]
    %v6753 = vld [vmem:[#allocation22 + $0x3a8] sm:$0xff]
    %v6754 = vld [vmem:[#allocation22 + $0x3b0] sm:$0xf]
    %v6755 = vld [vmem:[#allocation22 + $0x3b4] sm:$0xff]
    %v6756 = vld [vmem:[#allocation22 + $0x3bc] sm:$0xf]
    %v6757 = vld [vmem:[#allocation22 + $0x3c0] sm:$0xff]
    %v6758 = vld [vmem:[#allocation22 + $0x3c8] sm:$0xf]
    %v6759 = vld [vmem:[#allocation22 + $0x3cc] sm:$0xff]
    %v6760 = vld [vmem:[#allocation22 + $0x3d4] sm:$0xf]
    %v6761 = vld [vmem:[#allocation22 + $0x3d8] sm:$0xff]
    %v6762 = vld [vmem:[#allocation22 + $0x3e0] sm:$0xf]
    %v6763 = vld [vmem:[#allocation22 + $0x3e4] sm:$0xff]
    %v6764 = vld [vmem:[#allocation22 + $0x3ec] sm:$0xf]
    %v6765 = vld [vmem:[#allocation22 + $0x3f0] sm:$0xff]
    %v6766 = vld [vmem:[#allocation22 + $0x3f8] sm:$0xf]
    %v6767 = vld [vmem:[#allocation22 + $0x3fc] sm:$0xff]
    %v6768 = vld [vmem:[#allocation22 + $0x404] sm:$0xf]
    %v6769 = vld [vmem:[#allocation22 + $0x408] sm:$0xff]
    %v6770 = vld [vmem:[#allocation22 + $0x410] sm:$0xf]
    %v6771 = vld [vmem:[#allocation22 + $0x414] sm:$0xff]
    %v6772 = vld [vmem:[#allocation22 + $0x41c] sm:$0xf]
    %v6773 = vld [vmem:[#allocation22 + $0x420] sm:$0xff]
    %v6774 = vld [vmem:[#allocation22 + $0x428] sm:$0xf]
    %v6775 = vld [vmem:[#allocation22 + $0x42c] sm:$0xff]
    %v6776 = vld [vmem:[#allocation22 + $0x434] sm:$0xf]
    %v6777 = vld [vmem:[#allocation22 + $0x438] sm:$0xff]
    %v6778 = vld [vmem:[#allocation22 + $0x440] sm:$0xf]
    %v6779 = vld [vmem:[#allocation22 + $0x444] sm:$0xff]
    %v6780 = vld [vmem:[#allocation22 + $0x44c] sm:$0xf]
    %v6781 = vld [vmem:[#allocation22 + $0x450] sm:$0xff]
    %v6782 = vld [vmem:[#allocation22 + $0x458] sm:$0xf]
    %v6783 = vld [vmem:[#allocation22 + $0x45c] sm:$0xff]
    %v6784 = vld [vmem:[#allocation22 + $0x464] sm:$0xf]
    %v6785 = vld [vmem:[#allocation22 + $0x468] sm:$0xff]
    %v6786 = vld [vmem:[#allocation22 + $0x470] sm:$0xf]
    %v6787 = vld [vmem:[#allocation22 + $0x474] sm:$0xff]
    %v6788 = vld [vmem:[#allocation22 + $0x47c] sm:$0xf]
    %v6789 = vld [vmem:[#allocation22 + $0x480] sm:$0xff]
    %v6790 = vld [vmem:[#allocation22 + $0x488] sm:$0xf]
    %v6791 = vld [vmem:[#allocation22 + $0x48c] sm:$0xff]
    %v6792 = vld [vmem:[#allocation22 + $0x494] sm:$0xf]
    %v6793 = vld [vmem:[#allocation22 + $0x498] sm:$0xff]
    %v6794 = vld [vmem:[#allocation22 + $0x4a0] sm:$0xf]
    %v6795 = vld [vmem:[#allocation22 + $0x4a4] sm:$0xff]
    %v6796 = vld [vmem:[#allocation22 + $0x4ac] sm:$0xf]
    %v6797 = vld [vmem:[#allocation22 + $0x4b0] sm:$0xff]
    %v6798 = vld [vmem:[#allocation22 + $0x4b8] sm:$0xf]
    %v6799 = vld [vmem:[#allocation22 + $0x4bc] sm:$0xff]
    %v6800 = vld [vmem:[#allocation22 + $0x4c4] sm:$0xf]
    %v6801 = vld [vmem:[#allocation22 + $0x4c8] sm:$0xff]
    %v6802 = vld [vmem:[#allocation22 + $0x4d0] sm:$0xf]
    %v6803 = vld [vmem:[#allocation22 + $0x4d4] sm:$0xff]
    %v6804 = vld [vmem:[#allocation22 + $0x4dc] sm:$0xf]
    %v6805 = vld [vmem:[#allocation22 + $0x4e0] sm:$0xff]
    %v6806 = vld [vmem:[#allocation22 + $0x4e8] sm:$0xf]
    %v6807 = vld [vmem:[#allocation22 + $0x4ec] sm:$0xff]
    %v6808 = vld [vmem:[#allocation22 + $0x4f4] sm:$0xf]
    %v6809 = vld [vmem:[#allocation22 + $0x4f8] sm:$0xff]
    %v6810 = vld [vmem:[#allocation22 + $0x500] sm:$0xf]
    %v6811 = vld [vmem:[#allocation22 + $0x504] sm:$0xff]
    %v6812 = vld [vmem:[#allocation22 + $0x50c] sm:$0xf]
    %v6813 = vld [vmem:[#allocation22 + $0x510] sm:$0xff]
    %v6814 = vld [vmem:[#allocation22 + $0x518] sm:$0xf]
    %v6815 = vld [vmem:[#allocation22 + $0x51c] sm:$0xff]
    %v6816 = vld [vmem:[#allocation22 + $0x524] sm:$0xf]
    %v6817 = vld [vmem:[#allocation22 + $0x528] sm:$0xff]
    %v6818 = vld [vmem:[#allocation22 + $0x530] sm:$0xf]
    %v6819 = vld [vmem:[#allocation22 + $0x534] sm:$0xff]
    %v6820 = vld [vmem:[#allocation22 + $0x53c] sm:$0xf]
    %v6821 = vld [vmem:[#allocation22 + $0x540] sm:$0xff]
    %v6822 = vld [vmem:[#allocation22 + $0x548] sm:$0xf]
    %v6823 = vld [vmem:[#allocation22 + $0x54c] sm:$0xff]
    %v6824 = vld [vmem:[#allocation22 + $0x554] sm:$0xf]
    %v6825 = vld [vmem:[#allocation22 + $0x558] sm:$0xff]
    %v6826 = vld [vmem:[#allocation22 + $0x560] sm:$0xf]
    %v6827 = vld [vmem:[#allocation22 + $0x564] sm:$0xff]
    %v6828 = vld [vmem:[#allocation22 + $0x56c] sm:$0xf]
    %v6829 = vld [vmem:[#allocation22 + $0x570] sm:$0xff]
    %v6830 = vld [vmem:[#allocation22 + $0x578] sm:$0xf]
    %v6831 = vld [vmem:[#allocation22 + $0x57c] sm:$0xff]
    %v6832 = vld [vmem:[#allocation22 + $0x584] sm:$0xf]
    %v6833 = vld [vmem:[#allocation22 + $0x588] sm:$0xff]
    %v6834 = vld [vmem:[#allocation22 + $0x590] sm:$0xf]
    %v6835 = vld [vmem:[#allocation22 + $0x594] sm:$0xff]
    %v6836 = vld [vmem:[#allocation22 + $0x59c] sm:$0xf]
    %v6837 = vld [vmem:[#allocation22 + $0x5a0] sm:$0xff]
    %v6838 = vld [vmem:[#allocation22 + $0x5a8] sm:$0xf]
    %v6839 = vld [vmem:[#allocation22 + $0x5ac] sm:$0xff]
    %v6840 = vld [vmem:[#allocation22 + $0x5b4] sm:$0xf]
    %v6841 = vld [vmem:[#allocation22 + $0x5b8] sm:$0xff]
    %v6842 = vld [vmem:[#allocation22 + $0x5c0] sm:$0xf]
    %v6843 = vld [vmem:[#allocation22 + $0x5c4] sm:$0xff]
    %v6844 = vld [vmem:[#allocation22 + $0x5cc] sm:$0xf]
    %v6845 = vld [vmem:[#allocation22 + $0x5d0] sm:$0xff]
    %v6846 = vld [vmem:[#allocation22 + $0x5d8] sm:$0xf]
    %v6847 = vld [vmem:[#allocation22 + $0x5dc] sm:$0xff]
    %v6848 = vld [vmem:[#allocation22 + $0x5e4] sm:$0xf]
    %v6849 = vld [vmem:[#allocation22 + $0x5e8] sm:$0xff]
    %v6850 = vld [vmem:[#allocation22 + $0x5f0] sm:$0xf]
    %v6851 = vld [vmem:[#allocation22 + $0x5f4] sm:$0xff]
    %v6852 = vld [vmem:[#allocation22 + $0x5fc] sm:$0xf]
    %v6853 = vld [vmem:[#allocation22 + $0x600] sm:$0xff]
    %v6854 = vld [vmem:[#allocation22 + $0x608] sm:$0xf]
    %v6855 = vld [vmem:[#allocation22 + $0x60c] sm:$0xff]
    %v6856 = vld [vmem:[#allocation22 + $0x614] sm:$0xf]
    %v6857 = vld [vmem:[#allocation22 + $0x618] sm:$0xff]
    %v6858 = vld [vmem:[#allocation22 + $0x620] sm:$0xf]
    %v6859 = vld [vmem:[#allocation22 + $0x624] sm:$0xff]
    %v6860 = vld [vmem:[#allocation22 + $0x62c] sm:$0xf]
    %v6861 = vld [vmem:[#allocation22 + $0x630] sm:$0xff]
    %v6862 = vld [vmem:[#allocation22 + $0x638] sm:$0xf]
    %v6863 = vld [vmem:[#allocation22 + $0x63c] sm:$0xff]
    %v6864 = vld [vmem:[#allocation22 + $0x644] sm:$0xf]
    %v6865 = vld [vmem:[#allocation22 + $0x648] sm:$0xff]
    %v6866 = vld [vmem:[#allocation22 + $0x650] sm:$0xf]
    %v6867 = vld [vmem:[#allocation22 + $0x654] sm:$0xff]
    %v6868 = vld [vmem:[#allocation22 + $0x65c] sm:$0xf]
    %v6869 = vld [vmem:[#allocation22 + $0x660] sm:$0xff]
    %v6870 = vld [vmem:[#allocation22 + $0x668] sm:$0xf]
    %v6871 = vld [vmem:[#allocation22 + $0x66c] sm:$0xff]
    %v6872 = vld [vmem:[#allocation22 + $0x674] sm:$0xf]
    %v6873 = vld [vmem:[#allocation22 + $0x678] sm:$0xff]
    %v6874 = vld [vmem:[#allocation22 + $0x680] sm:$0xf]
    %v6875 = vld [vmem:[#allocation22 + $0x684] sm:$0xff]
    %v6876 = vld [vmem:[#allocation22 + $0x68c] sm:$0xf]
    %v6877 = vld [vmem:[#allocation22 + $0x690] sm:$0xff]
    %v6878 = vld [vmem:[#allocation22 + $0x698] sm:$0xf]
    %v6879 = vld [vmem:[#allocation22 + $0x69c] sm:$0xff]
    %v6880 = vld [vmem:[#allocation22 + $0x6a4] sm:$0xf]
    %v6881 = vld [vmem:[#allocation22 + $0x6a8] sm:$0xff]
    %v6882 = vld [vmem:[#allocation22 + $0x6b0] sm:$0xf]
    %v6883 = vld [vmem:[#allocation22 + $0x6b4] sm:$0xff]
    %v6884 = vld [vmem:[#allocation22 + $0x6bc] sm:$0xf]
    %v6885 = vld [vmem:[#allocation22 + $0x6c0] sm:$0xff]
    %v6886 = vld [vmem:[#allocation22 + $0x6c8] sm:$0xf]
    %v6887 = vld [vmem:[#allocation22 + $0x6cc] sm:$0xff]
    %v6888 = vld [vmem:[#allocation22 + $0x6d4] sm:$0xf]
    %v6889 = vld [vmem:[#allocation22 + $0x6d8] sm:$0xff]
    %v6890 = vld [vmem:[#allocation22 + $0x6e0] sm:$0xf]
    %v6891 = vld [vmem:[#allocation22 + $0x6e4] sm:$0xff]
    %v6892 = vld [vmem:[#allocation22 + $0x6ec] sm:$0xf]
    %v6893 = vld [vmem:[#allocation22 + $0x6f0] sm:$0xff]
    %v6894 = vld [vmem:[#allocation22 + $0x6f8] sm:$0xf]
    %v6895 = vld [vmem:[#allocation22 + $0x6fc] sm:$0xff]
    %v6896 = vld [vmem:[#allocation22 + $0x704] sm:$0xf]
    %v6897 = vld [vmem:[#allocation22 + $0x708] sm:$0xff]
    %v6898 = vld [vmem:[#allocation22 + $0x710] sm:$0xf]
    %v6899 = vld [vmem:[#allocation22 + $0x714] sm:$0xff]
    %v6900 = vld [vmem:[#allocation22 + $0x71c] sm:$0xf]
    %v6901 = vld [vmem:[#allocation22 + $0x720] sm:$0xff]
    %v6902 = vld [vmem:[#allocation22 + $0x728] sm:$0xf]
    %v6903 = vld [vmem:[#allocation22 + $0x72c] sm:$0xff]
    %v6904 = vld [vmem:[#allocation22 + $0x734] sm:$0xf]
    %v6905 = vld [vmem:[#allocation22 + $0x738] sm:$0xff]
    %v6906 = vld [vmem:[#allocation22 + $0x740] sm:$0xf]
    %v6907 = vld [vmem:[#allocation22 + $0x744] sm:$0xff]
    %v6908 = vld [vmem:[#allocation22 + $0x74c] sm:$0xf]
    %v6909 = vld [vmem:[#allocation22 + $0x750] sm:$0xff]
    %v6910 = vld [vmem:[#allocation22 + $0x758] sm:$0xf]
    %v6911 = vld [vmem:[#allocation22 + $0x75c] sm:$0xff]
    %v6912 = vld [vmem:[#allocation22 + $0x764] sm:$0xf]
    %v6913 = vld [vmem:[#allocation22 + $0x768] sm:$0xff]
    %v6914 = vld [vmem:[#allocation22 + $0x770] sm:$0xf]
    %v6915 = vld [vmem:[#allocation22 + $0x774] sm:$0xff]
    %v6916 = vld [vmem:[#allocation22 + $0x77c] sm:$0xf]
    %v6917 = vld [vmem:[#allocation22 + $0x780] sm:$0xff]
    %v6918 = vld [vmem:[#allocation22 + $0x788] sm:$0xf]
    %v6919 = vld [vmem:[#allocation22 + $0x78c] sm:$0xff]
    %v6920 = vld [vmem:[#allocation22 + $0x794] sm:$0xf]
    %v6921 = vld [vmem:[#allocation22 + $0x798] sm:$0xff]
    %v6922 = vld [vmem:[#allocation22 + $0x7a0] sm:$0xf]
    %v6923 = vld [vmem:[#allocation22 + $0x7a4] sm:$0xff]
    %v6924 = vld [vmem:[#allocation22 + $0x7ac] sm:$0xf]
    %v6925 = vld [vmem:[#allocation22 + $0x7b0] sm:$0xff]
    %v6926 = vld [vmem:[#allocation22 + $0x7b8] sm:$0xf]
    %v6927 = vld [vmem:[#allocation22 + $0x7bc] sm:$0xff]
    %v6928 = vld [vmem:[#allocation22 + $0x7c4] sm:$0xf]
    %v6929 = vld [vmem:[#allocation22 + $0x7c8] sm:$0xff]
    %v6930 = vld [vmem:[#allocation22 + $0x7d0] sm:$0xf]
    %v6931 = vld [vmem:[#allocation22 + $0x7d4] sm:$0xff]
    %v6932 = vld [vmem:[#allocation22 + $0x7dc] sm:$0xf]
    %v6933 = vld [vmem:[#allocation22 + $0x7e0] sm:$0xff]
    %v6934 = vld [vmem:[#allocation22 + $0x7e8] sm:$0xf]
    %v6935 = vld [vmem:[#allocation22 + $0x7ec] sm:$0xff]
    %v6936 = vld [vmem:[#allocation22 + $0x7f4] sm:$0xf]
    %v6937 = vld [vmem:[#allocation22 + $0x7f8] sm:$0xff]
    %v6938 = vld [vmem:[#allocation22 + $0x800] sm:$0xf]
    %v6939 = vld [vmem:[#allocation22 + $0x804] sm:$0xff]
    %v6940 = vld [vmem:[#allocation22 + $0x80c] sm:$0xf]
    %v6941 = vld [vmem:[#allocation22 + $0x810] sm:$0xff]
    %v6942 = vld [vmem:[#allocation22 + $0x818] sm:$0xf]
    %v6943 = vld [vmem:[#allocation22 + $0x81c] sm:$0xff]
    %v6944 = vld [vmem:[#allocation22 + $0x824] sm:$0xf]
    %v6945 = vld [vmem:[#allocation22 + $0x828] sm:$0xff]
    %v6946 = vld [vmem:[#allocation22 + $0x830] sm:$0xf]
    %v6947 = vld [vmem:[#allocation22 + $0x834] sm:$0xff]
    %v6948 = vld [vmem:[#allocation22 + $0x83c] sm:$0xf]
    %v6949 = vld [vmem:[#allocation22 + $0x840] sm:$0xff]
    %v6950 = vld [vmem:[#allocation22 + $0x848] sm:$0xf]
    %v6951 = vld [vmem:[#allocation22 + $0x84c] sm:$0xff]
    %v6952 = vld [vmem:[#allocation22 + $0x854] sm:$0xf]
    %v6953 = vld [vmem:[#allocation22 + $0x858] sm:$0xff]
    %v6954 = vld [vmem:[#allocation22 + $0x860] sm:$0xf]
    %v6955 = vld [vmem:[#allocation22 + $0x864] sm:$0xff]
    %v6956 = vld [vmem:[#allocation22 + $0x86c] sm:$0xf]
    %v6957 = vld [vmem:[#allocation22 + $0x870] sm:$0xff]
    %v6958 = vld [vmem:[#allocation22 + $0x878] sm:$0xf]
    %v6959 = vld [vmem:[#allocation22 + $0x87c] sm:$0xff]
    %v6960 = vld [vmem:[#allocation22 + $0x884] sm:$0xf]
    %v6961 = vld [vmem:[#allocation22 + $0x888] sm:$0xff]
    %v6962 = vld [vmem:[#allocation22 + $0x890] sm:$0xf]
    %v6963 = vld [vmem:[#allocation22 + $0x894] sm:$0xff]
    %v6964 = vld [vmem:[#allocation22 + $0x89c] sm:$0xf]
    %v6965 = vld [vmem:[#allocation22 + $0x8a0] sm:$0xff]
    %v6966 = vld [vmem:[#allocation22 + $0x8a8] sm:$0xf]
    %v6967 = vld [vmem:[#allocation22 + $0x8ac] sm:$0xff]
    %v6968 = vld [vmem:[#allocation22 + $0x8b4] sm:$0xf]
    %v6969 = vld [vmem:[#allocation22 + $0x8b8] sm:$0xff]
    %v6970 = vld [vmem:[#allocation22 + $0x8c0] sm:$0xf]
    %v6971 = vld [vmem:[#allocation22 + $0x8c4] sm:$0xff]
    %v6972 = vld [vmem:[#allocation22 + $0x8cc] sm:$0xf]
    %v6973 = vld [vmem:[#allocation22 + $0x8d0] sm:$0xff]
    %v6974 = vld [vmem:[#allocation22 + $0x8d8] sm:$0xf]
    %v6975 = vld [vmem:[#allocation22 + $0x8dc] sm:$0xff]
    %v6976 = vld [vmem:[#allocation22 + $0x8e4] sm:$0xf]
    %v6977 = vld [vmem:[#allocation22 + $0x8e8] sm:$0xff]
    %v6978 = vld [vmem:[#allocation22 + $0x8f0] sm:$0xf]
    %v6979 = vld [vmem:[#allocation22 + $0x8f4] sm:$0xff]
    %v6980 = vld [vmem:[#allocation22 + $0x8fc] sm:$0xf]
    %v6981 = vld [vmem:[#allocation23] sm:$0x7]
    %v6983 = vlaneseq
    %v6984 = vshrl.u32 %v6983, 7
    %v6985 = vsub.s32 0, %v6984
    %v6986 = vrot.slane %v6981, %v6985
    %v6987 = vlaneseq
    %v6988 = vshrl.u32 %v6987, 7
    %v6989 = vsub.s32 1, %v6988
    %v6990 = vrot.slane %v6981, %v6989
    %v6991 = vlaneseq
    %v6992 = vshrl.u32 %v6991, 7
    %v6993 = vsub.s32 2, %v6992
    %v6994 = vrot.slane %v6981, %v6993
    %v7382 = vunpack.c.l.b16 %v6597
    %v7383 = vunpack.c.h.b16 %v6597
    %v7384 = vunpack.c.l.b16 %v6598
    %v7385 = vunpack.c.l.b16 %v6599
    %v7386 = vunpack.c.h.b16 %v6599
    %v7387 = vunpack.c.l.b16 %v6600
    %v7388 = vunpack.c.l.b16 %v6601
    %v7389 = vunpack.c.h.b16 %v6601
    %v7390 = vunpack.c.l.b16 %v6602
    %v7391 = vunpack.c.l.b16 %v6603
    %v7392 = vunpack.c.h.b16 %v6603
    %v7393 = vunpack.c.l.b16 %v6604
    %v7394 = vunpack.c.l.b16 %v6605
    %v7395 = vunpack.c.h.b16 %v6605
    %v7396 = vunpack.c.l.b16 %v6606
    %v7397 = vunpack.c.l.b16 %v6607
    %v7398 = vunpack.c.h.b16 %v6607
    %v7399 = vunpack.c.l.b16 %v6608
    %v7400 = vunpack.c.l.b16 %v6609
    %v7401 = vunpack.c.h.b16 %v6609
    %v7402 = vunpack.c.l.b16 %v6610
    %v7403 = vunpack.c.l.b16 %v6611
    %v7404 = vunpack.c.h.b16 %v6611
    %v7405 = vunpack.c.l.b16 %v6612
    %v7406 = vunpack.c.l.b16 %v6613
    %v7407 = vunpack.c.h.b16 %v6613
    %v7408 = vunpack.c.l.b16 %v6614
    %v7409 = vunpack.c.l.b16 %v6615
    %v7410 = vunpack.c.h.b16 %v6615
    %v7411 = vunpack.c.l.b16 %v6616
    %v7412 = vunpack.c.l.b16 %v6617
    %v7413 = vunpack.c.h.b16 %v6617
    %v7414 = vunpack.c.l.b16 %v6618
    %v7415 = vunpack.c.l.b16 %v6619
    %v7416 = vunpack.c.h.b16 %v6619
    %v7417 = vunpack.c.l.b16 %v6620
    %v7418 = vunpack.c.l.b16 %v6621
    %v7419 = vunpack.c.h.b16 %v6621
    %v7420 = vunpack.c.l.b16 %v6622
    %v7421 = vunpack.c.l.b16 %v6623
    %v7422 = vunpack.c.h.b16 %v6623
    %v7423 = vunpack.c.l.b16 %v6624
    %v7424 = vunpack.c.l.b16 %v6625
    %v7425 = vunpack.c.h.b16 %v6625
    %v7426 = vunpack.c.l.b16 %v6626
    %v7427 = vunpack.c.l.b16 %v6627
    %v7428 = vunpack.c.h.b16 %v6627
    %v7429 = vunpack.c.l.b16 %v6628
    %v7430 = vunpack.c.l.b16 %v6629
    %v7431 = vunpack.c.h.b16 %v6629
    %v7432 = vunpack.c.l.b16 %v6630
    %v7433 = vunpack.c.l.b16 %v6631
    %v7434 = vunpack.c.h.b16 %v6631
    %v7435 = vunpack.c.l.b16 %v6632
    %v7436 = vunpack.c.l.b16 %v6633
    %v7437 = vunpack.c.h.b16 %v6633
    %v7438 = vunpack.c.l.b16 %v6634
    %v7439 = vunpack.c.l.b16 %v6635
    %v7440 = vunpack.c.h.b16 %v6635
    %v7441 = vunpack.c.l.b16 %v6636
    %v7442 = vunpack.c.l.b16 %v6637
    %v7443 = vunpack.c.h.b16 %v6637
    %v7444 = vunpack.c.l.b16 %v6638
    %v7445 = vunpack.c.l.b16 %v6639
    %v7446 = vunpack.c.h.b16 %v6639
    %v7447 = vunpack.c.l.b16 %v6640
    %v7448 = vunpack.c.l.b16 %v6641
    %v7449 = vunpack.c.h.b16 %v6641
    %v7450 = vunpack.c.l.b16 %v6642
    %v7451 = vunpack.c.l.b16 %v6643
    %v7452 = vunpack.c.h.b16 %v6643
    %v7453 = vunpack.c.l.b16 %v6644
    %v7454 = vunpack.c.l.b16 %v6645
    %v7455 = vunpack.c.h.b16 %v6645
    %v7456 = vunpack.c.l.b16 %v6646
    %v7457 = vunpack.c.l.b16 %v6647
    %v7458 = vunpack.c.h.b16 %v6647
    %v7459 = vunpack.c.l.b16 %v6648
    %v7460 = vunpack.c.l.b16 %v6649
    %v7461 = vunpack.c.h.b16 %v6649
    %v7462 = vunpack.c.l.b16 %v6650
    %v7463 = vunpack.c.l.b16 %v6651
    %v7464 = vunpack.c.h.b16 %v6651
    %v7465 = vunpack.c.l.b16 %v6652
    %v7466 = vunpack.c.l.b16 %v6653
    %v7467 = vunpack.c.h.b16 %v6653
    %v7468 = vunpack.c.l.b16 %v6654
    %v7469 = vunpack.c.l.b16 %v6655
    %v7470 = vunpack.c.h.b16 %v6655
    %v7471 = vunpack.c.l.b16 %v6656
    %v7472 = vunpack.c.l.b16 %v6657
    %v7473 = vunpack.c.h.b16 %v6657
    %v7474 = vunpack.c.l.b16 %v6658
    %v7475 = vunpack.c.l.b16 %v6659
    %v7476 = vunpack.c.h.b16 %v6659
    %v7477 = vunpack.c.l.b16 %v6660
    %v7478 = vunpack.c.l.b16 %v6661
    %v7479 = vunpack.c.h.b16 %v6661
    %v7480 = vunpack.c.l.b16 %v6662
    %v7481 = vunpack.c.l.b16 %v6663
    %v7482 = vunpack.c.h.b16 %v6663
    %v7483 = vunpack.c.l.b16 %v6664
    %v7484 = vunpack.c.l.b16 %v6665
    %v7485 = vunpack.c.h.b16 %v6665
    %v7486 = vunpack.c.l.b16 %v6666
    %v7487 = vunpack.c.l.b16 %v6667
    %v7488 = vunpack.c.h.b16 %v6667
    %v7489 = vunpack.c.l.b16 %v6668
    %v7490 = vunpack.c.l.b16 %v6669
    %v7491 = vunpack.c.h.b16 %v6669
    %v7492 = vunpack.c.l.b16 %v6670
    %v7493 = vunpack.c.l.b16 %v6671
    %v7494 = vunpack.c.h.b16 %v6671
    %v7495 = vunpack.c.l.b16 %v6672
    %v7496 = vunpack.c.l.b16 %v6673
    %v7497 = vunpack.c.h.b16 %v6673
    %v7498 = vunpack.c.l.b16 %v6674
    %v7499 = vunpack.c.l.b16 %v6675
    %v7500 = vunpack.c.h.b16 %v6675
    %v7501 = vunpack.c.l.b16 %v6676
    %v7502 = vunpack.c.l.b16 %v6677
    %v7503 = vunpack.c.h.b16 %v6677
    %v7504 = vunpack.c.l.b16 %v6678
    %v7505 = vunpack.c.l.b16 %v6679
    %v7506 = vunpack.c.h.b16 %v6679
    %v7507 = vunpack.c.l.b16 %v6680
    %v7508 = vunpack.c.l.b16 %v6681
    %v7509 = vunpack.c.h.b16 %v6681
    %v7510 = vunpack.c.l.b16 %v6682
    %v7511 = vunpack.c.l.b16 %v6683
    %v7512 = vunpack.c.h.b16 %v6683
    %v7513 = vunpack.c.l.b16 %v6684
    %v7514 = vunpack.c.l.b16 %v6685
    %v7515 = vunpack.c.h.b16 %v6685
    %v7516 = vunpack.c.l.b16 %v6686
    %v7517 = vunpack.c.l.b16 %v6687
    %v7518 = vunpack.c.h.b16 %v6687
    %v7519 = vunpack.c.l.b16 %v6688
    %v7520 = vunpack.c.l.b16 %v6689
    %v7521 = vunpack.c.h.b16 %v6689
    %v7522 = vunpack.c.l.b16 %v6690
    %v7523 = vunpack.c.l.b16 %v6691
    %v7524 = vunpack.c.h.b16 %v6691
    %v7525 = vunpack.c.l.b16 %v6692
    %v7526 = vunpack.c.l.b16 %v6693
    %v7527 = vunpack.c.h.b16 %v6693
    %v7528 = vunpack.c.l.b16 %v6694
    %v7529 = vunpack.c.l.b16 %v6695
    %v7530 = vunpack.c.h.b16 %v6695
    %v7531 = vunpack.c.l.b16 %v6696
    %v7532 = vunpack.c.l.b16 %v6697
    %v7533 = vunpack.c.h.b16 %v6697
    %v7534 = vunpack.c.l.b16 %v6698
    %v7535 = vunpack.c.l.b16 %v6699
    %v7536 = vunpack.c.h.b16 %v6699
    %v7537 = vunpack.c.l.b16 %v6700
    %v7538 = vunpack.c.l.b16 %v6701
    %v7539 = vunpack.c.h.b16 %v6701
    %v7540 = vunpack.c.l.b16 %v6702
    %v7541 = vunpack.c.l.b16 %v6703
    %v7542 = vunpack.c.h.b16 %v6703
    %v7543 = vunpack.c.l.b16 %v6704
    %v7544 = vunpack.c.l.b16 %v6705
    %v7545 = vunpack.c.h.b16 %v6705
    %v7546 = vunpack.c.l.b16 %v6706
    %v7547 = vunpack.c.l.b16 %v6707
    %v7548 = vunpack.c.h.b16 %v6707
    %v7549 = vunpack.c.l.b16 %v6708
    %v7550 = vunpack.c.l.b16 %v6709
    %v7551 = vunpack.c.h.b16 %v6709
    %v7552 = vunpack.c.l.b16 %v6710
    %v7553 = vunpack.c.l.b16 %v6711
    %v7554 = vunpack.c.h.b16 %v6711
    %v7555 = vunpack.c.l.b16 %v6712
    %v7556 = vunpack.c.l.b16 %v6713
    %v7557 = vunpack.c.h.b16 %v6713
    %v7558 = vunpack.c.l.b16 %v6714
    %v7559 = vunpack.c.l.b16 %v6715
    %v7560 = vunpack.c.h.b16 %v6715
    %v7561 = vunpack.c.l.b16 %v6716
    %v7562 = vunpack.c.l.b16 %v6717
    %v7563 = vunpack.c.h.b16 %v6717
    %v7564 = vunpack.c.l.b16 %v6718
    %v7565 = vunpack.c.l.b16 %v6719
    %v7566 = vunpack.c.h.b16 %v6719
    %v7567 = vunpack.c.l.b16 %v6720
    %v7568 = vunpack.c.l.b16 %v6721
    %v7569 = vunpack.c.h.b16 %v6721
    %v7570 = vunpack.c.l.b16 %v6722
    %v7571 = vunpack.c.l.b16 %v6723
    %v7572 = vunpack.c.h.b16 %v6723
    %v7573 = vunpack.c.l.b16 %v6724
    %v7574 = vunpack.c.l.b16 %v6725
    %v7575 = vunpack.c.h.b16 %v6725
    %v7576 = vunpack.c.l.b16 %v6726
    %v7577 = vunpack.c.l.b16 %v6727
    %v7578 = vunpack.c.h.b16 %v6727
    %v7579 = vunpack.c.l.b16 %v6728
    %v7580 = vunpack.c.l.b16 %v6729
    %v7581 = vunpack.c.h.b16 %v6729
    %v7582 = vunpack.c.l.b16 %v6730
    %v7583 = vunpack.c.l.b16 %v6731
    %v7584 = vunpack.c.h.b16 %v6731
    %v7585 = vunpack.c.l.b16 %v6732
    %v7586 = vunpack.c.l.b16 %v6733
    %v7587 = vunpack.c.h.b16 %v6733
    %v7588 = vunpack.c.l.b16 %v6734
    %v7589 = vunpack.c.l.b16 %v6735
    %v7590 = vunpack.c.h.b16 %v6735
    %v7591 = vunpack.c.l.b16 %v6736
    %v7592 = vunpack.c.l.b16 %v6737
    %v7593 = vunpack.c.h.b16 %v6737
    %v7594 = vunpack.c.l.b16 %v6738
    %v7595 = vunpack.c.l.b16 %v6739
    %v7596 = vunpack.c.h.b16 %v6739
    %v7597 = vunpack.c.l.b16 %v6740
    %v7598 = vunpack.c.l.b16 %v6741
    %v7599 = vunpack.c.h.b16 %v6741
    %v7600 = vunpack.c.l.b16 %v6742
    %v7601 = vunpack.c.l.b16 %v6743
    %v7602 = vunpack.c.h.b16 %v6743
    %v7603 = vunpack.c.l.b16 %v6744
    %v7604 = vunpack.c.l.b16 %v6745
    %v7605 = vunpack.c.h.b16 %v6745
    %v7606 = vunpack.c.l.b16 %v6746
    %v7607 = vunpack.c.l.b16 %v6747
    %v7608 = vunpack.c.h.b16 %v6747
    %v7609 = vunpack.c.l.b16 %v6748
    %v7610 = vunpack.c.l.b16 %v6749
    %v7611 = vunpack.c.h.b16 %v6749
    %v7612 = vunpack.c.l.b16 %v6750
    %v7613 = vunpack.c.l.b16 %v6751
    %v7614 = vunpack.c.h.b16 %v6751
    %v7615 = vunpack.c.l.b16 %v6752
    %v7616 = vunpack.c.l.b16 %v6753
    %v7617 = vunpack.c.h.b16 %v6753
    %v7618 = vunpack.c.l.b16 %v6754
    %v7619 = vunpack.c.l.b16 %v6755
    %v7620 = vunpack.c.h.b16 %v6755
    %v7621 = vunpack.c.l.b16 %v6756
    %v7622 = vunpack.c.l.b16 %v6757
    %v7623 = vunpack.c.h.b16 %v6757
    %v7624 = vunpack.c.l.b16 %v6758
    %v7625 = vunpack.c.l.b16 %v6759
    %v7626 = vunpack.c.h.b16 %v6759
    %v7627 = vunpack.c.l.b16 %v6760
    %v7628 = vunpack.c.l.b16 %v6761
    %v7629 = vunpack.c.h.b16 %v6761
    %v7630 = vunpack.c.l.b16 %v6762
    %v7631 = vunpack.c.l.b16 %v6763
    %v7632 = vunpack.c.h.b16 %v6763
    %v7633 = vunpack.c.l.b16 %v6764
    %v7634 = vunpack.c.l.b16 %v6765
    %v7635 = vunpack.c.h.b16 %v6765
    %v7636 = vunpack.c.l.b16 %v6766
    %v7637 = vunpack.c.l.b16 %v6767
    %v7638 = vunpack.c.h.b16 %v6767
    %v7639 = vunpack.c.l.b16 %v6768
    %v7640 = vunpack.c.l.b16 %v6769
    %v7641 = vunpack.c.h.b16 %v6769
    %v7642 = vunpack.c.l.b16 %v6770
    %v7643 = vunpack.c.l.b16 %v6771
    %v7644 = vunpack.c.h.b16 %v6771
    %v7645 = vunpack.c.l.b16 %v6772
    %v7646 = vunpack.c.l.b16 %v6773
    %v7647 = vunpack.c.h.b16 %v6773
    %v7648 = vunpack.c.l.b16 %v6774
    %v7649 = vunpack.c.l.b16 %v6775
    %v7650 = vunpack.c.h.b16 %v6775
    %v7651 = vunpack.c.l.b16 %v6776
    %v7652 = vunpack.c.l.b16 %v6777
    %v7653 = vunpack.c.h.b16 %v6777
    %v7654 = vunpack.c.l.b16 %v6778
    %v7655 = vunpack.c.l.b16 %v6779
    %v7656 = vunpack.c.h.b16 %v6779
    %v7657 = vunpack.c.l.b16 %v6780
    %v7658 = vunpack.c.l.b16 %v6781
    %v7659 = vunpack.c.h.b16 %v6781
    %v7660 = vunpack.c.l.b16 %v6782
    %v7661 = vunpack.c.l.b16 %v6783
    %v7662 = vunpack.c.h.b16 %v6783
    %v7663 = vunpack.c.l.b16 %v6784
    %v7664 = vunpack.c.l.b16 %v6785
    %v7665 = vunpack.c.h.b16 %v6785
    %v7666 = vunpack.c.l.b16 %v6786
    %v7667 = vunpack.c.l.b16 %v6787
    %v7668 = vunpack.c.h.b16 %v6787
    %v7669 = vunpack.c.l.b16 %v6788
    %v7670 = vunpack.c.l.b16 %v6789
    %v7671 = vunpack.c.h.b16 %v6789
    %v7672 = vunpack.c.l.b16 %v6790
    %v7673 = vunpack.c.l.b16 %v6791
    %v7674 = vunpack.c.h.b16 %v6791
    %v7675 = vunpack.c.l.b16 %v6792
    %v7676 = vunpack.c.l.b16 %v6793
    %v7677 = vunpack.c.h.b16 %v6793
    %v7678 = vunpack.c.l.b16 %v6794
    %v7679 = vunpack.c.l.b16 %v6795
    %v7680 = vunpack.c.h.b16 %v6795
    %v7681 = vunpack.c.l.b16 %v6796
    %v7682 = vunpack.c.l.b16 %v6797
    %v7683 = vunpack.c.h.b16 %v6797
    %v7684 = vunpack.c.l.b16 %v6798
    %v7685 = vunpack.c.l.b16 %v6799
    %v7686 = vunpack.c.h.b16 %v6799
    %v7687 = vunpack.c.l.b16 %v6800
    %v7688 = vunpack.c.l.b16 %v6801
    %v7689 = vunpack.c.h.b16 %v6801
    %v7690 = vunpack.c.l.b16 %v6802
    %v7691 = vunpack.c.l.b16 %v6803
    %v7692 = vunpack.c.h.b16 %v6803
    %v7693 = vunpack.c.l.b16 %v6804
    %v7694 = vunpack.c.l.b16 %v6805
    %v7695 = vunpack.c.h.b16 %v6805
    %v7696 = vunpack.c.l.b16 %v6806
    %v7697 = vunpack.c.l.b16 %v6807
    %v7698 = vunpack.c.h.b16 %v6807
    %v7699 = vunpack.c.l.b16 %v6808
    %v7700 = vunpack.c.l.b16 %v6809
    %v7701 = vunpack.c.h.b16 %v6809
    %v7702 = vunpack.c.l.b16 %v6810
    %v7703 = vunpack.c.l.b16 %v6811
    %v7704 = vunpack.c.h.b16 %v6811
    %v7705 = vunpack.c.l.b16 %v6812
    %v7706 = vunpack.c.l.b16 %v6813
    %v7707 = vunpack.c.h.b16 %v6813
    %v7708 = vunpack.c.l.b16 %v6814
    %v7709 = vunpack.c.l.b16 %v6815
    %v7710 = vunpack.c.h.b16 %v6815
    %v7711 = vunpack.c.l.b16 %v6816
    %v7712 = vunpack.c.l.b16 %v6817
    %v7713 = vunpack.c.h.b16 %v6817
    %v7714 = vunpack.c.l.b16 %v6818
    %v7715 = vunpack.c.l.b16 %v6819
    %v7716 = vunpack.c.h.b16 %v6819
    %v7717 = vunpack.c.l.b16 %v6820
    %v7718 = vunpack.c.l.b16 %v6821
    %v7719 = vunpack.c.h.b16 %v6821
    %v7720 = vunpack.c.l.b16 %v6822
    %v7721 = vunpack.c.l.b16 %v6823
    %v7722 = vunpack.c.h.b16 %v6823
    %v7723 = vunpack.c.l.b16 %v6824
    %v7724 = vunpack.c.l.b16 %v6825
    %v7725 = vunpack.c.h.b16 %v6825
    %v7726 = vunpack.c.l.b16 %v6826
    %v7727 = vunpack.c.l.b16 %v6827
    %v7728 = vunpack.c.h.b16 %v6827
    %v7729 = vunpack.c.l.b16 %v6828
    %v7730 = vunpack.c.l.b16 %v6829
    %v7731 = vunpack.c.h.b16 %v6829
    %v7732 = vunpack.c.l.b16 %v6830
    %v7733 = vunpack.c.l.b16 %v6831
    %v7734 = vunpack.c.h.b16 %v6831
    %v7735 = vunpack.c.l.b16 %v6832
    %v7736 = vunpack.c.l.b16 %v6833
    %v7737 = vunpack.c.h.b16 %v6833
    %v7738 = vunpack.c.l.b16 %v6834
    %v7739 = vunpack.c.l.b16 %v6835
    %v7740 = vunpack.c.h.b16 %v6835
    %v7741 = vunpack.c.l.b16 %v6836
    %v7742 = vunpack.c.l.b16 %v6837
    %v7743 = vunpack.c.h.b16 %v6837
    %v7744 = vunpack.c.l.b16 %v6838
    %v7745 = vunpack.c.l.b16 %v6839
    %v7746 = vunpack.c.h.b16 %v6839
    %v7747 = vunpack.c.l.b16 %v6840
    %v7748 = vunpack.c.l.b16 %v6841
    %v7749 = vunpack.c.h.b16 %v6841
    %v7750 = vunpack.c.l.b16 %v6842
    %v7751 = vunpack.c.l.b16 %v6843
    %v7752 = vunpack.c.h.b16 %v6843
    %v7753 = vunpack.c.l.b16 %v6844
    %v7754 = vunpack.c.l.b16 %v6845
    %v7755 = vunpack.c.h.b16 %v6845
    %v7756 = vunpack.c.l.b16 %v6846
    %v7757 = vunpack.c.l.b16 %v6847
    %v7758 = vunpack.c.h.b16 %v6847
    %v7759 = vunpack.c.l.b16 %v6848
    %v7760 = vunpack.c.l.b16 %v6849
    %v7761 = vunpack.c.h.b16 %v6849
    %v7762 = vunpack.c.l.b16 %v6850
    %v7763 = vunpack.c.l.b16 %v6851
    %v7764 = vunpack.c.h.b16 %v6851
    %v7765 = vunpack.c.l.b16 %v6852
    %v7766 = vunpack.c.l.b16 %v6853
    %v7767 = vunpack.c.h.b16 %v6853
    %v7768 = vunpack.c.l.b16 %v6854
    %v7769 = vunpack.c.l.b16 %v6855
    %v7770 = vunpack.c.h.b16 %v6855
    %v7771 = vunpack.c.l.b16 %v6856
    %v7772 = vunpack.c.l.b16 %v6857
    %v7773 = vunpack.c.h.b16 %v6857
    %v7774 = vunpack.c.l.b16 %v6858
    %v7775 = vunpack.c.l.b16 %v6859
    %v7776 = vunpack.c.h.b16 %v6859
    %v7777 = vunpack.c.l.b16 %v6860
    %v7778 = vunpack.c.l.b16 %v6861
    %v7779 = vunpack.c.h.b16 %v6861
    %v7780 = vunpack.c.l.b16 %v6862
    %v7781 = vunpack.c.l.b16 %v6863
    %v7782 = vunpack.c.h.b16 %v6863
    %v7783 = vunpack.c.l.b16 %v6864
    %v7784 = vunpack.c.l.b16 %v6865
    %v7785 = vunpack.c.h.b16 %v6865
    %v7786 = vunpack.c.l.b16 %v6866
    %v7787 = vunpack.c.l.b16 %v6867
    %v7788 = vunpack.c.h.b16 %v6867
    %v7789 = vunpack.c.l.b16 %v6868
    %v7790 = vunpack.c.l.b16 %v6869
    %v7791 = vunpack.c.h.b16 %v6869
    %v7792 = vunpack.c.l.b16 %v6870
    %v7793 = vunpack.c.l.b16 %v6871
    %v7794 = vunpack.c.h.b16 %v6871
    %v7795 = vunpack.c.l.b16 %v6872
    %v7796 = vunpack.c.l.b16 %v6873
    %v7797 = vunpack.c.h.b16 %v6873
    %v7798 = vunpack.c.l.b16 %v6874
    %v7799 = vunpack.c.l.b16 %v6875
    %v7800 = vunpack.c.h.b16 %v6875
    %v7801 = vunpack.c.l.b16 %v6876
    %v7802 = vunpack.c.l.b16 %v6877
    %v7803 = vunpack.c.h.b16 %v6877
    %v7804 = vunpack.c.l.b16 %v6878
    %v7805 = vunpack.c.l.b16 %v6879
    %v7806 = vunpack.c.h.b16 %v6879
    %v7807 = vunpack.c.l.b16 %v6880
    %v7808 = vunpack.c.l.b16 %v6881
    %v7809 = vunpack.c.h.b16 %v6881
    %v7810 = vunpack.c.l.b16 %v6882
    %v7811 = vunpack.c.l.b16 %v6883
    %v7812 = vunpack.c.h.b16 %v6883
    %v7813 = vunpack.c.l.b16 %v6884
    %v7814 = vunpack.c.l.b16 %v6885
    %v7815 = vunpack.c.h.b16 %v6885
    %v7816 = vunpack.c.l.b16 %v6886
    %v7817 = vunpack.c.l.b16 %v6887
    %v7818 = vunpack.c.h.b16 %v6887
    %v7819 = vunpack.c.l.b16 %v6888
    %v7820 = vunpack.c.l.b16 %v6889
    %v7821 = vunpack.c.h.b16 %v6889
    %v7822 = vunpack.c.l.b16 %v6890
    %v7823 = vunpack.c.l.b16 %v6891
    %v7824 = vunpack.c.h.b16 %v6891
    %v7825 = vunpack.c.l.b16 %v6892
    %v7826 = vunpack.c.l.b16 %v6893
    %v7827 = vunpack.c.h.b16 %v6893
    %v7828 = vunpack.c.l.b16 %v6894
    %v7829 = vunpack.c.l.b16 %v6895
    %v7830 = vunpack.c.h.b16 %v6895
    %v7831 = vunpack.c.l.b16 %v6896
    %v7832 = vunpack.c.l.b16 %v6897
    %v7833 = vunpack.c.h.b16 %v6897
    %v7834 = vunpack.c.l.b16 %v6898
    %v7835 = vunpack.c.l.b16 %v6899
    %v7836 = vunpack.c.h.b16 %v6899
    %v7837 = vunpack.c.l.b16 %v6900
    %v7838 = vunpack.c.l.b16 %v6901
    %v7839 = vunpack.c.h.b16 %v6901
    %v7840 = vunpack.c.l.b16 %v6902
    %v7841 = vunpack.c.l.b16 %v6903
    %v7842 = vunpack.c.h.b16 %v6903
    %v7843 = vunpack.c.l.b16 %v6904
    %v7844 = vunpack.c.l.b16 %v6905
    %v7845 = vunpack.c.h.b16 %v6905
    %v7846 = vunpack.c.l.b16 %v6906
    %v7847 = vunpack.c.l.b16 %v6907
    %v7848 = vunpack.c.h.b16 %v6907
    %v7849 = vunpack.c.l.b16 %v6908
    %v7850 = vunpack.c.l.b16 %v6909
    %v7851 = vunpack.c.h.b16 %v6909
    %v7852 = vunpack.c.l.b16 %v6910
    %v7853 = vunpack.c.l.b16 %v6911
    %v7854 = vunpack.c.h.b16 %v6911
    %v7855 = vunpack.c.l.b16 %v6912
    %v7856 = vunpack.c.l.b16 %v6913
    %v7857 = vunpack.c.h.b16 %v6913
    %v7858 = vunpack.c.l.b16 %v6914
    %v7859 = vunpack.c.l.b16 %v6915
    %v7860 = vunpack.c.h.b16 %v6915
    %v7861 = vunpack.c.l.b16 %v6916
    %v7862 = vunpack.c.l.b16 %v6917
    %v7863 = vunpack.c.h.b16 %v6917
    %v7864 = vunpack.c.l.b16 %v6918
    %v7865 = vunpack.c.l.b16 %v6919
    %v7866 = vunpack.c.h.b16 %v6919
    %v7867 = vunpack.c.l.b16 %v6920
    %v7868 = vunpack.c.l.b16 %v6921
    %v7869 = vunpack.c.h.b16 %v6921
    %v7870 = vunpack.c.l.b16 %v6922
    %v7871 = vunpack.c.l.b16 %v6923
    %v7872 = vunpack.c.h.b16 %v6923
    %v7873 = vunpack.c.l.b16 %v6924
    %v7874 = vunpack.c.l.b16 %v6925
    %v7875 = vunpack.c.h.b16 %v6925
    %v7876 = vunpack.c.l.b16 %v6926
    %v7877 = vunpack.c.l.b16 %v6927
    %v7878 = vunpack.c.h.b16 %v6927
    %v7879 = vunpack.c.l.b16 %v6928
    %v7880 = vunpack.c.l.b16 %v6929
    %v7881 = vunpack.c.h.b16 %v6929
    %v7882 = vunpack.c.l.b16 %v6930
    %v7883 = vunpack.c.l.b16 %v6931
    %v7884 = vunpack.c.h.b16 %v6931
    %v7885 = vunpack.c.l.b16 %v6932
    %v7886 = vunpack.c.l.b16 %v6933
    %v7887 = vunpack.c.h.b16 %v6933
    %v7888 = vunpack.c.l.b16 %v6934
    %v7889 = vunpack.c.l.b16 %v6935
    %v7890 = vunpack.c.h.b16 %v6935
    %v7891 = vunpack.c.l.b16 %v6936
    %v7892 = vunpack.c.l.b16 %v6937
    %v7893 = vunpack.c.h.b16 %v6937
    %v7894 = vunpack.c.l.b16 %v6938
    %v7895 = vunpack.c.l.b16 %v6939
    %v7896 = vunpack.c.h.b16 %v6939
    %v7897 = vunpack.c.l.b16 %v6940
    %v7898 = vunpack.c.l.b16 %v6941
    %v7899 = vunpack.c.h.b16 %v6941
    %v7900 = vunpack.c.l.b16 %v6942
    %v7901 = vunpack.c.l.b16 %v6943
    %v7902 = vunpack.c.h.b16 %v6943
    %v7903 = vunpack.c.l.b16 %v6944
    %v7904 = vunpack.c.l.b16 %v6945
    %v7905 = vunpack.c.h.b16 %v6945
    %v7906 = vunpack.c.l.b16 %v6946
    %v7907 = vunpack.c.l.b16 %v6947
    %v7908 = vunpack.c.h.b16 %v6947
    %v7909 = vunpack.c.l.b16 %v6948
    %v7910 = vunpack.c.l.b16 %v6949
    %v7911 = vunpack.c.h.b16 %v6949
    %v7912 = vunpack.c.l.b16 %v6950
    %v7913 = vunpack.c.l.b16 %v6951
    %v7914 = vunpack.c.h.b16 %v6951
    %v7915 = vunpack.c.l.b16 %v6952
    %v7916 = vunpack.c.l.b16 %v6953
    %v7917 = vunpack.c.h.b16 %v6953
    %v7918 = vunpack.c.l.b16 %v6954
    %v7919 = vunpack.c.l.b16 %v6955
    %v7920 = vunpack.c.h.b16 %v6955
    %v7921 = vunpack.c.l.b16 %v6956
    %v7922 = vunpack.c.l.b16 %v6957
    %v7923 = vunpack.c.h.b16 %v6957
    %v7924 = vunpack.c.l.b16 %v6958
    %v7925 = vunpack.c.l.b16 %v6959
    %v7926 = vunpack.c.h.b16 %v6959
    %v7927 = vunpack.c.l.b16 %v6960
    %v7928 = vunpack.c.l.b16 %v6961
    %v7929 = vunpack.c.h.b16 %v6961
    %v7930 = vunpack.c.l.b16 %v6962
    %v7931 = vunpack.c.l.b16 %v6963
    %v7932 = vunpack.c.h.b16 %v6963
    %v7933 = vunpack.c.l.b16 %v6964
    %v7934 = vunpack.c.l.b16 %v6965
    %v7935 = vunpack.c.h.b16 %v6965
    %v7936 = vunpack.c.l.b16 %v6966
    %v7937 = vunpack.c.l.b16 %v6967
    %v7938 = vunpack.c.h.b16 %v6967
    %v7939 = vunpack.c.l.b16 %v6968
    %v7940 = vunpack.c.l.b16 %v6969
    %v7941 = vunpack.c.h.b16 %v6969
    %v7942 = vunpack.c.l.b16 %v6970
    %v7943 = vunpack.c.l.b16 %v6971
    %v7944 = vunpack.c.h.b16 %v6971
    %v7945 = vunpack.c.l.b16 %v6972
    %v7946 = vunpack.c.l.b16 %v6973
    %v7947 = vunpack.c.h.b16 %v6973
    %v7948 = vunpack.c.l.b16 %v6974
    %v7949 = vunpack.c.l.b16 %v6975
    %v7950 = vunpack.c.h.b16 %v6975
    %v7951 = vunpack.c.l.b16 %v6976
    %v7952 = vunpack.c.l.b16 %v6977
    %v7953 = vunpack.c.h.b16 %v6977
    %v7954 = vunpack.c.l.b16 %v6978
    %v7955 = vunpack.c.l.b16 %v6979
    %v7956 = vunpack.c.h.b16 %v6979
    %v7957 = vunpack.c.l.b16 %v6980
    %v7958 = vpack.c.b16 %v7385, %v7382
    %v7959 = vpack.c.b16 %v7386, %v7383
    %v7960 = vpack.c.b16 %v7387, %v7384
    %v7961 = vpack.c.b16 %v7391, %v7388
    %v7962 = vpack.c.b16 %v7392, %v7389
    %v7963 = vpack.c.b16 %v7393, %v7390
    %v7964 = vpack.c.b16 %v7397, %v7394
    %v7965 = vpack.c.b16 %v7398, %v7395
    %v7966 = vpack.c.b16 %v7399, %v7396
    %v7967 = vpack.c.b16 %v7403, %v7400
    %v7968 = vpack.c.b16 %v7404, %v7401
    %v7969 = vpack.c.b16 %v7405, %v7402
    %v7970 = vpack.c.b16 %v7409, %v7406
    %v7971 = vpack.c.b16 %v7410, %v7407
    %v7972 = vpack.c.b16 %v7411, %v7408
    %v7973 = vpack.c.b16 %v7415, %v7412
    %v7974 = vpack.c.b16 %v7416, %v7413
    %v7975 = vpack.c.b16 %v7417, %v7414
    %v7976 = vpack.c.b16 %v7421, %v7418
    %v7977 = vpack.c.b16 %v7422, %v7419
    %v7978 = vpack.c.b16 %v7423, %v7420
    %v7979 = vpack.c.b16 %v7427, %v7424
    %v7980 = vpack.c.b16 %v7428, %v7425
    %v7981 = vpack.c.b16 %v7429, %v7426
    %v7982 = vpack.c.b16 %v7433, %v7430
    %v7983 = vpack.c.b16 %v7434, %v7431
    %v7984 = vpack.c.b16 %v7435, %v7432
    %v7985 = vpack.c.b16 %v7439, %v7436
    %v7986 = vpack.c.b16 %v7440, %v7437
    %v7987 = vpack.c.b16 %v7441, %v7438
    %v7988 = vpack.c.b16 %v7445, %v7442
    %v7989 = vpack.c.b16 %v7446, %v7443
    %v7990 = vpack.c.b16 %v7447, %v7444
    %v7991 = vpack.c.b16 %v7451, %v7448
    %v7992 = vpack.c.b16 %v7452, %v7449
    %v7993 = vpack.c.b16 %v7453, %v7450
    %v7994 = vpack.c.b16 %v7457, %v7454
    %v7995 = vpack.c.b16 %v7458, %v7455
    %v7996 = vpack.c.b16 %v7459, %v7456
    %v7997 = vpack.c.b16 %v7463, %v7460
    %v7998 = vpack.c.b16 %v7464, %v7461
    %v7999 = vpack.c.b16 %v7465, %v7462
    %v8000 = vpack.c.b16 %v7469, %v7466
    %v8001 = vpack.c.b16 %v7470, %v7467
    %v8002 = vpack.c.b16 %v7471, %v7468
    %v8003 = vpack.c.b16 %v7475, %v7472
    %v8004 = vpack.c.b16 %v7476, %v7473
    %v8005 = vpack.c.b16 %v7477, %v7474
    %v8006 = vpack.c.b16 %v7481, %v7478
    %v8007 = vpack.c.b16 %v7482, %v7479
    %v8008 = vpack.c.b16 %v7483, %v7480
    %v8009 = vpack.c.b16 %v7487, %v7484
    %v8010 = vpack.c.b16 %v7488, %v7485
    %v8011 = vpack.c.b16 %v7489, %v7486
    %v8012 = vpack.c.b16 %v7493, %v7490
    %v8013 = vpack.c.b16 %v7494, %v7491
    %v8014 = vpack.c.b16 %v7495, %v7492
    %v8015 = vpack.c.b16 %v7499, %v7496
    %v8016 = vpack.c.b16 %v7500, %v7497
    %v8017 = vpack.c.b16 %v7501, %v7498
    %v8018 = vpack.c.b16 %v7505, %v7502
    %v8019 = vpack.c.b16 %v7506, %v7503
    %v8020 = vpack.c.b16 %v7507, %v7504
    %v8021 = vpack.c.b16 %v7511, %v7508
    %v8022 = vpack.c.b16 %v7512, %v7509
    %v8023 = vpack.c.b16 %v7513, %v7510
    %v8024 = vpack.c.b16 %v7517, %v7514
    %v8025 = vpack.c.b16 %v7518, %v7515
    %v8026 = vpack.c.b16 %v7519, %v7516
    %v8027 = vpack.c.b16 %v7523, %v7520
    %v8028 = vpack.c.b16 %v7524, %v7521
    %v8029 = vpack.c.b16 %v7525, %v7522
    %v8030 = vpack.c.b16 %v7529, %v7526
    %v8031 = vpack.c.b16 %v7530, %v7527
    %v8032 = vpack.c.b16 %v7531, %v7528
    %v8033 = vpack.c.b16 %v7535, %v7532
    %v8034 = vpack.c.b16 %v7536, %v7533
    %v8035 = vpack.c.b16 %v7537, %v7534
    %v8036 = vpack.c.b16 %v7541, %v7538
    %v8037 = vpack.c.b16 %v7542, %v7539
    %v8038 = vpack.c.b16 %v7543, %v7540
    %v8039 = vpack.c.b16 %v7547, %v7544
    %v8040 = vpack.c.b16 %v7548, %v7545
    %v8041 = vpack.c.b16 %v7549, %v7546
    %v8042 = vpack.c.b16 %v7553, %v7550
    %v8043 = vpack.c.b16 %v7554, %v7551
    %v8044 = vpack.c.b16 %v7555, %v7552
    %v8045 = vpack.c.b16 %v7559, %v7556
    %v8046 = vpack.c.b16 %v7560, %v7557
    %v8047 = vpack.c.b16 %v7561, %v7558
    %v8048 = vpack.c.b16 %v7565, %v7562
    %v8049 = vpack.c.b16 %v7566, %v7563
    %v8050 = vpack.c.b16 %v7567, %v7564
    %v8051 = vpack.c.b16 %v7571, %v7568
    %v8052 = vpack.c.b16 %v7572, %v7569
    %v8053 = vpack.c.b16 %v7573, %v7570
    %v8054 = vpack.c.b16 %v7577, %v7574
    %v8055 = vpack.c.b16 %v7578, %v7575
    %v8056 = vpack.c.b16 %v7579, %v7576
    %v8057 = vpack.c.b16 %v7583, %v7580
    %v8058 = vpack.c.b16 %v7584, %v7581
    %v8059 = vpack.c.b16 %v7585, %v7582
    %v8060 = vpack.c.b16 %v7589, %v7586
    %v8061 = vpack.c.b16 %v7590, %v7587
    %v8062 = vpack.c.b16 %v7591, %v7588
    %v8063 = vpack.c.b16 %v7595, %v7592
    %v8064 = vpack.c.b16 %v7596, %v7593
    %v8065 = vpack.c.b16 %v7597, %v7594
    %v8066 = vpack.c.b16 %v7601, %v7598
    %v8067 = vpack.c.b16 %v7602, %v7599
    %v8068 = vpack.c.b16 %v7603, %v7600
    %v8069 = vpack.c.b16 %v7607, %v7604
    %v8070 = vpack.c.b16 %v7608, %v7605
    %v8071 = vpack.c.b16 %v7609, %v7606
    %v8072 = vpack.c.b16 %v7613, %v7610
    %v8073 = vpack.c.b16 %v7614, %v7611
    %v8074 = vpack.c.b16 %v7615, %v7612
    %v8075 = vpack.c.b16 %v7619, %v7616
    %v8076 = vpack.c.b16 %v7620, %v7617
    %v8077 = vpack.c.b16 %v7621, %v7618
    %v8078 = vpack.c.b16 %v7625, %v7622
    %v8079 = vpack.c.b16 %v7626, %v7623
    %v8080 = vpack.c.b16 %v7627, %v7624
    %v8081 = vpack.c.b16 %v7631, %v7628
    %v8082 = vpack.c.b16 %v7632, %v7629
    %v8083 = vpack.c.b16 %v7633, %v7630
    %v8084 = vpack.c.b16 %v7637, %v7634
    %v8085 = vpack.c.b16 %v7638, %v7635
    %v8086 = vpack.c.b16 %v7639, %v7636
    %v8087 = vpack.c.b16 %v7643, %v7640
    %v8088 = vpack.c.b16 %v7644, %v7641
    %v8089 = vpack.c.b16 %v7645, %v7642
    %v8090 = vpack.c.b16 %v7649, %v7646
    %v8091 = vpack.c.b16 %v7650, %v7647
    %v8092 = vpack.c.b16 %v7651, %v7648
    %v8093 = vpack.c.b16 %v7655, %v7652
    %v8094 = vpack.c.b16 %v7656, %v7653
    %v8095 = vpack.c.b16 %v7657, %v7654
    %v8096 = vpack.c.b16 %v7661, %v7658
    %v8097 = vpack.c.b16 %v7662, %v7659
    %v8098 = vpack.c.b16 %v7663, %v7660
    %v8099 = vpack.c.b16 %v7667, %v7664
    %v8100 = vpack.c.b16 %v7668, %v7665
    %v8101 = vpack.c.b16 %v7669, %v7666
    %v8102 = vpack.c.b16 %v7673, %v7670
    %v8103 = vpack.c.b16 %v7674, %v7671
    %v8104 = vpack.c.b16 %v7675, %v7672
    %v8105 = vpack.c.b16 %v7679, %v7676
    %v8106 = vpack.c.b16 %v7680, %v7677
    %v8107 = vpack.c.b16 %v7681, %v7678
    %v8108 = vpack.c.b16 %v7685, %v7682
    %v8109 = vpack.c.b16 %v7686, %v7683
    %v8110 = vpack.c.b16 %v7687, %v7684
    %v8111 = vpack.c.b16 %v7691, %v7688
    %v8112 = vpack.c.b16 %v7692, %v7689
    %v8113 = vpack.c.b16 %v7693, %v7690
    %v8114 = vpack.c.b16 %v7697, %v7694
    %v8115 = vpack.c.b16 %v7698, %v7695
    %v8116 = vpack.c.b16 %v7699, %v7696
    %v8117 = vpack.c.b16 %v7703, %v7700
    %v8118 = vpack.c.b16 %v7704, %v7701
    %v8119 = vpack.c.b16 %v7705, %v7702
    %v8120 = vpack.c.b16 %v7709, %v7706
    %v8121 = vpack.c.b16 %v7710, %v7707
    %v8122 = vpack.c.b16 %v7711, %v7708
    %v8123 = vpack.c.b16 %v7715, %v7712
    %v8124 = vpack.c.b16 %v7716, %v7713
    %v8125 = vpack.c.b16 %v7717, %v7714
    %v8126 = vpack.c.b16 %v7721, %v7718
    %v8127 = vpack.c.b16 %v7722, %v7719
    %v8128 = vpack.c.b16 %v7723, %v7720
    %v8129 = vpack.c.b16 %v7727, %v7724
    %v8130 = vpack.c.b16 %v7728, %v7725
    %v8131 = vpack.c.b16 %v7729, %v7726
    %v8132 = vpack.c.b16 %v7733, %v7730
    %v8133 = vpack.c.b16 %v7734, %v7731
    %v8134 = vpack.c.b16 %v7735, %v7732
    %v8135 = vpack.c.b16 %v7739, %v7736
    %v8136 = vpack.c.b16 %v7740, %v7737
    %v8137 = vpack.c.b16 %v7741, %v7738
    %v8138 = vpack.c.b16 %v7745, %v7742
    %v8139 = vpack.c.b16 %v7746, %v7743
    %v8140 = vpack.c.b16 %v7747, %v7744
    %v8141 = vpack.c.b16 %v7751, %v7748
    %v8142 = vpack.c.b16 %v7752, %v7749
    %v8143 = vpack.c.b16 %v7753, %v7750
    %v8144 = vpack.c.b16 %v7757, %v7754
    %v8145 = vpack.c.b16 %v7758, %v7755
    %v8146 = vpack.c.b16 %v7759, %v7756
    %v8147 = vpack.c.b16 %v7763, %v7760
    %v8148 = vpack.c.b16 %v7764, %v7761
    %v8149 = vpack.c.b16 %v7765, %v7762
    %v8150 = vpack.c.b16 %v7769, %v7766
    %v8151 = vpack.c.b16 %v7770, %v7767
    %v8152 = vpack.c.b16 %v7771, %v7768
    %v8153 = vpack.c.b16 %v7775, %v7772
    %v8154 = vpack.c.b16 %v7776, %v7773
    %v8155 = vpack.c.b16 %v7777, %v7774
    %v8156 = vpack.c.b16 %v7781, %v7778
    %v8157 = vpack.c.b16 %v7782, %v7779
    %v8158 = vpack.c.b16 %v7783, %v7780
    %v8159 = vpack.c.b16 %v7787, %v7784
    %v8160 = vpack.c.b16 %v7788, %v7785
    %v8161 = vpack.c.b16 %v7789, %v7786
    %v8162 = vpack.c.b16 %v7793, %v7790
    %v8163 = vpack.c.b16 %v7794, %v7791
    %v8164 = vpack.c.b16 %v7795, %v7792
    %v8165 = vpack.c.b16 %v7799, %v7796
    %v8166 = vpack.c.b16 %v7800, %v7797
    %v8167 = vpack.c.b16 %v7801, %v7798
    %v8168 = vpack.c.b16 %v7805, %v7802
    %v8169 = vpack.c.b16 %v7806, %v7803
    %v8170 = vpack.c.b16 %v7807, %v7804
    %v8171 = vpack.c.b16 %v7811, %v7808
    %v8172 = vpack.c.b16 %v7812, %v7809
    %v8173 = vpack.c.b16 %v7813, %v7810
    %v8174 = vpack.c.b16 %v7817, %v7814
    %v8175 = vpack.c.b16 %v7818, %v7815
    %v8176 = vpack.c.b16 %v7819, %v7816
    %v8177 = vpack.c.b16 %v7823, %v7820
    %v8178 = vpack.c.b16 %v7824, %v7821
    %v8179 = vpack.c.b16 %v7825, %v7822
    %v8180 = vpack.c.b16 %v7829, %v7826
    %v8181 = vpack.c.b16 %v7830, %v7827
    %v8182 = vpack.c.b16 %v7831, %v7828
    %v8183 = vpack.c.b16 %v7835, %v7832
    %v8184 = vpack.c.b16 %v7836, %v7833
    %v8185 = vpack.c.b16 %v7837, %v7834
    %v8186 = vpack.c.b16 %v7841, %v7838
    %v8187 = vpack.c.b16 %v7842, %v7839
    %v8188 = vpack.c.b16 %v7843, %v7840
    %v8189 = vpack.c.b16 %v7847, %v7844
    %v8190 = vpack.c.b16 %v7848, %v7845
    %v8191 = vpack.c.b16 %v7849, %v7846
    %v8192 = vpack.c.b16 %v7853, %v7850
    %v8193 = vpack.c.b16 %v7854, %v7851
    %v8194 = vpack.c.b16 %v7855, %v7852
    %v8195 = vpack.c.b16 %v7859, %v7856
    %v8196 = vpack.c.b16 %v7860, %v7857
    %v8197 = vpack.c.b16 %v7861, %v7858
    %v8198 = vpack.c.b16 %v7865, %v7862
    %v8199 = vpack.c.b16 %v7866, %v7863
    %v8200 = vpack.c.b16 %v7867, %v7864
    %v8201 = vpack.c.b16 %v7871, %v7868
    %v8202 = vpack.c.b16 %v7872, %v7869
    %v8203 = vpack.c.b16 %v7873, %v7870
    %v8204 = vpack.c.b16 %v7877, %v7874
    %v8205 = vpack.c.b16 %v7878, %v7875
    %v8206 = vpack.c.b16 %v7879, %v7876
    %v8207 = vpack.c.b16 %v7883, %v7880
    %v8208 = vpack.c.b16 %v7884, %v7881
    %v8209 = vpack.c.b16 %v7885, %v7882
    %v8210 = vpack.c.b16 %v7889, %v7886
    %v8211 = vpack.c.b16 %v7890, %v7887
    %v8212 = vpack.c.b16 %v7891, %v7888
    %v8213 = vpack.c.b16 %v7895, %v7892
    %v8214 = vpack.c.b16 %v7896, %v7893
    %v8215 = vpack.c.b16 %v7897, %v7894
    %v8216 = vpack.c.b16 %v7901, %v7898
    %v8217 = vpack.c.b16 %v7902, %v7899
    %v8218 = vpack.c.b16 %v7903, %v7900
    %v8219 = vpack.c.b16 %v7907, %v7904
    %v8220 = vpack.c.b16 %v7908, %v7905
    %v8221 = vpack.c.b16 %v7909, %v7906
    %v8222 = vpack.c.b16 %v7913, %v7910
    %v8223 = vpack.c.b16 %v7914, %v7911
    %v8224 = vpack.c.b16 %v7915, %v7912
    %v8225 = vpack.c.b16 %v7919, %v7916
    %v8226 = vpack.c.b16 %v7920, %v7917
    %v8227 = vpack.c.b16 %v7921, %v7918
    %v8228 = vpack.c.b16 %v7925, %v7922
    %v8229 = vpack.c.b16 %v7926, %v7923
    %v8230 = vpack.c.b16 %v7927, %v7924
    %v8231 = vpack.c.b16 %v7931, %v7928
    %v8232 = vpack.c.b16 %v7932, %v7929
    %v8233 = vpack.c.b16 %v7933, %v7930
    %v8234 = vpack.c.b16 %v7937, %v7934
    %v8235 = vpack.c.b16 %v7938, %v7935
    %v8236 = vpack.c.b16 %v7939, %v7936
    %v8237 = vpack.c.b16 %v7943, %v7940
    %v8238 = vpack.c.b16 %v7944, %v7941
    %v8239 = vpack.c.b16 %v7945, %v7942
    %v8240 = vpack.c.b16 %v7949, %v7946
    %v8241 = vpack.c.b16 %v7950, %v7947
    %v8242 = vpack.c.b16 %v7951, %v7948
    %v8243 = vpack.c.b16 %v7955, %v7952
    %v8244 = vpack.c.b16 %v7956, %v7953
    %v8245 = vpack.c.b16 %v7957, %v7954
    %8534 = vmatprep.subr.bf16.mxu0 %v7959
    %8535 = vmatpush1.bf16.msra.mxu0 %v7958
    %8536 = vmatprep.subr.bf16.mxu0 %v7962
    %8537 = vmatpush1.bf16.msra.mxu0 %v7961
    %8538 = vmatprep.subr.bf16.mxu0 %v7965
    %8539 = vmatpush1.bf16.msra.mxu0 %v7964
    %8540 = vmatprep.subr.bf16.mxu0 %v7968
    %8541 = vmatpush1.bf16.msra.mxu0 %v7967
    %8542 = vmatprep.subr.bf16.mxu0 %v7971
    %8543 = vmatpush1.bf16.msra.mxu0 %v7970
    %8544 = vmatprep.subr.bf16.mxu0 %v7974
    %8545 = vmatpush1.bf16.msra.mxu0 %v7973
    %8546 = vmatprep.subr.bf16.mxu0 %v7977
    %8547 = vmatpush1.bf16.msra.mxu0 %v7976
    %8548 = vmatprep.subr.bf16.mxu0 %v7980
    %8549 = vmatpush1.bf16.msra.mxu0 %v7979
    %8550 = vmatprep.subr.bf16.mxu0 %v7983
    %8551 = vmatpush1.bf16.msra.mxu0 %v7982
    %8552 = vmatprep.subr.bf16.mxu0 %v7986
    %8553 = vmatpush1.bf16.msra.mxu0 %v7985
    %8554 = vmatprep.subr.bf16.mxu0 %v7989
    %8555 = vmatpush1.bf16.msra.mxu0 %v7988
    %8556 = vmatprep.subr.bf16.mxu0 %v7992
    %8557 = vmatpush1.bf16.msra.mxu0 %v7991
    %8558 = vmatprep.subr.bf16.mxu0 %v7995
    %8559 = vmatpush1.bf16.msra.mxu0 %v7994
    %8560 = vmatprep.subr.bf16.mxu0 %v7998
    %8561 = vmatpush1.bf16.msra.mxu0 %v7997
    %8562 = vmatprep.subr.bf16.mxu0 %v8001
    %8563 = vmatpush1.bf16.msra.mxu0 %v8000
    %8564 = vmatprep.subr.bf16.mxu0 %v8004
    %8565 = vmatpush1.bf16.msra.mxu0 %v8003
    %8566 = vmatprep.mubr.bf16.mxu0 %v6586
    %8567 = vmatmul.mubr.bf16.gmra.mrb[0].mxu0 %v6585
    %v8568 = vpop.f32.mrb[0].mxu0
    %v8569 = vadd.f32 %v6986, %v8568
    %v8570 = vpop.f32.mrb[0].mxu0
    %v8571 = vadd.f32 %v6990, %v8570
    %v8572 = vpop.f32.mrb[0].mxu0
    %v8573 = vadd.f32 %v6986, %v8572
    %v8574 = vpop.f32.mrb[0].mxu0
    %v8575 = vadd.f32 %v6990, %v8574
    %8576 = vdwg.mxu0
    %8577 = vmatprep.subr.bf16.mxu0 %v8007
    %8578 = vmatpush1.bf16.msra.mxu0 %v8006
    %8579 = vmatprep.subr.bf16.mxu0 %v8010
    %8580 = vmatpush1.bf16.msra.mxu0 %v8009
    %8581 = vmatprep.subr.bf16.mxu0 %v8013
    %8582 = vmatpush1.bf16.msra.mxu0 %v8012
    %8583 = vmatprep.subr.bf16.mxu0 %v8016
    %8584 = vmatpush1.bf16.msra.mxu0 %v8015
    %8585 = vmatprep.subr.bf16.mxu0 %v8019
    %8586 = vmatpush1.bf16.msra.mxu0 %v8018
    %8587 = vmatprep.subr.bf16.mxu0 %v8022
    %8588 = vmatpush1.bf16.msra.mxu0 %v8021
    %8589 = vmatprep.subr.bf16.mxu0 %v8025
    %8590 = vmatpush1.bf16.msra.mxu0 %v8024
    %8591 = vmatprep.subr.bf16.mxu0 %v8028
    %8592 = vmatpush1.bf16.msra.mxu0 %v8027
    %8593 = vmatprep.subr.bf16.mxu0 %v8031
    %8594 = vmatpush1.bf16.msra.mxu0 %v8030
    %8595 = vmatprep.subr.bf16.mxu0 %v8034
    %8596 = vmatpush1.bf16.msra.mxu0 %v8033
    %8597 = vmatprep.subr.bf16.mxu0 %v8037
    %8598 = vmatpush1.bf16.msra.mxu0 %v8036
    %8599 = vmatprep.subr.bf16.mxu0 %v8040
    %8600 = vmatpush1.bf16.msra.mxu0 %v8039
    %8601 = vmatprep.subr.bf16.mxu0 %v8043
    %8602 = vmatpush1.bf16.msra.mxu0 %v8042
    %8603 = vmatprep.subr.bf16.mxu0 %v8046
    %8604 = vmatpush1.bf16.msra.mxu0 %v8045
    %8605 = vmatprep.subr.bf16.mxu0 %v8049
    %8606 = vmatpush1.bf16.msra.mxu0 %v8048
    %8607 = vmatprep.subr.bf16.mxu0 %v8052
    %8608 = vmatpush1.bf16.msra.mxu0 %v8051
    %8609 = vmatprep.mubr.bf16.mxu0 %v6588
    %8610 = vmatmul.mubr.bf16.gmra.mrb[0].mxu0 %v6587
    %v8611 = vpop.f32.mrb[0].mxu0
    %v8612 = vadd.f32 %v8569, %v8611
    %v8613 = vpop.f32.mrb[0].mxu0
    %v8614 = vadd.f32 %v8571, %v8613
    %v8615 = vpop.f32.mrb[0].mxu0
    %v8616 = vadd.f32 %v8573, %v8615
    %v8617 = vpop.f32.mrb[0].mxu0
    %v8618 = vadd.f32 %v8575, %v8617
    %8619 = vdwg.mxu0
    %8620 = vmatprep.subr.bf16.mxu0 %v8055
    %8621 = vmatpush1.bf16.msra.mxu0 %v8054
    %8622 = vmatprep.subr.bf16.mxu0 %v8058
    %8623 = vmatpush1.bf16.msra.mxu0 %v8057
    %8624 = vmatprep.subr.bf16.mxu0 %v8061
    %8625 = vmatpush1.bf16.msra.mxu0 %v8060
    %8626 = vmatprep.subr.bf16.mxu0 %v8064
    %8627 = vmatpush1.bf16.msra.mxu0 %v8063
    %8628 = vmatprep.subr.bf16.mxu0 %v8067
    %8629 = vmatpush1.bf16.msra.mxu0 %v8066
    %8630 = vmatprep.subr.bf16.mxu0 %v8070
    %8631 = vmatpush1.bf16.msra.mxu0 %v8069
    %8632 = vmatprep.subr.bf16.mxu0 %v8073
    %8633 = vmatpush1.bf16.msra.mxu0 %v8072
    %8634 = vmatprep.subr.bf16.mxu0 %v8076
    %8635 = vmatpush1.bf16.msra.mxu0 %v8075
    %8636 = vmatprep.subr.bf16.mxu0 %v8079
    %8637 = vmatpush1.bf16.msra.mxu0 %v8078
    %8638 = vmatprep.subr.bf16.mxu0 %v8082
    %8639 = vmatpush1.bf16.msra.mxu0 %v8081
    %8640 = vmatprep.subr.bf16.mxu0 %v8085
    %8641 = vmatpush1.bf16.msra.mxu0 %v8084
    %8642 = vmatprep.subr.bf16.mxu0 %v8088
    %8643 = vmatpush1.bf16.msra.mxu0 %v8087
    %8644 = vmatprep.subr.bf16.mxu0 %v8091
    %8645 = vmatpush1.bf16.msra.mxu0 %v8090
    %8646 = vmatprep.subr.bf16.mxu0 %v8094
    %8647 = vmatpush1.bf16.msra.mxu0 %v8093
    %8648 = vmatprep.subr.bf16.mxu0 %v8097
    %8649 = vmatpush1.bf16.msra.mxu0 %v8096
    %8650 = vmatprep.subr.bf16.mxu0 %v8100
    %8651 = vmatpush1.bf16.msra.mxu0 %v8099
    %8652 = vmatprep.mubr.bf16.mxu0 %v6590
    %8653 = vmatmul.mubr.bf16.gmra.mrb[0].mxu0 %v6589
    %v8654 = vpop.f32.mrb[0].mxu0
    %v8655 = vadd.f32 %v8612, %v8654
    %v8656 = vpop.f32.mrb[0].mxu0
    %v8657 = vadd.f32 %v8614, %v8656
    %v8658 = vpop.f32.mrb[0].mxu0
    %v8659 = vadd.f32 %v8616, %v8658
    %v8660 = vpop.f32.mrb[0].mxu0
    %v8661 = vadd.f32 %v8618, %v8660
    %8662 = vdwg.mxu0
    %8663 = vmatprep.subr.bf16.mxu0 %v8103
    %8664 = vmatpush1.bf16.msra.mxu0 %v8102
    %8665 = vmatprep.subr.bf16.mxu0 %v8106
    %8666 = vmatpush1.bf16.msra.mxu0 %v8105
    %8667 = vmatprep.subr.bf16.mxu0 %v8109
    %8668 = vmatpush1.bf16.msra.mxu0 %v8108
    %8669 = vmatprep.subr.bf16.mxu0 %v8112
    %8670 = vmatpush1.bf16.msra.mxu0 %v8111
    %8671 = vmatprep.subr.bf16.mxu0 %v8115
    %8672 = vmatpush1.bf16.msra.mxu0 %v8114
    %8673 = vmatprep.subr.bf16.mxu0 %v8118
    %8674 = vmatpush1.bf16.msra.mxu0 %v8117
    %8675 = vmatprep.subr.bf16.mxu0 %v8121
    %8676 = vmatpush1.bf16.msra.mxu0 %v8120
    %8677 = vmatprep.subr.bf16.mxu0 %v8124
    %8678 = vmatpush1.bf16.msra.mxu0 %v8123
    %8679 = vmatprep.subr.bf16.mxu0 %v8127
    %8680 = vmatpush1.bf16.msra.mxu0 %v8126
    %8681 = vmatprep.subr.bf16.mxu0 %v8130
    %8682 = vmatpush1.bf16.msra.mxu0 %v8129
    %8683 = vmatprep.subr.bf16.mxu0 %v8133
    %8684 = vmatpush1.bf16.msra.mxu0 %v8132
    %8685 = vmatprep.subr.bf16.mxu0 %v8136
    %8686 = vmatpush1.bf16.msra.mxu0 %v8135
    %8687 = vmatprep.subr.bf16.mxu0 %v8139
    %8688 = vmatpush1.bf16.msra.mxu0 %v8138
    %8689 = vmatprep.subr.bf16.mxu0 %v8142
    %8690 = vmatpush1.bf16.msra.mxu0 %v8141
    %8691 = vmatprep.subr.bf16.mxu0 %v8145
    %8692 = vmatpush1.bf16.msra.mxu0 %v8144
    %8693 = vmatprep.subr.bf16.mxu0 %v8148
    %8694 = vmatpush1.bf16.msra.mxu0 %v8147
    %8695 = vmatprep.mubr.bf16.mxu0 %v6592
    %8696 = vmatmul.mubr.bf16.gmra.mrb[0].mxu0 %v6591
    %v8697 = vpop.f32.mrb[0].mxu0
    %v8698 = vadd.f32 %v8655, %v8697
    %v8699 = vpop.f32.mrb[0].mxu0
    %v8700 = vadd.f32 %v8657, %v8699
    %v8701 = vpop.f32.mrb[0].mxu0
    %v8702 = vadd.f32 %v8659, %v8701
    %v8703 = vpop.f32.mrb[0].mxu0
    %v8704 = vadd.f32 %v8661, %v8703
    %8705 = vdwg.mxu0
    %8706 = vmatprep.subr.bf16.mxu0 %v8151
    %8707 = vmatpush1.bf16.msra.mxu0 %v8150
    %8708 = vmatprep.subr.bf16.mxu0 %v8154
    %8709 = vmatpush1.bf16.msra.mxu0 %v8153
    %8710 = vmatprep.subr.bf16.mxu0 %v8157
    %8711 = vmatpush1.bf16.msra.mxu0 %v8156
    %8712 = vmatprep.subr.bf16.mxu0 %v8160
    %8713 = vmatpush1.bf16.msra.mxu0 %v8159
    %8714 = vmatprep.subr.bf16.mxu0 %v8163
    %8715 = vmatpush1.bf16.msra.mxu0 %v8162
    %8716 = vmatprep.subr.bf16.mxu0 %v8166
    %8717 = vmatpush1.bf16.msra.mxu0 %v8165
    %8718 = vmatprep.subr.bf16.mxu0 %v8169
    %8719 = vmatpush1.bf16.msra.mxu0 %v8168
    %8720 = vmatprep.subr.bf16.mxu0 %v8172
    %8721 = vmatpush1.bf16.msra.mxu0 %v8171
    %8722 = vmatprep.subr.bf16.mxu0 %v8175
    %8723 = vmatpush1.bf16.msra.mxu0 %v8174
    %8724 = vmatprep.subr.bf16.mxu0 %v8178
    %8725 = vmatpush1.bf16.msra.mxu0 %v8177
    %8726 = vmatprep.subr.bf16.mxu0 %v8181
    %8727 = vmatpush1.bf16.msra.mxu0 %v8180
    %8728 = vmatprep.subr.bf16.mxu0 %v8184
    %8729 = vmatpush1.bf16.msra.mxu0 %v8183
    %8730 = vmatprep.subr.bf16.mxu0 %v8187
    %8731 = vmatpush1.bf16.msra.mxu0 %v8186
    %8732 = vmatprep.subr.bf16.mxu0 %v8190
    %8733 = vmatpush1.bf16.msra.mxu0 %v8189
    %8734 = vmatprep.subr.bf16.mxu0 %v8193
    %8735 = vmatpush1.bf16.msra.mxu0 %v8192
    %8736 = vmatprep.subr.bf16.mxu0 %v8196
    %8737 = vmatpush1.bf16.msra.mxu0 %v8195
    %8738 = vmatprep.mubr.bf16.mxu0 %v6594
    %8739 = vmatmul.mubr.bf16.gmra.mrb[0].mxu0 %v6593
    %v8740 = vpop.f32.mrb[0].mxu0
    %v8741 = vadd.f32 %v8698, %v8740
    %v8742 = vpop.f32.mrb[0].mxu0
    %v8743 = vadd.f32 %v8700, %v8742
    %v8744 = vpop.f32.mrb[0].mxu0
    %v8745 = vadd.f32 %v8702, %v8744
    %v8746 = vpop.f32.mrb[0].mxu0
    %v8747 = vadd.f32 %v8704, %v8746
    %8748 = vdwg.mxu0
    %8749 = vmatprep.subr.bf16.mxu0 %v8199
    %8750 = vmatpush1.bf16.msra.mxu0 %v8198
    %8751 = vmatprep.subr.bf16.mxu0 %v8202
    %8752 = vmatpush1.bf16.msra.mxu0 %v8201
    %8753 = vmatprep.subr.bf16.mxu0 %v8205
    %8754 = vmatpush1.bf16.msra.mxu0 %v8204
    %8755 = vmatprep.subr.bf16.mxu0 %v8208
    %8756 = vmatpush1.bf16.msra.mxu0 %v8207
    %8757 = vmatprep.subr.bf16.mxu0 %v8211
    %8758 = vmatpush1.bf16.msra.mxu0 %v8210
    %8759 = vmatprep.subr.bf16.mxu0 %v8214
    %8760 = vmatpush1.bf16.msra.mxu0 %v8213
    %8761 = vmatprep.subr.bf16.mxu0 %v8217
    %8762 = vmatpush1.bf16.msra.mxu0 %v8216
    %8763 = vmatprep.subr.bf16.mxu0 %v8220
    %8764 = vmatpush1.bf16.msra.mxu0 %v8219
    %8765 = vmatprep.subr.bf16.mxu0 %v8223
    %8766 = vmatpush1.bf16.msra.mxu0 %v8222
    %8767 = vmatprep.subr.bf16.mxu0 %v8226
    %8768 = vmatpush1.bf16.msra.mxu0 %v8225
    %8769 = vmatprep.subr.bf16.mxu0 %v8229
    %8770 = vmatpush1.bf16.msra.mxu0 %v8228
    %8771 = vmatprep.subr.bf16.mxu0 %v8232
    %8772 = vmatpush1.bf16.msra.mxu0 %v8231
    %8773 = vmatprep.subr.bf16.mxu0 %v8235
    %8774 = vmatpush1.bf16.msra.mxu0 %v8234
    %8775 = vmatprep.subr.bf16.mxu0 %v8238
    %8776 = vmatpush1.bf16.msra.mxu0 %v8237
    %8777 = vmatprep.subr.bf16.mxu0 %v8241
    %8778 = vmatpush1.bf16.msra.mxu0 %v8240
    %8779 = vmatprep.subr.bf16.mxu0 %v8244
    %8780 = vmatpush1.bf16.msra.mxu0 %v8243
    %8781 = vmatprep.mubr.bf16.mxu0 %v6596
    %8782 = vmatmul.mubr.bf16.gmra.mrb[0].mxu0 %v6595
    %v8783 = vpop.f32.mrb[0].mxu0
    %v8784 = vadd.f32 %v8741, %v8783
    %v8785 = vpop.f32.mrb[0].mxu0
    %v8786 = vadd.f32 %v8743, %v8785
    %v8787 = vpop.f32.mrb[0].mxu0
    %v8788 = vadd.f32 %v8745, %v8787
    %v8789 = vpop.f32.mrb[0].mxu0
    %v8790 = vadd.f32 %v8747, %v8789
    %8791 = vdwg.mxu0
    %8792 = vmatprep.subr.bf16.mxu0 0
    %8793 = vmatpush1.bf16.msra.mxu0 %v7960
    %8794 = vmatprep.subr.bf16.mxu0 0
    %8795 = vmatpush1.bf16.msra.mxu0 %v7963
    %8796 = vmatprep.subr.bf16.mxu0 0
    %8797 = vmatpush1.bf16.msra.mxu0 %v7966
    %8798 = vmatprep.subr.bf16.mxu0 0
    %8799 = vmatpush1.bf16.msra.mxu0 %v7969
    %8800 = vmatprep.subr.bf16.mxu0 0
    %8801 = vmatpush1.bf16.msra.mxu0 %v7972
    %8802 = vmatprep.subr.bf16.mxu0 0
    %8803 = vmatpush1.bf16.msra.mxu0 %v7975
    %8804 = vmatprep.subr.bf16.mxu0 0
    %8805 = vmatpush1.bf16.msra.mxu0 %v7978
    %8806 = vmatprep.subr.bf16.mxu0 0
    %8807 = vmatpush1.bf16.msra.mxu0 %v7981
    %8808 = vmatprep.subr.bf16.mxu0 0
    %8809 = vmatpush1.bf16.msra.mxu0 %v7984
    %8810 = vmatprep.subr.bf16.mxu0 0
    %8811 = vmatpush1.bf16.msra.mxu0 %v7987
    %8812 = vmatprep.subr.bf16.mxu0 0
    %8813 = vmatpush1.bf16.msra.mxu0 %v7990
    %8814 = vmatprep.subr.bf16.mxu0 0
    %8815 = vmatpush1.bf16.msra.mxu0 %v7993
    %8816 = vmatprep.subr.bf16.mxu0 0
    %8817 = vmatpush1.bf16.msra.mxu0 %v7996
    %8818 = vmatprep.subr.bf16.mxu0 0
    %8819 = vmatpush1.bf16.msra.mxu0 %v7999
    %8820 = vmatprep.subr.bf16.mxu0 0
    %8821 = vmatpush1.bf16.msra.mxu0 %v8002
    %8822 = vmatprep.subr.bf16.mxu0 0
    %8823 = vmatpush1.bf16.msra.mxu0 %v8005
    %8824 = vmatprep.mubr.bf16.mxu0 %v6586
    %8825 = vmatmul.mubr.bf16.gmra.mrb[0].mxu0 %v6585
    %v8826 = vpop.f32.mrb[0].mxu0
    %v8827 = vadd.f32 %v6994, %v8826
    %v8828 = vpop.f32.mrb[0].mxu0
    %v8829 = vpop.f32.mrb[0].mxu0
    %v8830 = vadd.f32 %v6994, %v8829
    %v8831 = vpop.f32.mrb[0].mxu0
    %8832 = vdwg.mxu0
    %8833 = vmatprep.subr.bf16.mxu0 0
    %8834 = vmatpush1.bf16.msra.mxu0 %v8008
    %8835 = vmatprep.subr.bf16.mxu0 0
    %8836 = vmatpush1.bf16.msra.mxu0 %v8011
    %8837 = vmatprep.subr.bf16.mxu0 0
    %8838 = vmatpush1.bf16.msra.mxu0 %v8014
    %8839 = vmatprep.subr.bf16.mxu0 0
    %8840 = vmatpush1.bf16.msra.mxu0 %v8017
    %8841 = vmatprep.subr.bf16.mxu0 0
    %8842 = vmatpush1.bf16.msra.mxu0 %v8020
    %8843 = vmatprep.subr.bf16.mxu0 0
    %8844 = vmatpush1.bf16.msra.mxu0 %v8023
    %8845 = vmatprep.subr.bf16.mxu0 0
    %8846 = vmatpush1.bf16.msra.mxu0 %v8026
    %8847 = vmatprep.subr.bf16.mxu0 0
    %8848 = vmatpush1.bf16.msra.mxu0 %v8029
    %8849 = vmatprep.subr.bf16.mxu0 0
    %8850 = vmatpush1.bf16.msra.mxu0 %v8032
    %8851 = vmatprep.subr.bf16.mxu0 0
    %8852 = vmatpush1.bf16.msra.mxu0 %v8035
    %8853 = vmatprep.subr.bf16.mxu0 0
    %8854 = vmatpush1.bf16.msra.mxu0 %v8038
    %8855 = vmatprep.subr.bf16.mxu0 0
    %8856 = vmatpush1.bf16.msra.mxu0 %v8041
    %8857 = vmatprep.subr.bf16.mxu0 0
    %8858 = vmatpush1.bf16.msra.mxu0 %v8044
    %8859 = vmatprep.subr.bf16.mxu0 0
    %8860 = vmatpush1.bf16.msra.mxu0 %v8047
    %8861 = vmatprep.subr.bf16.mxu0 0
    %8862 = vmatpush1.bf16.msra.mxu0 %v8050
    %8863 = vmatprep.subr.bf16.mxu0 0
    %8864 = vmatpush1.bf16.msra.mxu0 %v8053
    %8865 = vmatprep.mubr.bf16.mxu0 %v6588
    %8866 = vmatmul.mubr.bf16.gmra.mrb[0].mxu0 %v6587
    %v8867 = vpop.f32.mrb[0].mxu0
    %v8868 = vadd.f32 %v8827, %v8867
    %v8869 = vpop.f32.mrb[0].mxu0
    %v8870 = vpop.f32.mrb[0].mxu0
    %v8871 = vadd.f32 %v8830, %v8870
    %v8872 = vpop.f32.mrb[0].mxu0
    %8873 = vdwg.mxu0
    %8874 = vmatprep.subr.bf16.mxu0 0
    %8875 = vmatpush1.bf16.msra.mxu0 %v8056
    %8876 = vmatprep.subr.bf16.mxu0 0
    %8877 = vmatpush1.bf16.msra.mxu0 %v8059
    %8878 = vmatprep.subr.bf16.mxu0 0
    %8879 = vmatpush1.bf16.msra.mxu0 %v8062
    %8880 = vmatprep.subr.bf16.mxu0 0
    %8881 = vmatpush1.bf16.msra.mxu0 %v8065
    %8882 = vmatprep.subr.bf16.mxu0 0
    %8883 = vmatpush1.bf16.msra.mxu0 %v8068
    %8884 = vmatprep.subr.bf16.mxu0 0
    %8885 = vmatpush1.bf16.msra.mxu0 %v8071
    %8886 = vmatprep.subr.bf16.mxu0 0
    %8887 = vmatpush1.bf16.msra.mxu0 %v8074
    %8888 = vmatprep.subr.bf16.mxu0 0
    %8889 = vmatpush1.bf16.msra.mxu0 %v8077
    %8890 = vmatprep.subr.bf16.mxu0 0
    %8891 = vmatpush1.bf16.msra.mxu0 %v8080
    %8892 = vmatprep.subr.bf16.mxu0 0
    %8893 = vmatpush1.bf16.msra.mxu0 %v8083
    %8894 = vmatprep.subr.bf16.mxu0 0
    %8895 = vmatpush1.bf16.msra.mxu0 %v8086
    %8896 = vmatprep.subr.bf16.mxu0 0
    %8897 = vmatpush1.bf16.msra.mxu0 %v8089
    %8898 = vmatprep.subr.bf16.mxu0 0
    %8899 = vmatpush1.bf16.msra.mxu0 %v8092
    %8900 = vmatprep.subr.bf16.mxu0 0
    %8901 = vmatpush1.bf16.msra.mxu0 %v8095
    %8902 = vmatprep.subr.bf16.mxu0 0
    %8903 = vmatpush1.bf16.msra.mxu0 %v8098
    %8904 = vmatprep.subr.bf16.mxu0 0
    %8905 = vmatpush1.bf16.msra.mxu0 %v8101
    %8906 = vmatprep.mubr.bf16.mxu0 %v6590
    %8907 = vmatmul.mubr.bf16.gmra.mrb[0].mxu0 %v6589
    %v8908 = vpop.f32.mrb[0].mxu0
    %v8909 = vadd.f32 %v8868, %v8908
    %v8910 = vpop.f32.mrb[0].mxu0
    %v8911 = vpop.f32.mrb[0].mxu0
    %v8912 = vadd.f32 %v8871, %v8911
    %v8913 = vpop.f32.mrb[0].mxu0
    %8914 = vdwg.mxu0
    %8915 = vmatprep.subr.bf16.mxu0 0
    %8916 = vmatpush1.bf16.msra.mxu0 %v8104
    %8917 = vmatprep.subr.bf16.mxu0 0
    %8918 = vmatpush1.bf16.msra.mxu0 %v8107
    %8919 = vmatprep.subr.bf16.mxu0 0
    %8920 = vmatpush1.bf16.msra.mxu0 %v8110
    %8921 = vmatprep.subr.bf16.mxu0 0
    %8922 = vmatpush1.bf16.msra.mxu0 %v8113
    %8923 = vmatprep.subr.bf16.mxu0 0
    %8924 = vmatpush1.bf16.msra.mxu0 %v8116
    %8925 = vmatprep.subr.bf16.mxu0 0
    %8926 = vmatpush1.bf16.msra.mxu0 %v8119
    %8927 = vmatprep.subr.bf16.mxu0 0
    %8928 = vmatpush1.bf16.msra.mxu0 %v8122
    %8929 = vmatprep.subr.bf16.mxu0 0
    %8930 = vmatpush1.bf16.msra.mxu0 %v8125
    %8931 = vmatprep.subr.bf16.mxu0 0
    %8932 = vmatpush1.bf16.msra.mxu0 %v8128
    %8933 = vmatprep.subr.bf16.mxu0 0
    %8934 = vmatpush1.bf16.msra.mxu0 %v8131
    %8935 = vmatprep.subr.bf16.mxu0 0
    %8936 = vmatpush1.bf16.msra.mxu0 %v8134
    %8937 = vmatprep.subr.bf16.mxu0 0
    %8938 = vmatpush1.bf16.msra.mxu0 %v8137
    %8939 = vmatprep.subr.bf16.mxu0 0
    %8940 = vmatpush1.bf16.msra.mxu0 %v8140
    %8941 = vmatprep.subr.bf16.mxu0 0
    %8942 = vmatpush1.bf16.msra.mxu0 %v8143
    %8943 = vmatprep.subr.bf16.mxu0 0
    %8944 = vmatpush1.bf16.msra.mxu0 %v8146
    %8945 = vmatprep.subr.bf16.mxu0 0
    %8946 = vmatpush1.bf16.msra.mxu0 %v8149
    %8947 = vmatprep.mubr.bf16.mxu0 %v6592
    %8948 = vmatmul.mubr.bf16.gmra.mrb[0].mxu0 %v6591
    %v8949 = vpop.f32.mrb[0].mxu0
    %v8950 = vadd.f32 %v8909, %v8949
    %v8951 = vpop.f32.mrb[0].mxu0
    %v8952 = vpop.f32.mrb[0].mxu0
    %v8953 = vadd.f32 %v8912, %v8952
    %v8954 = vpop.f32.mrb[0].mxu0
    %8955 = vdwg.mxu0
    %8956 = vmatprep.subr.bf16.mxu0 0
    %8957 = vmatpush1.bf16.msra.mxu0 %v8152
    %8958 = vmatprep.subr.bf16.mxu0 0
    %8959 = vmatpush1.bf16.msra.mxu0 %v8155
    %8960 = vmatprep.subr.bf16.mxu0 0
    %8961 = vmatpush1.bf16.msra.mxu0 %v8158
    %8962 = vmatprep.subr.bf16.mxu0 0
    %8963 = vmatpush1.bf16.msra.mxu0 %v8161
    %8964 = vmatprep.subr.bf16.mxu0 0
    %8965 = vmatpush1.bf16.msra.mxu0 %v8164
    %8966 = vmatprep.subr.bf16.mxu0 0
    %8967 = vmatpush1.bf16.msra.mxu0 %v8167
    %8968 = vmatprep.subr.bf16.mxu0 0
    %8969 = vmatpush1.bf16.msra.mxu0 %v8170
    %8970 = vmatprep.subr.bf16.mxu0 0
    %8971 = vmatpush1.bf16.msra.mxu0 %v8173
    %8972 = vmatprep.subr.bf16.mxu0 0
    %8973 = vmatpush1.bf16.msra.mxu0 %v8176
    %8974 = vmatprep.subr.bf16.mxu0 0
    %8975 = vmatpush1.bf16.msra.mxu0 %v8179
    %8976 = vmatprep.subr.bf16.mxu0 0
    %8977 = vmatpush1.bf16.msra.mxu0 %v8182
    %8978 = vmatprep.subr.bf16.mxu0 0
    %8979 = vmatpush1.bf16.msra.mxu0 %v8185
    %8980 = vmatprep.subr.bf16.mxu0 0
    %8981 = vmatpush1.bf16.msra.mxu0 %v8188
    %8982 = vmatprep.subr.bf16.mxu0 0
    %8983 = vmatpush1.bf16.msra.mxu0 %v8191
    %8984 = vmatprep.subr.bf16.mxu0 0
    %8985 = vmatpush1.bf16.msra.mxu0 %v8194
    %8986 = vmatprep.subr.bf16.mxu0 0
    %8987 = vmatpush1.bf16.msra.mxu0 %v8197
    %8988 = vmatprep.mubr.bf16.mxu0 %v6594
    %8989 = vmatmul.mubr.bf16.gmra.mrb[0].mxu0 %v6593
    %v8990 = vpop.f32.mrb[0].mxu0
    %v8991 = vadd.f32 %v8950, %v8990
    %v8992 = vpop.f32.mrb[0].mxu0
    %v8993 = vpop.f32.mrb[0].mxu0
    %v8994 = vadd.f32 %v8953, %v8993
    %v8995 = vpop.f32.mrb[0].mxu0
    %8996 = vdwg.mxu0
    %8997 = vmatprep.subr.bf16.mxu0 0
    %8998 = vmatpush1.bf16.msra.mxu0 %v8200
    %8999 = vmatprep.subr.bf16.mxu0 0
    %9000 = vmatpush1.bf16.msra.mxu0 %v8203
    %9001 = vmatprep.subr.bf16.mxu0 0
    %9002 = vmatpush1.bf16.msra.mxu0 %v8206
    %9003 = vmatprep.subr.bf16.mxu0 0
    %9004 = vmatpush1.bf16.msra.mxu0 %v8209
    %9005 = vmatprep.subr.bf16.mxu0 0
    %9006 = vmatpush1.bf16.msra.mxu0 %v8212
    %9007 = vmatprep.subr.bf16.mxu0 0
    %9008 = vmatpush1.bf16.msra.mxu0 %v8215
    %9009 = vmatprep.subr.bf16.mxu0 0
    %9010 = vmatpush1.bf16.msra.mxu0 %v8218
    %9011 = vmatprep.subr.bf16.mxu0 0
    %9012 = vmatpush1.bf16.msra.mxu0 %v8221
    %9013 = vmatprep.subr.bf16.mxu0 0
    %9014 = vmatpush1.bf16.msra.mxu0 %v8224
    %9015 = vmatprep.subr.bf16.mxu0 0
    %9016 = vmatpush1.bf16.msra.mxu0 %v8227
    %9017 = vmatprep.subr.bf16.mxu0 0
    %9018 = vmatpush1.bf16.msra.mxu0 %v8230
    %9019 = vmatprep.subr.bf16.mxu0 0
    %9020 = vmatpush1.bf16.msra.mxu0 %v8233
    %9021 = vmatprep.subr.bf16.mxu0 0
    %9022 = vmatpush1.bf16.msra.mxu0 %v8236
    %9023 = vmatprep.subr.bf16.mxu0 0
    %9024 = vmatpush1.bf16.msra.mxu0 %v8239
    %9025 = vmatprep.subr.bf16.mxu0 0
    %9026 = vmatpush1.bf16.msra.mxu0 %v8242
    %9027 = vmatprep.subr.bf16.mxu0 0
    %9028 = vmatpush1.bf16.msra.mxu0 %v8245
    %9029 = vmatprep.mubr.bf16.mxu0 %v6596
    %9030 = vmatmul.mubr.bf16.gmra.mrb[0].mxu0 %v6595
    %v9031 = vpop.f32.mrb[0].mxu0
    %v9032 = vadd.f32 %v8991, %v9031
    %v9033 = vpop.f32.mrb[0].mxu0
    %v9034 = vpop.f32.mrb[0].mxu0
    %v9035 = vadd.f32 %v8994, %v9034
    %v9036 = vpop.f32.mrb[0].mxu0
    %9037 = vdwg.mxu0
    %v9038 = vadd.f32 %v4156, %v8784
    %v9039 = vadd.f32 %v4157, %v8786
    %v9040 = vadd.f32 %v4158, %v9032
    %v9041 = vadd.f32 %v4159, %v8788
    %v9042 = vadd.f32 %v4160, %v8790
    %v9043 = vadd.f32 %v4161, %v9035
    %9044 = vst [vmem:[#allocation25] sm:$0xff] %v9038
    %9045 = vst [vmem:[#allocation25 + $0x8] sm:$0xff] %v9039
    %9046 = vst [vmem:[#allocation25 + $0x10] sm:$0xff] %v9040
    %9047 = vst [vmem:[#allocation25 + $0x18] sm:$0xff] %v9041
    %9048 = vst [vmem:[#allocation25 + $0x20] sm:$0xff] %v9042
    %9049 = vst [vmem:[#allocation25 + $0x28] sm:$0xff] %v9043
    // Predicated region
    $region98: #{tpu_custom_call.1} parent=1 // pred_check
      _
    $region99: #{tpu_custom_call.1} parent=1 // pred_check_branch
      %9051 = sbr.rel (0) target = $region101
    $region100: #{tpu_custom_call.1} parent=1 // pred_region
      %s9053 = ssub.s32 768, 768
      %9054 = vsyncadd [#allocation7], %s9053
      %s9055 = sshll.u32 [#allocation25], 4
      %s9056 = int_to_ptr.vmem [resolvable:$true] %s9055
      %9061 = dma.vmem_to_hbm [thread:$0]  %s9056, 768, %s13, [#allocation7], 384, 384, 24
    $region101: #{tpu_custom_call.1} parent=1 // pred_fallthru
      _
    // Predicated region
    $region102: #{tpu_custom_call.1} parent=1 // pred_check
      _
    $region103: #{tpu_custom_call.1} parent=1 // pred_check_branch
      %9063 = sbr.rel (0) target = $region105
    $region104: #{tpu_custom_call.1} parent=1 // pred_region
      %9064 = dma.done [#allocation7], 768
    $region105: #{tpu_custom_call.1} parent=1 // pred_fallthru
      _
    %9065 = vsyncpa [#allocation6], 1
    %9066 = vsyncpa [#allocation9], 1
    %9067 = vsyncpa [#allocation12], 1
    %9068 = vsyncpa [#allocation15], 1
    %9069 = vsyncpa [#allocation18], 1
    %9070 = vsyncpa [#allocation21], 1
    %9071 = vsyncpa [#allocation24], 1
    %9072 = vsyncpa [#allocation7], 1

</llo_original>
